<compile_context>
chip_gen: v7x
topology: tpu7x:2x2x1
jax: 0.10.0
libtpu: 0.0.40
codegen_flags: <defaults>
</compile_context>

<pallas_src>
import jax
import jax.numpy as jnp
from jax import lax
from jax.experimental import pallas as pl
from jax.experimental.pallas import tpu as pltpu


# ---------------------------------------------------------------- helpers ---
def _full_spec(shape):
    zeros = (0,) * len(shape)
    return pl.BlockSpec(shape, lambda i, _z=zeros: _z)


def nearest_up_matrix(s, dtype=jnp.bfloat16):
    """One-hot (s^3, (2s)^3) matrix: (C, s^3) @ R == nearest x2 3-D upsample."""
    t = 2 * s
    dst = jnp.arange(t ** 3)
    dd, rem = dst // (t * t), dst % (t * t)
    dh, dw = rem // t, rem % t
    parent = (dd // 2) * (s * s) + (dh // 2) * s + (dw // 2)
    return (parent[None, :] == jnp.arange(s ** 3)[:, None]).astype(dtype)


def upsample_flat(x, s):
    """Nearest x2 upsample of channel-major (C, s^3) -> (C, (2s)^3) (XLA)."""
    c = x.shape[0]
    x = x.reshape(c, s, 1, s, 1, s, 1)
    x = jnp.broadcast_to(x, (c, s, 2, s, 2, s, 2))
    return x.reshape(c, (2 * s) ** 3)


# ------------------------------------------------- encoder matmul kernel ----
def _make_encoder_kernel(act, with_skip):
    def kernel(*refs):
        if with_skip:
            a_ref, w_ref, s_ref, w8_ref, o_ref, r_ref = refs
        else:
            a_ref, w_ref, s_ref, o_ref = refs
        a = a_ref[...]                                     # (K, tm) bf16 patches
        if act == "lrelu":
            a32 = a.astype(jnp.float32)
            a = jnp.where(a32 > 0, a32, 0.2 * a32).astype(jnp.bfloat16)
        # channel-major matmul: lane-dense (N, tm) output.
        y = jnp.dot(w_ref[...], a, preferred_element_type=jnp.float32)
        y = y + s_ref[...]                                 # folded bias + BN
        o_ref[...] = y.astype(o_ref.dtype)
        if with_skip:
            # deconv8 skip half: relu(e1) @ W8b, computed where e1 is produced.
            r = jnp.dot(w8_ref[...],
                        jnp.maximum(y, 0.0).astype(jnp.bfloat16),
                        preferred_element_type=jnp.float32)
            r_ref[...] = r
    return kernel


def encoder_matmul(a, w_t, shift, act=None, n_blocks=1, w8b=None):
    """a: (K, M) bf16 im2col, w_t: (N, K) bf16 (scale folded), shift: (N,1) f32."""
    K, M = a.shape
    N = w_t.shape[0]
    assert M % n_blocks == 0
    tm = M // n_blocks

    in_specs = [pl.BlockSpec((K, tm), lambda i: (0, i)),
                pl.BlockSpec((N, K), lambda i: (0, 0)),
                pl.BlockSpec((N, 1), lambda i: (0, 0))]
    args = [a, w_t, shift]
    if w8b is None:
        out_shape = jax.ShapeDtypeStruct((N, M), jnp.bfloat16)
        out_specs = pl.BlockSpec((N, tm), lambda i: (0, i))
    else:
        in_specs.append(pl.BlockSpec((1, N), lambda i: (0, 0)))
        args.append(w8b)
        out_shape = (jax.ShapeDtypeStruct((N, M), jnp.bfloat16),
                     jax.ShapeDtypeStruct((1, M), jnp.float32))
        out_specs = (pl.BlockSpec((N, tm), lambda i: (0, i)),
                     pl.BlockSpec((1, tm), lambda i: (0, i)))

    return pl.pallas_call(
        _make_encoder_kernel(act, w8b is not None),
        out_shape=out_shape,
        grid_spec=pltpu.PrefetchScalarGridSpec(
            num_scalar_prefetch=0,
            grid=(n_blocks,),
            in_specs=in_specs,
            out_specs=out_specs),
        compiler_params=pltpu.CompilerParams(
            dimension_semantics=("parallel",)),
    )(*args)


def conv3d_k4s2p1(x_cm, s_in, p, act=None, n_blocks=1, w8b=None):
    """Conv3d(4, stride 2, pad 1) + folded bias/BN on a channel-major
    (C, s_in^3) input.  Patch gather stays in XLA (pure data movement); the
    input activation + matmul + affine run inside one Pallas kernel."""
    c = x_cm.shape[0]
    s_out = s_in // 2
    x5 = x_cm.reshape(1, c, s_in, s_in, s_in)
    # TODO(synk): for large spatial sizes, move this gather into the kernel
    # (DMA overlapping slabs) to avoid the 64x im2col HBM expansion.
    patches = lax.conv_general_dilated_patches(
        x5, (4, 4, 4), (2, 2, 2), ((1, 1), (1, 1), (1, 1)),
        dimension_numbers=("NCDHW", "OIDHW", "NCDHW"))
    k = patches.shape[1]
    a = patches.reshape(k, s_out ** 3)          # (K, M) channel-major im2col
    return encoder_matmul(a, p["w"], p["shift"], act=act,
                          n_blocks=n_blocks, w8b=w8b)


# ----------------------------------- fused conv5 + decoder mega-kernel ------
def _decoder_kernel(e4_ref, e3_ref, e2_ref,
                    w5_ref, s5_ref,
                    wd4_ref, sd4_ref,
                    wd5a_ref, wd5b_ref, sd5_ref,
                    wd6a_ref, wd6b_ref, sd6_ref,
                    wd7a_ref, wd7b_ref, sd7_ref,
                    w8a_ref, up2_ref, up4_ref,
                    q7_ref):
    f32, bf16 = jnp.float32, jnp.bfloat16

    e4 = e4_ref[...].astype(f32)                          # (64, 8) channel-major
    a4 = jnp.where(e4 > 0, e4, 0.2 * e4).astype(bf16)     # lrelu -> conv5 input

    # conv5: 4x4x4/stride-2/pad-1 on a 2x2x2 map == full-window contraction
    # over its 8 spatial positions (the other 56 taps only ever hit padding).
    e5 = s5_ref[...]                                       # (64, 1), start at shift
    for s in range(e4_ref.shape[1]):
        e5 = e5 + jnp.dot(w5_ref[s], a4[:, s:s + 1],
                          preferred_element_type=f32)

    # deconv4 (1x1 conv + BN), nearest up 1 -> 8 points is a lane broadcast.
    p4 = jnp.dot(wd4_ref[...], jnp.maximum(e5, 0.0).astype(bf16),
                 preferred_element_type=f32) + sd4_ref[...]          # (64, 1)
    d4u = jnp.broadcast_to(jnp.maximum(p4, 0.0), e4_ref.shape).astype(bf16)

    # deconv5: K-split over the [up(d4), e4] skip concat (never materialized).
    a4r = jnp.maximum(e4, 0.0).astype(bf16)
    p5 = (jnp.dot(wd5a_ref[...], d4u, preferred_element_type=f32) +
          jnp.dot(wd5b_ref[...], a4r, preferred_element_type=f32) +
          sd5_ref[...])                                              # (32, 8)
    # nearest up 8 -> 64 points as a one-hot replication matmul (no reshapes).
    p5u = jnp.dot(jnp.maximum(p5, 0.0).astype(bf16), up2_ref[...],
                  preferred_element_type=f32).astype(bf16)           # (32, 64)

    e3 = e3_ref[...].astype(f32)
    a3r = jnp.maximum(e3, 0.0).astype(bf16)
    p6 = (jnp.dot(wd6a_ref[...], p5u, preferred_element_type=f32) +
          jnp.dot(wd6b_ref[...], a3r, preferred_element_type=f32) +
          sd6_ref[...])                                              # (16, 64)
    p6u = jnp.dot(jnp.maximum(p6, 0.0).astype(bf16), up4_ref[...],
                  preferred_element_type=f32).astype(bf16)           # (16, 512)

    e2 = e2_ref[...].astype(f32)
    a2r = jnp.maximum(e2, 0.0).astype(bf16)
    p7 = (jnp.dot(wd7a_ref[...], p6u, preferred_element_type=f32) +
          jnp.dot(wd7b_ref[...], a2r, preferred_element_type=f32) +
          sd7_ref[...])                                              # (8, 512)

    # deconv8, d7 half only: q7 = relu(p7) @ W8a.  (The e1 half was fused into
    # the conv1 kernel; tanh + the final upsample is a pointwise XLA epilogue.)
    q7_ref[...] = jnp.dot(w8a_ref[...], jnp.maximum(p7, 0.0).astype(bf16),
                          preferred_element_type=f32)                # (1, 512)


def decoder_fused(e4t, e3t, e2t, P, S):
    up2 = nearest_up_matrix(S // 16)   # (8, 64)   e4-res -> e3-res
    up4 = nearest_up_matrix(S // 8)    # (64, 512) e3-res -> e2-res
    args = [e4t, e3t, e2t,
            P["conv5"]["w"], P["conv5"]["shift"],
            P["deconv4"]["w"], P["deconv4"]["shift"],
            P["deconv5"]["wa"], P["deconv5"]["wb"], P["deconv5"]["shift"],
            P["deconv6"]["wa"], P["deconv6"]["wb"], P["deconv6"]["shift"],
            P["deconv7"]["wa"], P["deconv7"]["wb"], P["deconv7"]["shift"],
            P["deconv8"]["wa"], up2, up4]
    m = e2t.shape[1]
    return pl.pallas_call(
        _decoder_kernel,
        out_shape=jax.ShapeDtypeStruct((1, m), jnp.float32),
        grid_spec=pltpu.PrefetchScalarGridSpec(
            num_scalar_prefetch=0,
            grid=(1,),
            in_specs=[_full_spec(a.shape) for a in args],
            out_specs=_full_spec((1, m))),
        compiler_params=pltpu.CompilerParams(
            dimension_semantics=("arbitrary",)),
    )(*args)


# ----------------------------------------------------------------------------
# Deterministic synthetic parameters (matching nn.Module shapes).  Weights are
# stored channel-major (Cout, K) in bf16 with the eval-BatchNorm scale folded
# in; only a per-channel shift remains for the kernels to add.
# ----------------------------------------------------------------------------
def init_params(key, d=8, c=1):
    keys = iter(jax.random.split(key, 128))

    def nrm(shape, s=0.05):
        return s * jax.random.normal(next(keys), shape, dtype=jnp.float32)

    def bn_fold(cout, b):
        gamma = 1.0 + 0.1 * jax.random.normal(next(keys), (cout,), jnp.float32)
        beta, mean = nrm((cout,)), nrm((cout,))
        var = jnp.abs(nrm((cout,), 0.2)) + 1.0
        scale = gamma / jnp.sqrt(var + 1e-5)
        return scale, beta + scale * (b - mean)

    def layer(k_splits, cout, bn):
        ws = [nrm((cout, k)) for k in k_splits]
        b = nrm((cout,))
        if bn:
            scale, shift = bn_fold(cout, b)
        else:
            scale, shift = jnp.ones((cout,), jnp.float32), b
        ws = [(w * scale[:, None]).astype(jnp.bfloat16) for w in ws]
        return ws, shift.reshape(cout, 1)

    p = {}
    w, s = layer([64 * c], d, bn=False);            p["conv1"] = {"w": w[0], "shift": s}
    w, s = layer([64 * d], 2 * d, bn=True);         p["conv2"] = {"w": w[0], "shift": s}
    w, s = layer([64 * 2 * d], 4 * d, bn=True);     p["conv3"] = {"w": w[0], "shift": s}
    w, s = layer([64 * 4 * d], 8 * d, bn=True);     p["conv4"] = {"w": w[0], "shift": s}
    # conv5 on a 2x2x2 map only touches the 8 taps at kernel offsets (1..2)^3;
    # stored as (8, Cout, Cin) so the fused kernel loops over spatial taps.
    w, s = layer([8 * d] * 8, 8 * d, bn=True)
    p["conv5"] = {"w": jnp.stack(w, axis=0), "shift": s}
    w, s = layer([8 * d], 8 * d, bn=True);          p["deconv4"] = {"w": w[0], "shift": s}
    w, s = layer([8 * d, 8 * d], 4 * d, bn=True);   p["deconv5"] = {"wa": w[0], "wb": w[1], "shift": s}
    w, s = layer([4 * d, 4 * d], 2 * d, bn=True);   p["deconv6"] = {"wa": w[0], "wb": w[1], "shift": s}
    w, s = layer([2 * d, 2 * d], d, bn=True);       p["deconv7"] = {"wa": w[0], "wb": w[1], "shift": s}
    w, s = layer([d, d], 1, bn=False);              p["deconv8"] = {"wa": w[0], "wb": w[1], "b": s}
    return p


# ----------------------------------------------------------------------------
# Forward pass (mirrors UNet_G_HR.forward, upsample=True branch, eval mode).
# Decoder 1x1 convs are computed BEFORE their nearest upsamples (exact since
# every op involved is pointwise / nearest-replication).  Dropout is identity.
# ----------------------------------------------------------------------------
def unet_g_hr_forward(x, P):
    n, S, _, _, c = x.shape
    assert n == 1, "this kernel harness assumes batch 1"
    x_cm = jnp.transpose(x, (0, 4, 1, 2, 3)).reshape(c, S ** 3).astype(jnp.bfloat16)

    # Encoder (channel-major activations).  conv1 also emits the deconv8 skip
    # product relu(e1) @ W8b so the M=4096 / N=1 matmul never runs lane-sparse.
    e1t, skip8 = conv3d_k4s2p1(x_cm, S, P["conv1"], act=None,
                               n_blocks=2, w8b=P["deconv8"]["wb"])
    e2t = conv3d_k4s2p1(e1t, S // 2, P["conv2"], act="lrelu")
    e3t = conv3d_k4s2p1(e2t, S // 4, P["conv3"], act="lrelu")
    e4t = conv3d_k4s2p1(e3t, S // 8, P["conv4"], act="lrelu")

    # conv5 + deconv4..deconv7 + deconv8 (d7 half) in ONE fused pallas_call.
    q7 = decoder_fused(e4t, e3t, e2t, P, S)                  # (1, (S//4)^3)

    # deconv8 epilogue: tanh(up(q7) + relu(e1) @ W8b + b8), then the final
    # nearest x2 upsample — pure broadcast/pointwise, fused by XLA.
    p8 = jnp.tanh(upsample_flat(q7, S // 4) + skip8 + P["deconv8"]["b"])
    out = upsample_flat(p8, S // 2)
    return out.reshape(n, S, S, S, 1)


if __name__ == "__main__":
    key = jax.random.PRNGKey(0)
    kx, kp = jax.random.split(key)
    d, c, S = 8, 1, 32  # spatial must survive 5 stride-2 downsamples (32 -> 1)
    # PyTorch forward does torch.cat(input, 1); with c=1 the list holds one tensor.
    x = jax.random.normal(kx, (1, S, S, S, c), dtype=jnp.float32)
    params = init_params(kp, d=d, c=c)

    fwd = jax.jit(unet_g_hr_forward)
    out = jax.block_until_ready(fwd(x, params))
    assert out.shape == (1, S, S, S, 1), out.shape
    assert bool(jnp.all(jnp.isfinite(out)))
    print("KERNEL_OK")
</pallas_src>

<mosaic_0001>
module attributes {stable_mosaic.version = 11 : i64} {
  func.func @kernel(%arg0: i32, %arg1: memref<64x2048xbf16, #tpu.memory_space<vmem>>, %arg2: memref<8x64xbf16, #tpu.memory_space<vmem>>, %arg3: memref<8x1xf32, #tpu.memory_space<vmem>>, %arg4: memref<1x8xbf16, #tpu.memory_space<vmem>>, %arg5: memref<8x2048xbf16, #tpu.memory_space<vmem>>, %arg6: memref<1x2048xf32, #tpu.memory_space<vmem>>) attributes {dimension_semantics = [#tpu.dimension_semantics<parallel>], iteration_bounds = array<i64: 2>, scalar_prefetch = 0 : i64, scratch_operands = 0 : i64, tpu.core_type = #tpu.core_type<tc>, window_params = [{transform_indices = @transform_0, window_bounds = array<i64: 64, 2048>}, {pipeline_mode = #tpu.pipeline_mode<synchronous>, transform_indices = @transform_1, window_bounds = array<i64: 8, 64>}, {pipeline_mode = #tpu.pipeline_mode<synchronous>, transform_indices = @transform_2, window_bounds = array<i64: 8, 1>}, {pipeline_mode = #tpu.pipeline_mode<synchronous>, transform_indices = @transform_3, window_bounds = array<i64: 1, 8>}, {transform_indices = @transform_4, window_bounds = array<i64: 8, 2048>}, {transform_indices = @transform_5, window_bounds = array<i64: 1, 2048>}]} {
    %c0 = arith.constant 0 : index
    %c0_0 = arith.constant 0 : index
    %0 = vector.load %arg1[%c0, %c0_0] : memref<64x2048xbf16, #tpu.memory_space<vmem>>, vector<64x2048xbf16>
    %c0_1 = arith.constant 0 : index
    %c0_2 = arith.constant 0 : index
    %1 = vector.load %arg2[%c0_1, %c0_2] : memref<8x64xbf16, #tpu.memory_space<vmem>>, vector<8x64xbf16>
    %cst = arith.constant dense<0.000000e+00> : vector<8x2048xf32>
    %2 = tpu.matmul %1, %0, %cst {dimension_numbers = #tpu.dot_dimension_numbers<[1], [0], [0], [1], [0, 0, 1, 1], [], []>} : vector<8x64xbf16>, vector<64x2048xbf16>, vector<8x2048xf32> -> vector<8x2048xf32>
    %c0_3 = arith.constant 0 : index
    %c0_4 = arith.constant 0 : index
    %3 = vector.load %arg3[%c0_3, %c0_4] : memref<8x1xf32, #tpu.memory_space<vmem>>, vector<8x1xf32>
    %4 = vector.broadcast %3 : vector<8x1xf32> to vector<8x2048xf32>
    %5 = arith.addf %2, %4 : vector<8x2048xf32>
    %6 = arith.truncf %5 : vector<8x2048xf32> to vector<8x2048xbf16>
    %c0_5 = arith.constant 0 : index
    %c0_6 = arith.constant 0 : index
    %7 = vector.load %arg5[%c0_5, %c0_6] : memref<8x2048xbf16, #tpu.memory_space<vmem>>, vector<8x2048xbf16>
    tpu.vector_store %arg5[%c0_5, %c0_6], %6 {strides = array<i32>} : memref<8x2048xbf16, #tpu.memory_space<vmem>>, vector<8x2048xbf16>,
    %c0_7 = arith.constant 0 : index
    %c0_8 = arith.constant 0 : index
    %8 = vector.load %arg4[%c0_7, %c0_8] : memref<1x8xbf16, #tpu.memory_space<vmem>>, vector<1x8xbf16>
    %cst_9 = arith.constant 0.000000e+00 : f32
    %9 = vector.broadcast %cst_9 : f32 to vector<8x2048xf32>
    %10 = arith.maximumf %5, %9 : vector<8x2048xf32>
    %11 = arith.truncf %10 : vector<8x2048xf32> to vector<8x2048xbf16>
    %cst_10 = arith.constant dense<0.000000e+00> : vector<1x2048xf32>
    %12 = tpu.matmul %8, %11, %cst_10 {dimension_numbers = #tpu.dot_dimension_numbers<[1], [0], [0], [1], [0, 0, 1, 1], [], []>} : vector<1x8xbf16>, vector<8x2048xbf16>, vector<1x2048xf32> -> vector<1x2048xf32>
    %c0_11 = arith.constant 0 : index
    %c0_12 = arith.constant 0 : index
    %13 = vector.load %arg6[%c0_11, %c0_12] : memref<1x2048xf32, #tpu.memory_space<vmem>>, vector<1x2048xf32>
    tpu.vector_store %arg6[%c0_11, %c0_12], %12 {strides = array<i32>} : memref<1x2048xf32, #tpu.memory_space<vmem>>, vector<1x2048xf32>,
    return
  }
  func.func @transform_0(%arg0: i32) -> (i32, i32) {
    %c0_i32 = arith.constant 0 : i32
    %c0_i32_0 = arith.constant 0 : i32
    return %c0_i32, %arg0 : i32, i32
  }
  func.func @transform_1(%arg0: i32) -> (i32, i32) {
    %c0_i32 = arith.constant 0 : i32
    %c0_i32_0 = arith.constant 0 : i32
    %c0_i32_1 = arith.constant 0 : i32
    return %c0_i32, %c0_i32_0 : i32, i32
  }
  func.func @transform_2(%arg0: i32) -> (i32, i32) {
    %c0_i32 = arith.constant 0 : i32
    %c0_i32_0 = arith.constant 0 : i32
    %c0_i32_1 = arith.constant 0 : i32
    return %c0_i32, %c0_i32_0 : i32, i32
  }
  func.func @transform_3(%arg0: i32) -> (i32, i32) {
    %c0_i32 = arith.constant 0 : i32
    %c0_i32_0 = arith.constant 0 : i32
    %c0_i32_1 = arith.constant 0 : i32
    return %c0_i32, %c0_i32_0 : i32, i32
  }
  func.func @transform_4(%arg0: i32) -> (i32, i32) {
    %c0_i32 = arith.constant 0 : i32
    %c0_i32_0 = arith.constant 0 : i32
    return %c0_i32, %arg0 : i32, i32
  }
  func.func @transform_5(%arg0: i32) -> (i32, i32) {
    %c0_i32 = arith.constant 0 : i32
    %c0_i32_0 = arith.constant 0 : i32
    return %c0_i32, %arg0 : i32, i32
  }
}

module attributes {stable_mosaic.version = 11 : i64} {
  func.func @kernel(%arg0: i32, %arg1: memref<512x512xbf16, #tpu.memory_space<vmem>>, %arg2: memref<16x512xbf16, #tpu.memory_space<vmem>>, %arg3: memref<16x1xf32, #tpu.memory_space<vmem>>, %arg4: memref<16x512xbf16, #tpu.memory_space<vmem>>) attributes {dimension_semantics = [#tpu.dimension_semantics<parallel>], iteration_bounds = array<i64: 1>, scalar_prefetch = 0 : i64, scratch_operands = 0 : i64, tpu.core_type = #tpu.core_type<tc>, window_params = [{transform_indices = @transform_0, window_bounds = array<i64: 512, 512>}, {pipeline_mode = #tpu.pipeline_mode<synchronous>, transform_indices = @transform_1, window_bounds = array<i64: 16, 512>}, {pipeline_mode = #tpu.pipeline_mode<synchronous>, transform_indices = @transform_2, window_bounds = array<i64: 16, 1>}, {transform_indices = @transform_3, window_bounds = array<i64: 16, 512>}]} {
    %c0 = arith.constant 0 : index
    %c0_0 = arith.constant 0 : index
    %0 = vector.load %arg1[%c0, %c0_0] : memref<512x512xbf16, #tpu.memory_space<vmem>>, vector<512x512xbf16>
    %1 = arith.extf %0 : vector<512x512xbf16> to vector<512x512xf32>
    %cst = arith.constant 0.000000e+00 : f32
    %2 = vector.broadcast %cst : f32 to vector<512x512xf32>
    %3 = arith.cmpf ogt, %1, %2 : vector<512x512xf32>
    %cst_1 = arith.constant 2.000000e-01 : f32
    %4 = vector.broadcast %cst_1 : f32 to vector<512x512xf32>
    %5 = arith.mulf %4, %1 : vector<512x512xf32>
    %6 = arith.select %3, %1, %5 : vector<512x512xi1>, vector<512x512xf32>
    %7 = arith.truncf %6 : vector<512x512xf32> to vector<512x512xbf16>
    %c0_2 = arith.constant 0 : index
    %c0_3 = arith.constant 0 : index
    %8 = vector.load %arg2[%c0_2, %c0_3] : memref<16x512xbf16, #tpu.memory_space<vmem>>, vector<16x512xbf16>
    %cst_4 = arith.constant dense<0.000000e+00> : vector<16x512xf32>
    %9 = tpu.matmul %8, %7, %cst_4 {dimension_numbers = #tpu.dot_dimension_numbers<[1], [0], [0], [1], [0, 0, 1, 1], [], []>} : vector<16x512xbf16>, vector<512x512xbf16>, vector<16x512xf32> -> vector<16x512xf32>
    %c0_5 = arith.constant 0 : index
    %c0_6 = arith.constant 0 : index
    %10 = vector.load %arg3[%c0_5, %c0_6] : memref<16x1xf32, #tpu.memory_space<vmem>>, vector<16x1xf32>
    %11 = vector.broadcast %10 : vector<16x1xf32> to vector<16x512xf32>
    %12 = arith.addf %9, %11 : vector<16x512xf32>
    %13 = arith.truncf %12 : vector<16x512xf32> to vector<16x512xbf16>
    %c0_7 = arith.constant 0 : index
    %c0_8 = arith.constant 0 : index
    %14 = vector.load %arg4[%c0_7, %c0_8] : memref<16x512xbf16, #tpu.memory_space<vmem>>, vector<16x512xbf16>
    tpu.vector_store %arg4[%c0_7, %c0_8], %13 {strides = array<i32>} : memref<16x512xbf16, #tpu.memory_space<vmem>>, vector<16x512xbf16>,
    return
  }
  func.func @transform_0(%arg0: i32) -> (i32, i32) {
    %c0_i32 = arith.constant 0 : i32
    %c0_i32_0 = arith.constant 0 : i32
    return %c0_i32, %arg0 : i32, i32
  }
  func.func @transform_1(%arg0: i32) -> (i32, i32) {
    %c0_i32 = arith.constant 0 : i32
    %c0_i32_0 = arith.constant 0 : i32
    %c0_i32_1 = arith.constant 0 : i32
    return %c0_i32, %c0_i32_0 : i32, i32
  }
  func.func @transform_2(%arg0: i32) -> (i32, i32) {
    %c0_i32 = arith.constant 0 : i32
    %c0_i32_0 = arith.constant 0 : i32
    %c0_i32_1 = arith.constant 0 : i32
    return %c0_i32, %c0_i32_0 : i32, i32
  }
  func.func @transform_3(%arg0: i32) -> (i32, i32) {
    %c0_i32 = arith.constant 0 : i32
    %c0_i32_0 = arith.constant 0 : i32
    return %c0_i32, %arg0 : i32, i32
  }
}

module attributes {stable_mosaic.version = 11 : i64} {
  func.func @kernel(%arg0: i32, %arg1: memref<1024x64xbf16, #tpu.memory_space<vmem>>, %arg2: memref<32x1024xbf16, #tpu.memory_space<vmem>>, %arg3: memref<32x1xf32, #tpu.memory_space<vmem>>, %arg4: memref<32x64xbf16, #tpu.memory_space<vmem>>) attributes {dimension_semantics = [#tpu.dimension_semantics<parallel>], iteration_bounds = array<i64: 1>, scalar_prefetch = 0 : i64, scratch_operands = 0 : i64, tpu.core_type = #tpu.core_type<tc>, window_params = [{transform_indices = @transform_0, window_bounds = array<i64: 1024, 64>}, {pipeline_mode = #tpu.pipeline_mode<synchronous>, transform_indices = @transform_1, window_bounds = array<i64: 32, 1024>}, {pipeline_mode = #tpu.pipeline_mode<synchronous>, transform_indices = @transform_2, window_bounds = array<i64: 32, 1>}, {transform_indices = @transform_3, window_bounds = array<i64: 32, 64>}]} {
    %c0 = arith.constant 0 : index
    %c0_0 = arith.constant 0 : index
    %0 = vector.load %arg1[%c0, %c0_0] : memref<1024x64xbf16, #tpu.memory_space<vmem>>, vector<1024x64xbf16>
    %1 = arith.extf %0 : vector<1024x64xbf16> to vector<1024x64xf32>
    %cst = arith.constant 0.000000e+00 : f32
    %2 = vector.broadcast %cst : f32 to vector<1024x64xf32>
    %3 = arith.cmpf ogt, %1, %2 : vector<1024x64xf32>
    %cst_1 = arith.constant 2.000000e-01 : f32
    %4 = vector.broadcast %cst_1 : f32 to vector<1024x64xf32>
    %5 = arith.mulf %4, %1 : vector<1024x64xf32>
    %6 = arith.select %3, %1, %5 : vector<1024x64xi1>, vector<1024x64xf32>
    %7 = arith.truncf %6 : vector<1024x64xf32> to vector<1024x64xbf16>
    %c0_2 = arith.constant 0 : index
    %c0_3 = arith.constant 0 : index
    %8 = vector.load %arg2[%c0_2, %c0_3] : memref<32x1024xbf16, #tpu.memory_space<vmem>>, vector<32x1024xbf16>
    %cst_4 = arith.constant dense<0.000000e+00> : vector<32x64xf32>
    %9 = tpu.matmul %8, %7, %cst_4 {dimension_numbers = #tpu.dot_dimension_numbers<[1], [0], [0], [1], [0, 0, 1, 1], [], []>} : vector<32x1024xbf16>, vector<1024x64xbf16>, vector<32x64xf32> -> vector<32x64xf32>
    %c0_5 = arith.constant 0 : index
    %c0_6 = arith.constant 0 : index
    %10 = vector.load %arg3[%c0_5, %c0_6] : memref<32x1xf32, #tpu.memory_space<vmem>>, vector<32x1xf32>
    %11 = vector.broadcast %10 : vector<32x1xf32> to vector<32x64xf32>
    %12 = arith.addf %9, %11 : vector<32x64xf32>
    %13 = arith.truncf %12 : vector<32x64xf32> to vector<32x64xbf16>
    %c0_7 = arith.constant 0 : index
    %c0_8 = arith.constant 0 : index
    %14 = vector.load %arg4[%c0_7, %c0_8] : memref<32x64xbf16, #tpu.memory_space<vmem>>, vector<32x64xbf16>
    tpu.vector_store %arg4[%c0_7, %c0_8], %13 {strides = array<i32>} : memref<32x64xbf16, #tpu.memory_space<vmem>>, vector<32x64xbf16>,
    return
  }
  func.func @transform_0(%arg0: i32) -> (i32, i32) {
    %c0_i32 = arith.constant 0 : i32
    %c0_i32_0 = arith.constant 0 : i32
    return %c0_i32, %arg0 : i32, i32
  }
  func.func @transform_1(%arg0: i32) -> (i32, i32) {
    %c0_i32 = arith.constant 0 : i32
    %c0_i32_0 = arith.constant 0 : i32
    %c0_i32_1 = arith.constant 0 : i32
    return %c0_i32, %c0_i32_0 : i32, i32
  }
  func.func @transform_2(%arg0: i32) -> (i32, i32) {
    %c0_i32 = arith.constant 0 : i32
    %c0_i32_0 = arith.constant 0 : i32
    %c0_i32_1 = arith.constant 0 : i32
    return %c0_i32, %c0_i32_0 : i32, i32
  }
  func.func @transform_3(%arg0: i32) -> (i32, i32) {
    %c0_i32 = arith.constant 0 : i32
    %c0_i32_0 = arith.constant 0 : i32
    return %c0_i32, %arg0 : i32, i32
  }
}

module attributes {stable_mosaic.version = 11 : i64} {
  func.func @kernel(%arg0: i32, %arg1: memref<2048x8xbf16, #tpu.memory_space<vmem>>, %arg2: memref<64x2048xbf16, #tpu.memory_space<vmem>>, %arg3: memref<64x1xf32, #tpu.memory_space<vmem>>, %arg4: memref<64x8xbf16, #tpu.memory_space<vmem>>) attributes {dimension_semantics = [#tpu.dimension_semantics<parallel>], iteration_bounds = array<i64: 1>, scalar_prefetch = 0 : i64, scratch_operands = 0 : i64, tpu.core_type = #tpu.core_type<tc>, window_params = [{transform_indices = @transform_0, window_bounds = array<i64: 2048, 8>}, {pipeline_mode = #tpu.pipeline_mode<synchronous>, transform_indices = @transform_1, window_bounds = array<i64: 64, 2048>}, {pipeline_mode = #tpu.pipeline_mode<synchronous>, transform_indices = @transform_2, window_bounds = array<i64: 64, 1>}, {transform_indices = @transform_3, window_bounds = array<i64: 64, 8>}]} {
    %c0 = arith.constant 0 : index
    %c0_0 = arith.constant 0 : index
    %0 = vector.load %arg1[%c0, %c0_0] : memref<2048x8xbf16, #tpu.memory_space<vmem>>, vector<2048x8xbf16>
    %1 = arith.extf %0 : vector<2048x8xbf16> to vector<2048x8xf32>
    %cst = arith.constant 0.000000e+00 : f32
    %2 = vector.broadcast %cst : f32 to vector<2048x8xf32>
    %3 = arith.cmpf ogt, %1, %2 : vector<2048x8xf32>
    %cst_1 = arith.constant 2.000000e-01 : f32
    %4 = vector.broadcast %cst_1 : f32 to vector<2048x8xf32>
    %5 = arith.mulf %4, %1 : vector<2048x8xf32>
    %6 = arith.select %3, %1, %5 : vector<2048x8xi1>, vector<2048x8xf32>
    %7 = arith.truncf %6 : vector<2048x8xf32> to vector<2048x8xbf16>
    %c0_2 = arith.constant 0 : index
    %c0_3 = arith.constant 0 : index
    %8 = vector.load %arg2[%c0_2, %c0_3] : memref<64x2048xbf16, #tpu.memory_space<vmem>>, vector<64x2048xbf16>
    %cst_4 = arith.constant dense<0.000000e+00> : vector<64x8xf32>
    %9 = tpu.matmul %8, %7, %cst_4 {dimension_numbers = #tpu.dot_dimension_numbers<[1], [0], [0], [1], [0, 0, 1, 1], [], []>} : vector<64x2048xbf16>, vector<2048x8xbf16>, vector<64x8xf32> -> vector<64x8xf32>
    %c0_5 = arith.constant 0 : index
    %c0_6 = arith.constant 0 : index
    %10 = vector.load %arg3[%c0_5, %c0_6] : memref<64x1xf32, #tpu.memory_space<vmem>>, vector<64x1xf32>
    %11 = vector.broadcast %10 : vector<64x1xf32> to vector<64x8xf32>
    %12 = arith.addf %9, %11 : vector<64x8xf32>
    %13 = arith.truncf %12 : vector<64x8xf32> to vector<64x8xbf16>
    %c0_7 = arith.constant 0 : index
    %c0_8 = arith.constant 0 : index
    %14 = vector.load %arg4[%c0_7, %c0_8] : memref<64x8xbf16, #tpu.memory_space<vmem>>, vector<64x8xbf16>
    tpu.vector_store %arg4[%c0_7, %c0_8], %13 {strides = array<i32>} : memref<64x8xbf16, #tpu.memory_space<vmem>>, vector<64x8xbf16>,
    return
  }
  func.func @transform_0(%arg0: i32) -> (i32, i32) {
    %c0_i32 = arith.constant 0 : i32
    %c0_i32_0 = arith.constant 0 : i32
    return %c0_i32, %arg0 : i32, i32
  }
  func.func @transform_1(%arg0: i32) -> (i32, i32) {
    %c0_i32 = arith.constant 0 : i32
    %c0_i32_0 = arith.constant 0 : i32
    %c0_i32_1 = arith.constant 0 : i32
    return %c0_i32, %c0_i32_0 : i32, i32
  }
  func.func @transform_2(%arg0: i32) -> (i32, i32) {
    %c0_i32 = arith.constant 0 : i32
    %c0_i32_0 = arith.constant 0 : i32
    %c0_i32_1 = arith.constant 0 : i32
    return %c0_i32, %c0_i32_0 : i32, i32
  }
  func.func @transform_3(%arg0: i32) -> (i32, i32) {
    %c0_i32 = arith.constant 0 : i32
    %c0_i32_0 = arith.constant 0 : i32
    return %c0_i32, %arg0 : i32, i32
  }
}

module attributes {stable_mosaic.version = 11 : i64} {
  func.func @_decoder_kernel(%arg0: i32, %arg1: memref<64x8xbf16, #tpu.memory_space<vmem>>, %arg2: memref<32x64xbf16, #tpu.memory_space<vmem>>, %arg3: memref<16x512xbf16, #tpu.memory_space<vmem>>, %arg4: memref<8x64x64xbf16, #tpu.memory_space<vmem>>, %arg5: memref<64x1xf32, #tpu.memory_space<vmem>>, %arg6: memref<64x64xbf16, #tpu.memory_space<vmem>>, %arg7: memref<64x1xf32, #tpu.memory_space<vmem>>, %arg8: memref<32x64xbf16, #tpu.memory_space<vmem>>, %arg9: memref<32x64xbf16, #tpu.memory_space<vmem>>, %arg10: memref<32x1xf32, #tpu.memory_space<vmem>>, %arg11: memref<16x32xbf16, #tpu.memory_space<vmem>>, %arg12: memref<16x32xbf16, #tpu.memory_space<vmem>>, %arg13: memref<16x1xf32, #tpu.memory_space<vmem>>, %arg14: memref<8x16xbf16, #tpu.memory_space<vmem>>, %arg15: memref<8x16xbf16, #tpu.memory_space<vmem>>, %arg16: memref<8x1xf32, #tpu.memory_space<vmem>>, %arg17: memref<1x8xbf16, #tpu.memory_space<vmem>>, %arg18: memref<8x64xbf16, #tpu.memory_space<vmem>>, %arg19: memref<64x512xbf16, #tpu.memory_space<vmem>>, %arg20: memref<1x512xf32, #tpu.memory_space<vmem>>) attributes {dimension_semantics = [#tpu.dimension_semantics<arbitrary>], iteration_bounds = array<i64: 1>, scalar_prefetch = 0 : i64, scratch_operands = 0 : i64, tpu.core_type = #tpu.core_type<tc>, window_params = [{pipeline_mode = #tpu.pipeline_mode<synchronous>, transform_indices = @transform_0, window_bounds = array<i64: 64, 8>}, {pipeline_mode = #tpu.pipeline_mode<synchronous>, transform_indices = @transform_1, window_bounds = array<i64: 32, 64>}, {pipeline_mode = #tpu.pipeline_mode<synchronous>, transform_indices = @transform_2, window_bounds = array<i64: 16, 512>}, {pipeline_mode = #tpu.pipeline_mode<synchronous>, transform_indices = @transform_3, window_bounds = array<i64: 8, 64, 64>}, {pipeline_mode = #tpu.pipeline_mode<synchronous>, transform_indices = @transform_4, window_bounds = array<i64: 64, 1>}, {pipeline_mode = #tpu.pipeline_mode<synchronous>, transform_indices = @transform_5, window_bounds = array<i64: 64, 64>}, {pipeline_mode = #tpu.pipeline_mode<synchronous>, transform_indices = @transform_6, window_bounds = array<i64: 64, 1>}, {pipeline_mode = #tpu.pipeline_mode<synchronous>, transform_indices = @transform_7, window_bounds = array<i64: 32, 64>}, {pipeline_mode = #tpu.pipeline_mode<synchronous>, transform_indices = @transform_8, window_bounds = array<i64: 32, 64>}, {pipeline_mode = #tpu.pipeline_mode<synchronous>, transform_indices = @transform_9, window_bounds = array<i64: 32, 1>}, {pipeline_mode = #tpu.pipeline_mode<synchronous>, transform_indices = @transform_10, window_bounds = array<i64: 16, 32>}, {pipeline_mode = #tpu.pipeline_mode<synchronous>, transform_indices = @transform_11, window_bounds = array<i64: 16, 32>}, {pipeline_mode = #tpu.pipeline_mode<synchronous>, transform_indices = @transform_12, window_bounds = array<i64: 16, 1>}, {pipeline_mode = #tpu.pipeline_mode<synchronous>, transform_indices = @transform_13, window_bounds = array<i64: 8, 16>}, {pipeline_mode = #tpu.pipeline_mode<synchronous>, transform_indices = @transform_14, window_bounds = array<i64: 8, 16>}, {pipeline_mode = #tpu.pipeline_mode<synchronous>, transform_indices = @transform_15, window_bounds = array<i64: 8, 1>}, {pipeline_mode = #tpu.pipeline_mode<synchronous>, transform_indices = @transform_16, window_bounds = array<i64: 1, 8>}, {pipeline_mode = #tpu.pipeline_mode<synchronous>, transform_indices = @transform_17, window_bounds = array<i64: 8, 64>}, {pipeline_mode = #tpu.pipeline_mode<synchronous>, transform_indices = @transform_18, window_bounds = array<i64: 64, 512>}, {pipeline_mode = #tpu.pipeline_mode<synchronous>, transform_indices = @transform_19, window_bounds = array<i64: 1, 512>}]} {
    %c0 = arith.constant 0 : index
    %c0_0 = arith.constant 0 : index
    %0 = vector.load %arg1[%c0, %c0_0] : memref<64x8xbf16, #tpu.memory_space<vmem>>, vector<64x8xbf16>
    %1 = arith.extf %0 : vector<64x8xbf16> to vector<64x8xf32>
    %cst = arith.constant 0.000000e+00 : f32
    %2 = vector.broadcast %cst : f32 to vector<64x8xf32>
    %3 = arith.cmpf ogt, %1, %2 : vector<64x8xf32>
    %cst_1 = arith.constant 2.000000e-01 : f32
    %4 = vector.broadcast %cst_1 : f32 to vector<64x8xf32>
    %5 = arith.mulf %4, %1 : vector<64x8xf32>
    %6 = arith.select %3, %1, %5 : vector<64x8xi1>, vector<64x8xf32>
    %7 = arith.truncf %6 : vector<64x8xf32> to vector<64x8xbf16>
    %c0_2 = arith.constant 0 : index
    %c0_3 = arith.constant 0 : index
    %8 = vector.load %arg5[%c0_2, %c0_3] : memref<64x1xf32, #tpu.memory_space<vmem>>, vector<64x1xf32>
    %c0_4 = arith.constant 0 : index
    %c0_5 = arith.constant 0 : index
    %c0_6 = arith.constant 0 : index
    %9 = vector.load %arg4[%c0_4, %c0_5, %c0_6] : memref<8x64x64xbf16, #tpu.memory_space<vmem>>, vector<1x64x64xbf16>
    %10 = vector.shape_cast %9 : vector<1x64x64xbf16> to vector<64x64xbf16>
    %11 = vector.extract_strided_slice %7 {offsets = [0, 0], sizes = [64, 1], strides = [1, 1]} : vector<64x8xbf16> to vector<64x1xbf16>
    %cst_7 = arith.constant dense<0.000000e+00> : vector<64x1xf32>
    %12 = tpu.matmul %10, %11, %cst_7 {dimension_numbers = #tpu.dot_dimension_numbers<[1], [0], [0], [1], [0, 0, 1, 1], [], []>} : vector<64x64xbf16>, vector<64x1xbf16>, vector<64x1xf32> -> vector<64x1xf32>
    %13 = arith.addf %8, %12 : vector<64x1xf32>
    %c1 = arith.constant 1 : index
    %c0_8 = arith.constant 0 : index
    %c0_9 = arith.constant 0 : index
    %14 = vector.load %arg4[%c1, %c0_8, %c0_9] : memref<8x64x64xbf16, #tpu.memory_space<vmem>>, vector<1x64x64xbf16>
    %15 = vector.shape_cast %14 : vector<1x64x64xbf16> to vector<64x64xbf16>
    %16 = vector.extract_strided_slice %7 {offsets = [0, 1], sizes = [64, 1], strides = [1, 1]} : vector<64x8xbf16> to vector<64x1xbf16>
    %cst_10 = arith.constant dense<0.000000e+00> : vector<64x1xf32>
    %17 = tpu.matmul %15, %16, %cst_10 {dimension_numbers = #tpu.dot_dimension_numbers<[1], [0], [0], [1], [0, 0, 1, 1], [], []>} : vector<64x64xbf16>, vector<64x1xbf16>, vector<64x1xf32> -> vector<64x1xf32>
    %18 = arith.addf %13, %17 : vector<64x1xf32>
    %c2 = arith.constant 2 : index
    %c0_11 = arith.constant 0 : index
    %c0_12 = arith.constant 0 : index
    %19 = vector.load %arg4[%c2, %c0_11, %c0_12] : memref<8x64x64xbf16, #tpu.memory_space<vmem>>, vector<1x64x64xbf16>
    %20 = vector.shape_cast %19 : vector<1x64x64xbf16> to vector<64x64xbf16>
    %21 = vector.extract_strided_slice %7 {offsets = [0, 2], sizes = [64, 1], strides = [1, 1]} : vector<64x8xbf16> to vector<64x1xbf16>
    %cst_13 = arith.constant dense<0.000000e+00> : vector<64x1xf32>
    %22 = tpu.matmul %20, %21, %cst_13 {dimension_numbers = #tpu.dot_dimension_numbers<[1], [0], [0], [1], [0, 0, 1, 1], [], []>} : vector<64x64xbf16>, vector<64x1xbf16>, vector<64x1xf32> -> vector<64x1xf32>
    %23 = arith.addf %18, %22 : vector<64x1xf32>
    %c3 = arith.constant 3 : index
    %c0_14 = arith.constant 0 : index
    %c0_15 = arith.constant 0 : index
    %24 = vector.load %arg4[%c3, %c0_14, %c0_15] : memref<8x64x64xbf16, #tpu.memory_space<vmem>>, vector<1x64x64xbf16>
    %25 = vector.shape_cast %24 : vector<1x64x64xbf16> to vector<64x64xbf16>
    %26 = vector.extract_strided_slice %7 {offsets = [0, 3], sizes = [64, 1], strides = [1, 1]} : vector<64x8xbf16> to vector<64x1xbf16>
    %cst_16 = arith.constant dense<0.000000e+00> : vector<64x1xf32>
    %27 = tpu.matmul %25, %26, %cst_16 {dimension_numbers = #tpu.dot_dimension_numbers<[1], [0], [0], [1], [0, 0, 1, 1], [], []>} : vector<64x64xbf16>, vector<64x1xbf16>, vector<64x1xf32> -> vector<64x1xf32>
    %28 = arith.addf %23, %27 : vector<64x1xf32>
    %c4 = arith.constant 4 : index
    %c0_17 = arith.constant 0 : index
    %c0_18 = arith.constant 0 : index
    %29 = vector.load %arg4[%c4, %c0_17, %c0_18] : memref<8x64x64xbf16, #tpu.memory_space<vmem>>, vector<1x64x64xbf16>
    %30 = vector.shape_cast %29 : vector<1x64x64xbf16> to vector<64x64xbf16>
    %31 = vector.extract_strided_slice %7 {offsets = [0, 4], sizes = [64, 1], strides = [1, 1]} : vector<64x8xbf16> to vector<64x1xbf16>
    %cst_19 = arith.constant dense<0.000000e+00> : vector<64x1xf32>
    %32 = tpu.matmul %30, %31, %cst_19 {dimension_numbers = #tpu.dot_dimension_numbers<[1], [0], [0], [1], [0, 0, 1, 1], [], []>} : vector<64x64xbf16>, vector<64x1xbf16>, vector<64x1xf32> -> vector<64x1xf32>
    %33 = arith.addf %28, %32 : vector<64x1xf32>
    %c5 = arith.constant 5 : index
    %c0_20 = arith.constant 0 : index
    %c0_21 = arith.constant 0 : index
    %34 = vector.load %arg4[%c5, %c0_20, %c0_21] : memref<8x64x64xbf16, #tpu.memory_space<vmem>>, vector<1x64x64xbf16>
    %35 = vector.shape_cast %34 : vector<1x64x64xbf16> to vector<64x64xbf16>
    %36 = vector.extract_strided_slice %7 {offsets = [0, 5], sizes = [64, 1], strides = [1, 1]} : vector<64x8xbf16> to vector<64x1xbf16>
    %cst_22 = arith.constant dense<0.000000e+00> : vector<64x1xf32>
    %37 = tpu.matmul %35, %36, %cst_22 {dimension_numbers = #tpu.dot_dimension_numbers<[1], [0], [0], [1], [0, 0, 1, 1], [], []>} : vector<64x64xbf16>, vector<64x1xbf16>, vector<64x1xf32> -> vector<64x1xf32>
    %38 = arith.addf %33, %37 : vector<64x1xf32>
    %c6 = arith.constant 6 : index
    %c0_23 = arith.constant 0 : index
    %c0_24 = arith.constant 0 : index
    %39 = vector.load %arg4[%c6, %c0_23, %c0_24] : memref<8x64x64xbf16, #tpu.memory_space<vmem>>, vector<1x64x64xbf16>
    %40 = vector.shape_cast %39 : vector<1x64x64xbf16> to vector<64x64xbf16>
    %41 = vector.extract_strided_slice %7 {offsets = [0, 6], sizes = [64, 1], strides = [1, 1]} : vector<64x8xbf16> to vector<64x1xbf16>
    %cst_25 = arith.constant dense<0.000000e+00> : vector<64x1xf32>
    %42 = tpu.matmul %40, %41, %cst_25 {dimension_numbers = #tpu.dot_dimension_numbers<[1], [0], [0], [1], [0, 0, 1, 1], [], []>} : vector<64x64xbf16>, vector<64x1xbf16>, vector<64x1xf32> -> vector<64x1xf32>
    %43 = arith.addf %38, %42 : vector<64x1xf32>
    %c7 = arith.constant 7 : index
    %c0_26 = arith.constant 0 : index
    %c0_27 = arith.constant 0 : index
    %44 = vector.load %arg4[%c7, %c0_26, %c0_27] : memref<8x64x64xbf16, #tpu.memory_space<vmem>>, vector<1x64x64xbf16>
    %45 = vector.shape_cast %44 : vector<1x64x64xbf16> to vector<64x64xbf16>
    %46 = vector.extract_strided_slice %7 {offsets = [0, 7], sizes = [64, 1], strides = [1, 1]} : vector<64x8xbf16> to vector<64x1xbf16>
    %cst_28 = arith.constant dense<0.000000e+00> : vector<64x1xf32>
    %47 = tpu.matmul %45, %46, %cst_28 {dimension_numbers = #tpu.dot_dimension_numbers<[1], [0], [0], [1], [0, 0, 1, 1], [], []>} : vector<64x64xbf16>, vector<64x1xbf16>, vector<64x1xf32> -> vector<64x1xf32>
    %48 = arith.addf %43, %47 : vector<64x1xf32>
    %c0_29 = arith.constant 0 : index
    %c0_30 = arith.constant 0 : index
    %49 = vector.load %arg6[%c0_29, %c0_30] : memref<64x64xbf16, #tpu.memory_space<vmem>>, vector<64x64xbf16>
    %cst_31 = arith.constant 0.000000e+00 : f32
    %50 = vector.broadcast %cst_31 : f32 to vector<64x1xf32>
    %51 = arith.maximumf %48, %50 : vector<64x1xf32>
    %52 = arith.truncf %51 : vector<64x1xf32> to vector<64x1xbf16>
    %cst_32 = arith.constant dense<0.000000e+00> : vector<64x1xf32>
    %53 = tpu.matmul %49, %52, %cst_32 {dimension_numbers = #tpu.dot_dimension_numbers<[1], [0], [0], [1], [0, 0, 1, 1], [], []>} : vector<64x64xbf16>, vector<64x1xbf16>, vector<64x1xf32> -> vector<64x1xf32>
    %c0_33 = arith.constant 0 : index
    %c0_34 = arith.constant 0 : index
    %54 = vector.load %arg7[%c0_33, %c0_34] : memref<64x1xf32, #tpu.memory_space<vmem>>, vector<64x1xf32>
    %55 = arith.addf %53, %54 : vector<64x1xf32>
    %cst_35 = arith.constant 0.000000e+00 : f32
    %56 = vector.broadcast %cst_35 : f32 to vector<64x1xf32>
    %57 = arith.maximumf %55, %56 : vector<64x1xf32>
    %58 = vector.shape_cast %57 : vector<64x1xf32> to vector<64x1xf32>
    %59 = vector.broadcast %58 : vector<64x1xf32> to vector<64x8xf32>
    %60 = arith.truncf %59 : vector<64x8xf32> to vector<64x8xbf16>
    %cst_36 = arith.constant 0.000000e+00 : f32
    %61 = vector.broadcast %cst_36 : f32 to vector<64x8xf32>
    %62 = arith.maximumf %1, %61 : vector<64x8xf32>
    %63 = arith.truncf %62 : vector<64x8xf32> to vector<64x8xbf16>
    %c0_37 = arith.constant 0 : index
    %c0_38 = arith.constant 0 : index
    %64 = vector.load %arg8[%c0_37, %c0_38] : memref<32x64xbf16, #tpu.memory_space<vmem>>, vector<32x64xbf16>
    %cst_39 = arith.constant dense<0.000000e+00> : vector<32x8xf32>
    %65 = tpu.matmul %64, %60, %cst_39 {dimension_numbers = #tpu.dot_dimension_numbers<[1], [0], [0], [1], [0, 0, 1, 1], [], []>} : vector<32x64xbf16>, vector<64x8xbf16>, vector<32x8xf32> -> vector<32x8xf32>
    %c0_40 = arith.constant 0 : index
    %c0_41 = arith.constant 0 : index
    %66 = vector.load %arg9[%c0_40, %c0_41] : memref<32x64xbf16, #tpu.memory_space<vmem>>, vector<32x64xbf16>
    %cst_42 = arith.constant dense<0.000000e+00> : vector<32x8xf32>
    %67 = tpu.matmul %66, %63, %cst_42 {dimension_numbers = #tpu.dot_dimension_numbers<[1], [0], [0], [1], [0, 0, 1, 1], [], []>} : vector<32x64xbf16>, vector<64x8xbf16>, vector<32x8xf32> -> vector<32x8xf32>
    %68 = arith.addf %65, %67 : vector<32x8xf32>
    %c0_43 = arith.constant 0 : index
    %c0_44 = arith.constant 0 : index
    %69 = vector.load %arg10[%c0_43, %c0_44] : memref<32x1xf32, #tpu.memory_space<vmem>>, vector<32x1xf32>
    %70 = vector.broadcast %69 : vector<32x1xf32> to vector<32x8xf32>
    %71 = arith.addf %68, %70 : vector<32x8xf32>
    %cst_45 = arith.constant 0.000000e+00 : f32
    %72 = vector.broadcast %cst_45 : f32 to vector<32x8xf32>
    %73 = arith.maximumf %71, %72 : vector<32x8xf32>
    %74 = arith.truncf %73 : vector<32x8xf32> to vector<32x8xbf16>
    %c0_46 = arith.constant 0 : index
    %c0_47 = arith.constant 0 : index
    %75 = vector.load %arg18[%c0_46, %c0_47] : memref<8x64xbf16, #tpu.memory_space<vmem>>, vector<8x64xbf16>
    %cst_48 = arith.constant dense<0.000000e+00> : vector<32x64xf32>
    %76 = tpu.matmul %74, %75, %cst_48 {dimension_numbers = #tpu.dot_dimension_numbers<[1], [0], [0], [1], [0, 0, 1, 1], [], []>} : vector<32x8xbf16>, vector<8x64xbf16>, vector<32x64xf32> -> vector<32x64xf32>
    %77 = arith.truncf %76 : vector<32x64xf32> to vector<32x64xbf16>
    %c0_49 = arith.constant 0 : index
    %c0_50 = arith.constant 0 : index
    %78 = vector.load %arg2[%c0_49, %c0_50] : memref<32x64xbf16, #tpu.memory_space<vmem>>, vector<32x64xbf16>
    %79 = arith.extf %78 : vector<32x64xbf16> to vector<32x64xf32>
    %cst_51 = arith.constant 0.000000e+00 : f32
    %80 = vector.broadcast %cst_51 : f32 to vector<32x64xf32>
    %81 = arith.maximumf %79, %80 : vector<32x64xf32>
    %82 = arith.truncf %81 : vector<32x64xf32> to vector<32x64xbf16>
    %c0_52 = arith.constant 0 : index
    %c0_53 = arith.constant 0 : index
    %83 = vector.load %arg11[%c0_52, %c0_53] : memref<16x32xbf16, #tpu.memory_space<vmem>>, vector<16x32xbf16>
    %cst_54 = arith.constant dense<0.000000e+00> : vector<16x64xf32>
    %84 = tpu.matmul %83, %77, %cst_54 {dimension_numbers = #tpu.dot_dimension_numbers<[1], [0], [0], [1], [0, 0, 1, 1], [], []>} : vector<16x32xbf16>, vector<32x64xbf16>, vector<16x64xf32> -> vector<16x64xf32>
    %c0_55 = arith.constant 0 : index
    %c0_56 = arith.constant 0 : index
    %85 = vector.load %arg12[%c0_55, %c0_56] : memref<16x32xbf16, #tpu.memory_space<vmem>>, vector<16x32xbf16>
    %cst_57 = arith.constant dense<0.000000e+00> : vector<16x64xf32>
    %86 = tpu.matmul %85, %82, %cst_57 {dimension_numbers = #tpu.dot_dimension_numbers<[1], [0], [0], [1], [0, 0, 1, 1], [], []>} : vector<16x32xbf16>, vector<32x64xbf16>, vector<16x64xf32> -> vector<16x64xf32>
    %87 = arith.addf %84, %86 : vector<16x64xf32>
    %c0_58 = arith.constant 0 : index
    %c0_59 = arith.constant 0 : index
    %88 = vector.load %arg13[%c0_58, %c0_59] : memref<16x1xf32, #tpu.memory_space<vmem>>, vector<16x1xf32>
    %89 = vector.broadcast %88 : vector<16x1xf32> to vector<16x64xf32>
    %90 = arith.addf %87, %89 : vector<16x64xf32>
    %cst_60 = arith.constant 0.000000e+00 : f32
    %91 = vector.broadcast %cst_60 : f32 to vector<16x64xf32>
    %92 = arith.maximumf %90, %91 : vector<16x64xf32>
    %93 = arith.truncf %92 : vector<16x64xf32> to vector<16x64xbf16>
    %c0_61 = arith.constant 0 : index
    %c0_62 = arith.constant 0 : index
    %94 = vector.load %arg19[%c0_61, %c0_62] : memref<64x512xbf16, #tpu.memory_space<vmem>>, vector<64x512xbf16>
    %cst_63 = arith.constant dense<0.000000e+00> : vector<16x512xf32>
    %95 = tpu.matmul %93, %94, %cst_63 {dimension_numbers = #tpu.dot_dimension_numbers<[1], [0], [0], [1], [0, 0, 1, 1], [], []>} : vector<16x64xbf16>, vector<64x512xbf16>, vector<16x512xf32> -> vector<16x512xf32>
    %96 = arith.truncf %95 : vector<16x512xf32> to vector<16x512xbf16>
    %c0_64 = arith.constant 0 : index
    %c0_65 = arith.constant 0 : index
    %97 = vector.load %arg3[%c0_64, %c0_65] : memref<16x512xbf16, #tpu.memory_space<vmem>>, vector<16x512xbf16>
    %98 = arith.extf %97 : vector<16x512xbf16> to vector<16x512xf32>
    %cst_66 = arith.constant 0.000000e+00 : f32
    %99 = vector.broadcast %cst_66 : f32 to vector<16x512xf32>
    %100 = arith.maximumf %98, %99 : vector<16x512xf32>
    %101 = arith.truncf %100 : vector<16x512xf32> to vector<16x512xbf16>
    %c0_67 = arith.constant 0 : index
    %c0_68 = arith.constant 0 : index
    %102 = vector.load %arg14[%c0_67, %c0_68] : memref<8x16xbf16, #tpu.memory_space<vmem>>, vector<8x16xbf16>
    %cst_69 = arith.constant dense<0.000000e+00> : vector<8x512xf32>
    %103 = tpu.matmul %102, %96, %cst_69 {dimension_numbers = #tpu.dot_dimension_numbers<[1], [0], [0], [1], [0, 0, 1, 1], [], []>} : vector<8x16xbf16>, vector<16x512xbf16>, vector<8x512xf32> -> vector<8x512xf32>
    %c0_70 = arith.constant 0 : index
    %c0_71 = arith.constant 0 : index
    %104 = vector.load %arg15[%c0_70, %c0_71] : memref<8x16xbf16, #tpu.memory_space<vmem>>, vector<8x16xbf16>
    %cst_72 = arith.constant dense<0.000000e+00> : vector<8x512xf32>
    %105 = tpu.matmul %104, %101, %cst_72 {dimension_numbers = #tpu.dot_dimension_numbers<[1], [0], [0], [1], [0, 0, 1, 1], [], []>} : vector<8x16xbf16>, vector<16x512xbf16>, vector<8x512xf32> -> vector<8x512xf32>
    %106 = arith.addf %103, %105 : vector<8x512xf32>
    %c0_73 = arith.constant 0 : index
    %c0_74 = arith.constant 0 : index
    %107 = vector.load %arg16[%c0_73, %c0_74] : memref<8x1xf32, #tpu.memory_space<vmem>>, vector<8x1xf32>
    %108 = vector.broadcast %107 : vector<8x1xf32> to vector<8x512xf32>
    %109 = arith.addf %106, %108 : vector<8x512xf32>
    %c0_75 = arith.constant 0 : index
    %c0_76 = arith.constant 0 : index
    %110 = vector.load %arg17[%c0_75, %c0_76] : memref<1x8xbf16, #tpu.memory_space<vmem>>, vector<1x8xbf16>
    %cst_77 = arith.constant 0.000000e+00 : f32
    %111 = vector.broadcast %cst_77 : f32 to vector<8x512xf32>
    %112 = arith.maximumf %109, %111 : vector<8x512xf32>
    %113 = arith.truncf %112 : vector<8x512xf32> to vector<8x512xbf16>
    %cst_78 = arith.constant dense<0.000000e+00> : vector<1x512xf32>
    %114 = tpu.matmul %110, %113, %cst_78 {dimension_numbers = #tpu.dot_dimension_numbers<[1], [0], [0], [1], [0, 0, 1, 1], [], []>} : vector<1x8xbf16>, vector<8x512xbf16>, vector<1x512xf32> -> vector<1x512xf32>
    %c0_79 = arith.constant 0 : index
    %c0_80 = arith.constant 0 : index
    %115 = vector.load %arg20[%c0_79, %c0_80] : memref<1x512xf32, #tpu.memory_space<vmem>>, vector<1x512xf32>
    tpu.vector_store %arg20[%c0_79, %c0_80], %114 {strides = array<i32>} : memref<1x512xf32, #tpu.memory_space<vmem>>, vector<1x512xf32>,
    return
  }
  func.func @transform_0(%arg0: i32) -> (i32, i32) {
    %c0_i32 = arith.constant 0 : i32
    %c0_i32_0 = arith.constant 0 : i32
    %c0_i32_1 = arith.constant 0 : i32
    return %c0_i32, %c0_i32_0 : i32, i32
  }
  func.func @transform_1(%arg0: i32) -> (i32, i32) {
    %c0_i32 = arith.constant 0 : i32
    %c0_i32_0 = arith.constant 0 : i32
    %c0_i32_1 = arith.constant 0 : i32
    return %c0_i32, %c0_i32_0 : i32, i32
  }
  func.func @transform_2(%arg0: i32) -> (i32, i32) {
    %c0_i32 = arith.constant 0 : i32
    %c0_i32_0 = arith.constant 0 : i32
    %c0_i32_1 = arith.constant 0 : i32
    return %c0_i32, %c0_i32_0 : i32, i32
  }
  func.func @transform_3(%arg0: i32) -> (i32, i32, i32) {
    %c0_i32 = arith.constant 0 : i32
    %c0_i32_0 = arith.constant 0 : i32
    %c0_i32_1 = arith.constant 0 : i32
    %c0_i32_2 = arith.constant 0 : i32
    return %c0_i32, %c0_i32_0, %c0_i32_1 : i32, i32, i32
  }
  func.func @transform_4(%arg0: i32) -> (i32, i32) {
    %c0_i32 = arith.constant 0 : i32
    %c0_i32_0 = arith.constant 0 : i32
    %c0_i32_1 = arith.constant 0 : i32
    return %c0_i32, %c0_i32_0 : i32, i32
  }
  func.func @transform_5(%arg0: i32) -> (i32, i32) {
    %c0_i32 = arith.constant 0 : i32
    %c0_i32_0 = arith.constant 0 : i32
    %c0_i32_1 = arith.constant 0 : i32
    return %c0_i32, %c0_i32_0 : i32, i32
  }
  func.func @transform_6(%arg0: i32) -> (i32, i32) {
    %c0_i32 = arith.constant 0 : i32
    %c0_i32_0 = arith.constant 0 : i32
    %c0_i32_1 = arith.constant 0 : i32
    return %c0_i32, %c0_i32_0 : i32, i32
  }
  func.func @transform_7(%arg0: i32) -> (i32, i32) {
    %c0_i32 = arith.constant 0 : i32
    %c0_i32_0 = arith.constant 0 : i32
    %c0_i32_1 = arith.constant 0 : i32
    return %c0_i32, %c0_i32_0 : i32, i32
  }
  func.func @transform_8(%arg0: i32) -> (i32, i32) {
    %c0_i32 = arith.constant 0 : i32
    %c0_i32_0 = arith.constant 0 : i32
    %c0_i32_1 = arith.constant 0 : i32
    return %c0_i32, %c0_i32_0 : i32, i32
  }
  func.func @transform_9(%arg0: i32) -> (i32, i32) {
    %c0_i32 = arith.constant 0 : i32
    %c0_i32_0 = arith.constant 0 : i32
    %c0_i32_1 = arith.constant 0 : i32
    return %c0_i32, %c0_i32_0 : i32, i32
  }
  func.func @transform_10(%arg0: i32) -> (i32, i32) {
    %c0_i32 = arith.constant 0 : i32
    %c0_i32_0 = arith.constant 0 : i32
    %c0_i32_1 = arith.constant 0 : i32
    return %c0_i32, %c0_i32_0 : i32, i32
  }
  func.func @transform_11(%arg0: i32) -> (i32, i32) {
    %c0_i32 = arith.constant 0 : i32
    %c0_i32_0 = arith.constant 0 : i32
    %c0_i32_1 = arith.constant 0 : i32
    return %c0_i32, %c0_i32_0 : i32, i32
  }
  func.func @transform_12(%arg0: i32) -> (i32, i32) {
    %c0_i32 = arith.constant 0 : i32
    %c0_i32_0 = arith.constant 0 : i32
    %c0_i32_1 = arith.constant 0 : i32
    return %c0_i32, %c0_i32_0 : i32, i32
  }
  func.func @transform_13(%arg0: i32) -> (i32, i32) {
    %c0_i32 = arith.constant 0 : i32
    %c0_i32_0 = arith.constant 0 : i32
    %c0_i32_1 = arith.constant 0 : i32
    return %c0_i32, %c0_i32_0 : i32, i32
  }
  func.func @transform_14(%arg0: i32) -> (i32, i32) {
    %c0_i32 = arith.constant 0 : i32
    %c0_i32_0 = arith.constant 0 : i32
    %c0_i32_1 = arith.constant 0 : i32
    return %c0_i32, %c0_i32_0 : i32, i32
  }
  func.func @transform_15(%arg0: i32) -> (i32, i32) {
    %c0_i32 = arith.constant 0 : i32
    %c0_i32_0 = arith.constant 0 : i32
    %c0_i32_1 = arith.constant 0 : i32
    return %c0_i32, %c0_i32_0 : i32, i32
  }
  func.func @transform_16(%arg0: i32) -> (i32, i32) {
    %c0_i32 = arith.constant 0 : i32
    %c0_i32_0 = arith.constant 0 : i32
    %c0_i32_1 = arith.constant 0 : i32
    return %c0_i32, %c0_i32_0 : i32, i32
  }
  func.func @transform_17(%arg0: i32) -> (i32, i32) {
    %c0_i32 = arith.constant 0 : i32
    %c0_i32_0 = arith.constant 0 : i32
    %c0_i32_1 = arith.constant 0 : i32
    return %c0_i32, %c0_i32_0 : i32, i32
  }
  func.func @transform_18(%arg0: i32) -> (i32, i32) {
    %c0_i32 = arith.constant 0 : i32
    %c0_i32_0 = arith.constant 0 : i32
    %c0_i32_1 = arith.constant 0 : i32
    return %c0_i32, %c0_i32_0 : i32, i32
  }
  func.func @transform_19(%arg0: i32) -> (i32, i32) {
    %c0_i32 = arith.constant 0 : i32
    %c0_i32_0 = arith.constant 0 : i32
    %c0_i32_1 = arith.constant 0 : i32
    return %c0_i32, %c0_i32_0 : i32, i32
  }
}

</mosaic_0001>

<llo_original>
// kernel: unet_g_hr_forward.5
$region0: #{unet_g_hr_forward.5}
  #allocation0 [shape = 'u32[]', space=smem, size = 0x4, offset = 0x4, fixed_abs, tag = 'smem constant byte address 0x4 - core index']
  #allocation1 [shape = 'u32[144,128]{1,0:T(1,128)}', space=vmem, size = 0x12000, scoped, tag = 'internal scratch']
  %s0 = inlined_call_operand.vmem [shape: bf16[64,4096], index: 0, kind: input, shape index: {}]
  %s1 = inlined_call_operand.vmem [shape: bf16[8,64], index: 1, kind: input, shape index: {}]
  %s2 = inlined_call_operand.vmem [shape: f32[8,1], index: 2, kind: input, shape index: {}]
  %s3 = inlined_call_operand.vmem [shape: bf16[1,8], index: 3, kind: input, shape index: {}]
  %s4 = inlined_call_operand.vmem [shape: bf16[8,4096], index: 4, kind: output, shape index: {0}]
  %s5 = inlined_call_operand.vmem [shape: f32[1,4096], index: 5, kind: output, shape index: {1}]
  %6 = xla_tuple %s4, %s5
  %s7 = sld [smem:[#allocation0]]
  $region80: #{unet_g_hr_forward.5} parent=0
    _
  %s9 = ssub.s32 1, %s7
  %s10 = scalar_select 0, %s9, %s7
  $region1: #{unet_g_hr_forward.5} parent=0
    #allocation2 [shape = 'u8[524288]{0}', space=vmem, size = 0x80000, scoped, tag = 'input window, operand 0']
    loop: start=0, step=1, limit=4
    $region2: #{unet_g_hr_forward.5} parent=1 // loop_pre_header
      _
    $region3: #{unet_g_hr_forward.5} parent=1 // loop_header
      %s12 = sphi 0, %s16
      %p13 = scmp.ge.s32.totalorder %s12, 4
      %s22 = sphi 0, %s24
      %s25 = sphi 0, %s22
      %s26 = sphi 0, %s25
      %s42 = sphi 0, %s26
      %s46 = sphi 0, %s46
      %s48 = sphi 0, %s46
      %s49 = sphi 0, %s48
      %s63 = sphi 0, %s49
      %s67 = sphi 0, %s67
      %s69 = sphi 0, %s67
      %s70 = sphi 0, %s69
      %s84 = sphi 0, %s70
      %s88 = sphi 0, %s88
      %s90 = sphi 0, %s88
      %s91 = sphi 0, %s90
      %s105 = sphi 0, %s91
      %s111 = sphi 0, %s113
      %s114 = sphi 0, %s111
      %s115 = sphi 0, %s114
      %s131 = sphi 0, %s115
      %s137 = sphi 0, %s139
      %s140 = sphi 0, %s137
      %s141 = sphi 0, %s140
      %s157 = sphi 0, %s141
    $region4: #{unet_g_hr_forward.5} parent=1 // loop_header_branch
      %15 = sbr.rel (%p13) target = $region8
    $region5: #{unet_g_hr_forward.5} parent=1 // loop_body
      %s17 = ssub.s32 %s12, 1
      %s18 = ssub.s32 %s12, 2
      %s19 = sadd.s32 %s12, 1
      %s20 = ssub.s32 %s12, %s19
      %p21 = scmp.eq.s32.totalorder %s20, 0
      %s23 = sadd.s32 %s22, 1
      %s24 = scalar_select %p21, %s22, %s23
      %p27 = pneg %p21
      %p28 = scmp.eq.s32.totalorder %s12, 1
      %p29 = por %p27, %p28
      %p30 = scmp.ne.s32.totalorder %s22, %s25
      %p31 = scmp.eq.s32.totalorder %s12, 0
      %p32 = por %p30, %p31
      %p33 = scmp.ne.s32.totalorder %s22, %s25
      %p34 = scmp.eq.s32.totalorder %s17, 1
      %p35 = por %p33, %p34
      %p36 = scmp.ne.s32.totalorder %s25, %s26
      %p37 = scmp.eq.s32.totalorder %s17, 0
      %p38 = por %p36, %p37
      %p39 = scmp.ne.s32.totalorder %s25, %s26
      %p40 = scmp.eq.s32.totalorder %s18, 1
      %p41 = por %p39, %p40
      %p43 = scmp.ne.s32.totalorder %s26, %s42
      %p44 = scmp.eq.s32.totalorder %s18, 0
      %p45 = por %p43, %p44
      %s47 = sadd.s32 %s46, 1
      %p50 = scmp.eq.s32.totalorder %s12, 1
      %p51 = scmp.ne.s32.totalorder %s46, %s48
      %p52 = scmp.eq.s32.totalorder %s12, 0
      %p53 = por %p51, %p52
      %p54 = scmp.ne.s32.totalorder %s46, %s48
      %p55 = scmp.eq.s32.totalorder %s17, 1
      %p56 = por %p54, %p55
      %p57 = scmp.ne.s32.totalorder %s48, %s49
      %p58 = scmp.eq.s32.totalorder %s17, 0
      %p59 = por %p57, %p58
      %p60 = scmp.ne.s32.totalorder %s48, %s49
      %p61 = scmp.eq.s32.totalorder %s18, 1
      %p62 = por %p60, %p61
      %p64 = scmp.ne.s32.totalorder %s49, %s63
      %p65 = scmp.eq.s32.totalorder %s18, 0
      %p66 = por %p64, %p65
      %s68 = sadd.s32 %s67, 1
      %p71 = scmp.eq.s32.totalorder %s12, 1
      %p72 = scmp.ne.s32.totalorder %s67, %s69
      %p73 = scmp.eq.s32.totalorder %s12, 0
      %p74 = por %p72, %p73
      %p75 = scmp.ne.s32.totalorder %s67, %s69
      %p76 = scmp.eq.s32.totalorder %s17, 1
      %p77 = por %p75, %p76
      %p78 = scmp.ne.s32.totalorder %s69, %s70
      %p79 = scmp.eq.s32.totalorder %s17, 0
      %p80 = por %p78, %p79
      %p81 = scmp.ne.s32.totalorder %s69, %s70
      %p82 = scmp.eq.s32.totalorder %s18, 1
      %p83 = por %p81, %p82
      %p85 = scmp.ne.s32.totalorder %s70, %s84
      %p86 = scmp.eq.s32.totalorder %s18, 0
      %p87 = por %p85, %p86
      %s89 = sadd.s32 %s88, 1
      %p92 = scmp.eq.s32.totalorder %s12, 1
      %p93 = scmp.ne.s32.totalorder %s88, %s90
      %p94 = scmp.eq.s32.totalorder %s12, 0
      %p95 = por %p93, %p94
      %p96 = scmp.ne.s32.totalorder %s88, %s90
      %p97 = scmp.eq.s32.totalorder %s17, 1
      %p98 = por %p96, %p97
      %p99 = scmp.ne.s32.totalorder %s90, %s91
      %p100 = scmp.eq.s32.totalorder %s17, 0
      %p101 = por %p99, %p100
      %p102 = scmp.ne.s32.totalorder %s90, %s91
      %p103 = scmp.eq.s32.totalorder %s18, 1
      %p104 = por %p102, %p103
      %p106 = scmp.ne.s32.totalorder %s91, %s105
      %p107 = scmp.eq.s32.totalorder %s18, 0
      %p108 = por %p106, %p107
      %s109 = ssub.s32 %s12, %s19
      %p110 = scmp.eq.s32.totalorder %s109, 0
      %s112 = sadd.s32 %s111, 1
      %s113 = scalar_select %p110, %s111, %s112
      %p116 = pneg %p110
      %p117 = scmp.eq.s32.totalorder %s12, 1
      %p118 = por %p116, %p117
      %p119 = scmp.ne.s32.totalorder %s111, %s114
      %p120 = scmp.eq.s32.totalorder %s12, 0
      %p121 = por %p119, %p120
      %p122 = scmp.ne.s32.totalorder %s111, %s114
      %p123 = scmp.eq.s32.totalorder %s17, 1
      %p124 = por %p122, %p123
      %p125 = scmp.ne.s32.totalorder %s114, %s115
      %p126 = scmp.eq.s32.totalorder %s17, 0
      %p127 = por %p125, %p126
      %p128 = scmp.ne.s32.totalorder %s114, %s115
      %p129 = scmp.eq.s32.totalorder %s18, 1
      %p130 = por %p128, %p129
      %p132 = scmp.ne.s32.totalorder %s115, %s131
      %p133 = scmp.eq.s32.totalorder %s18, 0
      %p134 = por %p132, %p133
      %s135 = ssub.s32 %s12, %s19
      %p136 = scmp.eq.s32.totalorder %s135, 0
      %s138 = sadd.s32 %s137, 1
      %s139 = scalar_select %p136, %s137, %s138
      %p142 = pneg %p136
      %p143 = scmp.eq.s32.totalorder %s12, 1
      %p144 = por %p142, %p143
      %p145 = scmp.ne.s32.totalorder %s137, %s140
      %p146 = scmp.eq.s32.totalorder %s12, 0
      %p147 = por %p145, %p146
      %p148 = scmp.ne.s32.totalorder %s137, %s140
      %p149 = scmp.eq.s32.totalorder %s17, 1
      %p150 = por %p148, %p149
      %p151 = scmp.ne.s32.totalorder %s140, %s141
      %p152 = scmp.eq.s32.totalorder %s17, 0
      %p153 = por %p151, %p152
      %p154 = scmp.ne.s32.totalorder %s140, %s141
      %p155 = scmp.eq.s32.totalorder %s18, 1
      %p156 = por %p154, %p155
      %p158 = scmp.ne.s32.totalorder %s141, %s157
      %p159 = scmp.eq.s32.totalorder %s18, 0
      %p160 = por %p158, %p159
      %p161 = scmp.le.s32.totalorder 1, %s12
      %p162 = scmp.lt.s32.totalorder %s12, 3
      %p163 = pnand %p161, %p162
      %p164 = pneg %p163
      // Predicated region
      $region9: #{unet_g_hr_forward.5} parent=5 // pred_check
        _
      $region10: #{unet_g_hr_forward.5} parent=5 // pred_check_branch
        %166 = sbr.rel (%p163) target = $region12
      $region11: #{unet_g_hr_forward.5} parent=5 // pred_region
        %s167 = ssub.s32 %s12, 1
        // Predicated region
        $region13: #{unet_g_hr_forward.5} parent=11 // pred_check
          %p168 = pneg %p59
        $region14: #{unet_g_hr_forward.5} parent=11 // pred_check_branch
          %170 = sbr.rel (%p168) target = $region16
        $region15: #{unet_g_hr_forward.5} parent=11 // pred_region
          _
        $region16: #{unet_g_hr_forward.5} parent=11 // pred_fallthru
          _
        // Predicated region
        $region17: #{unet_g_hr_forward.5} parent=11 // pred_check
          %p171 = pneg %p80
        $region18: #{unet_g_hr_forward.5} parent=11 // pred_check_branch
          %173 = sbr.rel (%p171) target = $region20
        $region19: #{unet_g_hr_forward.5} parent=11 // pred_region
          _
        $region20: #{unet_g_hr_forward.5} parent=11 // pred_fallthru
          _
        // Predicated region
        $region21: #{unet_g_hr_forward.5} parent=11 // pred_check
          %p174 = pneg %p101
        $region22: #{unet_g_hr_forward.5} parent=11 // pred_check_branch
          %176 = sbr.rel (%p174) target = $region24
        $region23: #{unet_g_hr_forward.5} parent=11 // pred_region
          _
        $region24: #{unet_g_hr_forward.5} parent=11 // pred_fallthru
          _
      $region12: #{unet_g_hr_forward.5} parent=5 // pred_fallthru
        _
      %p177 = scmp.lt.s32.totalorder %s12, 2
      // Predicated region
      $region25: #{unet_g_hr_forward.5} parent=5 // pred_check
        %p178 = pneg %p177
      $region26: #{unet_g_hr_forward.5} parent=5 // pred_check_branch
        %180 = sbr.rel (%p178) target = $region28
      $region27: #{unet_g_hr_forward.5} parent=5 // pred_region
        // Predicated region
        $region29: #{unet_g_hr_forward.5} parent=27 // pred_check
          %p181 = pneg %p32
        $region30: #{unet_g_hr_forward.5} parent=27 // pred_check_branch
          %183 = sbr.rel (%p181) target = $region32
        $region31: #{unet_g_hr_forward.5} parent=27 // pred_region
          %s184 = sand.u32 %s22, 1
          %s185 = sand.u32 %s22, 1
          %s186 = smul.addr %s185, 512
          %s187 = scalar_lea.vmem [#allocation2], %s186
          %s188 = smul.u32 16, %s12
          %s189 = smul.addr %s188, 4
          %s190 = scalar_lea.vmem %s0, %s189
          // Predicated region
          $region33: #{unet_g_hr_forward.5} parent=31 // pred_check
            _
          $region34: #{unet_g_hr_forward.5} parent=31 // pred_check_branch
            %192 = sbr.rel (0) target = $region36
          $region35: #{unet_g_hr_forward.5} parent=31 // pred_region
            // Predicated region
            $region37: #{unet_g_hr_forward.5} parent=35 // pred_check
              _
            $region38: #{unet_g_hr_forward.5} parent=35 // pred_check_branch
              %194 = sbr.rel (0) target = $region40
            $region39: #{unet_g_hr_forward.5} parent=35 // pred_region
              loop: start=0, step=1, limit=1
              $region41: #{unet_g_hr_forward.5} parent=39 // loop_pre_header
                _
              $region42: #{unet_g_hr_forward.5} parent=39 // loop_header
                %s196 = sphi 0, %s200
                %p197 = scmp.ge.s32.totalorder %s196, 1
                %s201 = sphi %s190, %s190
                %s202 = sphi %s187, %s187
              $region43: #{unet_g_hr_forward.5} parent=39 // loop_header_branch
                %199 = sbr.rel (%p197) target = $region47
              $region44: #{unet_g_hr_forward.5} parent=39 // loop_body
                %v203 = vld [vmem:[%s201] sm:$0xff]
                %204 = vst [vmem:[%s202] sm:$0xff] %v203
                %v205 = vld [vmem:[%s201 + $0x8] sm:$0xff]
                %206 = vst [vmem:[%s202 + $0x8] sm:$0xff] %v205
                %v207 = vld [vmem:[%s201 + $0x10] sm:$0xff]
                %208 = vst [vmem:[%s202 + $0x10] sm:$0xff] %v207
                %v209 = vld [vmem:[%s201 + $0x18] sm:$0xff]
                %210 = vst [vmem:[%s202 + $0x18] sm:$0xff] %v209
                %v211 = vld [vmem:[%s201 + $0x20] sm:$0xff]
                %212 = vst [vmem:[%s202 + $0x20] sm:$0xff] %v211
                %v213 = vld [vmem:[%s201 + $0x28] sm:$0xff]
                %214 = vst [vmem:[%s202 + $0x28] sm:$0xff] %v213
                %v215 = vld [vmem:[%s201 + $0x30] sm:$0xff]
                %216 = vst [vmem:[%s202 + $0x30] sm:$0xff] %v215
                %v217 = vld [vmem:[%s201 + $0x38] sm:$0xff]
                %218 = vst [vmem:[%s202 + $0x38] sm:$0xff] %v217
                %v219 = vld [vmem:[%s201 + $0x80] sm:$0xff]
                %220 = vst [vmem:[%s202 + $0x40] sm:$0xff] %v219
                %v221 = vld [vmem:[%s201 + $0x88] sm:$0xff]
                %222 = vst [vmem:[%s202 + $0x48] sm:$0xff] %v221
                %v223 = vld [vmem:[%s201 + $0x90] sm:$0xff]
                %224 = vst [vmem:[%s202 + $0x50] sm:$0xff] %v223
                %v225 = vld [vmem:[%s201 + $0x98] sm:$0xff]
                %226 = vst [vmem:[%s202 + $0x58] sm:$0xff] %v225
                %v227 = vld [vmem:[%s201 + $0xa0] sm:$0xff]
                %228 = vst [vmem:[%s202 + $0x60] sm:$0xff] %v227
                %v229 = vld [vmem:[%s201 + $0xa8] sm:$0xff]
                %230 = vst [vmem:[%s202 + $0x68] sm:$0xff] %v229
                %v231 = vld [vmem:[%s201 + $0xb0] sm:$0xff]
                %232 = vst [vmem:[%s202 + $0x70] sm:$0xff] %v231
                %v233 = vld [vmem:[%s201 + $0xb8] sm:$0xff]
                %234 = vst [vmem:[%s202 + $0x78] sm:$0xff] %v233
                %v235 = vld [vmem:[%s201 + $0x100] sm:$0xff]
                %236 = vst [vmem:[%s202 + $0x80] sm:$0xff] %v235
                %v237 = vld [vmem:[%s201 + $0x108] sm:$0xff]
                %238 = vst [vmem:[%s202 + $0x88] sm:$0xff] %v237
                %v239 = vld [vmem:[%s201 + $0x110] sm:$0xff]
                %240 = vst [vmem:[%s202 + $0x90] sm:$0xff] %v239
                %v241 = vld [vmem:[%s201 + $0x118] sm:$0xff]
                %242 = vst [vmem:[%s202 + $0x98] sm:$0xff] %v241
                %v243 = vld [vmem:[%s201 + $0x120] sm:$0xff]
                %244 = vst [vmem:[%s202 + $0xa0] sm:$0xff] %v243
                %v245 = vld [vmem:[%s201 + $0x128] sm:$0xff]
                %246 = vst [vmem:[%s202 + $0xa8] sm:$0xff] %v245
                %v247 = vld [vmem:[%s201 + $0x130] sm:$0xff]
                %248 = vst [vmem:[%s202 + $0xb0] sm:$0xff] %v247
                %v249 = vld [vmem:[%s201 + $0x138] sm:$0xff]
                %250 = vst [vmem:[%s202 + $0xb8] sm:$0xff] %v249
                %v251 = vld [vmem:[%s201 + $0x180] sm:$0xff]
                %252 = vst [vmem:[%s202 + $0xc0] sm:$0xff] %v251
                %v253 = vld [vmem:[%s201 + $0x188] sm:$0xff]
                %254 = vst [vmem:[%s202 + $0xc8] sm:$0xff] %v253
                %v255 = vld [vmem:[%s201 + $0x190] sm:$0xff]
                %256 = vst [vmem:[%s202 + $0xd0] sm:$0xff] %v255
                %v257 = vld [vmem:[%s201 + $0x198] sm:$0xff]
                %258 = vst [vmem:[%s202 + $0xd8] sm:$0xff] %v257
                %v259 = vld [vmem:[%s201 + $0x1a0] sm:$0xff]
                %260 = vst [vmem:[%s202 + $0xe0] sm:$0xff] %v259
                %v261 = vld [vmem:[%s201 + $0x1a8] sm:$0xff]
                %262 = vst [vmem:[%s202 + $0xe8] sm:$0xff] %v261
                %v263 = vld [vmem:[%s201 + $0x1b0] sm:$0xff]
                %264 = vst [vmem:[%s202 + $0xf0] sm:$0xff] %v263
                %v265 = vld [vmem:[%s201 + $0x1b8] sm:$0xff]
                %266 = vst [vmem:[%s202 + $0xf8] sm:$0xff] %v265
                %v267 = vld [vmem:[%s201 + $0x200] sm:$0xff]
                %268 = vst [vmem:[%s202 + $0x100] sm:$0xff] %v267
                %v269 = vld [vmem:[%s201 + $0x208] sm:$0xff]
                %270 = vst [vmem:[%s202 + $0x108] sm:$0xff] %v269
                %v271 = vld [vmem:[%s201 + $0x210] sm:$0xff]
                %272 = vst [vmem:[%s202 + $0x110] sm:$0xff] %v271
                %v273 = vld [vmem:[%s201 + $0x218] sm:$0xff]
                %274 = vst [vmem:[%s202 + $0x118] sm:$0xff] %v273
                %v275 = vld [vmem:[%s201 + $0x220] sm:$0xff]
                %276 = vst [vmem:[%s202 + $0x120] sm:$0xff] %v275
                %v277 = vld [vmem:[%s201 + $0x228] sm:$0xff]
                %278 = vst [vmem:[%s202 + $0x128] sm:$0xff] %v277
                %v279 = vld [vmem:[%s201 + $0x230] sm:$0xff]
                %280 = vst [vmem:[%s202 + $0x130] sm:$0xff] %v279
                %v281 = vld [vmem:[%s201 + $0x238] sm:$0xff]
                %282 = vst [vmem:[%s202 + $0x138] sm:$0xff] %v281
                %v283 = vld [vmem:[%s201 + $0x280] sm:$0xff]
                %284 = vst [vmem:[%s202 + $0x140] sm:$0xff] %v283
                %v285 = vld [vmem:[%s201 + $0x288] sm:$0xff]
                %286 = vst [vmem:[%s202 + $0x148] sm:$0xff] %v285
                %v287 = vld [vmem:[%s201 + $0x290] sm:$0xff]
                %288 = vst [vmem:[%s202 + $0x150] sm:$0xff] %v287
                %v289 = vld [vmem:[%s201 + $0x298] sm:$0xff]
                %290 = vst [vmem:[%s202 + $0x158] sm:$0xff] %v289
                %v291 = vld [vmem:[%s201 + $0x2a0] sm:$0xff]
                %292 = vst [vmem:[%s202 + $0x160] sm:$0xff] %v291
                %v293 = vld [vmem:[%s201 + $0x2a8] sm:$0xff]
                %294 = vst [vmem:[%s202 + $0x168] sm:$0xff] %v293
                %v295 = vld [vmem:[%s201 + $0x2b0] sm:$0xff]
                %296 = vst [vmem:[%s202 + $0x170] sm:$0xff] %v295
                %v297 = vld [vmem:[%s201 + $0x2b8] sm:$0xff]
                %298 = vst [vmem:[%s202 + $0x178] sm:$0xff] %v297
                %v299 = vld [vmem:[%s201 + $0x300] sm:$0xff]
                %300 = vst [vmem:[%s202 + $0x180] sm:$0xff] %v299
                %v301 = vld [vmem:[%s201 + $0x308] sm:$0xff]
                %302 = vst [vmem:[%s202 + $0x188] sm:$0xff] %v301
                %v303 = vld [vmem:[%s201 + $0x310] sm:$0xff]
                %304 = vst [vmem:[%s202 + $0x190] sm:$0xff] %v303
                %v305 = vld [vmem:[%s201 + $0x318] sm:$0xff]
                %306 = vst [vmem:[%s202 + $0x198] sm:$0xff] %v305
                %v307 = vld [vmem:[%s201 + $0x320] sm:$0xff]
                %308 = vst [vmem:[%s202 + $0x1a0] sm:$0xff] %v307
                %v309 = vld [vmem:[%s201 + $0x328] sm:$0xff]
                %310 = vst [vmem:[%s202 + $0x1a8] sm:$0xff] %v309
                %v311 = vld [vmem:[%s201 + $0x330] sm:$0xff]
                %312 = vst [vmem:[%s202 + $0x1b0] sm:$0xff] %v311
                %v313 = vld [vmem:[%s201 + $0x338] sm:$0xff]
                %314 = vst [vmem:[%s202 + $0x1b8] sm:$0xff] %v313
                %v315 = vld [vmem:[%s201 + $0x380] sm:$0xff]
                %316 = vst [vmem:[%s202 + $0x1c0] sm:$0xff] %v315
                %v317 = vld [vmem:[%s201 + $0x388] sm:$0xff]
                %318 = vst [vmem:[%s202 + $0x1c8] sm:$0xff] %v317
                %v319 = vld [vmem:[%s201 + $0x390] sm:$0xff]
                %320 = vst [vmem:[%s202 + $0x1d0] sm:$0xff] %v319
                %v321 = vld [vmem:[%s201 + $0x398] sm:$0xff]
                %322 = vst [vmem:[%s202 + $0x1d8] sm:$0xff] %v321
                %v323 = vld [vmem:[%s201 + $0x3a0] sm:$0xff]
                %324 = vst [vmem:[%s202 + $0x1e0] sm:$0xff] %v323
                %v325 = vld [vmem:[%s201 + $0x3a8] sm:$0xff]
                %326 = vst [vmem:[%s202 + $0x1e8] sm:$0xff] %v325
                %v327 = vld [vmem:[%s201 + $0x3b0] sm:$0xff]
                %328 = vst [vmem:[%s202 + $0x1f0] sm:$0xff] %v327
                %v329 = vld [vmem:[%s201 + $0x3b8] sm:$0xff]
                %330 = vst [vmem:[%s202 + $0x1f8] sm:$0xff] %v329
              $region45: #{unet_g_hr_forward.5} parent=39 // loop_footer
                %s200 = sadd.s32 1, %s196
              $region46: #{unet_g_hr_forward.5} parent=39 // loop_footer_branch
                %195 = sbr.rel target = $region42
              $region47: #{unet_g_hr_forward.5} parent=39 // loop_exit
                _
            $region40: #{unet_g_hr_forward.5} parent=35 // pred_fallthru
              _
            // Predicated region
            $region48: #{unet_g_hr_forward.5} parent=35 // pred_check
              _
            $region49: #{unet_g_hr_forward.5} parent=35 // pred_check_branch
              %332 = sbr.rel target = $region51
            $region50: #{unet_g_hr_forward.5} parent=35 // pred_region
              _
            $region51: #{unet_g_hr_forward.5} parent=35 // pred_fallthru
              _
          $region36: #{unet_g_hr_forward.5} parent=31 // pred_fallthru
            _
          %333 = vnop
        $region32: #{unet_g_hr_forward.5} parent=27 // pred_fallthru
          _
      $region28: #{unet_g_hr_forward.5} parent=5 // pred_fallthru
        _
      %p334 = scmp.le.s32.totalorder 1, %s12
      %p335 = scmp.lt.s32.totalorder %s12, 3
      %p336 = pnand %p334, %p335
      %p337 = pneg %p336
      // Predicated region
      $region52: #{unet_g_hr_forward.5} parent=5 // pred_check
        _
      $region53: #{unet_g_hr_forward.5} parent=5 // pred_check_branch
        %339 = sbr.rel (%p336) target = $region55
      $region54: #{unet_g_hr_forward.5} parent=5 // pred_region
        %s340 = ssub.s32 %s12, 1
        %s341 = sand.u32 %s25, 1
        %s342 = sand.u32 %s25, 1
        %s343 = smul.addr %s342, 512
        %s344 = scalar_lea.vmem [#allocation2], %s343
        // Predicated region
        $region56: #{unet_g_hr_forward.5} parent=54 // pred_check
          %p345 = pneg %p38
        $region57: #{unet_g_hr_forward.5} parent=54 // pred_check_branch
          %347 = sbr.rel (%p345) target = $region59
        $region58: #{unet_g_hr_forward.5} parent=54 // pred_region
          _
        $region59: #{unet_g_hr_forward.5} parent=54 // pred_fallthru
          _
        %s348 = sand.u32 %s25, 1
        %s349 = sand.u32 %s25, 1
        %s350 = smul.addr %s349, 512
        %s351 = scalar_lea.vmem [#allocation2], %s350
        %p352 = pneg %p38
        %p353 = pneg %p35
        %p354 = pneg %p59
        %p355 = pneg %p56
        %p356 = pneg %p80
        %p357 = pneg %p77
        %p358 = pneg %p101
        %p359 = pneg %p98
        %p360 = pneg %p127
        %p361 = pneg %p124
        %s362 = smul.u32 16, %s17
        %p363 = scmp.lt.s32.totalorder %s362, 31
        %s364 = scalar_select %p363, %s362, 31
        %s365 = smul.addr %s364, 4
        %s366 = scalar_lea.vmem %s4, %s365
        %p367 = pneg %p153
        %p368 = pneg %p150
        %s369 = smul.u32 16, %s17
        %p370 = scmp.lt.s32.totalorder %s369, 31
        %s371 = scalar_select %p370, %s369, 31
        %s372 = scalar_lea.vmem %s5, %s371
        %s373 = smul.u32 16, %s17
        %s374 = smul.u32 16, %s17
        %p375 = scmp.lt.s32.totalorder %s374, 31
        %s376 = scalar_select %p375, %s374, 31
        %s377 = smul.addr %s376, 4
        %s378 = scalar_lea.vmem %s4, %s377
        %s379 = smul.u32 16, %s17
        %s380 = smul.u32 16, %s17
        %p381 = scmp.lt.s32.totalorder %s380, 31
        %s382 = scalar_select %p381, %s380, 31
        %s383 = scalar_lea.vmem %s5, %s382
        %s384 = smul.u32 16, %s17
        %v386 = vld [vmem:[%s344] sm:$0xff]
        %v387 = vld [vmem:[%s344 + $0x8] sm:$0xff]
        %v388 = vld [vmem:[%s344 + $0x10] sm:$0xff]
        %v389 = vld [vmem:[%s344 + $0x18] sm:$0xff]
        %v390 = vld [vmem:[%s344 + $0x20] sm:$0xff]
        %v391 = vld [vmem:[%s344 + $0x28] sm:$0xff]
        %v392 = vld [vmem:[%s344 + $0x30] sm:$0xff]
        %v393 = vld [vmem:[%s344 + $0x38] sm:$0xff]
        %v394 = vld [vmem:[%s344 + $0x40] sm:$0xff]
        %v395 = vld [vmem:[%s344 + $0x48] sm:$0xff]
        %v396 = vld [vmem:[%s344 + $0x50] sm:$0xff]
        %v397 = vld [vmem:[%s344 + $0x58] sm:$0xff]
        %v398 = vld [vmem:[%s344 + $0x60] sm:$0xff]
        %v399 = vld [vmem:[%s344 + $0x68] sm:$0xff]
        %v400 = vld [vmem:[%s344 + $0x70] sm:$0xff]
        %v401 = vld [vmem:[%s344 + $0x78] sm:$0xff]
        %v402 = vld [vmem:[%s344 + $0x80] sm:$0xff]
        %v403 = vld [vmem:[%s344 + $0x88] sm:$0xff]
        %v404 = vld [vmem:[%s344 + $0x90] sm:$0xff]
        %v405 = vld [vmem:[%s344 + $0x98] sm:$0xff]
        %v406 = vld [vmem:[%s344 + $0xa0] sm:$0xff]
        %v407 = vld [vmem:[%s344 + $0xa8] sm:$0xff]
        %v408 = vld [vmem:[%s344 + $0xb0] sm:$0xff]
        %v409 = vld [vmem:[%s344 + $0xb8] sm:$0xff]
        %v410 = vld [vmem:[%s344 + $0xc0] sm:$0xff]
        %v411 = vld [vmem:[%s344 + $0xc8] sm:$0xff]
        %v412 = vld [vmem:[%s344 + $0xd0] sm:$0xff]
        %v413 = vld [vmem:[%s344 + $0xd8] sm:$0xff]
        %v414 = vld [vmem:[%s344 + $0xe0] sm:$0xff]
        %v415 = vld [vmem:[%s344 + $0xe8] sm:$0xff]
        %v416 = vld [vmem:[%s344 + $0xf0] sm:$0xff]
        %v417 = vld [vmem:[%s344 + $0xf8] sm:$0xff]
        %v418 = vld [vmem:[%s344 + $0x100] sm:$0xff]
        %v419 = vld [vmem:[%s344 + $0x108] sm:$0xff]
        %v420 = vld [vmem:[%s344 + $0x110] sm:$0xff]
        %v421 = vld [vmem:[%s344 + $0x118] sm:$0xff]
        %v422 = vld [vmem:[%s344 + $0x120] sm:$0xff]
        %v423 = vld [vmem:[%s344 + $0x128] sm:$0xff]
        %v424 = vld [vmem:[%s344 + $0x130] sm:$0xff]
        %v425 = vld [vmem:[%s344 + $0x138] sm:$0xff]
        %v426 = vld [vmem:[%s344 + $0x140] sm:$0xff]
        %v427 = vld [vmem:[%s344 + $0x148] sm:$0xff]
        %v428 = vld [vmem:[%s344 + $0x150] sm:$0xff]
        %v429 = vld [vmem:[%s344 + $0x158] sm:$0xff]
        %v430 = vld [vmem:[%s344 + $0x160] sm:$0xff]
        %v431 = vld [vmem:[%s344 + $0x168] sm:$0xff]
        %v432 = vld [vmem:[%s344 + $0x170] sm:$0xff]
        %v433 = vld [vmem:[%s344 + $0x178] sm:$0xff]
        %v434 = vld [vmem:[%s344 + $0x180] sm:$0xff]
        %v435 = vld [vmem:[%s344 + $0x188] sm:$0xff]
        %v436 = vld [vmem:[%s344 + $0x190] sm:$0xff]
        %v437 = vld [vmem:[%s344 + $0x198] sm:$0xff]
        %v438 = vld [vmem:[%s344 + $0x1a0] sm:$0xff]
        %v439 = vld [vmem:[%s344 + $0x1a8] sm:$0xff]
        %v440 = vld [vmem:[%s344 + $0x1b0] sm:$0xff]
        %v441 = vld [vmem:[%s344 + $0x1b8] sm:$0xff]
        %v442 = vld [vmem:[%s344 + $0x1c0] sm:$0xff]
        %v443 = vld [vmem:[%s344 + $0x1c8] sm:$0xff]
        %v444 = vld [vmem:[%s344 + $0x1d0] sm:$0xff]
        %v445 = vld [vmem:[%s344 + $0x1d8] sm:$0xff]
        %v446 = vld [vmem:[%s344 + $0x1e0] sm:$0xff]
        %v447 = vld [vmem:[%s344 + $0x1e8] sm:$0xff]
        %v448 = vld [vmem:[%s344 + $0x1f0] sm:$0xff]
        %v449 = vld [vmem:[%s344 + $0x1f8] sm:$0xff]
        %v450 = vld [vmem:[%s1] sm:$0xf]
        %v451 = vld [vmem:[%s2] sm:$0xff]
        %453 = vset.pattern.permute.xlu0 0
        %454 = vperm.xlu0 %453, %v451
        %v455 = vpop.permute.xlu0 %454
        %v521 = vunpack.c.l.b16 %v386
        %v522 = vunpack.c.h.b16 %v386
        %v523 = vunpack.c.l.b16 %v387
        %v524 = vunpack.c.h.b16 %v387
        %v525 = vunpack.c.l.b16 %v388
        %v526 = vunpack.c.h.b16 %v388
        %v527 = vunpack.c.l.b16 %v389
        %v528 = vunpack.c.h.b16 %v389
        %v529 = vunpack.c.l.b16 %v390
        %v530 = vunpack.c.h.b16 %v390
        %v531 = vunpack.c.l.b16 %v391
        %v532 = vunpack.c.h.b16 %v391
        %v533 = vunpack.c.l.b16 %v392
        %v534 = vunpack.c.h.b16 %v392
        %v535 = vunpack.c.l.b16 %v393
        %v536 = vunpack.c.h.b16 %v393
        %v537 = vunpack.c.l.b16 %v394
        %v538 = vunpack.c.h.b16 %v394
        %v539 = vunpack.c.l.b16 %v395
        %v540 = vunpack.c.h.b16 %v395
        %v541 = vunpack.c.l.b16 %v396
        %v542 = vunpack.c.h.b16 %v396
        %v543 = vunpack.c.l.b16 %v397
        %v544 = vunpack.c.h.b16 %v397
        %v545 = vunpack.c.l.b16 %v398
        %v546 = vunpack.c.h.b16 %v398
        %v547 = vunpack.c.l.b16 %v399
        %v548 = vunpack.c.h.b16 %v399
        %v549 = vunpack.c.l.b16 %v400
        %v550 = vunpack.c.h.b16 %v400
        %v551 = vunpack.c.l.b16 %v401
        %v552 = vunpack.c.h.b16 %v401
        %v553 = vunpack.c.l.b16 %v402
        %v554 = vunpack.c.h.b16 %v402
        %v555 = vunpack.c.l.b16 %v403
        %v556 = vunpack.c.h.b16 %v403
        %v557 = vunpack.c.l.b16 %v404
        %v558 = vunpack.c.h.b16 %v404
        %v559 = vunpack.c.l.b16 %v405
        %v560 = vunpack.c.h.b16 %v405
        %v561 = vunpack.c.l.b16 %v406
        %v562 = vunpack.c.h.b16 %v406
        %v563 = vunpack.c.l.b16 %v407
        %v564 = vunpack.c.h.b16 %v407
        %v565 = vunpack.c.l.b16 %v408
        %v566 = vunpack.c.h.b16 %v408
        %v567 = vunpack.c.l.b16 %v409
        %v568 = vunpack.c.h.b16 %v409
        %v569 = vunpack.c.l.b16 %v410
        %v570 = vunpack.c.h.b16 %v410
        %v571 = vunpack.c.l.b16 %v411
        %v572 = vunpack.c.h.b16 %v411
        %v573 = vunpack.c.l.b16 %v412
        %v574 = vunpack.c.h.b16 %v412
        %v575 = vunpack.c.l.b16 %v413
        %v576 = vunpack.c.h.b16 %v413
        %v577 = vunpack.c.l.b16 %v414
        %v578 = vunpack.c.h.b16 %v414
        %v579 = vunpack.c.l.b16 %v415
        %v580 = vunpack.c.h.b16 %v415
        %v581 = vunpack.c.l.b16 %v416
        %v582 = vunpack.c.h.b16 %v416
        %v583 = vunpack.c.l.b16 %v417
        %v584 = vunpack.c.h.b16 %v417
        %v585 = vunpack.c.l.b16 %v418
        %v586 = vunpack.c.h.b16 %v418
        %v587 = vunpack.c.l.b16 %v419
        %v588 = vunpack.c.h.b16 %v419
        %v589 = vunpack.c.l.b16 %v420
        %v590 = vunpack.c.h.b16 %v420
        %v591 = vunpack.c.l.b16 %v421
        %v592 = vunpack.c.h.b16 %v421
        %v593 = vunpack.c.l.b16 %v422
        %v594 = vunpack.c.h.b16 %v422
        %v595 = vunpack.c.l.b16 %v423
        %v596 = vunpack.c.h.b16 %v423
        %v597 = vunpack.c.l.b16 %v424
        %v598 = vunpack.c.h.b16 %v424
        %v599 = vunpack.c.l.b16 %v425
        %v600 = vunpack.c.h.b16 %v425
        %v601 = vunpack.c.l.b16 %v426
        %v602 = vunpack.c.h.b16 %v426
        %v603 = vunpack.c.l.b16 %v427
        %v604 = vunpack.c.h.b16 %v427
        %v605 = vunpack.c.l.b16 %v428
        %v606 = vunpack.c.h.b16 %v428
        %v607 = vunpack.c.l.b16 %v429
        %v608 = vunpack.c.h.b16 %v429
        %v609 = vunpack.c.l.b16 %v430
        %v610 = vunpack.c.h.b16 %v430
        %v611 = vunpack.c.l.b16 %v431
        %v612 = vunpack.c.h.b16 %v431
        %v613 = vunpack.c.l.b16 %v432
        %v614 = vunpack.c.h.b16 %v432
        %v615 = vunpack.c.l.b16 %v433
        %v616 = vunpack.c.h.b16 %v433
        %v617 = vunpack.c.l.b16 %v434
        %v618 = vunpack.c.h.b16 %v434
        %v619 = vunpack.c.l.b16 %v435
        %v620 = vunpack.c.h.b16 %v435
        %v621 = vunpack.c.l.b16 %v436
        %v622 = vunpack.c.h.b16 %v436
        %v623 = vunpack.c.l.b16 %v437
        %v624 = vunpack.c.h.b16 %v437
        %v625 = vunpack.c.l.b16 %v438
        %v626 = vunpack.c.h.b16 %v438
        %v627 = vunpack.c.l.b16 %v439
        %v628 = vunpack.c.h.b16 %v439
        %v629 = vunpack.c.l.b16 %v440
        %v630 = vunpack.c.h.b16 %v440
        %v631 = vunpack.c.l.b16 %v441
        %v632 = vunpack.c.h.b16 %v441
        %v633 = vunpack.c.l.b16 %v442
        %v634 = vunpack.c.h.b16 %v442
        %v635 = vunpack.c.l.b16 %v443
        %v636 = vunpack.c.h.b16 %v443
        %v637 = vunpack.c.l.b16 %v444
        %v638 = vunpack.c.h.b16 %v444
        %v639 = vunpack.c.l.b16 %v445
        %v640 = vunpack.c.h.b16 %v445
        %v641 = vunpack.c.l.b16 %v446
        %v642 = vunpack.c.h.b16 %v446
        %v643 = vunpack.c.l.b16 %v447
        %v644 = vunpack.c.h.b16 %v447
        %v645 = vunpack.c.l.b16 %v448
        %v646 = vunpack.c.h.b16 %v448
        %v647 = vunpack.c.l.b16 %v449
        %v648 = vunpack.c.h.b16 %v449
        %v649 = vpack.c.b16 %v537, %v521
        %v650 = vpack.c.b16 %v538, %v522
        %v651 = vpack.c.b16 %v539, %v523
        %v652 = vpack.c.b16 %v540, %v524
        %v653 = vpack.c.b16 %v541, %v525
        %v654 = vpack.c.b16 %v542, %v526
        %v655 = vpack.c.b16 %v543, %v527
        %v656 = vpack.c.b16 %v544, %v528
        %v657 = vpack.c.b16 %v545, %v529
        %v658 = vpack.c.b16 %v546, %v530
        %v659 = vpack.c.b16 %v547, %v531
        %v660 = vpack.c.b16 %v548, %v532
        %v661 = vpack.c.b16 %v549, %v533
        %v662 = vpack.c.b16 %v550, %v534
        %v663 = vpack.c.b16 %v551, %v535
        %v664 = vpack.c.b16 %v552, %v536
        %v665 = vpack.c.b16 %v569, %v553
        %v666 = vpack.c.b16 %v570, %v554
        %v667 = vpack.c.b16 %v571, %v555
        %v668 = vpack.c.b16 %v572, %v556
        %v669 = vpack.c.b16 %v573, %v557
        %v670 = vpack.c.b16 %v574, %v558
        %v671 = vpack.c.b16 %v575, %v559
        %v672 = vpack.c.b16 %v576, %v560
        %v673 = vpack.c.b16 %v577, %v561
        %v674 = vpack.c.b16 %v578, %v562
        %v675 = vpack.c.b16 %v579, %v563
        %v676 = vpack.c.b16 %v580, %v564
        %v677 = vpack.c.b16 %v581, %v565
        %v678 = vpack.c.b16 %v582, %v566
        %v679 = vpack.c.b16 %v583, %v567
        %v680 = vpack.c.b16 %v584, %v568
        %v681 = vpack.c.b16 %v601, %v585
        %v682 = vpack.c.b16 %v602, %v586
        %v683 = vpack.c.b16 %v603, %v587
        %v684 = vpack.c.b16 %v604, %v588
        %v685 = vpack.c.b16 %v605, %v589
        %v686 = vpack.c.b16 %v606, %v590
        %v687 = vpack.c.b16 %v607, %v591
        %v688 = vpack.c.b16 %v608, %v592
        %v689 = vpack.c.b16 %v609, %v593
        %v690 = vpack.c.b16 %v610, %v594
        %v691 = vpack.c.b16 %v611, %v595
        %v692 = vpack.c.b16 %v612, %v596
        %v693 = vpack.c.b16 %v613, %v597
        %v694 = vpack.c.b16 %v614, %v598
        %v695 = vpack.c.b16 %v615, %v599
        %v696 = vpack.c.b16 %v616, %v600
        %v697 = vpack.c.b16 %v633, %v617
        %v698 = vpack.c.b16 %v634, %v618
        %v699 = vpack.c.b16 %v635, %v619
        %v700 = vpack.c.b16 %v636, %v620
        %v701 = vpack.c.b16 %v637, %v621
        %v702 = vpack.c.b16 %v638, %v622
        %v703 = vpack.c.b16 %v639, %v623
        %v704 = vpack.c.b16 %v640, %v624
        %v705 = vpack.c.b16 %v641, %v625
        %v706 = vpack.c.b16 %v642, %v626
        %v707 = vpack.c.b16 %v643, %v627
        %v708 = vpack.c.b16 %v644, %v628
        %v709 = vpack.c.b16 %v645, %v629
        %v710 = vpack.c.b16 %v646, %v630
        %v711 = vpack.c.b16 %v647, %v631
        %v712 = vpack.c.b16 %v648, %v632
        %vm777 = vcmask 523264
        %v779 = vsel %vm777, %v450, 0
        %781 = vmatprep.subr.bf16.mxu0 %v650
        %782 = vmatpush1.bf16.msra.mxu0 %v649
        %783 = vmatprep.subr.bf16.mxu0 %v666
        %784 = vmatpush1.bf16.msra.mxu0 %v665
        %785 = vmatprep.subr.bf16.mxu0 %v682
        %786 = vmatpush1.bf16.msra.mxu0 %v681
        %787 = vmatprep.subr.bf16.mxu0 %v698
        %788 = vmatpush1.bf16.msra.mxu0 %v697
        %789 = vmatprep.subr.bf16.mxu0 0
        %790 = vmatpush1.bf16.msra.mxu0 0
        %791 = vmatprep.subr.bf16.mxu0 0
        %792 = vmatpush1.bf16.msra.mxu0 0
        %793 = vmatprep.subr.bf16.mxu0 0
        %794 = vmatpush1.bf16.msra.mxu0 0
        %795 = vmatprep.subr.bf16.mxu0 0
        %796 = vmatpush1.bf16.msra.mxu0 0
        %797 = vmatprep.subr.bf16.mxu0 0
        %798 = vmatpush1.bf16.msra.mxu0 0
        %799 = vmatprep.subr.bf16.mxu0 0
        %800 = vmatpush1.bf16.msra.mxu0 0
        %801 = vmatprep.subr.bf16.mxu0 0
        %802 = vmatpush1.bf16.msra.mxu0 0
        %803 = vmatprep.subr.bf16.mxu0 0
        %804 = vmatpush1.bf16.msra.mxu0 0
        %805 = vmatprep.subr.bf16.mxu0 0
        %806 = vmatpush1.bf16.msra.mxu0 0
        %807 = vmatprep.subr.bf16.mxu0 0
        %808 = vmatpush1.bf16.msra.mxu0 0
        %809 = vmatprep.subr.bf16.mxu0 0
        %810 = vmatpush1.bf16.msra.mxu0 0
        %811 = vmatprep.subr.bf16.mxu0 0
        %812 = vmatpush1.bf16.msra.mxu0 0
        %813 = vmatprep.mubr.bf16.mxu0 0
        %814 = vmatmul.mubr.bf16.gmra.mrb[0].mxu0 %v779
        %v815 = vpop.f32.mrb[0].mxu0
        %v816 = vadd.f32 %v455, %v815
        %v817 = vpop.f32.mrb[0].mxu0
        %v818 = vadd.f32 %v455, %v817
        %v819 = vpop.f32.mrb[0].mxu0
        %v820 = vpop.f32.mrb[0].mxu0
        %821 = vdwg.mxu0
        %822 = vmatprep.subr.bf16.mxu0 %v652
        %823 = vmatpush1.bf16.msra.mxu0 %v651
        %824 = vmatprep.subr.bf16.mxu0 %v668
        %825 = vmatpush1.bf16.msra.mxu0 %v667
        %826 = vmatprep.subr.bf16.mxu0 %v684
        %827 = vmatpush1.bf16.msra.mxu0 %v683
        %828 = vmatprep.subr.bf16.mxu0 %v700
        %829 = vmatpush1.bf16.msra.mxu0 %v699
        %830 = vmatprep.subr.bf16.mxu0 0
        %831 = vmatpush1.bf16.msra.mxu0 0
        %832 = vmatprep.subr.bf16.mxu0 0
        %833 = vmatpush1.bf16.msra.mxu0 0
        %834 = vmatprep.subr.bf16.mxu0 0
        %835 = vmatpush1.bf16.msra.mxu0 0
        %836 = vmatprep.subr.bf16.mxu0 0
        %837 = vmatpush1.bf16.msra.mxu0 0
        %838 = vmatprep.subr.bf16.mxu0 0
        %839 = vmatpush1.bf16.msra.mxu0 0
        %840 = vmatprep.subr.bf16.mxu0 0
        %841 = vmatpush1.bf16.msra.mxu0 0
        %842 = vmatprep.subr.bf16.mxu0 0
        %843 = vmatpush1.bf16.msra.mxu0 0
        %844 = vmatprep.subr.bf16.mxu0 0
        %845 = vmatpush1.bf16.msra.mxu0 0
        %846 = vmatprep.subr.bf16.mxu0 0
        %847 = vmatpush1.bf16.msra.mxu0 0
        %848 = vmatprep.subr.bf16.mxu0 0
        %849 = vmatpush1.bf16.msra.mxu0 0
        %850 = vmatprep.subr.bf16.mxu0 0
        %851 = vmatpush1.bf16.msra.mxu0 0
        %852 = vmatprep.subr.bf16.mxu0 0
        %853 = vmatpush1.bf16.msra.mxu0 0
        %854 = vmatprep.mubr.bf16.mxu0 0
        %855 = vmatmul.mubr.bf16.gmra.mrb[0].mxu0 %v779
        %v856 = vpop.f32.mrb[0].mxu0
        %v857 = vadd.f32 %v455, %v856
        %v858 = vpop.f32.mrb[0].mxu0
        %v859 = vadd.f32 %v455, %v858
        %v860 = vpop.f32.mrb[0].mxu0
        %v861 = vpop.f32.mrb[0].mxu0
        %862 = vdwg.mxu0
        %863 = vmatprep.subr.bf16.mxu0 %v654
        %864 = vmatpush1.bf16.msra.mxu0 %v653
        %865 = vmatprep.subr.bf16.mxu0 %v670
        %866 = vmatpush1.bf16.msra.mxu0 %v669
        %867 = vmatprep.subr.bf16.mxu0 %v686
        %868 = vmatpush1.bf16.msra.mxu0 %v685
        %869 = vmatprep.subr.bf16.mxu0 %v702
        %870 = vmatpush1.bf16.msra.mxu0 %v701
        %871 = vmatprep.subr.bf16.mxu0 0
        %872 = vmatpush1.bf16.msra.mxu0 0
        %873 = vmatprep.subr.bf16.mxu0 0
        %874 = vmatpush1.bf16.msra.mxu0 0
        %875 = vmatprep.subr.bf16.mxu0 0
        %876 = vmatpush1.bf16.msra.mxu0 0
        %877 = vmatprep.subr.bf16.mxu0 0
        %878 = vmatpush1.bf16.msra.mxu0 0
        %879 = vmatprep.subr.bf16.mxu0 0
        %880 = vmatpush1.bf16.msra.mxu0 0
        %881 = vmatprep.subr.bf16.mxu0 0
        %882 = vmatpush1.bf16.msra.mxu0 0
        %883 = vmatprep.subr.bf16.mxu0 0
        %884 = vmatpush1.bf16.msra.mxu0 0
        %885 = vmatprep.subr.bf16.mxu0 0
        %886 = vmatpush1.bf16.msra.mxu0 0
        %887 = vmatprep.subr.bf16.mxu0 0
        %888 = vmatpush1.bf16.msra.mxu0 0
        %889 = vmatprep.subr.bf16.mxu0 0
        %890 = vmatpush1.bf16.msra.mxu0 0
        %891 = vmatprep.subr.bf16.mxu0 0
        %892 = vmatpush1.bf16.msra.mxu0 0
        %893 = vmatprep.subr.bf16.mxu0 0
        %894 = vmatpush1.bf16.msra.mxu0 0
        %895 = vmatprep.mubr.bf16.mxu0 0
        %896 = vmatmul.mubr.bf16.gmra.mrb[0].mxu0 %v779
        %v897 = vpop.f32.mrb[0].mxu0
        %v898 = vadd.f32 %v455, %v897
        %v899 = vpop.f32.mrb[0].mxu0
        %v900 = vadd.f32 %v455, %v899
        %v901 = vpop.f32.mrb[0].mxu0
        %v902 = vpop.f32.mrb[0].mxu0
        %903 = vdwg.mxu0
        %904 = vmatprep.subr.bf16.mxu0 %v656
        %905 = vmatpush1.bf16.msra.mxu0 %v655
        %906 = vmatprep.subr.bf16.mxu0 %v672
        %907 = vmatpush1.bf16.msra.mxu0 %v671
        %908 = vmatprep.subr.bf16.mxu0 %v688
        %909 = vmatpush1.bf16.msra.mxu0 %v687
        %910 = vmatprep.subr.bf16.mxu0 %v704
        %911 = vmatpush1.bf16.msra.mxu0 %v703
        %912 = vmatprep.subr.bf16.mxu0 0
        %913 = vmatpush1.bf16.msra.mxu0 0
        %914 = vmatprep.subr.bf16.mxu0 0
        %915 = vmatpush1.bf16.msra.mxu0 0
        %916 = vmatprep.subr.bf16.mxu0 0
        %917 = vmatpush1.bf16.msra.mxu0 0
        %918 = vmatprep.subr.bf16.mxu0 0
        %919 = vmatpush1.bf16.msra.mxu0 0
        %920 = vmatprep.subr.bf16.mxu0 0
        %921 = vmatpush1.bf16.msra.mxu0 0
        %922 = vmatprep.subr.bf16.mxu0 0
        %923 = vmatpush1.bf16.msra.mxu0 0
        %924 = vmatprep.subr.bf16.mxu0 0
        %925 = vmatpush1.bf16.msra.mxu0 0
        %926 = vmatprep.subr.bf16.mxu0 0
        %927 = vmatpush1.bf16.msra.mxu0 0
        %928 = vmatprep.subr.bf16.mxu0 0
        %929 = vmatpush1.bf16.msra.mxu0 0
        %930 = vmatprep.subr.bf16.mxu0 0
        %931 = vmatpush1.bf16.msra.mxu0 0
        %932 = vmatprep.subr.bf16.mxu0 0
        %933 = vmatpush1.bf16.msra.mxu0 0
        %934 = vmatprep.subr.bf16.mxu0 0
        %935 = vmatpush1.bf16.msra.mxu0 0
        %936 = vmatprep.mubr.bf16.mxu0 0
        %937 = vmatmul.mubr.bf16.gmra.mrb[0].mxu0 %v779
        %v938 = vpop.f32.mrb[0].mxu0
        %v939 = vadd.f32 %v455, %v938
        %v940 = vpop.f32.mrb[0].mxu0
        %v941 = vadd.f32 %v455, %v940
        %v942 = vpop.f32.mrb[0].mxu0
        %v943 = vpop.f32.mrb[0].mxu0
        %944 = vdwg.mxu0
        %945 = vmatprep.subr.bf16.mxu0 %v658
        %946 = vmatpush1.bf16.msra.mxu0 %v657
        %947 = vmatprep.subr.bf16.mxu0 %v674
        %948 = vmatpush1.bf16.msra.mxu0 %v673
        %949 = vmatprep.subr.bf16.mxu0 %v690
        %950 = vmatpush1.bf16.msra.mxu0 %v689
        %951 = vmatprep.subr.bf16.mxu0 %v706
        %952 = vmatpush1.bf16.msra.mxu0 %v705
        %953 = vmatprep.subr.bf16.mxu0 0
        %954 = vmatpush1.bf16.msra.mxu0 0
        %955 = vmatprep.subr.bf16.mxu0 0
        %956 = vmatpush1.bf16.msra.mxu0 0
        %957 = vmatprep.subr.bf16.mxu0 0
        %958 = vmatpush1.bf16.msra.mxu0 0
        %959 = vmatprep.subr.bf16.mxu0 0
        %960 = vmatpush1.bf16.msra.mxu0 0
        %961 = vmatprep.subr.bf16.mxu0 0
        %962 = vmatpush1.bf16.msra.mxu0 0
        %963 = vmatprep.subr.bf16.mxu0 0
        %964 = vmatpush1.bf16.msra.mxu0 0
        %965 = vmatprep.subr.bf16.mxu0 0
        %966 = vmatpush1.bf16.msra.mxu0 0
        %967 = vmatprep.subr.bf16.mxu0 0
        %968 = vmatpush1.bf16.msra.mxu0 0
        %969 = vmatprep.subr.bf16.mxu0 0
        %970 = vmatpush1.bf16.msra.mxu0 0
        %971 = vmatprep.subr.bf16.mxu0 0
        %972 = vmatpush1.bf16.msra.mxu0 0
        %973 = vmatprep.subr.bf16.mxu0 0
        %974 = vmatpush1.bf16.msra.mxu0 0
        %975 = vmatprep.subr.bf16.mxu0 0
        %976 = vmatpush1.bf16.msra.mxu0 0
        %977 = vmatprep.mubr.bf16.mxu0 0
        %978 = vmatmul.mubr.bf16.gmra.mrb[0].mxu0 %v779
        %v979 = vpop.f32.mrb[0].mxu0
        %v980 = vadd.f32 %v455, %v979
        %v981 = vpop.f32.mrb[0].mxu0
        %v982 = vadd.f32 %v455, %v981
        %v983 = vpop.f32.mrb[0].mxu0
        %v984 = vpop.f32.mrb[0].mxu0
        %985 = vdwg.mxu0
        %986 = vmatprep.subr.bf16.mxu0 %v660
        %987 = vmatpush1.bf16.msra.mxu0 %v659
        %988 = vmatprep.subr.bf16.mxu0 %v676
        %989 = vmatpush1.bf16.msra.mxu0 %v675
        %990 = vmatprep.subr.bf16.mxu0 %v692
        %991 = vmatpush1.bf16.msra.mxu0 %v691
        %992 = vmatprep.subr.bf16.mxu0 %v708
        %993 = vmatpush1.bf16.msra.mxu0 %v707
        %994 = vmatprep.subr.bf16.mxu0 0
        %995 = vmatpush1.bf16.msra.mxu0 0
        %996 = vmatprep.subr.bf16.mxu0 0
        %997 = vmatpush1.bf16.msra.mxu0 0
        %998 = vmatprep.subr.bf16.mxu0 0
        %999 = vmatpush1.bf16.msra.mxu0 0
        %1000 = vmatprep.subr.bf16.mxu0 0
        %1001 = vmatpush1.bf16.msra.mxu0 0
        %1002 = vmatprep.subr.bf16.mxu0 0
        %1003 = vmatpush1.bf16.msra.mxu0 0
        %1004 = vmatprep.subr.bf16.mxu0 0
        %1005 = vmatpush1.bf16.msra.mxu0 0
        %1006 = vmatprep.subr.bf16.mxu0 0
        %1007 = vmatpush1.bf16.msra.mxu0 0
        %1008 = vmatprep.subr.bf16.mxu0 0
        %1009 = vmatpush1.bf16.msra.mxu0 0
        %1010 = vmatprep.subr.bf16.mxu0 0
        %1011 = vmatpush1.bf16.msra.mxu0 0
        %1012 = vmatprep.subr.bf16.mxu0 0
        %1013 = vmatpush1.bf16.msra.mxu0 0
        %1014 = vmatprep.subr.bf16.mxu0 0
        %1015 = vmatpush1.bf16.msra.mxu0 0
        %1016 = vmatprep.subr.bf16.mxu0 0
        %1017 = vmatpush1.bf16.msra.mxu0 0
        %1018 = vmatprep.mubr.bf16.mxu0 0
        %1019 = vmatmul.mubr.bf16.gmra.mrb[0].mxu0 %v779
        %v1020 = vpop.f32.mrb[0].mxu0
        %v1021 = vadd.f32 %v455, %v1020
        %v1022 = vpop.f32.mrb[0].mxu0
        %v1023 = vadd.f32 %v455, %v1022
        %v1024 = vpop.f32.mrb[0].mxu0
        %v1025 = vpop.f32.mrb[0].mxu0
        %1026 = vdwg.mxu0
        %1027 = vmatprep.subr.bf16.mxu0 %v662
        %1028 = vmatpush1.bf16.msra.mxu0 %v661
        %1029 = vmatprep.subr.bf16.mxu0 %v678
        %1030 = vmatpush1.bf16.msra.mxu0 %v677
        %1031 = vmatprep.subr.bf16.mxu0 %v694
        %1032 = vmatpush1.bf16.msra.mxu0 %v693
        %1033 = vmatprep.subr.bf16.mxu0 %v710
        %1034 = vmatpush1.bf16.msra.mxu0 %v709
        %1035 = vmatprep.subr.bf16.mxu0 0
        %1036 = vmatpush1.bf16.msra.mxu0 0
        %1037 = vmatprep.subr.bf16.mxu0 0
        %1038 = vmatpush1.bf16.msra.mxu0 0
        %1039 = vmatprep.subr.bf16.mxu0 0
        %1040 = vmatpush1.bf16.msra.mxu0 0
        %1041 = vmatprep.subr.bf16.mxu0 0
        %1042 = vmatpush1.bf16.msra.mxu0 0
        %1043 = vmatprep.subr.bf16.mxu0 0
        %1044 = vmatpush1.bf16.msra.mxu0 0
        %1045 = vmatprep.subr.bf16.mxu0 0
        %1046 = vmatpush1.bf16.msra.mxu0 0
        %1047 = vmatprep.subr.bf16.mxu0 0
        %1048 = vmatpush1.bf16.msra.mxu0 0
        %1049 = vmatprep.subr.bf16.mxu0 0
        %1050 = vmatpush1.bf16.msra.mxu0 0
        %1051 = vmatprep.subr.bf16.mxu0 0
        %1052 = vmatpush1.bf16.msra.mxu0 0
        %1053 = vmatprep.subr.bf16.mxu0 0
        %1054 = vmatpush1.bf16.msra.mxu0 0
        %1055 = vmatprep.subr.bf16.mxu0 0
        %1056 = vmatpush1.bf16.msra.mxu0 0
        %1057 = vmatprep.subr.bf16.mxu0 0
        %1058 = vmatpush1.bf16.msra.mxu0 0
        %1059 = vmatprep.mubr.bf16.mxu0 0
        %1060 = vmatmul.mubr.bf16.gmra.mrb[0].mxu0 %v779
        %v1061 = vpop.f32.mrb[0].mxu0
        %v1062 = vadd.f32 %v455, %v1061
        %v1063 = vpop.f32.mrb[0].mxu0
        %v1064 = vadd.f32 %v455, %v1063
        %v1065 = vpop.f32.mrb[0].mxu0
        %v1066 = vpop.f32.mrb[0].mxu0
        %1067 = vdwg.mxu0
        %1068 = vmatprep.subr.bf16.mxu0 %v664
        %1069 = vmatpush1.bf16.msra.mxu0 %v663
        %1070 = vmatprep.subr.bf16.mxu0 %v680
        %1071 = vmatpush1.bf16.msra.mxu0 %v679
        %1072 = vmatprep.subr.bf16.mxu0 %v696
        %1073 = vmatpush1.bf16.msra.mxu0 %v695
        %1074 = vmatprep.subr.bf16.mxu0 %v712
        %1075 = vmatpush1.bf16.msra.mxu0 %v711
        %1076 = vmatprep.subr.bf16.mxu0 0
        %1077 = vmatpush1.bf16.msra.mxu0 0
        %1078 = vmatprep.subr.bf16.mxu0 0
        %1079 = vmatpush1.bf16.msra.mxu0 0
        %1080 = vmatprep.subr.bf16.mxu0 0
        %1081 = vmatpush1.bf16.msra.mxu0 0
        %1082 = vmatprep.subr.bf16.mxu0 0
        %1083 = vmatpush1.bf16.msra.mxu0 0
        %1084 = vmatprep.subr.bf16.mxu0 0
        %1085 = vmatpush1.bf16.msra.mxu0 0
        %1086 = vmatprep.subr.bf16.mxu0 0
        %1087 = vmatpush1.bf16.msra.mxu0 0
        %1088 = vmatprep.subr.bf16.mxu0 0
        %1089 = vmatpush1.bf16.msra.mxu0 0
        %1090 = vmatprep.subr.bf16.mxu0 0
        %1091 = vmatpush1.bf16.msra.mxu0 0
        %1092 = vmatprep.subr.bf16.mxu0 0
        %1093 = vmatpush1.bf16.msra.mxu0 0
        %1094 = vmatprep.subr.bf16.mxu0 0
        %1095 = vmatpush1.bf16.msra.mxu0 0
        %1096 = vmatprep.subr.bf16.mxu0 0
        %1097 = vmatpush1.bf16.msra.mxu0 0
        %1098 = vmatprep.subr.bf16.mxu0 0
        %1099 = vmatpush1.bf16.msra.mxu0 0
        %1100 = vmatprep.mubr.bf16.mxu0 0
        %1101 = vmatmul.mubr.bf16.gmra.mrb[0].mxu0 %v779
        %v1102 = vpop.f32.mrb[0].mxu0
        %v1103 = vadd.f32 %v455, %v1102
        %v1104 = vpop.f32.mrb[0].mxu0
        %v1105 = vadd.f32 %v455, %v1104
        %v1106 = vpop.f32.mrb[0].mxu0
        %v1107 = vpop.f32.mrb[0].mxu0
        %1108 = vdwg.mxu0
        %v1109 = vpack.c.bf16 %v816, %v816
        %v1110 = vpack.c.bf16 %v818, %v818
        %v1111 = vpack.c.bf16 %v857, %v857
        %v1112 = vpack.c.bf16 %v859, %v859
        %v1113 = vpack.c.bf16 %v898, %v898
        %v1114 = vpack.c.bf16 %v900, %v900
        %v1115 = vpack.c.bf16 %v939, %v939
        %v1116 = vpack.c.bf16 %v941, %v941
        %v1117 = vpack.c.bf16 %v980, %v980
        %v1118 = vpack.c.bf16 %v982, %v982
        %v1119 = vpack.c.bf16 %v1021, %v1021
        %v1120 = vpack.c.bf16 %v1023, %v1023
        %v1121 = vpack.c.bf16 %v1062, %v1062
        %v1122 = vpack.c.bf16 %v1064, %v1064
        %v1123 = vpack.c.bf16 %v1103, %v1103
        %v1124 = vpack.c.bf16 %v1105, %v1105
        %v1141 = vunpack.c.l.b16 %v1109
        %v1142 = vunpack.c.l.b16 %v1110
        %v1143 = vunpack.c.l.b16 %v1111
        %v1144 = vunpack.c.l.b16 %v1112
        %v1145 = vunpack.c.l.b16 %v1113
        %v1146 = vunpack.c.l.b16 %v1114
        %v1147 = vunpack.c.l.b16 %v1115
        %v1148 = vunpack.c.l.b16 %v1116
        %v1149 = vunpack.c.l.b16 %v1117
        %v1150 = vunpack.c.l.b16 %v1118
        %v1151 = vunpack.c.l.b16 %v1119
        %v1152 = vunpack.c.l.b16 %v1120
        %v1153 = vunpack.c.l.b16 %v1121
        %v1154 = vunpack.c.l.b16 %v1122
        %v1155 = vunpack.c.l.b16 %v1123
        %v1156 = vunpack.c.l.b16 %v1124
        %v1157 = vpack.c.b16 %v1142, %v1141
        %v1158 = vpack.c.b16 %v1144, %v1143
        %v1159 = vpack.c.b16 %v1146, %v1145
        %v1160 = vpack.c.b16 %v1148, %v1147
        %v1161 = vpack.c.b16 %v1150, %v1149
        %v1162 = vpack.c.b16 %v1152, %v1151
        %v1163 = vpack.c.b16 %v1154, %v1153
        %v1164 = vpack.c.b16 %v1156, %v1155
        %1173 = vst [vmem:[%s378] sm:$0xff] %v1157
        %1174 = vst [vmem:[%s378 + $0x8] sm:$0xff] %v1158
        %1175 = vst [vmem:[%s378 + $0x10] sm:$0xff] %v1159
        %1176 = vst [vmem:[%s378 + $0x18] sm:$0xff] %v1160
        %1177 = vst [vmem:[%s378 + $0x20] sm:$0xff] %v1161
        %1178 = vst [vmem:[%s378 + $0x28] sm:$0xff] %v1162
        %1179 = vst [vmem:[%s378 + $0x30] sm:$0xff] %v1163
        %1180 = vst [vmem:[%s378 + $0x38] sm:$0xff] %v1164
        %v1181 = vld [vmem:[%s3] sm:$0x1]
        %v1182 = vmax.f32 %v816, 0.0
        %v1183 = vmax.f32 %v818, 0.0
        %v1184 = vmax.f32 %v857, 0.0
        %v1185 = vmax.f32 %v859, 0.0
        %v1186 = vmax.f32 %v898, 0.0
        %v1187 = vmax.f32 %v900, 0.0
        %v1188 = vmax.f32 %v939, 0.0
        %v1189 = vmax.f32 %v941, 0.0
        %v1190 = vmax.f32 %v980, 0.0
        %v1191 = vmax.f32 %v982, 0.0
        %v1192 = vmax.f32 %v1021, 0.0
        %v1193 = vmax.f32 %v1023, 0.0
        %v1194 = vmax.f32 %v1062, 0.0
        %v1195 = vmax.f32 %v1064, 0.0
        %v1196 = vmax.f32 %v1103, 0.0
        %v1197 = vmax.f32 %v1105, 0.0
        %v1198 = vpack.c.bf16 %v1182, %v1182
        %v1199 = vpack.c.bf16 %v1183, %v1183
        %v1200 = vpack.c.bf16 %v1184, %v1184
        %v1201 = vpack.c.bf16 %v1185, %v1185
        %v1202 = vpack.c.bf16 %v1186, %v1186
        %v1203 = vpack.c.bf16 %v1187, %v1187
        %v1204 = vpack.c.bf16 %v1188, %v1188
        %v1205 = vpack.c.bf16 %v1189, %v1189
        %v1206 = vpack.c.bf16 %v1190, %v1190
        %v1207 = vpack.c.bf16 %v1191, %v1191
        %v1208 = vpack.c.bf16 %v1192, %v1192
        %v1209 = vpack.c.bf16 %v1193, %v1193
        %v1210 = vpack.c.bf16 %v1194, %v1194
        %v1211 = vpack.c.bf16 %v1195, %v1195
        %v1212 = vpack.c.bf16 %v1196, %v1196
        %v1213 = vpack.c.bf16 %v1197, %v1197
        %vm1214 = vcmask 64512
        %v1216 = vsel %vm1214, %v1181, 0
        %vm1218 = vcmask 1043456
        %v1220 = vsel %vm1218, %v1198, 0
        %v1223 = vsel %vm1218, %v1199, 0
        %v1226 = vsel %vm1218, %v1200, 0
        %v1229 = vsel %vm1218, %v1201, 0
        %v1232 = vsel %vm1218, %v1202, 0
        %v1235 = vsel %vm1218, %v1203, 0
        %v1238 = vsel %vm1218, %v1204, 0
        %v1241 = vsel %vm1218, %v1205, 0
        %v1244 = vsel %vm1218, %v1206, 0
        %v1247 = vsel %vm1218, %v1207, 0
        %v1250 = vsel %vm1218, %v1208, 0
        %v1253 = vsel %vm1218, %v1209, 0
        %v1256 = vsel %vm1218, %v1210, 0
        %v1259 = vsel %vm1218, %v1211, 0
        %v1262 = vsel %vm1218, %v1212, 0
        %v1265 = vsel %vm1218, %v1213, 0
        %1267 = vmatprep.subr.bf16.mxu0 %v1223
        %1268 = vmatpush1.bf16.msra.mxu0 %v1220
        %1269 = vmatprep.subr.bf16.mxu0 0
        %1270 = vmatpush1.bf16.msra.mxu0 0
        %1271 = vmatprep.subr.bf16.mxu0 0
        %1272 = vmatpush1.bf16.msra.mxu0 0
        %1273 = vmatprep.subr.bf16.mxu0 0
        %1274 = vmatpush1.bf16.msra.mxu0 0
        %1275 = vmatprep.subr.bf16.mxu0 0
        %1276 = vmatpush1.bf16.msra.mxu0 0
        %1277 = vmatprep.subr.bf16.mxu0 0
        %1278 = vmatpush1.bf16.msra.mxu0 0
        %1279 = vmatprep.subr.bf16.mxu0 0
        %1280 = vmatpush1.bf16.msra.mxu0 0
        %1281 = vmatprep.subr.bf16.mxu0 0
        %1282 = vmatpush1.bf16.msra.mxu0 0
        %1283 = vmatprep.subr.bf16.mxu0 0
        %1284 = vmatpush1.bf16.msra.mxu0 0
        %1285 = vmatprep.subr.bf16.mxu0 0
        %1286 = vmatpush1.bf16.msra.mxu0 0
        %1287 = vmatprep.subr.bf16.mxu0 0
        %1288 = vmatpush1.bf16.msra.mxu0 0
        %1289 = vmatprep.subr.bf16.mxu0 0
        %1290 = vmatpush1.bf16.msra.mxu0 0
        %1291 = vmatprep.subr.bf16.mxu0 0
        %1292 = vmatpush1.bf16.msra.mxu0 0
        %1293 = vmatprep.subr.bf16.mxu0 0
        %1294 = vmatpush1.bf16.msra.mxu0 0
        %1295 = vmatprep.subr.bf16.mxu0 0
        %1296 = vmatpush1.bf16.msra.mxu0 0
        %1297 = vmatprep.subr.bf16.mxu0 0
        %1298 = vmatpush1.bf16.msra.mxu0 0
        %1299 = vmatprep.mubr.bf16.mxu0 0
        %1300 = vmatmul.mubr.bf16.gmra.mrb[0].mxu0 %v1216
        %v1301 = vpop.f32.mrb[0].mxu0
        %v1302 = vadd.f32 0.0, %v1301
        %v1303 = vpop.f32.mrb[0].mxu0
        %v1304 = vadd.f32 0.0, %v1303
        %v1305 = vpop.f32.mrb[0].mxu0
        %v1306 = vpop.f32.mrb[0].mxu0
        %1307 = vdwg.mxu0
        %1308 = vmatprep.subr.bf16.mxu0 %v1229
        %1309 = vmatpush1.bf16.msra.mxu0 %v1226
        %1310 = vmatprep.subr.bf16.mxu0 0
        %1311 = vmatpush1.bf16.msra.mxu0 0
        %1312 = vmatprep.subr.bf16.mxu0 0
        %1313 = vmatpush1.bf16.msra.mxu0 0
        %1314 = vmatprep.subr.bf16.mxu0 0
        %1315 = vmatpush1.bf16.msra.mxu0 0
        %1316 = vmatprep.subr.bf16.mxu0 0
        %1317 = vmatpush1.bf16.msra.mxu0 0
        %1318 = vmatprep.subr.bf16.mxu0 0
        %1319 = vmatpush1.bf16.msra.mxu0 0
        %1320 = vmatprep.subr.bf16.mxu0 0
        %1321 = vmatpush1.bf16.msra.mxu0 0
        %1322 = vmatprep.subr.bf16.mxu0 0
        %1323 = vmatpush1.bf16.msra.mxu0 0
        %1324 = vmatprep.subr.bf16.mxu0 0
        %1325 = vmatpush1.bf16.msra.mxu0 0
        %1326 = vmatprep.subr.bf16.mxu0 0
        %1327 = vmatpush1.bf16.msra.mxu0 0
        %1328 = vmatprep.subr.bf16.mxu0 0
        %1329 = vmatpush1.bf16.msra.mxu0 0
        %1330 = vmatprep.subr.bf16.mxu0 0
        %1331 = vmatpush1.bf16.msra.mxu0 0
        %1332 = vmatprep.subr.bf16.mxu0 0
        %1333 = vmatpush1.bf16.msra.mxu0 0
        %1334 = vmatprep.subr.bf16.mxu0 0
        %1335 = vmatpush1.bf16.msra.mxu0 0
        %1336 = vmatprep.subr.bf16.mxu0 0
        %1337 = vmatpush1.bf16.msra.mxu0 0
        %1338 = vmatprep.subr.bf16.mxu0 0
        %1339 = vmatpush1.bf16.msra.mxu0 0
        %1340 = vmatprep.mubr.bf16.mxu0 0
        %1341 = vmatmul.mubr.bf16.gmra.mrb[0].mxu0 %v1216
        %v1342 = vpop.f32.mrb[0].mxu0
        %v1343 = vadd.f32 0.0, %v1342
        %v1344 = vpop.f32.mrb[0].mxu0
        %v1345 = vadd.f32 0.0, %v1344
        %v1346 = vpop.f32.mrb[0].mxu0
        %v1347 = vpop.f32.mrb[0].mxu0
        %1348 = vdwg.mxu0
        %1349 = vmatprep.subr.bf16.mxu0 %v1235
        %1350 = vmatpush1.bf16.msra.mxu0 %v1232
        %1351 = vmatprep.subr.bf16.mxu0 0
        %1352 = vmatpush1.bf16.msra.mxu0 0
        %1353 = vmatprep.subr.bf16.mxu0 0
        %1354 = vmatpush1.bf16.msra.mxu0 0
        %1355 = vmatprep.subr.bf16.mxu0 0
        %1356 = vmatpush1.bf16.msra.mxu0 0
        %1357 = vmatprep.subr.bf16.mxu0 0
        %1358 = vmatpush1.bf16.msra.mxu0 0
        %1359 = vmatprep.subr.bf16.mxu0 0
        %1360 = vmatpush1.bf16.msra.mxu0 0
        %1361 = vmatprep.subr.bf16.mxu0 0
        %1362 = vmatpush1.bf16.msra.mxu0 0
        %1363 = vmatprep.subr.bf16.mxu0 0
        %1364 = vmatpush1.bf16.msra.mxu0 0
        %1365 = vmatprep.subr.bf16.mxu0 0
        %1366 = vmatpush1.bf16.msra.mxu0 0
        %1367 = vmatprep.subr.bf16.mxu0 0
        %1368 = vmatpush1.bf16.msra.mxu0 0
        %1369 = vmatprep.subr.bf16.mxu0 0
        %1370 = vmatpush1.bf16.msra.mxu0 0
        %1371 = vmatprep.subr.bf16.mxu0 0
        %1372 = vmatpush1.bf16.msra.mxu0 0
        %1373 = vmatprep.subr.bf16.mxu0 0
        %1374 = vmatpush1.bf16.msra.mxu0 0
        %1375 = vmatprep.subr.bf16.mxu0 0
        %1376 = vmatpush1.bf16.msra.mxu0 0
        %1377 = vmatprep.subr.bf16.mxu0 0
        %1378 = vmatpush1.bf16.msra.mxu0 0
        %1379 = vmatprep.subr.bf16.mxu0 0
        %1380 = vmatpush1.bf16.msra.mxu0 0
        %1381 = vmatprep.mubr.bf16.mxu0 0
        %1382 = vmatmul.mubr.bf16.gmra.mrb[0].mxu0 %v1216
        %v1383 = vpop.f32.mrb[0].mxu0
        %v1384 = vadd.f32 0.0, %v1383
        %v1385 = vpop.f32.mrb[0].mxu0
        %v1386 = vadd.f32 0.0, %v1385
        %v1387 = vpop.f32.mrb[0].mxu0
        %v1388 = vpop.f32.mrb[0].mxu0
        %1389 = vdwg.mxu0
        %1390 = vmatprep.subr.bf16.mxu0 %v1241
        %1391 = vmatpush1.bf16.msra.mxu0 %v1238
        %1392 = vmatprep.subr.bf16.mxu0 0
        %1393 = vmatpush1.bf16.msra.mxu0 0
        %1394 = vmatprep.subr.bf16.mxu0 0
        %1395 = vmatpush1.bf16.msra.mxu0 0
        %1396 = vmatprep.subr.bf16.mxu0 0
        %1397 = vmatpush1.bf16.msra.mxu0 0
        %1398 = vmatprep.subr.bf16.mxu0 0
        %1399 = vmatpush1.bf16.msra.mxu0 0
        %1400 = vmatprep.subr.bf16.mxu0 0
        %1401 = vmatpush1.bf16.msra.mxu0 0
        %1402 = vmatprep.subr.bf16.mxu0 0
        %1403 = vmatpush1.bf16.msra.mxu0 0
        %1404 = vmatprep.subr.bf16.mxu0 0
        %1405 = vmatpush1.bf16.msra.mxu0 0
        %1406 = vmatprep.subr.bf16.mxu0 0
        %1407 = vmatpush1.bf16.msra.mxu0 0
        %1408 = vmatprep.subr.bf16.mxu0 0
        %1409 = vmatpush1.bf16.msra.mxu0 0
        %1410 = vmatprep.subr.bf16.mxu0 0
        %1411 = vmatpush1.bf16.msra.mxu0 0
        %1412 = vmatprep.subr.bf16.mxu0 0
        %1413 = vmatpush1.bf16.msra.mxu0 0
        %1414 = vmatprep.subr.bf16.mxu0 0
        %1415 = vmatpush1.bf16.msra.mxu0 0
        %1416 = vmatprep.subr.bf16.mxu0 0
        %1417 = vmatpush1.bf16.msra.mxu0 0
        %1418 = vmatprep.subr.bf16.mxu0 0
        %1419 = vmatpush1.bf16.msra.mxu0 0
        %1420 = vmatprep.subr.bf16.mxu0 0
        %1421 = vmatpush1.bf16.msra.mxu0 0
        %1422 = vmatprep.mubr.bf16.mxu0 0
        %1423 = vmatmul.mubr.bf16.gmra.mrb[0].mxu0 %v1216
        %v1424 = vpop.f32.mrb[0].mxu0
        %v1425 = vadd.f32 0.0, %v1424
        %v1426 = vpop.f32.mrb[0].mxu0
        %v1427 = vadd.f32 0.0, %v1426
        %v1428 = vpop.f32.mrb[0].mxu0
        %v1429 = vpop.f32.mrb[0].mxu0
        %1430 = vdwg.mxu0
        %1431 = vmatprep.subr.bf16.mxu0 %v1247
        %1432 = vmatpush1.bf16.msra.mxu0 %v1244
        %1433 = vmatprep.subr.bf16.mxu0 0
        %1434 = vmatpush1.bf16.msra.mxu0 0
        %1435 = vmatprep.subr.bf16.mxu0 0
        %1436 = vmatpush1.bf16.msra.mxu0 0
        %1437 = vmatprep.subr.bf16.mxu0 0
        %1438 = vmatpush1.bf16.msra.mxu0 0
        %1439 = vmatprep.subr.bf16.mxu0 0
        %1440 = vmatpush1.bf16.msra.mxu0 0
        %1441 = vmatprep.subr.bf16.mxu0 0
        %1442 = vmatpush1.bf16.msra.mxu0 0
        %1443 = vmatprep.subr.bf16.mxu0 0
        %1444 = vmatpush1.bf16.msra.mxu0 0
        %1445 = vmatprep.subr.bf16.mxu0 0
        %1446 = vmatpush1.bf16.msra.mxu0 0
        %1447 = vmatprep.subr.bf16.mxu0 0
        %1448 = vmatpush1.bf16.msra.mxu0 0
        %1449 = vmatprep.subr.bf16.mxu0 0
        %1450 = vmatpush1.bf16.msra.mxu0 0
        %1451 = vmatprep.subr.bf16.mxu0 0
        %1452 = vmatpush1.bf16.msra.mxu0 0
        %1453 = vmatprep.subr.bf16.mxu0 0
        %1454 = vmatpush1.bf16.msra.mxu0 0
        %1455 = vmatprep.subr.bf16.mxu0 0
        %1456 = vmatpush1.bf16.msra.mxu0 0
        %1457 = vmatprep.subr.bf16.mxu0 0
        %1458 = vmatpush1.bf16.msra.mxu0 0
        %1459 = vmatprep.subr.bf16.mxu0 0
        %1460 = vmatpush1.bf16.msra.mxu0 0
        %1461 = vmatprep.subr.bf16.mxu0 0
        %1462 = vmatpush1.bf16.msra.mxu0 0
        %1463 = vmatprep.mubr.bf16.mxu0 0
        %1464 = vmatmul.mubr.bf16.gmra.mrb[0].mxu0 %v1216
        %v1465 = vpop.f32.mrb[0].mxu0
        %v1466 = vadd.f32 0.0, %v1465
        %v1467 = vpop.f32.mrb[0].mxu0
        %v1468 = vadd.f32 0.0, %v1467
        %v1469 = vpop.f32.mrb[0].mxu0
        %v1470 = vpop.f32.mrb[0].mxu0
        %1471 = vdwg.mxu0
        %1472 = vmatprep.subr.bf16.mxu0 %v1253
        %1473 = vmatpush1.bf16.msra.mxu0 %v1250
        %1474 = vmatprep.subr.bf16.mxu0 0
        %1475 = vmatpush1.bf16.msra.mxu0 0
        %1476 = vmatprep.subr.bf16.mxu0 0
        %1477 = vmatpush1.bf16.msra.mxu0 0
        %1478 = vmatprep.subr.bf16.mxu0 0
        %1479 = vmatpush1.bf16.msra.mxu0 0
        %1480 = vmatprep.subr.bf16.mxu0 0
        %1481 = vmatpush1.bf16.msra.mxu0 0
        %1482 = vmatprep.subr.bf16.mxu0 0
        %1483 = vmatpush1.bf16.msra.mxu0 0
        %1484 = vmatprep.subr.bf16.mxu0 0
        %1485 = vmatpush1.bf16.msra.mxu0 0
        %1486 = vmatprep.subr.bf16.mxu0 0
        %1487 = vmatpush1.bf16.msra.mxu0 0
        %1488 = vmatprep.subr.bf16.mxu0 0
        %1489 = vmatpush1.bf16.msra.mxu0 0
        %1490 = vmatprep.subr.bf16.mxu0 0
        %1491 = vmatpush1.bf16.msra.mxu0 0
        %1492 = vmatprep.subr.bf16.mxu0 0
        %1493 = vmatpush1.bf16.msra.mxu0 0
        %1494 = vmatprep.subr.bf16.mxu0 0
        %1495 = vmatpush1.bf16.msra.mxu0 0
        %1496 = vmatprep.subr.bf16.mxu0 0
        %1497 = vmatpush1.bf16.msra.mxu0 0
        %1498 = vmatprep.subr.bf16.mxu0 0
        %1499 = vmatpush1.bf16.msra.mxu0 0
        %1500 = vmatprep.subr.bf16.mxu0 0
        %1501 = vmatpush1.bf16.msra.mxu0 0
        %1502 = vmatprep.subr.bf16.mxu0 0
        %1503 = vmatpush1.bf16.msra.mxu0 0
        %1504 = vmatprep.mubr.bf16.mxu0 0
        %1505 = vmatmul.mubr.bf16.gmra.mrb[0].mxu0 %v1216
        %v1506 = vpop.f32.mrb[0].mxu0
        %v1507 = vadd.f32 0.0, %v1506
        %v1508 = vpop.f32.mrb[0].mxu0
        %v1509 = vadd.f32 0.0, %v1508
        %v1510 = vpop.f32.mrb[0].mxu0
        %v1511 = vpop.f32.mrb[0].mxu0
        %1512 = vdwg.mxu0
        %1513 = vmatprep.subr.bf16.mxu0 %v1259
        %1514 = vmatpush1.bf16.msra.mxu0 %v1256
        %1515 = vmatprep.subr.bf16.mxu0 0
        %1516 = vmatpush1.bf16.msra.mxu0 0
        %1517 = vmatprep.subr.bf16.mxu0 0
        %1518 = vmatpush1.bf16.msra.mxu0 0
        %1519 = vmatprep.subr.bf16.mxu0 0
        %1520 = vmatpush1.bf16.msra.mxu0 0
        %1521 = vmatprep.subr.bf16.mxu0 0
        %1522 = vmatpush1.bf16.msra.mxu0 0
        %1523 = vmatprep.subr.bf16.mxu0 0
        %1524 = vmatpush1.bf16.msra.mxu0 0
        %1525 = vmatprep.subr.bf16.mxu0 0
        %1526 = vmatpush1.bf16.msra.mxu0 0
        %1527 = vmatprep.subr.bf16.mxu0 0
        %1528 = vmatpush1.bf16.msra.mxu0 0
        %1529 = vmatprep.subr.bf16.mxu0 0
        %1530 = vmatpush1.bf16.msra.mxu0 0
        %1531 = vmatprep.subr.bf16.mxu0 0
        %1532 = vmatpush1.bf16.msra.mxu0 0
        %1533 = vmatprep.subr.bf16.mxu0 0
        %1534 = vmatpush1.bf16.msra.mxu0 0
        %1535 = vmatprep.subr.bf16.mxu0 0
        %1536 = vmatpush1.bf16.msra.mxu0 0
        %1537 = vmatprep.subr.bf16.mxu0 0
        %1538 = vmatpush1.bf16.msra.mxu0 0
        %1539 = vmatprep.subr.bf16.mxu0 0
        %1540 = vmatpush1.bf16.msra.mxu0 0
        %1541 = vmatprep.subr.bf16.mxu0 0
        %1542 = vmatpush1.bf16.msra.mxu0 0
        %1543 = vmatprep.subr.bf16.mxu0 0
        %1544 = vmatpush1.bf16.msra.mxu0 0
        %1545 = vmatprep.mubr.bf16.mxu0 0
        %1546 = vmatmul.mubr.bf16.gmra.mrb[0].mxu0 %v1216
        %v1547 = vpop.f32.mrb[0].mxu0
        %v1548 = vadd.f32 0.0, %v1547
        %v1549 = vpop.f32.mrb[0].mxu0
        %v1550 = vadd.f32 0.0, %v1549
        %v1551 = vpop.f32.mrb[0].mxu0
        %v1552 = vpop.f32.mrb[0].mxu0
        %1553 = vdwg.mxu0
        %1554 = vmatprep.subr.bf16.mxu0 %v1265
        %1555 = vmatpush1.bf16.msra.mxu0 %v1262
        %1556 = vmatprep.subr.bf16.mxu0 0
        %1557 = vmatpush1.bf16.msra.mxu0 0
        %1558 = vmatprep.subr.bf16.mxu0 0
        %1559 = vmatpush1.bf16.msra.mxu0 0
        %1560 = vmatprep.subr.bf16.mxu0 0
        %1561 = vmatpush1.bf16.msra.mxu0 0
        %1562 = vmatprep.subr.bf16.mxu0 0
        %1563 = vmatpush1.bf16.msra.mxu0 0
        %1564 = vmatprep.subr.bf16.mxu0 0
        %1565 = vmatpush1.bf16.msra.mxu0 0
        %1566 = vmatprep.subr.bf16.mxu0 0
        %1567 = vmatpush1.bf16.msra.mxu0 0
        %1568 = vmatprep.subr.bf16.mxu0 0
        %1569 = vmatpush1.bf16.msra.mxu0 0
        %1570 = vmatprep.subr.bf16.mxu0 0
        %1571 = vmatpush1.bf16.msra.mxu0 0
        %1572 = vmatprep.subr.bf16.mxu0 0
        %1573 = vmatpush1.bf16.msra.mxu0 0
        %1574 = vmatprep.subr.bf16.mxu0 0
        %1575 = vmatpush1.bf16.msra.mxu0 0
        %1576 = vmatprep.subr.bf16.mxu0 0
        %1577 = vmatpush1.bf16.msra.mxu0 0
        %1578 = vmatprep.subr.bf16.mxu0 0
        %1579 = vmatpush1.bf16.msra.mxu0 0
        %1580 = vmatprep.subr.bf16.mxu0 0
        %1581 = vmatpush1.bf16.msra.mxu0 0
        %1582 = vmatprep.subr.bf16.mxu0 0
        %1583 = vmatpush1.bf16.msra.mxu0 0
        %1584 = vmatprep.subr.bf16.mxu0 0
        %1585 = vmatpush1.bf16.msra.mxu0 0
        %1586 = vmatprep.mubr.bf16.mxu0 0
        %1587 = vmatmul.mubr.bf16.gmra.mrb[0].mxu0 %v1216
        %v1588 = vpop.f32.mrb[0].mxu0
        %v1589 = vadd.f32 0.0, %v1588
        %v1590 = vpop.f32.mrb[0].mxu0
        %v1591 = vadd.f32 0.0, %v1590
        %v1592 = vpop.f32.mrb[0].mxu0
        %v1593 = vpop.f32.mrb[0].mxu0
        %1594 = vdwg.mxu0
        %v1611 = vcombine.low %v1302, %v1304
        %v1612 = vcombine.low %v1343, %v1345
        %v1613 = vcombine.low %v1384, %v1386
        %v1614 = vcombine.low %v1425, %v1427
        %v1616 = vunpack.c.l.s4 1966171168
        %v1617 = vunpack.c.0.s8 %v1616
        %v1618 = vlaneseq
        %v1619 = vshrl.u32 %v1618, 7
        %v1620 = vsub.s32 %v1617, %v1619
        %v1621 = vrot.slane %v1611, %v1620
        %v1623 = vunpack.c.l.s4 1966171168
        %v1624 = vunpack.c.0.s8 %v1623
        %v1625 = vlaneseq
        %v1626 = vshrl.u32 %v1625, 7
        %v1627 = vsub.s32 %v1624, %v1626
        %v1628 = vrot.slane %v1612, %v1627
        %v1630 = vunpack.c.l.s4 1966171168
        %v1631 = vunpack.c.0.s8 %v1630
        %v1632 = vlaneseq
        %v1633 = vshrl.u32 %v1632, 7
        %v1634 = vsub.s32 %v1631, %v1633
        %v1635 = vrot.slane %v1613, %v1634
        %v1637 = vunpack.c.l.s4 1966171168
        %v1638 = vunpack.c.0.s8 %v1637
        %v1639 = vlaneseq
        %v1640 = vshrl.u32 %v1639, 7
        %v1641 = vsub.s32 %v1638, %v1640
        %v1642 = vrot.slane %v1614, %v1641
        %v1643 = vcombine.low %v1621, %v1628
        %v1644 = vcombine.low %v1635, %v1642
        %v1646 = vunpack.c.l.s4 1966171168
        %v1647 = vunpack.c.0.s8 %v1646
        %v1648 = vlaneseq
        %v1649 = vshrl.u32 %v1648, 7
        %v1650 = vsub.s32 %v1647, %v1649
        %v1651 = vrot.slane %v1643, %v1650
        %v1653 = vunpack.c.l.s4 1966171168
        %v1654 = vunpack.c.0.s8 %v1653
        %v1655 = vlaneseq
        %v1656 = vshrl.u32 %v1655, 7
        %v1657 = vsub.s32 %v1654, %v1656
        %v1658 = vrot.slane %v1644, %v1657
        %v1659 = vcombine.low %v1651, %v1658
        %v1660 = vcombine.low %v1466, %v1468
        %v1661 = vcombine.low %v1507, %v1509
        %v1662 = vcombine.low %v1548, %v1550
        %v1663 = vcombine.low %v1589, %v1591
        %v1665 = vunpack.c.l.s4 1966171168
        %v1666 = vunpack.c.0.s8 %v1665
        %v1667 = vlaneseq
        %v1668 = vshrl.u32 %v1667, 7
        %v1669 = vsub.s32 %v1666, %v1668
        %v1670 = vrot.slane %v1660, %v1669
        %v1672 = vunpack.c.l.s4 1966171168
        %v1673 = vunpack.c.0.s8 %v1672
        %v1674 = vlaneseq
        %v1675 = vshrl.u32 %v1674, 7
        %v1676 = vsub.s32 %v1673, %v1675
        %v1677 = vrot.slane %v1661, %v1676
        %v1679 = vunpack.c.l.s4 1966171168
        %v1680 = vunpack.c.0.s8 %v1679
        %v1681 = vlaneseq
        %v1682 = vshrl.u32 %v1681, 7
        %v1683 = vsub.s32 %v1680, %v1682
        %v1684 = vrot.slane %v1662, %v1683
        %v1686 = vunpack.c.l.s4 1966171168
        %v1687 = vunpack.c.0.s8 %v1686
        %v1688 = vlaneseq
        %v1689 = vshrl.u32 %v1688, 7
        %v1690 = vsub.s32 %v1687, %v1689
        %v1691 = vrot.slane %v1663, %v1690
        %v1692 = vcombine.low %v1670, %v1677
        %v1693 = vcombine.low %v1684, %v1691
        %v1695 = vunpack.c.l.s4 1966171168
        %v1696 = vunpack.c.0.s8 %v1695
        %v1697 = vlaneseq
        %v1698 = vshrl.u32 %v1697, 7
        %v1699 = vsub.s32 %v1696, %v1698
        %v1700 = vrot.slane %v1692, %v1699
        %v1702 = vunpack.c.l.s4 1966171168
        %v1703 = vunpack.c.0.s8 %v1702
        %v1704 = vlaneseq
        %v1705 = vshrl.u32 %v1704, 7
        %v1706 = vsub.s32 %v1703, %v1705
        %v1707 = vrot.slane %v1693, %v1706
        %v1708 = vcombine.low %v1700, %v1707
        %1711 = vst [vmem:[%s383] sm:$0xff] %v1659
        %1712 = vst [vmem:[%s383 + $0x8] sm:$0xff] %v1708
        %s1713 = smul.u32 16, %s17
        %p1714 = scmp.lt.s32.totalorder %s1713, 31
        %s1715 = scalar_select %p1714, %s1713, 31
        %s1716 = smul.addr %s1715, 4
        %s1717 = scalar_lea.vmem %s4, %s1716
        %s1718 = smul.u32 16, %s17
        %p1719 = scmp.lt.s32.totalorder %s1718, 31
        %s1720 = scalar_select %p1719, %s1718, 31
        %s1721 = scalar_lea.vmem %s5, %s1720
        // Predicated region
        $region60: #{unet_g_hr_forward.5} parent=54 // pred_check
          %p1722 = pneg %p124
        $region61: #{unet_g_hr_forward.5} parent=54 // pred_check_branch
          %1724 = sbr.rel (%p1722) target = $region63
        $region62: #{unet_g_hr_forward.5} parent=54 // pred_region
          %s1725 = smul.u32 16, %s17
        $region63: #{unet_g_hr_forward.5} parent=54 // pred_fallthru
          _
        // Predicated region
        $region64: #{unet_g_hr_forward.5} parent=54 // pred_check
          %p1726 = pneg %p150
        $region65: #{unet_g_hr_forward.5} parent=54 // pred_check_branch
          %1728 = sbr.rel (%p1726) target = $region67
        $region66: #{unet_g_hr_forward.5} parent=54 // pred_region
          %s1729 = smul.u32 16, %s17
        $region67: #{unet_g_hr_forward.5} parent=54 // pred_fallthru
          _
      $region55: #{unet_g_hr_forward.5} parent=5 // pred_fallthru
        _
      %p1730 = scmp.le.s32.totalorder 2, %s12
      // Predicated region
      $region68: #{unet_g_hr_forward.5} parent=5 // pred_check
        %p1731 = pneg %p1730
      $region69: #{unet_g_hr_forward.5} parent=5 // pred_check_branch
        %1733 = sbr.rel (%p1731) target = $region71
      $region70: #{unet_g_hr_forward.5} parent=5 // pred_region
        %s1734 = ssub.s32 %s12, 2
        // Predicated region
        $region72: #{unet_g_hr_forward.5} parent=70 // pred_check
          %p1735 = pneg %p130
        $region73: #{unet_g_hr_forward.5} parent=70 // pred_check_branch
          %1737 = sbr.rel (%p1735) target = $region75
        $region74: #{unet_g_hr_forward.5} parent=70 // pred_region
          %s1738 = smul.u32 16, %s18
          %p1739 = scmp.lt.s32.totalorder %s1738, 31
          %s1740 = scalar_select %p1739, %s1738, 31
          %s1741 = smul.addr %s1740, 4
          %s1742 = scalar_lea.vmem %s4, %s1741
        $region75: #{unet_g_hr_forward.5} parent=70 // pred_fallthru
          _
        // Predicated region
        $region76: #{unet_g_hr_forward.5} parent=70 // pred_check
          %p1743 = pneg %p156
        $region77: #{unet_g_hr_forward.5} parent=70 // pred_check_branch
          %1745 = sbr.rel (%p1743) target = $region79
        $region78: #{unet_g_hr_forward.5} parent=70 // pred_region
          %s1746 = smul.u32 16, %s18
          %p1747 = scmp.lt.s32.totalorder %s1746, 31
          %s1748 = scalar_select %p1747, %s1746, 31
          %s1749 = scalar_lea.vmem %s5, %s1748
        $region79: #{unet_g_hr_forward.5} parent=70 // pred_fallthru
          _
      $region71: #{unet_g_hr_forward.5} parent=5 // pred_fallthru
        _
    $region6: #{unet_g_hr_forward.5} parent=1 // loop_footer
      %s16 = sadd.s32 1, %s12
    $region7: #{unet_g_hr_forward.5} parent=1 // loop_footer_branch
      %11 = sbr.rel target = $region3
    $region8: #{unet_g_hr_forward.5} parent=1 // loop_exit
      _

// kernel: unet_g_hr_forward.6
$region0: #{unet_g_hr_forward.6}
  #allocation0 [shape = 'u32[]', space=smem, size = 0x4, offset = 0x4, fixed_abs, tag = 'smem constant byte address 0x4 - core index']
  #allocation1 [shape = 'u32[144,128]{1,0:T(1,128)}', space=vmem, size = 0x12000, scoped, tag = 'internal scratch']
  %s0 = inlined_call_operand.vmem [shape: bf16[512,512], index: 0, kind: input, shape index: {}]
  %s1 = inlined_call_operand.vmem [shape: bf16[16,512], index: 1, kind: input, shape index: {}]
  %s2 = inlined_call_operand.vmem [shape: f32[16,1], index: 2, kind: input, shape index: {}]
  %s3 = inlined_call_operand.vmem [shape: bf16[16,512], index: 3, kind: output, shape index: {}]
  %s4 = sld [smem:[#allocation0]]
  $region22: #{unet_g_hr_forward.6} parent=0
    _
  %s6 = ssub.s32 1, %s4
  %s7 = scalar_select 0, %s6, %s4
  // Predicated region
  $region2: #{unet_g_hr_forward.6} parent=0 // pred_check
    _
  $region3: #{unet_g_hr_forward.6} parent=0 // pred_check_branch
    %9 = sbr.rel (0) target = $region5
  $region4: #{unet_g_hr_forward.6} parent=0 // pred_region
    _
  $region5: #{unet_g_hr_forward.6} parent=0 // pred_fallthru
    _
  // Predicated region
  $region6: #{unet_g_hr_forward.6} parent=0 // pred_check
    _
  $region7: #{unet_g_hr_forward.6} parent=0 // pred_check_branch
    %11 = sbr.rel (0) target = $region9
  $region8: #{unet_g_hr_forward.6} parent=0 // pred_region
    _
  $region9: #{unet_g_hr_forward.6} parent=0 // pred_fallthru
    _
  // Predicated region
  $region10: #{unet_g_hr_forward.6} parent=0 // pred_check
    _
  $region11: #{unet_g_hr_forward.6} parent=0 // pred_check_branch
    %13 = sbr.rel (0) target = $region13
  $region12: #{unet_g_hr_forward.6} parent=0 // pred_region
    _
  $region13: #{unet_g_hr_forward.6} parent=0 // pred_fallthru
    _
  %v14 = vld [vmem:[%s0] sm:$0xff]
  %v15 = vld [vmem:[%s0 + $0x8] sm:$0xff]
  %v16 = vld [vmem:[%s0 + $0x10] sm:$0xff]
  %v17 = vld [vmem:[%s0 + $0x18] sm:$0xff]
  %v18 = vld [vmem:[%s0 + $0x20] sm:$0xff]
  %v19 = vld [vmem:[%s0 + $0x28] sm:$0xff]
  %v20 = vld [vmem:[%s0 + $0x30] sm:$0xff]
  %v21 = vld [vmem:[%s0 + $0x38] sm:$0xff]
  %v22 = vld [vmem:[%s0 + $0x40] sm:$0xff]
  %v23 = vld [vmem:[%s0 + $0x48] sm:$0xff]
  %v24 = vld [vmem:[%s0 + $0x50] sm:$0xff]
  %v25 = vld [vmem:[%s0 + $0x58] sm:$0xff]
  %v26 = vld [vmem:[%s0 + $0x60] sm:$0xff]
  %v27 = vld [vmem:[%s0 + $0x68] sm:$0xff]
  %v28 = vld [vmem:[%s0 + $0x70] sm:$0xff]
  %v29 = vld [vmem:[%s0 + $0x78] sm:$0xff]
  %v30 = vld [vmem:[%s0 + $0x80] sm:$0xff]
  %v31 = vld [vmem:[%s0 + $0x88] sm:$0xff]
  %v32 = vld [vmem:[%s0 + $0x90] sm:$0xff]
  %v33 = vld [vmem:[%s0 + $0x98] sm:$0xff]
  %v34 = vld [vmem:[%s0 + $0xa0] sm:$0xff]
  %v35 = vld [vmem:[%s0 + $0xa8] sm:$0xff]
  %v36 = vld [vmem:[%s0 + $0xb0] sm:$0xff]
  %v37 = vld [vmem:[%s0 + $0xb8] sm:$0xff]
  %v38 = vld [vmem:[%s0 + $0xc0] sm:$0xff]
  %v39 = vld [vmem:[%s0 + $0xc8] sm:$0xff]
  %v40 = vld [vmem:[%s0 + $0xd0] sm:$0xff]
  %v41 = vld [vmem:[%s0 + $0xd8] sm:$0xff]
  %v42 = vld [vmem:[%s0 + $0xe0] sm:$0xff]
  %v43 = vld [vmem:[%s0 + $0xe8] sm:$0xff]
  %v44 = vld [vmem:[%s0 + $0xf0] sm:$0xff]
  %v45 = vld [vmem:[%s0 + $0xf8] sm:$0xff]
  %v46 = vld [vmem:[%s0 + $0x100] sm:$0xff]
  %v47 = vld [vmem:[%s0 + $0x108] sm:$0xff]
  %v48 = vld [vmem:[%s0 + $0x110] sm:$0xff]
  %v49 = vld [vmem:[%s0 + $0x118] sm:$0xff]
  %v50 = vld [vmem:[%s0 + $0x120] sm:$0xff]
  %v51 = vld [vmem:[%s0 + $0x128] sm:$0xff]
  %v52 = vld [vmem:[%s0 + $0x130] sm:$0xff]
  %v53 = vld [vmem:[%s0 + $0x138] sm:$0xff]
  %v54 = vld [vmem:[%s0 + $0x140] sm:$0xff]
  %v55 = vld [vmem:[%s0 + $0x148] sm:$0xff]
  %v56 = vld [vmem:[%s0 + $0x150] sm:$0xff]
  %v57 = vld [vmem:[%s0 + $0x158] sm:$0xff]
  %v58 = vld [vmem:[%s0 + $0x160] sm:$0xff]
  %v59 = vld [vmem:[%s0 + $0x168] sm:$0xff]
  %v60 = vld [vmem:[%s0 + $0x170] sm:$0xff]
  %v61 = vld [vmem:[%s0 + $0x178] sm:$0xff]
  %v62 = vld [vmem:[%s0 + $0x180] sm:$0xff]
  %v63 = vld [vmem:[%s0 + $0x188] sm:$0xff]
  %v64 = vld [vmem:[%s0 + $0x190] sm:$0xff]
  %v65 = vld [vmem:[%s0 + $0x198] sm:$0xff]
  %v66 = vld [vmem:[%s0 + $0x1a0] sm:$0xff]
  %v67 = vld [vmem:[%s0 + $0x1a8] sm:$0xff]
  %v68 = vld [vmem:[%s0 + $0x1b0] sm:$0xff]
  %v69 = vld [vmem:[%s0 + $0x1b8] sm:$0xff]
  %v70 = vld [vmem:[%s0 + $0x1c0] sm:$0xff]
  %v71 = vld [vmem:[%s0 + $0x1c8] sm:$0xff]
  %v72 = vld [vmem:[%s0 + $0x1d0] sm:$0xff]
  %v73 = vld [vmem:[%s0 + $0x1d8] sm:$0xff]
  %v74 = vld [vmem:[%s0 + $0x1e0] sm:$0xff]
  %v75 = vld [vmem:[%s0 + $0x1e8] sm:$0xff]
  %v76 = vld [vmem:[%s0 + $0x1f0] sm:$0xff]
  %v77 = vld [vmem:[%s0 + $0x1f8] sm:$0xff]
  %v78 = vld [vmem:[%s0 + $0x200] sm:$0xff]
  %v79 = vld [vmem:[%s0 + $0x208] sm:$0xff]
  %v80 = vld [vmem:[%s0 + $0x210] sm:$0xff]
  %v81 = vld [vmem:[%s0 + $0x218] sm:$0xff]
  %v82 = vld [vmem:[%s0 + $0x220] sm:$0xff]
  %v83 = vld [vmem:[%s0 + $0x228] sm:$0xff]
  %v84 = vld [vmem:[%s0 + $0x230] sm:$0xff]
  %v85 = vld [vmem:[%s0 + $0x238] sm:$0xff]
  %v86 = vld [vmem:[%s0 + $0x240] sm:$0xff]
  %v87 = vld [vmem:[%s0 + $0x248] sm:$0xff]
  %v88 = vld [vmem:[%s0 + $0x250] sm:$0xff]
  %v89 = vld [vmem:[%s0 + $0x258] sm:$0xff]
  %v90 = vld [vmem:[%s0 + $0x260] sm:$0xff]
  %v91 = vld [vmem:[%s0 + $0x268] sm:$0xff]
  %v92 = vld [vmem:[%s0 + $0x270] sm:$0xff]
  %v93 = vld [vmem:[%s0 + $0x278] sm:$0xff]
  %v94 = vld [vmem:[%s0 + $0x280] sm:$0xff]
  %v95 = vld [vmem:[%s0 + $0x288] sm:$0xff]
  %v96 = vld [vmem:[%s0 + $0x290] sm:$0xff]
  %v97 = vld [vmem:[%s0 + $0x298] sm:$0xff]
  %v98 = vld [vmem:[%s0 + $0x2a0] sm:$0xff]
  %v99 = vld [vmem:[%s0 + $0x2a8] sm:$0xff]
  %v100 = vld [vmem:[%s0 + $0x2b0] sm:$0xff]
  %v101 = vld [vmem:[%s0 + $0x2b8] sm:$0xff]
  %v102 = vld [vmem:[%s0 + $0x2c0] sm:$0xff]
  %v103 = vld [vmem:[%s0 + $0x2c8] sm:$0xff]
  %v104 = vld [vmem:[%s0 + $0x2d0] sm:$0xff]
  %v105 = vld [vmem:[%s0 + $0x2d8] sm:$0xff]
  %v106 = vld [vmem:[%s0 + $0x2e0] sm:$0xff]
  %v107 = vld [vmem:[%s0 + $0x2e8] sm:$0xff]
  %v108 = vld [vmem:[%s0 + $0x2f0] sm:$0xff]
  %v109 = vld [vmem:[%s0 + $0x2f8] sm:$0xff]
  %v110 = vld [vmem:[%s0 + $0x300] sm:$0xff]
  %v111 = vld [vmem:[%s0 + $0x308] sm:$0xff]
  %v112 = vld [vmem:[%s0 + $0x310] sm:$0xff]
  %v113 = vld [vmem:[%s0 + $0x318] sm:$0xff]
  %v114 = vld [vmem:[%s0 + $0x320] sm:$0xff]
  %v115 = vld [vmem:[%s0 + $0x328] sm:$0xff]
  %v116 = vld [vmem:[%s0 + $0x330] sm:$0xff]
  %v117 = vld [vmem:[%s0 + $0x338] sm:$0xff]
  %v118 = vld [vmem:[%s0 + $0x340] sm:$0xff]
  %v119 = vld [vmem:[%s0 + $0x348] sm:$0xff]
  %v120 = vld [vmem:[%s0 + $0x350] sm:$0xff]
  %v121 = vld [vmem:[%s0 + $0x358] sm:$0xff]
  %v122 = vld [vmem:[%s0 + $0x360] sm:$0xff]
  %v123 = vld [vmem:[%s0 + $0x368] sm:$0xff]
  %v124 = vld [vmem:[%s0 + $0x370] sm:$0xff]
  %v125 = vld [vmem:[%s0 + $0x378] sm:$0xff]
  %v126 = vld [vmem:[%s0 + $0x380] sm:$0xff]
  %v127 = vld [vmem:[%s0 + $0x388] sm:$0xff]
  %v128 = vld [vmem:[%s0 + $0x390] sm:$0xff]
  %v129 = vld [vmem:[%s0 + $0x398] sm:$0xff]
  %v130 = vld [vmem:[%s0 + $0x3a0] sm:$0xff]
  %v131 = vld [vmem:[%s0 + $0x3a8] sm:$0xff]
  %v132 = vld [vmem:[%s0 + $0x3b0] sm:$0xff]
  %v133 = vld [vmem:[%s0 + $0x3b8] sm:$0xff]
  %v134 = vld [vmem:[%s0 + $0x3c0] sm:$0xff]
  %v135 = vld [vmem:[%s0 + $0x3c8] sm:$0xff]
  %v136 = vld [vmem:[%s0 + $0x3d0] sm:$0xff]
  %v137 = vld [vmem:[%s0 + $0x3d8] sm:$0xff]
  %v138 = vld [vmem:[%s0 + $0x3e0] sm:$0xff]
  %v139 = vld [vmem:[%s0 + $0x3e8] sm:$0xff]
  %v140 = vld [vmem:[%s0 + $0x3f0] sm:$0xff]
  %v141 = vld [vmem:[%s0 + $0x3f8] sm:$0xff]
  %v142 = vunpack.c.l.bf16 %v14
  %v143 = vunpack.c.h.bf16 %v14
  %v144 = vunpack.c.l.bf16 %v15
  %v145 = vunpack.c.h.bf16 %v15
  %v146 = vunpack.c.l.bf16 %v16
  %v147 = vunpack.c.h.bf16 %v16
  %v148 = vunpack.c.l.bf16 %v17
  %v149 = vunpack.c.h.bf16 %v17
  %v150 = vunpack.c.l.bf16 %v18
  %v151 = vunpack.c.h.bf16 %v18
  %v152 = vunpack.c.l.bf16 %v19
  %v153 = vunpack.c.h.bf16 %v19
  %v154 = vunpack.c.l.bf16 %v20
  %v155 = vunpack.c.h.bf16 %v20
  %v156 = vunpack.c.l.bf16 %v21
  %v157 = vunpack.c.h.bf16 %v21
  %v158 = vunpack.c.l.bf16 %v22
  %v159 = vunpack.c.h.bf16 %v22
  %v160 = vunpack.c.l.bf16 %v23
  %v161 = vunpack.c.h.bf16 %v23
  %v162 = vunpack.c.l.bf16 %v24
  %v163 = vunpack.c.h.bf16 %v24
  %v164 = vunpack.c.l.bf16 %v25
  %v165 = vunpack.c.h.bf16 %v25
  %v166 = vunpack.c.l.bf16 %v26
  %v167 = vunpack.c.h.bf16 %v26
  %v168 = vunpack.c.l.bf16 %v27
  %v169 = vunpack.c.h.bf16 %v27
  %v170 = vunpack.c.l.bf16 %v28
  %v171 = vunpack.c.h.bf16 %v28
  %v172 = vunpack.c.l.bf16 %v29
  %v173 = vunpack.c.h.bf16 %v29
  %v174 = vunpack.c.l.bf16 %v30
  %v175 = vunpack.c.h.bf16 %v30
  %v176 = vunpack.c.l.bf16 %v31
  %v177 = vunpack.c.h.bf16 %v31
  %v178 = vunpack.c.l.bf16 %v32
  %v179 = vunpack.c.h.bf16 %v32
  %v180 = vunpack.c.l.bf16 %v33
  %v181 = vunpack.c.h.bf16 %v33
  %v182 = vunpack.c.l.bf16 %v34
  %v183 = vunpack.c.h.bf16 %v34
  %v184 = vunpack.c.l.bf16 %v35
  %v185 = vunpack.c.h.bf16 %v35
  %v186 = vunpack.c.l.bf16 %v36
  %v187 = vunpack.c.h.bf16 %v36
  %v188 = vunpack.c.l.bf16 %v37
  %v189 = vunpack.c.h.bf16 %v37
  %v190 = vunpack.c.l.bf16 %v38
  %v191 = vunpack.c.h.bf16 %v38
  %v192 = vunpack.c.l.bf16 %v39
  %v193 = vunpack.c.h.bf16 %v39
  %v194 = vunpack.c.l.bf16 %v40
  %v195 = vunpack.c.h.bf16 %v40
  %v196 = vunpack.c.l.bf16 %v41
  %v197 = vunpack.c.h.bf16 %v41
  %v198 = vunpack.c.l.bf16 %v42
  %v199 = vunpack.c.h.bf16 %v42
  %v200 = vunpack.c.l.bf16 %v43
  %v201 = vunpack.c.h.bf16 %v43
  %v202 = vunpack.c.l.bf16 %v44
  %v203 = vunpack.c.h.bf16 %v44
  %v204 = vunpack.c.l.bf16 %v45
  %v205 = vunpack.c.h.bf16 %v45
  %v206 = vunpack.c.l.bf16 %v46
  %v207 = vunpack.c.h.bf16 %v46
  %v208 = vunpack.c.l.bf16 %v47
  %v209 = vunpack.c.h.bf16 %v47
  %v210 = vunpack.c.l.bf16 %v48
  %v211 = vunpack.c.h.bf16 %v48
  %v212 = vunpack.c.l.bf16 %v49
  %v213 = vunpack.c.h.bf16 %v49
  %v214 = vunpack.c.l.bf16 %v50
  %v215 = vunpack.c.h.bf16 %v50
  %v216 = vunpack.c.l.bf16 %v51
  %v217 = vunpack.c.h.bf16 %v51
  %v218 = vunpack.c.l.bf16 %v52
  %v219 = vunpack.c.h.bf16 %v52
  %v220 = vunpack.c.l.bf16 %v53
  %v221 = vunpack.c.h.bf16 %v53
  %v222 = vunpack.c.l.bf16 %v54
  %v223 = vunpack.c.h.bf16 %v54
  %v224 = vunpack.c.l.bf16 %v55
  %v225 = vunpack.c.h.bf16 %v55
  %v226 = vunpack.c.l.bf16 %v56
  %v227 = vunpack.c.h.bf16 %v56
  %v228 = vunpack.c.l.bf16 %v57
  %v229 = vunpack.c.h.bf16 %v57
  %v230 = vunpack.c.l.bf16 %v58
  %v231 = vunpack.c.h.bf16 %v58
  %v232 = vunpack.c.l.bf16 %v59
  %v233 = vunpack.c.h.bf16 %v59
  %v234 = vunpack.c.l.bf16 %v60
  %v235 = vunpack.c.h.bf16 %v60
  %v236 = vunpack.c.l.bf16 %v61
  %v237 = vunpack.c.h.bf16 %v61
  %v238 = vunpack.c.l.bf16 %v62
  %v239 = vunpack.c.h.bf16 %v62
  %v240 = vunpack.c.l.bf16 %v63
  %v241 = vunpack.c.h.bf16 %v63
  %v242 = vunpack.c.l.bf16 %v64
  %v243 = vunpack.c.h.bf16 %v64
  %v244 = vunpack.c.l.bf16 %v65
  %v245 = vunpack.c.h.bf16 %v65
  %v246 = vunpack.c.l.bf16 %v66
  %v247 = vunpack.c.h.bf16 %v66
  %v248 = vunpack.c.l.bf16 %v67
  %v249 = vunpack.c.h.bf16 %v67
  %v250 = vunpack.c.l.bf16 %v68
  %v251 = vunpack.c.h.bf16 %v68
  %v252 = vunpack.c.l.bf16 %v69
  %v253 = vunpack.c.h.bf16 %v69
  %v254 = vunpack.c.l.bf16 %v70
  %v255 = vunpack.c.h.bf16 %v70
  %v256 = vunpack.c.l.bf16 %v71
  %v257 = vunpack.c.h.bf16 %v71
  %v258 = vunpack.c.l.bf16 %v72
  %v259 = vunpack.c.h.bf16 %v72
  %v260 = vunpack.c.l.bf16 %v73
  %v261 = vunpack.c.h.bf16 %v73
  %v262 = vunpack.c.l.bf16 %v74
  %v263 = vunpack.c.h.bf16 %v74
  %v264 = vunpack.c.l.bf16 %v75
  %v265 = vunpack.c.h.bf16 %v75
  %v266 = vunpack.c.l.bf16 %v76
  %v267 = vunpack.c.h.bf16 %v76
  %v268 = vunpack.c.l.bf16 %v77
  %v269 = vunpack.c.h.bf16 %v77
  %v270 = vunpack.c.l.bf16 %v78
  %v271 = vunpack.c.h.bf16 %v78
  %v272 = vunpack.c.l.bf16 %v79
  %v273 = vunpack.c.h.bf16 %v79
  %v274 = vunpack.c.l.bf16 %v80
  %v275 = vunpack.c.h.bf16 %v80
  %v276 = vunpack.c.l.bf16 %v81
  %v277 = vunpack.c.h.bf16 %v81
  %v278 = vunpack.c.l.bf16 %v82
  %v279 = vunpack.c.h.bf16 %v82
  %v280 = vunpack.c.l.bf16 %v83
  %v281 = vunpack.c.h.bf16 %v83
  %v282 = vunpack.c.l.bf16 %v84
  %v283 = vunpack.c.h.bf16 %v84
  %v284 = vunpack.c.l.bf16 %v85
  %v285 = vunpack.c.h.bf16 %v85
  %v286 = vunpack.c.l.bf16 %v86
  %v287 = vunpack.c.h.bf16 %v86
  %v288 = vunpack.c.l.bf16 %v87
  %v289 = vunpack.c.h.bf16 %v87
  %v290 = vunpack.c.l.bf16 %v88
  %v291 = vunpack.c.h.bf16 %v88
  %v292 = vunpack.c.l.bf16 %v89
  %v293 = vunpack.c.h.bf16 %v89
  %v294 = vunpack.c.l.bf16 %v90
  %v295 = vunpack.c.h.bf16 %v90
  %v296 = vunpack.c.l.bf16 %v91
  %v297 = vunpack.c.h.bf16 %v91
  %v298 = vunpack.c.l.bf16 %v92
  %v299 = vunpack.c.h.bf16 %v92
  %v300 = vunpack.c.l.bf16 %v93
  %v301 = vunpack.c.h.bf16 %v93
  %v302 = vunpack.c.l.bf16 %v94
  %v303 = vunpack.c.h.bf16 %v94
  %v304 = vunpack.c.l.bf16 %v95
  %v305 = vunpack.c.h.bf16 %v95
  %v306 = vunpack.c.l.bf16 %v96
  %v307 = vunpack.c.h.bf16 %v96
  %v308 = vunpack.c.l.bf16 %v97
  %v309 = vunpack.c.h.bf16 %v97
  %v310 = vunpack.c.l.bf16 %v98
  %v311 = vunpack.c.h.bf16 %v98
  %v312 = vunpack.c.l.bf16 %v99
  %v313 = vunpack.c.h.bf16 %v99
  %v314 = vunpack.c.l.bf16 %v100
  %v315 = vunpack.c.h.bf16 %v100
  %v316 = vunpack.c.l.bf16 %v101
  %v317 = vunpack.c.h.bf16 %v101
  %v318 = vunpack.c.l.bf16 %v102
  %v319 = vunpack.c.h.bf16 %v102
  %v320 = vunpack.c.l.bf16 %v103
  %v321 = vunpack.c.h.bf16 %v103
  %v322 = vunpack.c.l.bf16 %v104
  %v323 = vunpack.c.h.bf16 %v104
  %v324 = vunpack.c.l.bf16 %v105
  %v325 = vunpack.c.h.bf16 %v105
  %v326 = vunpack.c.l.bf16 %v106
  %v327 = vunpack.c.h.bf16 %v106
  %v328 = vunpack.c.l.bf16 %v107
  %v329 = vunpack.c.h.bf16 %v107
  %v330 = vunpack.c.l.bf16 %v108
  %v331 = vunpack.c.h.bf16 %v108
  %v332 = vunpack.c.l.bf16 %v109
  %v333 = vunpack.c.h.bf16 %v109
  %v334 = vunpack.c.l.bf16 %v110
  %v335 = vunpack.c.h.bf16 %v110
  %v336 = vunpack.c.l.bf16 %v111
  %v337 = vunpack.c.h.bf16 %v111
  %v338 = vunpack.c.l.bf16 %v112
  %v339 = vunpack.c.h.bf16 %v112
  %v340 = vunpack.c.l.bf16 %v113
  %v341 = vunpack.c.h.bf16 %v113
  %v342 = vunpack.c.l.bf16 %v114
  %v343 = vunpack.c.h.bf16 %v114
  %v344 = vunpack.c.l.bf16 %v115
  %v345 = vunpack.c.h.bf16 %v115
  %v346 = vunpack.c.l.bf16 %v116
  %v347 = vunpack.c.h.bf16 %v116
  %v348 = vunpack.c.l.bf16 %v117
  %v349 = vunpack.c.h.bf16 %v117
  %v350 = vunpack.c.l.bf16 %v118
  %v351 = vunpack.c.h.bf16 %v118
  %v352 = vunpack.c.l.bf16 %v119
  %v353 = vunpack.c.h.bf16 %v119
  %v354 = vunpack.c.l.bf16 %v120
  %v355 = vunpack.c.h.bf16 %v120
  %v356 = vunpack.c.l.bf16 %v121
  %v357 = vunpack.c.h.bf16 %v121
  %v358 = vunpack.c.l.bf16 %v122
  %v359 = vunpack.c.h.bf16 %v122
  %v360 = vunpack.c.l.bf16 %v123
  %v361 = vunpack.c.h.bf16 %v123
  %v362 = vunpack.c.l.bf16 %v124
  %v363 = vunpack.c.h.bf16 %v124
  %v364 = vunpack.c.l.bf16 %v125
  %v365 = vunpack.c.h.bf16 %v125
  %v366 = vunpack.c.l.bf16 %v126
  %v367 = vunpack.c.h.bf16 %v126
  %v368 = vunpack.c.l.bf16 %v127
  %v369 = vunpack.c.h.bf16 %v127
  %v370 = vunpack.c.l.bf16 %v128
  %v371 = vunpack.c.h.bf16 %v128
  %v372 = vunpack.c.l.bf16 %v129
  %v373 = vunpack.c.h.bf16 %v129
  %v374 = vunpack.c.l.bf16 %v130
  %v375 = vunpack.c.h.bf16 %v130
  %v376 = vunpack.c.l.bf16 %v131
  %v377 = vunpack.c.h.bf16 %v131
  %v378 = vunpack.c.l.bf16 %v132
  %v379 = vunpack.c.h.bf16 %v132
  %v380 = vunpack.c.l.bf16 %v133
  %v381 = vunpack.c.h.bf16 %v133
  %v382 = vunpack.c.l.bf16 %v134
  %v383 = vunpack.c.h.bf16 %v134
  %v384 = vunpack.c.l.bf16 %v135
  %v385 = vunpack.c.h.bf16 %v135
  %v386 = vunpack.c.l.bf16 %v136
  %v387 = vunpack.c.h.bf16 %v136
  %v388 = vunpack.c.l.bf16 %v137
  %v389 = vunpack.c.h.bf16 %v137
  %v390 = vunpack.c.l.bf16 %v138
  %v391 = vunpack.c.h.bf16 %v138
  %v392 = vunpack.c.l.bf16 %v139
  %v393 = vunpack.c.h.bf16 %v139
  %v394 = vunpack.c.l.bf16 %v140
  %v395 = vunpack.c.h.bf16 %v140
  %v396 = vunpack.c.l.bf16 %v141
  %v397 = vunpack.c.h.bf16 %v141
  %vm398 = vcmp.gt.f32.partialorder %v142, 0.0
  %vm399 = vcmp.gt.f32.partialorder %v143, 0.0
  %vm400 = vcmp.gt.f32.partialorder %v144, 0.0
  %vm401 = vcmp.gt.f32.partialorder %v145, 0.0
  %vm402 = vcmp.gt.f32.partialorder %v146, 0.0
  %vm403 = vcmp.gt.f32.partialorder %v147, 0.0
  %vm404 = vcmp.gt.f32.partialorder %v148, 0.0
  %vm405 = vcmp.gt.f32.partialorder %v149, 0.0
  %vm406 = vcmp.gt.f32.partialorder %v150, 0.0
  %vm407 = vcmp.gt.f32.partialorder %v151, 0.0
  %vm408 = vcmp.gt.f32.partialorder %v152, 0.0
  %vm409 = vcmp.gt.f32.partialorder %v153, 0.0
  %vm410 = vcmp.gt.f32.partialorder %v154, 0.0
  %vm411 = vcmp.gt.f32.partialorder %v155, 0.0
  %vm412 = vcmp.gt.f32.partialorder %v156, 0.0
  %vm413 = vcmp.gt.f32.partialorder %v157, 0.0
  %vm414 = vcmp.gt.f32.partialorder %v158, 0.0
  %vm415 = vcmp.gt.f32.partialorder %v159, 0.0
  %vm416 = vcmp.gt.f32.partialorder %v160, 0.0
  %vm417 = vcmp.gt.f32.partialorder %v161, 0.0
  %vm418 = vcmp.gt.f32.partialorder %v162, 0.0
  %vm419 = vcmp.gt.f32.partialorder %v163, 0.0
  %vm420 = vcmp.gt.f32.partialorder %v164, 0.0
  %vm421 = vcmp.gt.f32.partialorder %v165, 0.0
  %vm422 = vcmp.gt.f32.partialorder %v166, 0.0
  %vm423 = vcmp.gt.f32.partialorder %v167, 0.0
  %vm424 = vcmp.gt.f32.partialorder %v168, 0.0
  %vm425 = vcmp.gt.f32.partialorder %v169, 0.0
  %vm426 = vcmp.gt.f32.partialorder %v170, 0.0
  %vm427 = vcmp.gt.f32.partialorder %v171, 0.0
  %vm428 = vcmp.gt.f32.partialorder %v172, 0.0
  %vm429 = vcmp.gt.f32.partialorder %v173, 0.0
  %vm430 = vcmp.gt.f32.partialorder %v174, 0.0
  %vm431 = vcmp.gt.f32.partialorder %v175, 0.0
  %vm432 = vcmp.gt.f32.partialorder %v176, 0.0
  %vm433 = vcmp.gt.f32.partialorder %v177, 0.0
  %vm434 = vcmp.gt.f32.partialorder %v178, 0.0
  %vm435 = vcmp.gt.f32.partialorder %v179, 0.0
  %vm436 = vcmp.gt.f32.partialorder %v180, 0.0
  %vm437 = vcmp.gt.f32.partialorder %v181, 0.0
  %vm438 = vcmp.gt.f32.partialorder %v182, 0.0
  %vm439 = vcmp.gt.f32.partialorder %v183, 0.0
  %vm440 = vcmp.gt.f32.partialorder %v184, 0.0
  %vm441 = vcmp.gt.f32.partialorder %v185, 0.0
  %vm442 = vcmp.gt.f32.partialorder %v186, 0.0
  %vm443 = vcmp.gt.f32.partialorder %v187, 0.0
  %vm444 = vcmp.gt.f32.partialorder %v188, 0.0
  %vm445 = vcmp.gt.f32.partialorder %v189, 0.0
  %vm446 = vcmp.gt.f32.partialorder %v190, 0.0
  %vm447 = vcmp.gt.f32.partialorder %v191, 0.0
  %vm448 = vcmp.gt.f32.partialorder %v192, 0.0
  %vm449 = vcmp.gt.f32.partialorder %v193, 0.0
  %vm450 = vcmp.gt.f32.partialorder %v194, 0.0
  %vm451 = vcmp.gt.f32.partialorder %v195, 0.0
  %vm452 = vcmp.gt.f32.partialorder %v196, 0.0
  %vm453 = vcmp.gt.f32.partialorder %v197, 0.0
  %vm454 = vcmp.gt.f32.partialorder %v198, 0.0
  %vm455 = vcmp.gt.f32.partialorder %v199, 0.0
  %vm456 = vcmp.gt.f32.partialorder %v200, 0.0
  %vm457 = vcmp.gt.f32.partialorder %v201, 0.0
  %vm458 = vcmp.gt.f32.partialorder %v202, 0.0
  %vm459 = vcmp.gt.f32.partialorder %v203, 0.0
  %vm460 = vcmp.gt.f32.partialorder %v204, 0.0
  %vm461 = vcmp.gt.f32.partialorder %v205, 0.0
  %vm462 = vcmp.gt.f32.partialorder %v206, 0.0
  %vm463 = vcmp.gt.f32.partialorder %v207, 0.0
  %vm464 = vcmp.gt.f32.partialorder %v208, 0.0
  %vm465 = vcmp.gt.f32.partialorder %v209, 0.0
  %vm466 = vcmp.gt.f32.partialorder %v210, 0.0
  %vm467 = vcmp.gt.f32.partialorder %v211, 0.0
  %vm468 = vcmp.gt.f32.partialorder %v212, 0.0
  %vm469 = vcmp.gt.f32.partialorder %v213, 0.0
  %vm470 = vcmp.gt.f32.partialorder %v214, 0.0
  %vm471 = vcmp.gt.f32.partialorder %v215, 0.0
  %vm472 = vcmp.gt.f32.partialorder %v216, 0.0
  %vm473 = vcmp.gt.f32.partialorder %v217, 0.0
  %vm474 = vcmp.gt.f32.partialorder %v218, 0.0
  %vm475 = vcmp.gt.f32.partialorder %v219, 0.0
  %vm476 = vcmp.gt.f32.partialorder %v220, 0.0
  %vm477 = vcmp.gt.f32.partialorder %v221, 0.0
  %vm478 = vcmp.gt.f32.partialorder %v222, 0.0
  %vm479 = vcmp.gt.f32.partialorder %v223, 0.0
  %vm480 = vcmp.gt.f32.partialorder %v224, 0.0
  %vm481 = vcmp.gt.f32.partialorder %v225, 0.0
  %vm482 = vcmp.gt.f32.partialorder %v226, 0.0
  %vm483 = vcmp.gt.f32.partialorder %v227, 0.0
  %vm484 = vcmp.gt.f32.partialorder %v228, 0.0
  %vm485 = vcmp.gt.f32.partialorder %v229, 0.0
  %vm486 = vcmp.gt.f32.partialorder %v230, 0.0
  %vm487 = vcmp.gt.f32.partialorder %v231, 0.0
  %vm488 = vcmp.gt.f32.partialorder %v232, 0.0
  %vm489 = vcmp.gt.f32.partialorder %v233, 0.0
  %vm490 = vcmp.gt.f32.partialorder %v234, 0.0
  %vm491 = vcmp.gt.f32.partialorder %v235, 0.0
  %vm492 = vcmp.gt.f32.partialorder %v236, 0.0
  %vm493 = vcmp.gt.f32.partialorder %v237, 0.0
  %vm494 = vcmp.gt.f32.partialorder %v238, 0.0
  %vm495 = vcmp.gt.f32.partialorder %v239, 0.0
  %vm496 = vcmp.gt.f32.partialorder %v240, 0.0
  %vm497 = vcmp.gt.f32.partialorder %v241, 0.0
  %vm498 = vcmp.gt.f32.partialorder %v242, 0.0
  %vm499 = vcmp.gt.f32.partialorder %v243, 0.0
  %vm500 = vcmp.gt.f32.partialorder %v244, 0.0
  %vm501 = vcmp.gt.f32.partialorder %v245, 0.0
  %vm502 = vcmp.gt.f32.partialorder %v246, 0.0
  %vm503 = vcmp.gt.f32.partialorder %v247, 0.0
  %vm504 = vcmp.gt.f32.partialorder %v248, 0.0
  %vm505 = vcmp.gt.f32.partialorder %v249, 0.0
  %vm506 = vcmp.gt.f32.partialorder %v250, 0.0
  %vm507 = vcmp.gt.f32.partialorder %v251, 0.0
  %vm508 = vcmp.gt.f32.partialorder %v252, 0.0
  %vm509 = vcmp.gt.f32.partialorder %v253, 0.0
  %vm510 = vcmp.gt.f32.partialorder %v254, 0.0
  %vm511 = vcmp.gt.f32.partialorder %v255, 0.0
  %vm512 = vcmp.gt.f32.partialorder %v256, 0.0
  %vm513 = vcmp.gt.f32.partialorder %v257, 0.0
  %vm514 = vcmp.gt.f32.partialorder %v258, 0.0
  %vm515 = vcmp.gt.f32.partialorder %v259, 0.0
  %vm516 = vcmp.gt.f32.partialorder %v260, 0.0
  %vm517 = vcmp.gt.f32.partialorder %v261, 0.0
  %vm518 = vcmp.gt.f32.partialorder %v262, 0.0
  %vm519 = vcmp.gt.f32.partialorder %v263, 0.0
  %vm520 = vcmp.gt.f32.partialorder %v264, 0.0
  %vm521 = vcmp.gt.f32.partialorder %v265, 0.0
  %vm522 = vcmp.gt.f32.partialorder %v266, 0.0
  %vm523 = vcmp.gt.f32.partialorder %v267, 0.0
  %vm524 = vcmp.gt.f32.partialorder %v268, 0.0
  %vm525 = vcmp.gt.f32.partialorder %v269, 0.0
  %vm526 = vcmp.gt.f32.partialorder %v270, 0.0
  %vm527 = vcmp.gt.f32.partialorder %v271, 0.0
  %vm528 = vcmp.gt.f32.partialorder %v272, 0.0
  %vm529 = vcmp.gt.f32.partialorder %v273, 0.0
  %vm530 = vcmp.gt.f32.partialorder %v274, 0.0
  %vm531 = vcmp.gt.f32.partialorder %v275, 0.0
  %vm532 = vcmp.gt.f32.partialorder %v276, 0.0
  %vm533 = vcmp.gt.f32.partialorder %v277, 0.0
  %vm534 = vcmp.gt.f32.partialorder %v278, 0.0
  %vm535 = vcmp.gt.f32.partialorder %v279, 0.0
  %vm536 = vcmp.gt.f32.partialorder %v280, 0.0
  %vm537 = vcmp.gt.f32.partialorder %v281, 0.0
  %vm538 = vcmp.gt.f32.partialorder %v282, 0.0
  %vm539 = vcmp.gt.f32.partialorder %v283, 0.0
  %vm540 = vcmp.gt.f32.partialorder %v284, 0.0
  %vm541 = vcmp.gt.f32.partialorder %v285, 0.0
  %vm542 = vcmp.gt.f32.partialorder %v286, 0.0
  %vm543 = vcmp.gt.f32.partialorder %v287, 0.0
  %vm544 = vcmp.gt.f32.partialorder %v288, 0.0
  %vm545 = vcmp.gt.f32.partialorder %v289, 0.0
  %vm546 = vcmp.gt.f32.partialorder %v290, 0.0
  %vm547 = vcmp.gt.f32.partialorder %v291, 0.0
  %vm548 = vcmp.gt.f32.partialorder %v292, 0.0
  %vm549 = vcmp.gt.f32.partialorder %v293, 0.0
  %vm550 = vcmp.gt.f32.partialorder %v294, 0.0
  %vm551 = vcmp.gt.f32.partialorder %v295, 0.0
  %vm552 = vcmp.gt.f32.partialorder %v296, 0.0
  %vm553 = vcmp.gt.f32.partialorder %v297, 0.0
  %vm554 = vcmp.gt.f32.partialorder %v298, 0.0
  %vm555 = vcmp.gt.f32.partialorder %v299, 0.0
  %vm556 = vcmp.gt.f32.partialorder %v300, 0.0
  %vm557 = vcmp.gt.f32.partialorder %v301, 0.0
  %vm558 = vcmp.gt.f32.partialorder %v302, 0.0
  %vm559 = vcmp.gt.f32.partialorder %v303, 0.0
  %vm560 = vcmp.gt.f32.partialorder %v304, 0.0
  %vm561 = vcmp.gt.f32.partialorder %v305, 0.0
  %vm562 = vcmp.gt.f32.partialorder %v306, 0.0
  %vm563 = vcmp.gt.f32.partialorder %v307, 0.0
  %vm564 = vcmp.gt.f32.partialorder %v308, 0.0
  %vm565 = vcmp.gt.f32.partialorder %v309, 0.0
  %vm566 = vcmp.gt.f32.partialorder %v310, 0.0
  %vm567 = vcmp.gt.f32.partialorder %v311, 0.0
  %vm568 = vcmp.gt.f32.partialorder %v312, 0.0
  %vm569 = vcmp.gt.f32.partialorder %v313, 0.0
  %vm570 = vcmp.gt.f32.partialorder %v314, 0.0
  %vm571 = vcmp.gt.f32.partialorder %v315, 0.0
  %vm572 = vcmp.gt.f32.partialorder %v316, 0.0
  %vm573 = vcmp.gt.f32.partialorder %v317, 0.0
  %vm574 = vcmp.gt.f32.partialorder %v318, 0.0
  %vm575 = vcmp.gt.f32.partialorder %v319, 0.0
  %vm576 = vcmp.gt.f32.partialorder %v320, 0.0
  %vm577 = vcmp.gt.f32.partialorder %v321, 0.0
  %vm578 = vcmp.gt.f32.partialorder %v322, 0.0
  %vm579 = vcmp.gt.f32.partialorder %v323, 0.0
  %vm580 = vcmp.gt.f32.partialorder %v324, 0.0
  %vm581 = vcmp.gt.f32.partialorder %v325, 0.0
  %vm582 = vcmp.gt.f32.partialorder %v326, 0.0
  %vm583 = vcmp.gt.f32.partialorder %v327, 0.0
  %vm584 = vcmp.gt.f32.partialorder %v328, 0.0
  %vm585 = vcmp.gt.f32.partialorder %v329, 0.0
  %vm586 = vcmp.gt.f32.partialorder %v330, 0.0
  %vm587 = vcmp.gt.f32.partialorder %v331, 0.0
  %vm588 = vcmp.gt.f32.partialorder %v332, 0.0
  %vm589 = vcmp.gt.f32.partialorder %v333, 0.0
  %vm590 = vcmp.gt.f32.partialorder %v334, 0.0
  %vm591 = vcmp.gt.f32.partialorder %v335, 0.0
  %vm592 = vcmp.gt.f32.partialorder %v336, 0.0
  %vm593 = vcmp.gt.f32.partialorder %v337, 0.0
  %vm594 = vcmp.gt.f32.partialorder %v338, 0.0
  %vm595 = vcmp.gt.f32.partialorder %v339, 0.0
  %vm596 = vcmp.gt.f32.partialorder %v340, 0.0
  %vm597 = vcmp.gt.f32.partialorder %v341, 0.0
  %vm598 = vcmp.gt.f32.partialorder %v342, 0.0
  %vm599 = vcmp.gt.f32.partialorder %v343, 0.0
  %vm600 = vcmp.gt.f32.partialorder %v344, 0.0
  %vm601 = vcmp.gt.f32.partialorder %v345, 0.0
  %vm602 = vcmp.gt.f32.partialorder %v346, 0.0
  %vm603 = vcmp.gt.f32.partialorder %v347, 0.0
  %vm604 = vcmp.gt.f32.partialorder %v348, 0.0
  %vm605 = vcmp.gt.f32.partialorder %v349, 0.0
  %vm606 = vcmp.gt.f32.partialorder %v350, 0.0
  %vm607 = vcmp.gt.f32.partialorder %v351, 0.0
  %vm608 = vcmp.gt.f32.partialorder %v352, 0.0
  %vm609 = vcmp.gt.f32.partialorder %v353, 0.0
  %vm610 = vcmp.gt.f32.partialorder %v354, 0.0
  %vm611 = vcmp.gt.f32.partialorder %v355, 0.0
  %vm612 = vcmp.gt.f32.partialorder %v356, 0.0
  %vm613 = vcmp.gt.f32.partialorder %v357, 0.0
  %vm614 = vcmp.gt.f32.partialorder %v358, 0.0
  %vm615 = vcmp.gt.f32.partialorder %v359, 0.0
  %vm616 = vcmp.gt.f32.partialorder %v360, 0.0
  %vm617 = vcmp.gt.f32.partialorder %v361, 0.0
  %vm618 = vcmp.gt.f32.partialorder %v362, 0.0
  %vm619 = vcmp.gt.f32.partialorder %v363, 0.0
  %vm620 = vcmp.gt.f32.partialorder %v364, 0.0
  %vm621 = vcmp.gt.f32.partialorder %v365, 0.0
  %vm622 = vcmp.gt.f32.partialorder %v366, 0.0
  %vm623 = vcmp.gt.f32.partialorder %v367, 0.0
  %vm624 = vcmp.gt.f32.partialorder %v368, 0.0
  %vm625 = vcmp.gt.f32.partialorder %v369, 0.0
  %vm626 = vcmp.gt.f32.partialorder %v370, 0.0
  %vm627 = vcmp.gt.f32.partialorder %v371, 0.0
  %vm628 = vcmp.gt.f32.partialorder %v372, 0.0
  %vm629 = vcmp.gt.f32.partialorder %v373, 0.0
  %vm630 = vcmp.gt.f32.partialorder %v374, 0.0
  %vm631 = vcmp.gt.f32.partialorder %v375, 0.0
  %vm632 = vcmp.gt.f32.partialorder %v376, 0.0
  %vm633 = vcmp.gt.f32.partialorder %v377, 0.0
  %vm634 = vcmp.gt.f32.partialorder %v378, 0.0
  %vm635 = vcmp.gt.f32.partialorder %v379, 0.0
  %vm636 = vcmp.gt.f32.partialorder %v380, 0.0
  %vm637 = vcmp.gt.f32.partialorder %v381, 0.0
  %vm638 = vcmp.gt.f32.partialorder %v382, 0.0
  %vm639 = vcmp.gt.f32.partialorder %v383, 0.0
  %vm640 = vcmp.gt.f32.partialorder %v384, 0.0
  %vm641 = vcmp.gt.f32.partialorder %v385, 0.0
  %vm642 = vcmp.gt.f32.partialorder %v386, 0.0
  %vm643 = vcmp.gt.f32.partialorder %v387, 0.0
  %vm644 = vcmp.gt.f32.partialorder %v388, 0.0
  %vm645 = vcmp.gt.f32.partialorder %v389, 0.0
  %vm646 = vcmp.gt.f32.partialorder %v390, 0.0
  %vm647 = vcmp.gt.f32.partialorder %v391, 0.0
  %vm648 = vcmp.gt.f32.partialorder %v392, 0.0
  %vm649 = vcmp.gt.f32.partialorder %v393, 0.0
  %vm650 = vcmp.gt.f32.partialorder %v394, 0.0
  %vm651 = vcmp.gt.f32.partialorder %v395, 0.0
  %vm652 = vcmp.gt.f32.partialorder %v396, 0.0
  %vm653 = vcmp.gt.f32.partialorder %v397, 0.0
  %v654 = vmul.f32 %v142, 0.2
  %v655 = vmul.f32 %v143, 0.2
  %v656 = vmul.f32 %v144, 0.2
  %v657 = vmul.f32 %v145, 0.2
  %v658 = vmul.f32 %v146, 0.2
  %v659 = vmul.f32 %v147, 0.2
  %v660 = vmul.f32 %v148, 0.2
  %v661 = vmul.f32 %v149, 0.2
  %v662 = vmul.f32 %v150, 0.2
  %v663 = vmul.f32 %v151, 0.2
  %v664 = vmul.f32 %v152, 0.2
  %v665 = vmul.f32 %v153, 0.2
  %v666 = vmul.f32 %v154, 0.2
  %v667 = vmul.f32 %v155, 0.2
  %v668 = vmul.f32 %v156, 0.2
  %v669 = vmul.f32 %v157, 0.2
  %v670 = vmul.f32 %v158, 0.2
  %v671 = vmul.f32 %v159, 0.2
  %v672 = vmul.f32 %v160, 0.2
  %v673 = vmul.f32 %v161, 0.2
  %v674 = vmul.f32 %v162, 0.2
  %v675 = vmul.f32 %v163, 0.2
  %v676 = vmul.f32 %v164, 0.2
  %v677 = vmul.f32 %v165, 0.2
  %v678 = vmul.f32 %v166, 0.2
  %v679 = vmul.f32 %v167, 0.2
  %v680 = vmul.f32 %v168, 0.2
  %v681 = vmul.f32 %v169, 0.2
  %v682 = vmul.f32 %v170, 0.2
  %v683 = vmul.f32 %v171, 0.2
  %v684 = vmul.f32 %v172, 0.2
  %v685 = vmul.f32 %v173, 0.2
  %v686 = vmul.f32 %v174, 0.2
  %v687 = vmul.f32 %v175, 0.2
  %v688 = vmul.f32 %v176, 0.2
  %v689 = vmul.f32 %v177, 0.2
  %v690 = vmul.f32 %v178, 0.2
  %v691 = vmul.f32 %v179, 0.2
  %v692 = vmul.f32 %v180, 0.2
  %v693 = vmul.f32 %v181, 0.2
  %v694 = vmul.f32 %v182, 0.2
  %v695 = vmul.f32 %v183, 0.2
  %v696 = vmul.f32 %v184, 0.2
  %v697 = vmul.f32 %v185, 0.2
  %v698 = vmul.f32 %v186, 0.2
  %v699 = vmul.f32 %v187, 0.2
  %v700 = vmul.f32 %v188, 0.2
  %v701 = vmul.f32 %v189, 0.2
  %v702 = vmul.f32 %v190, 0.2
  %v703 = vmul.f32 %v191, 0.2
  %v704 = vmul.f32 %v192, 0.2
  %v705 = vmul.f32 %v193, 0.2
  %v706 = vmul.f32 %v194, 0.2
  %v707 = vmul.f32 %v195, 0.2
  %v708 = vmul.f32 %v196, 0.2
  %v709 = vmul.f32 %v197, 0.2
  %v710 = vmul.f32 %v198, 0.2
  %v711 = vmul.f32 %v199, 0.2
  %v712 = vmul.f32 %v200, 0.2
  %v713 = vmul.f32 %v201, 0.2
  %v714 = vmul.f32 %v202, 0.2
  %v715 = vmul.f32 %v203, 0.2
  %v716 = vmul.f32 %v204, 0.2
  %v717 = vmul.f32 %v205, 0.2
  %v718 = vmul.f32 %v206, 0.2
  %v719 = vmul.f32 %v207, 0.2
  %v720 = vmul.f32 %v208, 0.2
  %v721 = vmul.f32 %v209, 0.2
  %v722 = vmul.f32 %v210, 0.2
  %v723 = vmul.f32 %v211, 0.2
  %v724 = vmul.f32 %v212, 0.2
  %v725 = vmul.f32 %v213, 0.2
  %v726 = vmul.f32 %v214, 0.2
  %v727 = vmul.f32 %v215, 0.2
  %v728 = vmul.f32 %v216, 0.2
  %v729 = vmul.f32 %v217, 0.2
  %v730 = vmul.f32 %v218, 0.2
  %v731 = vmul.f32 %v219, 0.2
  %v732 = vmul.f32 %v220, 0.2
  %v733 = vmul.f32 %v221, 0.2
  %v734 = vmul.f32 %v222, 0.2
  %v735 = vmul.f32 %v223, 0.2
  %v736 = vmul.f32 %v224, 0.2
  %v737 = vmul.f32 %v225, 0.2
  %v738 = vmul.f32 %v226, 0.2
  %v739 = vmul.f32 %v227, 0.2
  %v740 = vmul.f32 %v228, 0.2
  %v741 = vmul.f32 %v229, 0.2
  %v742 = vmul.f32 %v230, 0.2
  %v743 = vmul.f32 %v231, 0.2
  %v744 = vmul.f32 %v232, 0.2
  %v745 = vmul.f32 %v233, 0.2
  %v746 = vmul.f32 %v234, 0.2
  %v747 = vmul.f32 %v235, 0.2
  %v748 = vmul.f32 %v236, 0.2
  %v749 = vmul.f32 %v237, 0.2
  %v750 = vmul.f32 %v238, 0.2
  %v751 = vmul.f32 %v239, 0.2
  %v752 = vmul.f32 %v240, 0.2
  %v753 = vmul.f32 %v241, 0.2
  %v754 = vmul.f32 %v242, 0.2
  %v755 = vmul.f32 %v243, 0.2
  %v756 = vmul.f32 %v244, 0.2
  %v757 = vmul.f32 %v245, 0.2
  %v758 = vmul.f32 %v246, 0.2
  %v759 = vmul.f32 %v247, 0.2
  %v760 = vmul.f32 %v248, 0.2
  %v761 = vmul.f32 %v249, 0.2
  %v762 = vmul.f32 %v250, 0.2
  %v763 = vmul.f32 %v251, 0.2
  %v764 = vmul.f32 %v252, 0.2
  %v765 = vmul.f32 %v253, 0.2
  %v766 = vmul.f32 %v254, 0.2
  %v767 = vmul.f32 %v255, 0.2
  %v768 = vmul.f32 %v256, 0.2
  %v769 = vmul.f32 %v257, 0.2
  %v770 = vmul.f32 %v258, 0.2
  %v771 = vmul.f32 %v259, 0.2
  %v772 = vmul.f32 %v260, 0.2
  %v773 = vmul.f32 %v261, 0.2
  %v774 = vmul.f32 %v262, 0.2
  %v775 = vmul.f32 %v263, 0.2
  %v776 = vmul.f32 %v264, 0.2
  %v777 = vmul.f32 %v265, 0.2
  %v778 = vmul.f32 %v266, 0.2
  %v779 = vmul.f32 %v267, 0.2
  %v780 = vmul.f32 %v268, 0.2
  %v781 = vmul.f32 %v269, 0.2
  %v782 = vmul.f32 %v270, 0.2
  %v783 = vmul.f32 %v271, 0.2
  %v784 = vmul.f32 %v272, 0.2
  %v785 = vmul.f32 %v273, 0.2
  %v786 = vmul.f32 %v274, 0.2
  %v787 = vmul.f32 %v275, 0.2
  %v788 = vmul.f32 %v276, 0.2
  %v789 = vmul.f32 %v277, 0.2
  %v790 = vmul.f32 %v278, 0.2
  %v791 = vmul.f32 %v279, 0.2
  %v792 = vmul.f32 %v280, 0.2
  %v793 = vmul.f32 %v281, 0.2
  %v794 = vmul.f32 %v282, 0.2
  %v795 = vmul.f32 %v283, 0.2
  %v796 = vmul.f32 %v284, 0.2
  %v797 = vmul.f32 %v285, 0.2
  %v798 = vmul.f32 %v286, 0.2
  %v799 = vmul.f32 %v287, 0.2
  %v800 = vmul.f32 %v288, 0.2
  %v801 = vmul.f32 %v289, 0.2
  %v802 = vmul.f32 %v290, 0.2
  %v803 = vmul.f32 %v291, 0.2
  %v804 = vmul.f32 %v292, 0.2
  %v805 = vmul.f32 %v293, 0.2
  %v806 = vmul.f32 %v294, 0.2
  %v807 = vmul.f32 %v295, 0.2
  %v808 = vmul.f32 %v296, 0.2
  %v809 = vmul.f32 %v297, 0.2
  %v810 = vmul.f32 %v298, 0.2
  %v811 = vmul.f32 %v299, 0.2
  %v812 = vmul.f32 %v300, 0.2
  %v813 = vmul.f32 %v301, 0.2
  %v814 = vmul.f32 %v302, 0.2
  %v815 = vmul.f32 %v303, 0.2
  %v816 = vmul.f32 %v304, 0.2
  %v817 = vmul.f32 %v305, 0.2
  %v818 = vmul.f32 %v306, 0.2
  %v819 = vmul.f32 %v307, 0.2
  %v820 = vmul.f32 %v308, 0.2
  %v821 = vmul.f32 %v309, 0.2
  %v822 = vmul.f32 %v310, 0.2
  %v823 = vmul.f32 %v311, 0.2
  %v824 = vmul.f32 %v312, 0.2
  %v825 = vmul.f32 %v313, 0.2
  %v826 = vmul.f32 %v314, 0.2
  %v827 = vmul.f32 %v315, 0.2
  %v828 = vmul.f32 %v316, 0.2
  %v829 = vmul.f32 %v317, 0.2
  %v830 = vmul.f32 %v318, 0.2
  %v831 = vmul.f32 %v319, 0.2
  %v832 = vmul.f32 %v320, 0.2
  %v833 = vmul.f32 %v321, 0.2
  %v834 = vmul.f32 %v322, 0.2
  %v835 = vmul.f32 %v323, 0.2
  %v836 = vmul.f32 %v324, 0.2
  %v837 = vmul.f32 %v325, 0.2
  %v838 = vmul.f32 %v326, 0.2
  %v839 = vmul.f32 %v327, 0.2
  %v840 = vmul.f32 %v328, 0.2
  %v841 = vmul.f32 %v329, 0.2
  %v842 = vmul.f32 %v330, 0.2
  %v843 = vmul.f32 %v331, 0.2
  %v844 = vmul.f32 %v332, 0.2
  %v845 = vmul.f32 %v333, 0.2
  %v846 = vmul.f32 %v334, 0.2
  %v847 = vmul.f32 %v335, 0.2
  %v848 = vmul.f32 %v336, 0.2
  %v849 = vmul.f32 %v337, 0.2
  %v850 = vmul.f32 %v338, 0.2
  %v851 = vmul.f32 %v339, 0.2
  %v852 = vmul.f32 %v340, 0.2
  %v853 = vmul.f32 %v341, 0.2
  %v854 = vmul.f32 %v342, 0.2
  %v855 = vmul.f32 %v343, 0.2
  %v856 = vmul.f32 %v344, 0.2
  %v857 = vmul.f32 %v345, 0.2
  %v858 = vmul.f32 %v346, 0.2
  %v859 = vmul.f32 %v347, 0.2
  %v860 = vmul.f32 %v348, 0.2
  %v861 = vmul.f32 %v349, 0.2
  %v862 = vmul.f32 %v350, 0.2
  %v863 = vmul.f32 %v351, 0.2
  %v864 = vmul.f32 %v352, 0.2
  %v865 = vmul.f32 %v353, 0.2
  %v866 = vmul.f32 %v354, 0.2
  %v867 = vmul.f32 %v355, 0.2
  %v868 = vmul.f32 %v356, 0.2
  %v869 = vmul.f32 %v357, 0.2
  %v870 = vmul.f32 %v358, 0.2
  %v871 = vmul.f32 %v359, 0.2
  %v872 = vmul.f32 %v360, 0.2
  %v873 = vmul.f32 %v361, 0.2
  %v874 = vmul.f32 %v362, 0.2
  %v875 = vmul.f32 %v363, 0.2
  %v876 = vmul.f32 %v364, 0.2
  %v877 = vmul.f32 %v365, 0.2
  %v878 = vmul.f32 %v366, 0.2
  %v879 = vmul.f32 %v367, 0.2
  %v880 = vmul.f32 %v368, 0.2
  %v881 = vmul.f32 %v369, 0.2
  %v882 = vmul.f32 %v370, 0.2
  %v883 = vmul.f32 %v371, 0.2
  %v884 = vmul.f32 %v372, 0.2
  %v885 = vmul.f32 %v373, 0.2
  %v886 = vmul.f32 %v374, 0.2
  %v887 = vmul.f32 %v375, 0.2
  %v888 = vmul.f32 %v376, 0.2
  %v889 = vmul.f32 %v377, 0.2
  %v890 = vmul.f32 %v378, 0.2
  %v891 = vmul.f32 %v379, 0.2
  %v892 = vmul.f32 %v380, 0.2
  %v893 = vmul.f32 %v381, 0.2
  %v894 = vmul.f32 %v382, 0.2
  %v895 = vmul.f32 %v383, 0.2
  %v896 = vmul.f32 %v384, 0.2
  %v897 = vmul.f32 %v385, 0.2
  %v898 = vmul.f32 %v386, 0.2
  %v899 = vmul.f32 %v387, 0.2
  %v900 = vmul.f32 %v388, 0.2
  %v901 = vmul.f32 %v389, 0.2
  %v902 = vmul.f32 %v390, 0.2
  %v903 = vmul.f32 %v391, 0.2
  %v904 = vmul.f32 %v392, 0.2
  %v905 = vmul.f32 %v393, 0.2
  %v906 = vmul.f32 %v394, 0.2
  %v907 = vmul.f32 %v395, 0.2
  %v908 = vmul.f32 %v396, 0.2
  %v909 = vmul.f32 %v397, 0.2
  %v910 = vsel %vm398, %v142, %v654
  %v911 = vsel %vm399, %v143, %v655
  %v912 = vsel %vm400, %v144, %v656
  %v913 = vsel %vm401, %v145, %v657
  %v914 = vsel %vm402, %v146, %v658
  %v915 = vsel %vm403, %v147, %v659
  %v916 = vsel %vm404, %v148, %v660
  %v917 = vsel %vm405, %v149, %v661
  %v918 = vsel %vm406, %v150, %v662
  %v919 = vsel %vm407, %v151, %v663
  %v920 = vsel %vm408, %v152, %v664
  %v921 = vsel %vm409, %v153, %v665
  %v922 = vsel %vm410, %v154, %v666
  %v923 = vsel %vm411, %v155, %v667
  %v924 = vsel %vm412, %v156, %v668
  %v925 = vsel %vm413, %v157, %v669
  %v926 = vsel %vm414, %v158, %v670
  %v927 = vsel %vm415, %v159, %v671
  %v928 = vsel %vm416, %v160, %v672
  %v929 = vsel %vm417, %v161, %v673
  %v930 = vsel %vm418, %v162, %v674
  %v931 = vsel %vm419, %v163, %v675
  %v932 = vsel %vm420, %v164, %v676
  %v933 = vsel %vm421, %v165, %v677
  %v934 = vsel %vm422, %v166, %v678
  %v935 = vsel %vm423, %v167, %v679
  %v936 = vsel %vm424, %v168, %v680
  %v937 = vsel %vm425, %v169, %v681
  %v938 = vsel %vm426, %v170, %v682
  %v939 = vsel %vm427, %v171, %v683
  %v940 = vsel %vm428, %v172, %v684
  %v941 = vsel %vm429, %v173, %v685
  %v942 = vsel %vm430, %v174, %v686
  %v943 = vsel %vm431, %v175, %v687
  %v944 = vsel %vm432, %v176, %v688
  %v945 = vsel %vm433, %v177, %v689
  %v946 = vsel %vm434, %v178, %v690
  %v947 = vsel %vm435, %v179, %v691
  %v948 = vsel %vm436, %v180, %v692
  %v949 = vsel %vm437, %v181, %v693
  %v950 = vsel %vm438, %v182, %v694
  %v951 = vsel %vm439, %v183, %v695
  %v952 = vsel %vm440, %v184, %v696
  %v953 = vsel %vm441, %v185, %v697
  %v954 = vsel %vm442, %v186, %v698
  %v955 = vsel %vm443, %v187, %v699
  %v956 = vsel %vm444, %v188, %v700
  %v957 = vsel %vm445, %v189, %v701
  %v958 = vsel %vm446, %v190, %v702
  %v959 = vsel %vm447, %v191, %v703
  %v960 = vsel %vm448, %v192, %v704
  %v961 = vsel %vm449, %v193, %v705
  %v962 = vsel %vm450, %v194, %v706
  %v963 = vsel %vm451, %v195, %v707
  %v964 = vsel %vm452, %v196, %v708
  %v965 = vsel %vm453, %v197, %v709
  %v966 = vsel %vm454, %v198, %v710
  %v967 = vsel %vm455, %v199, %v711
  %v968 = vsel %vm456, %v200, %v712
  %v969 = vsel %vm457, %v201, %v713
  %v970 = vsel %vm458, %v202, %v714
  %v971 = vsel %vm459, %v203, %v715
  %v972 = vsel %vm460, %v204, %v716
  %v973 = vsel %vm461, %v205, %v717
  %v974 = vsel %vm462, %v206, %v718
  %v975 = vsel %vm463, %v207, %v719
  %v976 = vsel %vm464, %v208, %v720
  %v977 = vsel %vm465, %v209, %v721
  %v978 = vsel %vm466, %v210, %v722
  %v979 = vsel %vm467, %v211, %v723
  %v980 = vsel %vm468, %v212, %v724
  %v981 = vsel %vm469, %v213, %v725
  %v982 = vsel %vm470, %v214, %v726
  %v983 = vsel %vm471, %v215, %v727
  %v984 = vsel %vm472, %v216, %v728
  %v985 = vsel %vm473, %v217, %v729
  %v986 = vsel %vm474, %v218, %v730
  %v987 = vsel %vm475, %v219, %v731
  %v988 = vsel %vm476, %v220, %v732
  %v989 = vsel %vm477, %v221, %v733
  %v990 = vsel %vm478, %v222, %v734
  %v991 = vsel %vm479, %v223, %v735
  %v992 = vsel %vm480, %v224, %v736
  %v993 = vsel %vm481, %v225, %v737
  %v994 = vsel %vm482, %v226, %v738
  %v995 = vsel %vm483, %v227, %v739
  %v996 = vsel %vm484, %v228, %v740
  %v997 = vsel %vm485, %v229, %v741
  %v998 = vsel %vm486, %v230, %v742
  %v999 = vsel %vm487, %v231, %v743
  %v1000 = vsel %vm488, %v232, %v744
  %v1001 = vsel %vm489, %v233, %v745
  %v1002 = vsel %vm490, %v234, %v746
  %v1003 = vsel %vm491, %v235, %v747
  %v1004 = vsel %vm492, %v236, %v748
  %v1005 = vsel %vm493, %v237, %v749
  %v1006 = vsel %vm494, %v238, %v750
  %v1007 = vsel %vm495, %v239, %v751
  %v1008 = vsel %vm496, %v240, %v752
  %v1009 = vsel %vm497, %v241, %v753
  %v1010 = vsel %vm498, %v242, %v754
  %v1011 = vsel %vm499, %v243, %v755
  %v1012 = vsel %vm500, %v244, %v756
  %v1013 = vsel %vm501, %v245, %v757
  %v1014 = vsel %vm502, %v246, %v758
  %v1015 = vsel %vm503, %v247, %v759
  %v1016 = vsel %vm504, %v248, %v760
  %v1017 = vsel %vm505, %v249, %v761
  %v1018 = vsel %vm506, %v250, %v762
  %v1019 = vsel %vm507, %v251, %v763
  %v1020 = vsel %vm508, %v252, %v764
  %v1021 = vsel %vm509, %v253, %v765
  %v1022 = vsel %vm510, %v254, %v766
  %v1023 = vsel %vm511, %v255, %v767
  %v1024 = vsel %vm512, %v256, %v768
  %v1025 = vsel %vm513, %v257, %v769
  %v1026 = vsel %vm514, %v258, %v770
  %v1027 = vsel %vm515, %v259, %v771
  %v1028 = vsel %vm516, %v260, %v772
  %v1029 = vsel %vm517, %v261, %v773
  %v1030 = vsel %vm518, %v262, %v774
  %v1031 = vsel %vm519, %v263, %v775
  %v1032 = vsel %vm520, %v264, %v776
  %v1033 = vsel %vm521, %v265, %v777
  %v1034 = vsel %vm522, %v266, %v778
  %v1035 = vsel %vm523, %v267, %v779
  %v1036 = vsel %vm524, %v268, %v780
  %v1037 = vsel %vm525, %v269, %v781
  %v1038 = vsel %vm526, %v270, %v782
  %v1039 = vsel %vm527, %v271, %v783
  %v1040 = vsel %vm528, %v272, %v784
  %v1041 = vsel %vm529, %v273, %v785
  %v1042 = vsel %vm530, %v274, %v786
  %v1043 = vsel %vm531, %v275, %v787
  %v1044 = vsel %vm532, %v276, %v788
  %v1045 = vsel %vm533, %v277, %v789
  %v1046 = vsel %vm534, %v278, %v790
  %v1047 = vsel %vm535, %v279, %v791
  %v1048 = vsel %vm536, %v280, %v792
  %v1049 = vsel %vm537, %v281, %v793
  %v1050 = vsel %vm538, %v282, %v794
  %v1051 = vsel %vm539, %v283, %v795
  %v1052 = vsel %vm540, %v284, %v796
  %v1053 = vsel %vm541, %v285, %v797
  %v1054 = vsel %vm542, %v286, %v798
  %v1055 = vsel %vm543, %v287, %v799
  %v1056 = vsel %vm544, %v288, %v800
  %v1057 = vsel %vm545, %v289, %v801
  %v1058 = vsel %vm546, %v290, %v802
  %v1059 = vsel %vm547, %v291, %v803
  %v1060 = vsel %vm548, %v292, %v804
  %v1061 = vsel %vm549, %v293, %v805
  %v1062 = vsel %vm550, %v294, %v806
  %v1063 = vsel %vm551, %v295, %v807
  %v1064 = vsel %vm552, %v296, %v808
  %v1065 = vsel %vm553, %v297, %v809
  %v1066 = vsel %vm554, %v298, %v810
  %v1067 = vsel %vm555, %v299, %v811
  %v1068 = vsel %vm556, %v300, %v812
  %v1069 = vsel %vm557, %v301, %v813
  %v1070 = vsel %vm558, %v302, %v814
  %v1071 = vsel %vm559, %v303, %v815
  %v1072 = vsel %vm560, %v304, %v816
  %v1073 = vsel %vm561, %v305, %v817
  %v1074 = vsel %vm562, %v306, %v818
  %v1075 = vsel %vm563, %v307, %v819
  %v1076 = vsel %vm564, %v308, %v820
  %v1077 = vsel %vm565, %v309, %v821
  %v1078 = vsel %vm566, %v310, %v822
  %v1079 = vsel %vm567, %v311, %v823
  %v1080 = vsel %vm568, %v312, %v824
  %v1081 = vsel %vm569, %v313, %v825
  %v1082 = vsel %vm570, %v314, %v826
  %v1083 = vsel %vm571, %v315, %v827
  %v1084 = vsel %vm572, %v316, %v828
  %v1085 = vsel %vm573, %v317, %v829
  %v1086 = vsel %vm574, %v318, %v830
  %v1087 = vsel %vm575, %v319, %v831
  %v1088 = vsel %vm576, %v320, %v832
  %v1089 = vsel %vm577, %v321, %v833
  %v1090 = vsel %vm578, %v322, %v834
  %v1091 = vsel %vm579, %v323, %v835
  %v1092 = vsel %vm580, %v324, %v836
  %v1093 = vsel %vm581, %v325, %v837
  %v1094 = vsel %vm582, %v326, %v838
  %v1095 = vsel %vm583, %v327, %v839
  %v1096 = vsel %vm584, %v328, %v840
  %v1097 = vsel %vm585, %v329, %v841
  %v1098 = vsel %vm586, %v330, %v842
  %v1099 = vsel %vm587, %v331, %v843
  %v1100 = vsel %vm588, %v332, %v844
  %v1101 = vsel %vm589, %v333, %v845
  %v1102 = vsel %vm590, %v334, %v846
  %v1103 = vsel %vm591, %v335, %v847
  %v1104 = vsel %vm592, %v336, %v848
  %v1105 = vsel %vm593, %v337, %v849
  %v1106 = vsel %vm594, %v338, %v850
  %v1107 = vsel %vm595, %v339, %v851
  %v1108 = vsel %vm596, %v340, %v852
  %v1109 = vsel %vm597, %v341, %v853
  %v1110 = vsel %vm598, %v342, %v854
  %v1111 = vsel %vm599, %v343, %v855
  %v1112 = vsel %vm600, %v344, %v856
  %v1113 = vsel %vm601, %v345, %v857
  %v1114 = vsel %vm602, %v346, %v858
  %v1115 = vsel %vm603, %v347, %v859
  %v1116 = vsel %vm604, %v348, %v860
  %v1117 = vsel %vm605, %v349, %v861
  %v1118 = vsel %vm606, %v350, %v862
  %v1119 = vsel %vm607, %v351, %v863
  %v1120 = vsel %vm608, %v352, %v864
  %v1121 = vsel %vm609, %v353, %v865
  %v1122 = vsel %vm610, %v354, %v866
  %v1123 = vsel %vm611, %v355, %v867
  %v1124 = vsel %vm612, %v356, %v868
  %v1125 = vsel %vm613, %v357, %v869
  %v1126 = vsel %vm614, %v358, %v870
  %v1127 = vsel %vm615, %v359, %v871
  %v1128 = vsel %vm616, %v360, %v872
  %v1129 = vsel %vm617, %v361, %v873
  %v1130 = vsel %vm618, %v362, %v874
  %v1131 = vsel %vm619, %v363, %v875
  %v1132 = vsel %vm620, %v364, %v876
  %v1133 = vsel %vm621, %v365, %v877
  %v1134 = vsel %vm622, %v366, %v878
  %v1135 = vsel %vm623, %v367, %v879
  %v1136 = vsel %vm624, %v368, %v880
  %v1137 = vsel %vm625, %v369, %v881
  %v1138 = vsel %vm626, %v370, %v882
  %v1139 = vsel %vm627, %v371, %v883
  %v1140 = vsel %vm628, %v372, %v884
  %v1141 = vsel %vm629, %v373, %v885
  %v1142 = vsel %vm630, %v374, %v886
  %v1143 = vsel %vm631, %v375, %v887
  %v1144 = vsel %vm632, %v376, %v888
  %v1145 = vsel %vm633, %v377, %v889
  %v1146 = vsel %vm634, %v378, %v890
  %v1147 = vsel %vm635, %v379, %v891
  %v1148 = vsel %vm636, %v380, %v892
  %v1149 = vsel %vm637, %v381, %v893
  %v1150 = vsel %vm638, %v382, %v894
  %v1151 = vsel %vm639, %v383, %v895
  %v1152 = vsel %vm640, %v384, %v896
  %v1153 = vsel %vm641, %v385, %v897
  %v1154 = vsel %vm642, %v386, %v898
  %v1155 = vsel %vm643, %v387, %v899
  %v1156 = vsel %vm644, %v388, %v900
  %v1157 = vsel %vm645, %v389, %v901
  %v1158 = vsel %vm646, %v390, %v902
  %v1159 = vsel %vm647, %v391, %v903
  %v1160 = vsel %vm648, %v392, %v904
  %v1161 = vsel %vm649, %v393, %v905
  %v1162 = vsel %vm650, %v394, %v906
  %v1163 = vsel %vm651, %v395, %v907
  %v1164 = vsel %vm652, %v396, %v908
  %v1165 = vsel %vm653, %v397, %v909
  %v1166 = vpack.c.bf16 %v914, %v910
  %v1167 = vpack.c.bf16 %v915, %v911
  %v1168 = vpack.c.bf16 %v916, %v912
  %v1169 = vpack.c.bf16 %v917, %v913
  %v1170 = vpack.c.bf16 %v922, %v918
  %v1171 = vpack.c.bf16 %v923, %v919
  %v1172 = vpack.c.bf16 %v924, %v920
  %v1173 = vpack.c.bf16 %v925, %v921
  %v1174 = vpack.c.bf16 %v930, %v926
  %v1175 = vpack.c.bf16 %v931, %v927
  %v1176 = vpack.c.bf16 %v932, %v928
  %v1177 = vpack.c.bf16 %v933, %v929
  %v1178 = vpack.c.bf16 %v938, %v934
  %v1179 = vpack.c.bf16 %v939, %v935
  %v1180 = vpack.c.bf16 %v940, %v936
  %v1181 = vpack.c.bf16 %v941, %v937
  %v1182 = vpack.c.bf16 %v946, %v942
  %v1183 = vpack.c.bf16 %v947, %v943
  %v1184 = vpack.c.bf16 %v948, %v944
  %v1185 = vpack.c.bf16 %v949, %v945
  %v1186 = vpack.c.bf16 %v954, %v950
  %v1187 = vpack.c.bf16 %v955, %v951
  %v1188 = vpack.c.bf16 %v956, %v952
  %v1189 = vpack.c.bf16 %v957, %v953
  %v1190 = vpack.c.bf16 %v962, %v958
  %v1191 = vpack.c.bf16 %v963, %v959
  %v1192 = vpack.c.bf16 %v964, %v960
  %v1193 = vpack.c.bf16 %v965, %v961
  %v1194 = vpack.c.bf16 %v970, %v966
  %v1195 = vpack.c.bf16 %v971, %v967
  %v1196 = vpack.c.bf16 %v972, %v968
  %v1197 = vpack.c.bf16 %v973, %v969
  %v1198 = vpack.c.bf16 %v978, %v974
  %v1199 = vpack.c.bf16 %v979, %v975
  %v1200 = vpack.c.bf16 %v980, %v976
  %v1201 = vpack.c.bf16 %v981, %v977
  %v1202 = vpack.c.bf16 %v986, %v982
  %v1203 = vpack.c.bf16 %v987, %v983
  %v1204 = vpack.c.bf16 %v988, %v984
  %v1205 = vpack.c.bf16 %v989, %v985
  %v1206 = vpack.c.bf16 %v994, %v990
  %v1207 = vpack.c.bf16 %v995, %v991
  %v1208 = vpack.c.bf16 %v996, %v992
  %v1209 = vpack.c.bf16 %v997, %v993
  %v1210 = vpack.c.bf16 %v1002, %v998
  %v1211 = vpack.c.bf16 %v1003, %v999
  %v1212 = vpack.c.bf16 %v1004, %v1000
  %v1213 = vpack.c.bf16 %v1005, %v1001
  %v1214 = vpack.c.bf16 %v1010, %v1006
  %v1215 = vpack.c.bf16 %v1011, %v1007
  %v1216 = vpack.c.bf16 %v1012, %v1008
  %v1217 = vpack.c.bf16 %v1013, %v1009
  %v1218 = vpack.c.bf16 %v1018, %v1014
  %v1219 = vpack.c.bf16 %v1019, %v1015
  %v1220 = vpack.c.bf16 %v1020, %v1016
  %v1221 = vpack.c.bf16 %v1021, %v1017
  %v1222 = vpack.c.bf16 %v1026, %v1022
  %v1223 = vpack.c.bf16 %v1027, %v1023
  %v1224 = vpack.c.bf16 %v1028, %v1024
  %v1225 = vpack.c.bf16 %v1029, %v1025
  %v1226 = vpack.c.bf16 %v1034, %v1030
  %v1227 = vpack.c.bf16 %v1035, %v1031
  %v1228 = vpack.c.bf16 %v1036, %v1032
  %v1229 = vpack.c.bf16 %v1037, %v1033
  %v1230 = vpack.c.bf16 %v1042, %v1038
  %v1231 = vpack.c.bf16 %v1043, %v1039
  %v1232 = vpack.c.bf16 %v1044, %v1040
  %v1233 = vpack.c.bf16 %v1045, %v1041
  %v1234 = vpack.c.bf16 %v1050, %v1046
  %v1235 = vpack.c.bf16 %v1051, %v1047
  %v1236 = vpack.c.bf16 %v1052, %v1048
  %v1237 = vpack.c.bf16 %v1053, %v1049
  %v1238 = vpack.c.bf16 %v1058, %v1054
  %v1239 = vpack.c.bf16 %v1059, %v1055
  %v1240 = vpack.c.bf16 %v1060, %v1056
  %v1241 = vpack.c.bf16 %v1061, %v1057
  %v1242 = vpack.c.bf16 %v1066, %v1062
  %v1243 = vpack.c.bf16 %v1067, %v1063
  %v1244 = vpack.c.bf16 %v1068, %v1064
  %v1245 = vpack.c.bf16 %v1069, %v1065
  %v1246 = vpack.c.bf16 %v1074, %v1070
  %v1247 = vpack.c.bf16 %v1075, %v1071
  %v1248 = vpack.c.bf16 %v1076, %v1072
  %v1249 = vpack.c.bf16 %v1077, %v1073
  %v1250 = vpack.c.bf16 %v1082, %v1078
  %v1251 = vpack.c.bf16 %v1083, %v1079
  %v1252 = vpack.c.bf16 %v1084, %v1080
  %v1253 = vpack.c.bf16 %v1085, %v1081
  %v1254 = vpack.c.bf16 %v1090, %v1086
  %v1255 = vpack.c.bf16 %v1091, %v1087
  %v1256 = vpack.c.bf16 %v1092, %v1088
  %v1257 = vpack.c.bf16 %v1093, %v1089
  %v1258 = vpack.c.bf16 %v1098, %v1094
  %v1259 = vpack.c.bf16 %v1099, %v1095
  %v1260 = vpack.c.bf16 %v1100, %v1096
  %v1261 = vpack.c.bf16 %v1101, %v1097
  %v1262 = vpack.c.bf16 %v1106, %v1102
  %v1263 = vpack.c.bf16 %v1107, %v1103
  %v1264 = vpack.c.bf16 %v1108, %v1104
  %v1265 = vpack.c.bf16 %v1109, %v1105
  %v1266 = vpack.c.bf16 %v1114, %v1110
  %v1267 = vpack.c.bf16 %v1115, %v1111
  %v1268 = vpack.c.bf16 %v1116, %v1112
  %v1269 = vpack.c.bf16 %v1117, %v1113
  %v1270 = vpack.c.bf16 %v1122, %v1118
  %v1271 = vpack.c.bf16 %v1123, %v1119
  %v1272 = vpack.c.bf16 %v1124, %v1120
  %v1273 = vpack.c.bf16 %v1125, %v1121
  %v1274 = vpack.c.bf16 %v1130, %v1126
  %v1275 = vpack.c.bf16 %v1131, %v1127
  %v1276 = vpack.c.bf16 %v1132, %v1128
  %v1277 = vpack.c.bf16 %v1133, %v1129
  %v1278 = vpack.c.bf16 %v1138, %v1134
  %v1279 = vpack.c.bf16 %v1139, %v1135
  %v1280 = vpack.c.bf16 %v1140, %v1136
  %v1281 = vpack.c.bf16 %v1141, %v1137
  %v1282 = vpack.c.bf16 %v1146, %v1142
  %v1283 = vpack.c.bf16 %v1147, %v1143
  %v1284 = vpack.c.bf16 %v1148, %v1144
  %v1285 = vpack.c.bf16 %v1149, %v1145
  %v1286 = vpack.c.bf16 %v1154, %v1150
  %v1287 = vpack.c.bf16 %v1155, %v1151
  %v1288 = vpack.c.bf16 %v1156, %v1152
  %v1289 = vpack.c.bf16 %v1157, %v1153
  %v1290 = vpack.c.bf16 %v1162, %v1158
  %v1291 = vpack.c.bf16 %v1163, %v1159
  %v1292 = vpack.c.bf16 %v1164, %v1160
  %v1293 = vpack.c.bf16 %v1165, %v1161
  %v1294 = vld [vmem:[%s1] sm:$0xff]
  %v1295 = vld [vmem:[%s1 + $0x8] sm:$0xff]
  %v1296 = vld [vmem:[%s1 + $0x10] sm:$0xff]
  %v1297 = vld [vmem:[%s1 + $0x18] sm:$0xff]
  %v1298 = vld [vmem:[%s2] sm:$0xff]
  %v1299 = vld [vmem:[%s2 + $0x8] sm:$0xff]
  %1301 = vset.pattern.permute.xlu0 0
  %1302 = vperm.xlu0 %1301, %v1298
  %v1303 = vpop.permute.xlu0 %1302
  %1306 = vset.pattern.permute.xlu0 0
  %1307 = vperm.xlu0 %1306, %v1299
  %v1308 = vpop.permute.xlu0 %1307
  %v1314 = vunpack.c.l.b16 %v1294
  %v1315 = vunpack.c.h.b16 %v1294
  %v1316 = vunpack.c.l.b16 %v1295
  %v1317 = vunpack.c.h.b16 %v1295
  %v1318 = vunpack.c.l.b16 %v1296
  %v1319 = vunpack.c.h.b16 %v1296
  %v1320 = vunpack.c.l.b16 %v1297
  %v1321 = vunpack.c.h.b16 %v1297
  %v1322 = vpack.c.b16 %v1318, %v1314
  %v1323 = vpack.c.b16 %v1319, %v1315
  %v1324 = vpack.c.b16 %v1320, %v1316
  %v1325 = vpack.c.b16 %v1321, %v1317
  %1330 = vmatprep.subr.bf16.mxu0 %v1167
  %1331 = vmatpush1.bf16.msra.mxu0 %v1166
  %1332 = vmatprep.subr.bf16.mxu0 %v1171
  %1333 = vmatpush1.bf16.msra.mxu0 %v1170
  %1334 = vmatprep.subr.bf16.mxu0 %v1175
  %1335 = vmatpush1.bf16.msra.mxu0 %v1174
  %1336 = vmatprep.subr.bf16.mxu0 %v1179
  %1337 = vmatpush1.bf16.msra.mxu0 %v1178
  %1338 = vmatprep.subr.bf16.mxu0 %v1183
  %1339 = vmatpush1.bf16.msra.mxu0 %v1182
  %1340 = vmatprep.subr.bf16.mxu0 %v1187
  %1341 = vmatpush1.bf16.msra.mxu0 %v1186
  %1342 = vmatprep.subr.bf16.mxu0 %v1191
  %1343 = vmatpush1.bf16.msra.mxu0 %v1190
  %1344 = vmatprep.subr.bf16.mxu0 %v1195
  %1345 = vmatpush1.bf16.msra.mxu0 %v1194
  %1346 = vmatprep.subr.bf16.mxu0 %v1199
  %1347 = vmatpush1.bf16.msra.mxu0 %v1198
  %1348 = vmatprep.subr.bf16.mxu0 %v1203
  %1349 = vmatpush1.bf16.msra.mxu0 %v1202
  %1350 = vmatprep.subr.bf16.mxu0 %v1207
  %1351 = vmatpush1.bf16.msra.mxu0 %v1206
  %1352 = vmatprep.subr.bf16.mxu0 %v1211
  %1353 = vmatpush1.bf16.msra.mxu0 %v1210
  %1354 = vmatprep.subr.bf16.mxu0 %v1215
  %1355 = vmatpush1.bf16.msra.mxu0 %v1214
  %1356 = vmatprep.subr.bf16.mxu0 %v1219
  %1357 = vmatpush1.bf16.msra.mxu0 %v1218
  %1358 = vmatprep.subr.bf16.mxu0 %v1223
  %1359 = vmatpush1.bf16.msra.mxu0 %v1222
  %1360 = vmatprep.subr.bf16.mxu0 %v1227
  %1361 = vmatpush1.bf16.msra.mxu0 %v1226
  %1362 = vmatprep.mubr.bf16.mxu0 %v1323
  %1363 = vmatmul.mubr.bf16.gmra.mrb[0].mxu0 %v1322
  %v1364 = vpop.f32.mrb[0].mxu0
  %v1365 = vadd.f32 %v1303, %v1364
  %v1366 = vpop.f32.mrb[0].mxu0
  %v1367 = vadd.f32 %v1303, %v1366
  %v1368 = vpop.f32.mrb[0].mxu0
  %v1369 = vadd.f32 %v1308, %v1368
  %v1370 = vpop.f32.mrb[0].mxu0
  %v1371 = vadd.f32 %v1308, %v1370
  %1372 = vdwg.mxu0
  %1373 = vmatprep.subr.bf16.mxu0 %v1231
  %1374 = vmatpush1.bf16.msra.mxu0 %v1230
  %1375 = vmatprep.subr.bf16.mxu0 %v1235
  %1376 = vmatpush1.bf16.msra.mxu0 %v1234
  %1377 = vmatprep.subr.bf16.mxu0 %v1239
  %1378 = vmatpush1.bf16.msra.mxu0 %v1238
  %1379 = vmatprep.subr.bf16.mxu0 %v1243
  %1380 = vmatpush1.bf16.msra.mxu0 %v1242
  %1381 = vmatprep.subr.bf16.mxu0 %v1247
  %1382 = vmatpush1.bf16.msra.mxu0 %v1246
  %1383 = vmatprep.subr.bf16.mxu0 %v1251
  %1384 = vmatpush1.bf16.msra.mxu0 %v1250
  %1385 = vmatprep.subr.bf16.mxu0 %v1255
  %1386 = vmatpush1.bf16.msra.mxu0 %v1254
  %1387 = vmatprep.subr.bf16.mxu0 %v1259
  %1388 = vmatpush1.bf16.msra.mxu0 %v1258
  %1389 = vmatprep.subr.bf16.mxu0 %v1263
  %1390 = vmatpush1.bf16.msra.mxu0 %v1262
  %1391 = vmatprep.subr.bf16.mxu0 %v1267
  %1392 = vmatpush1.bf16.msra.mxu0 %v1266
  %1393 = vmatprep.subr.bf16.mxu0 %v1271
  %1394 = vmatpush1.bf16.msra.mxu0 %v1270
  %1395 = vmatprep.subr.bf16.mxu0 %v1275
  %1396 = vmatpush1.bf16.msra.mxu0 %v1274
  %1397 = vmatprep.subr.bf16.mxu0 %v1279
  %1398 = vmatpush1.bf16.msra.mxu0 %v1278
  %1399 = vmatprep.subr.bf16.mxu0 %v1283
  %1400 = vmatpush1.bf16.msra.mxu0 %v1282
  %1401 = vmatprep.subr.bf16.mxu0 %v1287
  %1402 = vmatpush1.bf16.msra.mxu0 %v1286
  %1403 = vmatprep.subr.bf16.mxu0 %v1291
  %1404 = vmatpush1.bf16.msra.mxu0 %v1290
  %1405 = vmatprep.mubr.bf16.mxu0 %v1325
  %1406 = vmatmul.mubr.bf16.gmra.mrb[0].mxu0 %v1324
  %v1407 = vpop.f32.mrb[0].mxu0
  %v1408 = vadd.f32 %v1365, %v1407
  %v1409 = vpop.f32.mrb[0].mxu0
  %v1410 = vadd.f32 %v1367, %v1409
  %v1411 = vpop.f32.mrb[0].mxu0
  %v1412 = vadd.f32 %v1369, %v1411
  %v1413 = vpop.f32.mrb[0].mxu0
  %v1414 = vadd.f32 %v1371, %v1413
  %1415 = vdwg.mxu0
  %1416 = vmatprep.subr.bf16.mxu0 %v1169
  %1417 = vmatpush1.bf16.msra.mxu0 %v1168
  %1418 = vmatprep.subr.bf16.mxu0 %v1173
  %1419 = vmatpush1.bf16.msra.mxu0 %v1172
  %1420 = vmatprep.subr.bf16.mxu0 %v1177
  %1421 = vmatpush1.bf16.msra.mxu0 %v1176
  %1422 = vmatprep.subr.bf16.mxu0 %v1181
  %1423 = vmatpush1.bf16.msra.mxu0 %v1180
  %1424 = vmatprep.subr.bf16.mxu0 %v1185
  %1425 = vmatpush1.bf16.msra.mxu0 %v1184
  %1426 = vmatprep.subr.bf16.mxu0 %v1189
  %1427 = vmatpush1.bf16.msra.mxu0 %v1188
  %1428 = vmatprep.subr.bf16.mxu0 %v1193
  %1429 = vmatpush1.bf16.msra.mxu0 %v1192
  %1430 = vmatprep.subr.bf16.mxu0 %v1197
  %1431 = vmatpush1.bf16.msra.mxu0 %v1196
  %1432 = vmatprep.subr.bf16.mxu0 %v1201
  %1433 = vmatpush1.bf16.msra.mxu0 %v1200
  %1434 = vmatprep.subr.bf16.mxu0 %v1205
  %1435 = vmatpush1.bf16.msra.mxu0 %v1204
  %1436 = vmatprep.subr.bf16.mxu0 %v1209
  %1437 = vmatpush1.bf16.msra.mxu0 %v1208
  %1438 = vmatprep.subr.bf16.mxu0 %v1213
  %1439 = vmatpush1.bf16.msra.mxu0 %v1212
  %1440 = vmatprep.subr.bf16.mxu0 %v1217
  %1441 = vmatpush1.bf16.msra.mxu0 %v1216
  %1442 = vmatprep.subr.bf16.mxu0 %v1221
  %1443 = vmatpush1.bf16.msra.mxu0 %v1220
  %1444 = vmatprep.subr.bf16.mxu0 %v1225
  %1445 = vmatpush1.bf16.msra.mxu0 %v1224
  %1446 = vmatprep.subr.bf16.mxu0 %v1229
  %1447 = vmatpush1.bf16.msra.mxu0 %v1228
  %1448 = vmatprep.mubr.bf16.mxu0 %v1323
  %1449 = vmatmul.mubr.bf16.gmra.mrb[0].mxu0 %v1322
  %v1450 = vpop.f32.mrb[0].mxu0
  %v1451 = vadd.f32 %v1303, %v1450
  %v1452 = vpop.f32.mrb[0].mxu0
  %v1453 = vadd.f32 %v1303, %v1452
  %v1454 = vpop.f32.mrb[0].mxu0
  %v1455 = vadd.f32 %v1308, %v1454
  %v1456 = vpop.f32.mrb[0].mxu0
  %v1457 = vadd.f32 %v1308, %v1456
  %1458 = vdwg.mxu0
  %1459 = vmatprep.subr.bf16.mxu0 %v1233
  %1460 = vmatpush1.bf16.msra.mxu0 %v1232
  %1461 = vmatprep.subr.bf16.mxu0 %v1237
  %1462 = vmatpush1.bf16.msra.mxu0 %v1236
  %1463 = vmatprep.subr.bf16.mxu0 %v1241
  %1464 = vmatpush1.bf16.msra.mxu0 %v1240
  %1465 = vmatprep.subr.bf16.mxu0 %v1245
  %1466 = vmatpush1.bf16.msra.mxu0 %v1244
  %1467 = vmatprep.subr.bf16.mxu0 %v1249
  %1468 = vmatpush1.bf16.msra.mxu0 %v1248
  %1469 = vmatprep.subr.bf16.mxu0 %v1253
  %1470 = vmatpush1.bf16.msra.mxu0 %v1252
  %1471 = vmatprep.subr.bf16.mxu0 %v1257
  %1472 = vmatpush1.bf16.msra.mxu0 %v1256
  %1473 = vmatprep.subr.bf16.mxu0 %v1261
  %1474 = vmatpush1.bf16.msra.mxu0 %v1260
  %1475 = vmatprep.subr.bf16.mxu0 %v1265
  %1476 = vmatpush1.bf16.msra.mxu0 %v1264
  %1477 = vmatprep.subr.bf16.mxu0 %v1269
  %1478 = vmatpush1.bf16.msra.mxu0 %v1268
  %1479 = vmatprep.subr.bf16.mxu0 %v1273
  %1480 = vmatpush1.bf16.msra.mxu0 %v1272
  %1481 = vmatprep.subr.bf16.mxu0 %v1277
  %1482 = vmatpush1.bf16.msra.mxu0 %v1276
  %1483 = vmatprep.subr.bf16.mxu0 %v1281
  %1484 = vmatpush1.bf16.msra.mxu0 %v1280
  %1485 = vmatprep.subr.bf16.mxu0 %v1285
  %1486 = vmatpush1.bf16.msra.mxu0 %v1284
  %1487 = vmatprep.subr.bf16.mxu0 %v1289
  %1488 = vmatpush1.bf16.msra.mxu0 %v1288
  %1489 = vmatprep.subr.bf16.mxu0 %v1293
  %1490 = vmatpush1.bf16.msra.mxu0 %v1292
  %1491 = vmatprep.mubr.bf16.mxu0 %v1325
  %1492 = vmatmul.mubr.bf16.gmra.mrb[0].mxu0 %v1324
  %v1493 = vpop.f32.mrb[0].mxu0
  %v1494 = vadd.f32 %v1451, %v1493
  %v1495 = vpop.f32.mrb[0].mxu0
  %v1496 = vadd.f32 %v1453, %v1495
  %v1497 = vpop.f32.mrb[0].mxu0
  %v1498 = vadd.f32 %v1455, %v1497
  %v1499 = vpop.f32.mrb[0].mxu0
  %v1500 = vadd.f32 %v1457, %v1499
  %1501 = vdwg.mxu0
  %v1502 = vpack.c.bf16 %v1412, %v1408
  %v1503 = vpack.c.bf16 %v1414, %v1410
  %v1504 = vpack.c.bf16 %v1498, %v1494
  %v1505 = vpack.c.bf16 %v1500, %v1496
  %v1510 = vunpack.c.l.b16 %v1502
  %v1511 = vunpack.c.l.b16 %v1503
  %v1512 = vunpack.c.l.b16 %v1504
  %v1513 = vunpack.c.l.b16 %v1505
  %v1514 = vunpack.c.h.b16 %v1502
  %v1515 = vunpack.c.h.b16 %v1503
  %v1516 = vunpack.c.h.b16 %v1504
  %v1517 = vunpack.c.h.b16 %v1505
  %v1518 = vpack.c.b16 %v1511, %v1510
  %v1519 = vpack.c.b16 %v1513, %v1512
  %v1520 = vpack.c.b16 %v1515, %v1514
  %v1521 = vpack.c.b16 %v1517, %v1516
  %1526 = vst [vmem:[%s3] sm:$0xff] %v1518
  %1527 = vst [vmem:[%s3 + $0x8] sm:$0xff] %v1519
  %1528 = vst [vmem:[%s3 + $0x10] sm:$0xff] %v1520
  %1529 = vst [vmem:[%s3 + $0x18] sm:$0xff] %v1521
  // Predicated region
  $region14: #{unet_g_hr_forward.6} parent=0 // pred_check
    _
  $region15: #{unet_g_hr_forward.6} parent=0 // pred_check_branch
    %1531 = sbr.rel (0) target = $region17
  $region16: #{unet_g_hr_forward.6} parent=0 // pred_region
    _
  $region17: #{unet_g_hr_forward.6} parent=0 // pred_fallthru
    _
  // Predicated region
  $region18: #{unet_g_hr_forward.6} parent=0 // pred_check
    _
  $region19: #{unet_g_hr_forward.6} parent=0 // pred_check_branch
    %1533 = sbr.rel (0) target = $region21
  $region20: #{unet_g_hr_forward.6} parent=0 // pred_region
    _
  $region21: #{unet_g_hr_forward.6} parent=0 // pred_fallthru
    _

// kernel: unet_g_hr_forward.7
$region0: #{unet_g_hr_forward.7}
  #allocation0 [shape = 'u32[]', space=smem, size = 0x4, offset = 0x4, fixed_abs, tag = 'smem constant byte address 0x4 - core index']
  #allocation1 [shape = 'u32[144,128]{1,0:T(1,128)}', space=vmem, size = 0x12000, scoped, tag = 'internal scratch']
  %s0 = inlined_call_operand.vmem [shape: bf16[1024,64], index: 0, kind: input, shape index: {}]
  %s1 = inlined_call_operand.vmem [shape: bf16[32,1024], index: 1, kind: input, shape index: {}]
  %s2 = inlined_call_operand.vmem [shape: f32[32,1], index: 2, kind: input, shape index: {}]
  %s3 = inlined_call_operand.vmem [shape: bf16[32,64], index: 3, kind: output, shape index: {}]
  %s4 = sld [smem:[#allocation0]]
  $region22: #{unet_g_hr_forward.7} parent=0
    _
  %s6 = ssub.s32 1, %s4
  %s7 = scalar_select 0, %s6, %s4
  // Predicated region
  $region2: #{unet_g_hr_forward.7} parent=0 // pred_check
    _
  $region3: #{unet_g_hr_forward.7} parent=0 // pred_check_branch
    %9 = sbr.rel (0) target = $region5
  $region4: #{unet_g_hr_forward.7} parent=0 // pred_region
    _
  $region5: #{unet_g_hr_forward.7} parent=0 // pred_fallthru
    _
  // Predicated region
  $region6: #{unet_g_hr_forward.7} parent=0 // pred_check
    _
  $region7: #{unet_g_hr_forward.7} parent=0 // pred_check_branch
    %11 = sbr.rel (0) target = $region9
  $region8: #{unet_g_hr_forward.7} parent=0 // pred_region
    _
  $region9: #{unet_g_hr_forward.7} parent=0 // pred_fallthru
    _
  // Predicated region
  $region10: #{unet_g_hr_forward.7} parent=0 // pred_check
    _
  $region11: #{unet_g_hr_forward.7} parent=0 // pred_check_branch
    %13 = sbr.rel (0) target = $region13
  $region12: #{unet_g_hr_forward.7} parent=0 // pred_region
    _
  $region13: #{unet_g_hr_forward.7} parent=0 // pred_fallthru
    _
  %v15 = vld [vmem:[%s0] sm:$0xf]
  %v16 = vld [vmem:[%s0 + $0x4] sm:$0xf]
  %v17 = vld [vmem:[%s0 + $0x8] sm:$0xf]
  %v18 = vld [vmem:[%s0 + $0xc] sm:$0xf]
  %v19 = vld [vmem:[%s0 + $0x10] sm:$0xf]
  %v20 = vld [vmem:[%s0 + $0x14] sm:$0xf]
  %v21 = vld [vmem:[%s0 + $0x18] sm:$0xf]
  %v22 = vld [vmem:[%s0 + $0x1c] sm:$0xf]
  %v23 = vld [vmem:[%s0 + $0x20] sm:$0xf]
  %v24 = vld [vmem:[%s0 + $0x24] sm:$0xf]
  %v25 = vld [vmem:[%s0 + $0x28] sm:$0xf]
  %v26 = vld [vmem:[%s0 + $0x2c] sm:$0xf]
  %v27 = vld [vmem:[%s0 + $0x30] sm:$0xf]
  %v28 = vld [vmem:[%s0 + $0x34] sm:$0xf]
  %v29 = vld [vmem:[%s0 + $0x38] sm:$0xf]
  %v30 = vld [vmem:[%s0 + $0x3c] sm:$0xf]
  %v31 = vld [vmem:[%s0 + $0x40] sm:$0xf]
  %v32 = vld [vmem:[%s0 + $0x44] sm:$0xf]
  %v33 = vld [vmem:[%s0 + $0x48] sm:$0xf]
  %v34 = vld [vmem:[%s0 + $0x4c] sm:$0xf]
  %v35 = vld [vmem:[%s0 + $0x50] sm:$0xf]
  %v36 = vld [vmem:[%s0 + $0x54] sm:$0xf]
  %v37 = vld [vmem:[%s0 + $0x58] sm:$0xf]
  %v38 = vld [vmem:[%s0 + $0x5c] sm:$0xf]
  %v39 = vld [vmem:[%s0 + $0x60] sm:$0xf]
  %v40 = vld [vmem:[%s0 + $0x64] sm:$0xf]
  %v41 = vld [vmem:[%s0 + $0x68] sm:$0xf]
  %v42 = vld [vmem:[%s0 + $0x6c] sm:$0xf]
  %v43 = vld [vmem:[%s0 + $0x70] sm:$0xf]
  %v44 = vld [vmem:[%s0 + $0x74] sm:$0xf]
  %v45 = vld [vmem:[%s0 + $0x78] sm:$0xf]
  %v46 = vld [vmem:[%s0 + $0x7c] sm:$0xf]
  %v47 = vld [vmem:[%s0 + $0x80] sm:$0xf]
  %v48 = vld [vmem:[%s0 + $0x84] sm:$0xf]
  %v49 = vld [vmem:[%s0 + $0x88] sm:$0xf]
  %v50 = vld [vmem:[%s0 + $0x8c] sm:$0xf]
  %v51 = vld [vmem:[%s0 + $0x90] sm:$0xf]
  %v52 = vld [vmem:[%s0 + $0x94] sm:$0xf]
  %v53 = vld [vmem:[%s0 + $0x98] sm:$0xf]
  %v54 = vld [vmem:[%s0 + $0x9c] sm:$0xf]
  %v55 = vld [vmem:[%s0 + $0xa0] sm:$0xf]
  %v56 = vld [vmem:[%s0 + $0xa4] sm:$0xf]
  %v57 = vld [vmem:[%s0 + $0xa8] sm:$0xf]
  %v58 = vld [vmem:[%s0 + $0xac] sm:$0xf]
  %v59 = vld [vmem:[%s0 + $0xb0] sm:$0xf]
  %v60 = vld [vmem:[%s0 + $0xb4] sm:$0xf]
  %v61 = vld [vmem:[%s0 + $0xb8] sm:$0xf]
  %v62 = vld [vmem:[%s0 + $0xbc] sm:$0xf]
  %v63 = vld [vmem:[%s0 + $0xc0] sm:$0xf]
  %v64 = vld [vmem:[%s0 + $0xc4] sm:$0xf]
  %v65 = vld [vmem:[%s0 + $0xc8] sm:$0xf]
  %v66 = vld [vmem:[%s0 + $0xcc] sm:$0xf]
  %v67 = vld [vmem:[%s0 + $0xd0] sm:$0xf]
  %v68 = vld [vmem:[%s0 + $0xd4] sm:$0xf]
  %v69 = vld [vmem:[%s0 + $0xd8] sm:$0xf]
  %v70 = vld [vmem:[%s0 + $0xdc] sm:$0xf]
  %v71 = vld [vmem:[%s0 + $0xe0] sm:$0xf]
  %v72 = vld [vmem:[%s0 + $0xe4] sm:$0xf]
  %v73 = vld [vmem:[%s0 + $0xe8] sm:$0xf]
  %v74 = vld [vmem:[%s0 + $0xec] sm:$0xf]
  %v75 = vld [vmem:[%s0 + $0xf0] sm:$0xf]
  %v76 = vld [vmem:[%s0 + $0xf4] sm:$0xf]
  %v77 = vld [vmem:[%s0 + $0xf8] sm:$0xf]
  %v78 = vld [vmem:[%s0 + $0xfc] sm:$0xf]
  %v79 = vld [vmem:[%s0 + $0x100] sm:$0xf]
  %v80 = vld [vmem:[%s0 + $0x104] sm:$0xf]
  %v81 = vld [vmem:[%s0 + $0x108] sm:$0xf]
  %v82 = vld [vmem:[%s0 + $0x10c] sm:$0xf]
  %v83 = vld [vmem:[%s0 + $0x110] sm:$0xf]
  %v84 = vld [vmem:[%s0 + $0x114] sm:$0xf]
  %v85 = vld [vmem:[%s0 + $0x118] sm:$0xf]
  %v86 = vld [vmem:[%s0 + $0x11c] sm:$0xf]
  %v87 = vld [vmem:[%s0 + $0x120] sm:$0xf]
  %v88 = vld [vmem:[%s0 + $0x124] sm:$0xf]
  %v89 = vld [vmem:[%s0 + $0x128] sm:$0xf]
  %v90 = vld [vmem:[%s0 + $0x12c] sm:$0xf]
  %v91 = vld [vmem:[%s0 + $0x130] sm:$0xf]
  %v92 = vld [vmem:[%s0 + $0x134] sm:$0xf]
  %v93 = vld [vmem:[%s0 + $0x138] sm:$0xf]
  %v94 = vld [vmem:[%s0 + $0x13c] sm:$0xf]
  %v95 = vld [vmem:[%s0 + $0x140] sm:$0xf]
  %v96 = vld [vmem:[%s0 + $0x144] sm:$0xf]
  %v97 = vld [vmem:[%s0 + $0x148] sm:$0xf]
  %v98 = vld [vmem:[%s0 + $0x14c] sm:$0xf]
  %v99 = vld [vmem:[%s0 + $0x150] sm:$0xf]
  %v100 = vld [vmem:[%s0 + $0x154] sm:$0xf]
  %v101 = vld [vmem:[%s0 + $0x158] sm:$0xf]
  %v102 = vld [vmem:[%s0 + $0x15c] sm:$0xf]
  %v103 = vld [vmem:[%s0 + $0x160] sm:$0xf]
  %v104 = vld [vmem:[%s0 + $0x164] sm:$0xf]
  %v105 = vld [vmem:[%s0 + $0x168] sm:$0xf]
  %v106 = vld [vmem:[%s0 + $0x16c] sm:$0xf]
  %v107 = vld [vmem:[%s0 + $0x170] sm:$0xf]
  %v108 = vld [vmem:[%s0 + $0x174] sm:$0xf]
  %v109 = vld [vmem:[%s0 + $0x178] sm:$0xf]
  %v110 = vld [vmem:[%s0 + $0x17c] sm:$0xf]
  %v111 = vld [vmem:[%s0 + $0x180] sm:$0xf]
  %v112 = vld [vmem:[%s0 + $0x184] sm:$0xf]
  %v113 = vld [vmem:[%s0 + $0x188] sm:$0xf]
  %v114 = vld [vmem:[%s0 + $0x18c] sm:$0xf]
  %v115 = vld [vmem:[%s0 + $0x190] sm:$0xf]
  %v116 = vld [vmem:[%s0 + $0x194] sm:$0xf]
  %v117 = vld [vmem:[%s0 + $0x198] sm:$0xf]
  %v118 = vld [vmem:[%s0 + $0x19c] sm:$0xf]
  %v119 = vld [vmem:[%s0 + $0x1a0] sm:$0xf]
  %v120 = vld [vmem:[%s0 + $0x1a4] sm:$0xf]
  %v121 = vld [vmem:[%s0 + $0x1a8] sm:$0xf]
  %v122 = vld [vmem:[%s0 + $0x1ac] sm:$0xf]
  %v123 = vld [vmem:[%s0 + $0x1b0] sm:$0xf]
  %v124 = vld [vmem:[%s0 + $0x1b4] sm:$0xf]
  %v125 = vld [vmem:[%s0 + $0x1b8] sm:$0xf]
  %v126 = vld [vmem:[%s0 + $0x1bc] sm:$0xf]
  %v127 = vld [vmem:[%s0 + $0x1c0] sm:$0xf]
  %v128 = vld [vmem:[%s0 + $0x1c4] sm:$0xf]
  %v129 = vld [vmem:[%s0 + $0x1c8] sm:$0xf]
  %v130 = vld [vmem:[%s0 + $0x1cc] sm:$0xf]
  %v131 = vld [vmem:[%s0 + $0x1d0] sm:$0xf]
  %v132 = vld [vmem:[%s0 + $0x1d4] sm:$0xf]
  %v133 = vld [vmem:[%s0 + $0x1d8] sm:$0xf]
  %v134 = vld [vmem:[%s0 + $0x1dc] sm:$0xf]
  %v135 = vld [vmem:[%s0 + $0x1e0] sm:$0xf]
  %v136 = vld [vmem:[%s0 + $0x1e4] sm:$0xf]
  %v137 = vld [vmem:[%s0 + $0x1e8] sm:$0xf]
  %v138 = vld [vmem:[%s0 + $0x1ec] sm:$0xf]
  %v139 = vld [vmem:[%s0 + $0x1f0] sm:$0xf]
  %v140 = vld [vmem:[%s0 + $0x1f4] sm:$0xf]
  %v141 = vld [vmem:[%s0 + $0x1f8] sm:$0xf]
  %v142 = vld [vmem:[%s0 + $0x1fc] sm:$0xf]
  %v143 = vunpack.c.l.bf16 %v15
  %v144 = vunpack.c.l.bf16 %v16
  %v145 = vunpack.c.l.bf16 %v17
  %v146 = vunpack.c.l.bf16 %v18
  %v147 = vunpack.c.l.bf16 %v19
  %v148 = vunpack.c.l.bf16 %v20
  %v149 = vunpack.c.l.bf16 %v21
  %v150 = vunpack.c.l.bf16 %v22
  %v151 = vunpack.c.l.bf16 %v23
  %v152 = vunpack.c.l.bf16 %v24
  %v153 = vunpack.c.l.bf16 %v25
  %v154 = vunpack.c.l.bf16 %v26
  %v155 = vunpack.c.l.bf16 %v27
  %v156 = vunpack.c.l.bf16 %v28
  %v157 = vunpack.c.l.bf16 %v29
  %v158 = vunpack.c.l.bf16 %v30
  %v159 = vunpack.c.l.bf16 %v31
  %v160 = vunpack.c.l.bf16 %v32
  %v161 = vunpack.c.l.bf16 %v33
  %v162 = vunpack.c.l.bf16 %v34
  %v163 = vunpack.c.l.bf16 %v35
  %v164 = vunpack.c.l.bf16 %v36
  %v165 = vunpack.c.l.bf16 %v37
  %v166 = vunpack.c.l.bf16 %v38
  %v167 = vunpack.c.l.bf16 %v39
  %v168 = vunpack.c.l.bf16 %v40
  %v169 = vunpack.c.l.bf16 %v41
  %v170 = vunpack.c.l.bf16 %v42
  %v171 = vunpack.c.l.bf16 %v43
  %v172 = vunpack.c.l.bf16 %v44
  %v173 = vunpack.c.l.bf16 %v45
  %v174 = vunpack.c.l.bf16 %v46
  %v175 = vunpack.c.l.bf16 %v47
  %v176 = vunpack.c.l.bf16 %v48
  %v177 = vunpack.c.l.bf16 %v49
  %v178 = vunpack.c.l.bf16 %v50
  %v179 = vunpack.c.l.bf16 %v51
  %v180 = vunpack.c.l.bf16 %v52
  %v181 = vunpack.c.l.bf16 %v53
  %v182 = vunpack.c.l.bf16 %v54
  %v183 = vunpack.c.l.bf16 %v55
  %v184 = vunpack.c.l.bf16 %v56
  %v185 = vunpack.c.l.bf16 %v57
  %v186 = vunpack.c.l.bf16 %v58
  %v187 = vunpack.c.l.bf16 %v59
  %v188 = vunpack.c.l.bf16 %v60
  %v189 = vunpack.c.l.bf16 %v61
  %v190 = vunpack.c.l.bf16 %v62
  %v191 = vunpack.c.l.bf16 %v63
  %v192 = vunpack.c.l.bf16 %v64
  %v193 = vunpack.c.l.bf16 %v65
  %v194 = vunpack.c.l.bf16 %v66
  %v195 = vunpack.c.l.bf16 %v67
  %v196 = vunpack.c.l.bf16 %v68
  %v197 = vunpack.c.l.bf16 %v69
  %v198 = vunpack.c.l.bf16 %v70
  %v199 = vunpack.c.l.bf16 %v71
  %v200 = vunpack.c.l.bf16 %v72
  %v201 = vunpack.c.l.bf16 %v73
  %v202 = vunpack.c.l.bf16 %v74
  %v203 = vunpack.c.l.bf16 %v75
  %v204 = vunpack.c.l.bf16 %v76
  %v205 = vunpack.c.l.bf16 %v77
  %v206 = vunpack.c.l.bf16 %v78
  %v207 = vunpack.c.l.bf16 %v79
  %v208 = vunpack.c.l.bf16 %v80
  %v209 = vunpack.c.l.bf16 %v81
  %v210 = vunpack.c.l.bf16 %v82
  %v211 = vunpack.c.l.bf16 %v83
  %v212 = vunpack.c.l.bf16 %v84
  %v213 = vunpack.c.l.bf16 %v85
  %v214 = vunpack.c.l.bf16 %v86
  %v215 = vunpack.c.l.bf16 %v87
  %v216 = vunpack.c.l.bf16 %v88
  %v217 = vunpack.c.l.bf16 %v89
  %v218 = vunpack.c.l.bf16 %v90
  %v219 = vunpack.c.l.bf16 %v91
  %v220 = vunpack.c.l.bf16 %v92
  %v221 = vunpack.c.l.bf16 %v93
  %v222 = vunpack.c.l.bf16 %v94
  %v223 = vunpack.c.l.bf16 %v95
  %v224 = vunpack.c.l.bf16 %v96
  %v225 = vunpack.c.l.bf16 %v97
  %v226 = vunpack.c.l.bf16 %v98
  %v227 = vunpack.c.l.bf16 %v99
  %v228 = vunpack.c.l.bf16 %v100
  %v229 = vunpack.c.l.bf16 %v101
  %v230 = vunpack.c.l.bf16 %v102
  %v231 = vunpack.c.l.bf16 %v103
  %v232 = vunpack.c.l.bf16 %v104
  %v233 = vunpack.c.l.bf16 %v105
  %v234 = vunpack.c.l.bf16 %v106
  %v235 = vunpack.c.l.bf16 %v107
  %v236 = vunpack.c.l.bf16 %v108
  %v237 = vunpack.c.l.bf16 %v109
  %v238 = vunpack.c.l.bf16 %v110
  %v239 = vunpack.c.l.bf16 %v111
  %v240 = vunpack.c.l.bf16 %v112
  %v241 = vunpack.c.l.bf16 %v113
  %v242 = vunpack.c.l.bf16 %v114
  %v243 = vunpack.c.l.bf16 %v115
  %v244 = vunpack.c.l.bf16 %v116
  %v245 = vunpack.c.l.bf16 %v117
  %v246 = vunpack.c.l.bf16 %v118
  %v247 = vunpack.c.l.bf16 %v119
  %v248 = vunpack.c.l.bf16 %v120
  %v249 = vunpack.c.l.bf16 %v121
  %v250 = vunpack.c.l.bf16 %v122
  %v251 = vunpack.c.l.bf16 %v123
  %v252 = vunpack.c.l.bf16 %v124
  %v253 = vunpack.c.l.bf16 %v125
  %v254 = vunpack.c.l.bf16 %v126
  %v255 = vunpack.c.l.bf16 %v127
  %v256 = vunpack.c.l.bf16 %v128
  %v257 = vunpack.c.l.bf16 %v129
  %v258 = vunpack.c.l.bf16 %v130
  %v259 = vunpack.c.l.bf16 %v131
  %v260 = vunpack.c.l.bf16 %v132
  %v261 = vunpack.c.l.bf16 %v133
  %v262 = vunpack.c.l.bf16 %v134
  %v263 = vunpack.c.l.bf16 %v135
  %v264 = vunpack.c.l.bf16 %v136
  %v265 = vunpack.c.l.bf16 %v137
  %v266 = vunpack.c.l.bf16 %v138
  %v267 = vunpack.c.l.bf16 %v139
  %v268 = vunpack.c.l.bf16 %v140
  %v269 = vunpack.c.l.bf16 %v141
  %v270 = vunpack.c.l.bf16 %v142
  %vm271 = vcmp.gt.f32.partialorder %v143, 0.0
  %vm272 = vcmp.gt.f32.partialorder %v144, 0.0
  %vm273 = vcmp.gt.f32.partialorder %v145, 0.0
  %vm274 = vcmp.gt.f32.partialorder %v146, 0.0
  %vm275 = vcmp.gt.f32.partialorder %v147, 0.0
  %vm276 = vcmp.gt.f32.partialorder %v148, 0.0
  %vm277 = vcmp.gt.f32.partialorder %v149, 0.0
  %vm278 = vcmp.gt.f32.partialorder %v150, 0.0
  %vm279 = vcmp.gt.f32.partialorder %v151, 0.0
  %vm280 = vcmp.gt.f32.partialorder %v152, 0.0
  %vm281 = vcmp.gt.f32.partialorder %v153, 0.0
  %vm282 = vcmp.gt.f32.partialorder %v154, 0.0
  %vm283 = vcmp.gt.f32.partialorder %v155, 0.0
  %vm284 = vcmp.gt.f32.partialorder %v156, 0.0
  %vm285 = vcmp.gt.f32.partialorder %v157, 0.0
  %vm286 = vcmp.gt.f32.partialorder %v158, 0.0
  %vm287 = vcmp.gt.f32.partialorder %v159, 0.0
  %vm288 = vcmp.gt.f32.partialorder %v160, 0.0
  %vm289 = vcmp.gt.f32.partialorder %v161, 0.0
  %vm290 = vcmp.gt.f32.partialorder %v162, 0.0
  %vm291 = vcmp.gt.f32.partialorder %v163, 0.0
  %vm292 = vcmp.gt.f32.partialorder %v164, 0.0
  %vm293 = vcmp.gt.f32.partialorder %v165, 0.0
  %vm294 = vcmp.gt.f32.partialorder %v166, 0.0
  %vm295 = vcmp.gt.f32.partialorder %v167, 0.0
  %vm296 = vcmp.gt.f32.partialorder %v168, 0.0
  %vm297 = vcmp.gt.f32.partialorder %v169, 0.0
  %vm298 = vcmp.gt.f32.partialorder %v170, 0.0
  %vm299 = vcmp.gt.f32.partialorder %v171, 0.0
  %vm300 = vcmp.gt.f32.partialorder %v172, 0.0
  %vm301 = vcmp.gt.f32.partialorder %v173, 0.0
  %vm302 = vcmp.gt.f32.partialorder %v174, 0.0
  %vm303 = vcmp.gt.f32.partialorder %v175, 0.0
  %vm304 = vcmp.gt.f32.partialorder %v176, 0.0
  %vm305 = vcmp.gt.f32.partialorder %v177, 0.0
  %vm306 = vcmp.gt.f32.partialorder %v178, 0.0
  %vm307 = vcmp.gt.f32.partialorder %v179, 0.0
  %vm308 = vcmp.gt.f32.partialorder %v180, 0.0
  %vm309 = vcmp.gt.f32.partialorder %v181, 0.0
  %vm310 = vcmp.gt.f32.partialorder %v182, 0.0
  %vm311 = vcmp.gt.f32.partialorder %v183, 0.0
  %vm312 = vcmp.gt.f32.partialorder %v184, 0.0
  %vm313 = vcmp.gt.f32.partialorder %v185, 0.0
  %vm314 = vcmp.gt.f32.partialorder %v186, 0.0
  %vm315 = vcmp.gt.f32.partialorder %v187, 0.0
  %vm316 = vcmp.gt.f32.partialorder %v188, 0.0
  %vm317 = vcmp.gt.f32.partialorder %v189, 0.0
  %vm318 = vcmp.gt.f32.partialorder %v190, 0.0
  %vm319 = vcmp.gt.f32.partialorder %v191, 0.0
  %vm320 = vcmp.gt.f32.partialorder %v192, 0.0
  %vm321 = vcmp.gt.f32.partialorder %v193, 0.0
  %vm322 = vcmp.gt.f32.partialorder %v194, 0.0
  %vm323 = vcmp.gt.f32.partialorder %v195, 0.0
  %vm324 = vcmp.gt.f32.partialorder %v196, 0.0
  %vm325 = vcmp.gt.f32.partialorder %v197, 0.0
  %vm326 = vcmp.gt.f32.partialorder %v198, 0.0
  %vm327 = vcmp.gt.f32.partialorder %v199, 0.0
  %vm328 = vcmp.gt.f32.partialorder %v200, 0.0
  %vm329 = vcmp.gt.f32.partialorder %v201, 0.0
  %vm330 = vcmp.gt.f32.partialorder %v202, 0.0
  %vm331 = vcmp.gt.f32.partialorder %v203, 0.0
  %vm332 = vcmp.gt.f32.partialorder %v204, 0.0
  %vm333 = vcmp.gt.f32.partialorder %v205, 0.0
  %vm334 = vcmp.gt.f32.partialorder %v206, 0.0
  %vm335 = vcmp.gt.f32.partialorder %v207, 0.0
  %vm336 = vcmp.gt.f32.partialorder %v208, 0.0
  %vm337 = vcmp.gt.f32.partialorder %v209, 0.0
  %vm338 = vcmp.gt.f32.partialorder %v210, 0.0
  %vm339 = vcmp.gt.f32.partialorder %v211, 0.0
  %vm340 = vcmp.gt.f32.partialorder %v212, 0.0
  %vm341 = vcmp.gt.f32.partialorder %v213, 0.0
  %vm342 = vcmp.gt.f32.partialorder %v214, 0.0
  %vm343 = vcmp.gt.f32.partialorder %v215, 0.0
  %vm344 = vcmp.gt.f32.partialorder %v216, 0.0
  %vm345 = vcmp.gt.f32.partialorder %v217, 0.0
  %vm346 = vcmp.gt.f32.partialorder %v218, 0.0
  %vm347 = vcmp.gt.f32.partialorder %v219, 0.0
  %vm348 = vcmp.gt.f32.partialorder %v220, 0.0
  %vm349 = vcmp.gt.f32.partialorder %v221, 0.0
  %vm350 = vcmp.gt.f32.partialorder %v222, 0.0
  %vm351 = vcmp.gt.f32.partialorder %v223, 0.0
  %vm352 = vcmp.gt.f32.partialorder %v224, 0.0
  %vm353 = vcmp.gt.f32.partialorder %v225, 0.0
  %vm354 = vcmp.gt.f32.partialorder %v226, 0.0
  %vm355 = vcmp.gt.f32.partialorder %v227, 0.0
  %vm356 = vcmp.gt.f32.partialorder %v228, 0.0
  %vm357 = vcmp.gt.f32.partialorder %v229, 0.0
  %vm358 = vcmp.gt.f32.partialorder %v230, 0.0
  %vm359 = vcmp.gt.f32.partialorder %v231, 0.0
  %vm360 = vcmp.gt.f32.partialorder %v232, 0.0
  %vm361 = vcmp.gt.f32.partialorder %v233, 0.0
  %vm362 = vcmp.gt.f32.partialorder %v234, 0.0
  %vm363 = vcmp.gt.f32.partialorder %v235, 0.0
  %vm364 = vcmp.gt.f32.partialorder %v236, 0.0
  %vm365 = vcmp.gt.f32.partialorder %v237, 0.0
  %vm366 = vcmp.gt.f32.partialorder %v238, 0.0
  %vm367 = vcmp.gt.f32.partialorder %v239, 0.0
  %vm368 = vcmp.gt.f32.partialorder %v240, 0.0
  %vm369 = vcmp.gt.f32.partialorder %v241, 0.0
  %vm370 = vcmp.gt.f32.partialorder %v242, 0.0
  %vm371 = vcmp.gt.f32.partialorder %v243, 0.0
  %vm372 = vcmp.gt.f32.partialorder %v244, 0.0
  %vm373 = vcmp.gt.f32.partialorder %v245, 0.0
  %vm374 = vcmp.gt.f32.partialorder %v246, 0.0
  %vm375 = vcmp.gt.f32.partialorder %v247, 0.0
  %vm376 = vcmp.gt.f32.partialorder %v248, 0.0
  %vm377 = vcmp.gt.f32.partialorder %v249, 0.0
  %vm378 = vcmp.gt.f32.partialorder %v250, 0.0
  %vm379 = vcmp.gt.f32.partialorder %v251, 0.0
  %vm380 = vcmp.gt.f32.partialorder %v252, 0.0
  %vm381 = vcmp.gt.f32.partialorder %v253, 0.0
  %vm382 = vcmp.gt.f32.partialorder %v254, 0.0
  %vm383 = vcmp.gt.f32.partialorder %v255, 0.0
  %vm384 = vcmp.gt.f32.partialorder %v256, 0.0
  %vm385 = vcmp.gt.f32.partialorder %v257, 0.0
  %vm386 = vcmp.gt.f32.partialorder %v258, 0.0
  %vm387 = vcmp.gt.f32.partialorder %v259, 0.0
  %vm388 = vcmp.gt.f32.partialorder %v260, 0.0
  %vm389 = vcmp.gt.f32.partialorder %v261, 0.0
  %vm390 = vcmp.gt.f32.partialorder %v262, 0.0
  %vm391 = vcmp.gt.f32.partialorder %v263, 0.0
  %vm392 = vcmp.gt.f32.partialorder %v264, 0.0
  %vm393 = vcmp.gt.f32.partialorder %v265, 0.0
  %vm394 = vcmp.gt.f32.partialorder %v266, 0.0
  %vm395 = vcmp.gt.f32.partialorder %v267, 0.0
  %vm396 = vcmp.gt.f32.partialorder %v268, 0.0
  %vm397 = vcmp.gt.f32.partialorder %v269, 0.0
  %vm398 = vcmp.gt.f32.partialorder %v270, 0.0
  %v399 = vmul.f32 %v143, 0.2
  %v400 = vmul.f32 %v144, 0.2
  %v401 = vmul.f32 %v145, 0.2
  %v402 = vmul.f32 %v146, 0.2
  %v403 = vmul.f32 %v147, 0.2
  %v404 = vmul.f32 %v148, 0.2
  %v405 = vmul.f32 %v149, 0.2
  %v406 = vmul.f32 %v150, 0.2
  %v407 = vmul.f32 %v151, 0.2
  %v408 = vmul.f32 %v152, 0.2
  %v409 = vmul.f32 %v153, 0.2
  %v410 = vmul.f32 %v154, 0.2
  %v411 = vmul.f32 %v155, 0.2
  %v412 = vmul.f32 %v156, 0.2
  %v413 = vmul.f32 %v157, 0.2
  %v414 = vmul.f32 %v158, 0.2
  %v415 = vmul.f32 %v159, 0.2
  %v416 = vmul.f32 %v160, 0.2
  %v417 = vmul.f32 %v161, 0.2
  %v418 = vmul.f32 %v162, 0.2
  %v419 = vmul.f32 %v163, 0.2
  %v420 = vmul.f32 %v164, 0.2
  %v421 = vmul.f32 %v165, 0.2
  %v422 = vmul.f32 %v166, 0.2
  %v423 = vmul.f32 %v167, 0.2
  %v424 = vmul.f32 %v168, 0.2
  %v425 = vmul.f32 %v169, 0.2
  %v426 = vmul.f32 %v170, 0.2
  %v427 = vmul.f32 %v171, 0.2
  %v428 = vmul.f32 %v172, 0.2
  %v429 = vmul.f32 %v173, 0.2
  %v430 = vmul.f32 %v174, 0.2
  %v431 = vmul.f32 %v175, 0.2
  %v432 = vmul.f32 %v176, 0.2
  %v433 = vmul.f32 %v177, 0.2
  %v434 = vmul.f32 %v178, 0.2
  %v435 = vmul.f32 %v179, 0.2
  %v436 = vmul.f32 %v180, 0.2
  %v437 = vmul.f32 %v181, 0.2
  %v438 = vmul.f32 %v182, 0.2
  %v439 = vmul.f32 %v183, 0.2
  %v440 = vmul.f32 %v184, 0.2
  %v441 = vmul.f32 %v185, 0.2
  %v442 = vmul.f32 %v186, 0.2
  %v443 = vmul.f32 %v187, 0.2
  %v444 = vmul.f32 %v188, 0.2
  %v445 = vmul.f32 %v189, 0.2
  %v446 = vmul.f32 %v190, 0.2
  %v447 = vmul.f32 %v191, 0.2
  %v448 = vmul.f32 %v192, 0.2
  %v449 = vmul.f32 %v193, 0.2
  %v450 = vmul.f32 %v194, 0.2
  %v451 = vmul.f32 %v195, 0.2
  %v452 = vmul.f32 %v196, 0.2
  %v453 = vmul.f32 %v197, 0.2
  %v454 = vmul.f32 %v198, 0.2
  %v455 = vmul.f32 %v199, 0.2
  %v456 = vmul.f32 %v200, 0.2
  %v457 = vmul.f32 %v201, 0.2
  %v458 = vmul.f32 %v202, 0.2
  %v459 = vmul.f32 %v203, 0.2
  %v460 = vmul.f32 %v204, 0.2
  %v461 = vmul.f32 %v205, 0.2
  %v462 = vmul.f32 %v206, 0.2
  %v463 = vmul.f32 %v207, 0.2
  %v464 = vmul.f32 %v208, 0.2
  %v465 = vmul.f32 %v209, 0.2
  %v466 = vmul.f32 %v210, 0.2
  %v467 = vmul.f32 %v211, 0.2
  %v468 = vmul.f32 %v212, 0.2
  %v469 = vmul.f32 %v213, 0.2
  %v470 = vmul.f32 %v214, 0.2
  %v471 = vmul.f32 %v215, 0.2
  %v472 = vmul.f32 %v216, 0.2
  %v473 = vmul.f32 %v217, 0.2
  %v474 = vmul.f32 %v218, 0.2
  %v475 = vmul.f32 %v219, 0.2
  %v476 = vmul.f32 %v220, 0.2
  %v477 = vmul.f32 %v221, 0.2
  %v478 = vmul.f32 %v222, 0.2
  %v479 = vmul.f32 %v223, 0.2
  %v480 = vmul.f32 %v224, 0.2
  %v481 = vmul.f32 %v225, 0.2
  %v482 = vmul.f32 %v226, 0.2
  %v483 = vmul.f32 %v227, 0.2
  %v484 = vmul.f32 %v228, 0.2
  %v485 = vmul.f32 %v229, 0.2
  %v486 = vmul.f32 %v230, 0.2
  %v487 = vmul.f32 %v231, 0.2
  %v488 = vmul.f32 %v232, 0.2
  %v489 = vmul.f32 %v233, 0.2
  %v490 = vmul.f32 %v234, 0.2
  %v491 = vmul.f32 %v235, 0.2
  %v492 = vmul.f32 %v236, 0.2
  %v493 = vmul.f32 %v237, 0.2
  %v494 = vmul.f32 %v238, 0.2
  %v495 = vmul.f32 %v239, 0.2
  %v496 = vmul.f32 %v240, 0.2
  %v497 = vmul.f32 %v241, 0.2
  %v498 = vmul.f32 %v242, 0.2
  %v499 = vmul.f32 %v243, 0.2
  %v500 = vmul.f32 %v244, 0.2
  %v501 = vmul.f32 %v245, 0.2
  %v502 = vmul.f32 %v246, 0.2
  %v503 = vmul.f32 %v247, 0.2
  %v504 = vmul.f32 %v248, 0.2
  %v505 = vmul.f32 %v249, 0.2
  %v506 = vmul.f32 %v250, 0.2
  %v507 = vmul.f32 %v251, 0.2
  %v508 = vmul.f32 %v252, 0.2
  %v509 = vmul.f32 %v253, 0.2
  %v510 = vmul.f32 %v254, 0.2
  %v511 = vmul.f32 %v255, 0.2
  %v512 = vmul.f32 %v256, 0.2
  %v513 = vmul.f32 %v257, 0.2
  %v514 = vmul.f32 %v258, 0.2
  %v515 = vmul.f32 %v259, 0.2
  %v516 = vmul.f32 %v260, 0.2
  %v517 = vmul.f32 %v261, 0.2
  %v518 = vmul.f32 %v262, 0.2
  %v519 = vmul.f32 %v263, 0.2
  %v520 = vmul.f32 %v264, 0.2
  %v521 = vmul.f32 %v265, 0.2
  %v522 = vmul.f32 %v266, 0.2
  %v523 = vmul.f32 %v267, 0.2
  %v524 = vmul.f32 %v268, 0.2
  %v525 = vmul.f32 %v269, 0.2
  %v526 = vmul.f32 %v270, 0.2
  %v527 = vsel %vm271, %v143, %v399
  %v528 = vsel %vm272, %v144, %v400
  %v529 = vsel %vm273, %v145, %v401
  %v530 = vsel %vm274, %v146, %v402
  %v531 = vsel %vm275, %v147, %v403
  %v532 = vsel %vm276, %v148, %v404
  %v533 = vsel %vm277, %v149, %v405
  %v534 = vsel %vm278, %v150, %v406
  %v535 = vsel %vm279, %v151, %v407
  %v536 = vsel %vm280, %v152, %v408
  %v537 = vsel %vm281, %v153, %v409
  %v538 = vsel %vm282, %v154, %v410
  %v539 = vsel %vm283, %v155, %v411
  %v540 = vsel %vm284, %v156, %v412
  %v541 = vsel %vm285, %v157, %v413
  %v542 = vsel %vm286, %v158, %v414
  %v543 = vsel %vm287, %v159, %v415
  %v544 = vsel %vm288, %v160, %v416
  %v545 = vsel %vm289, %v161, %v417
  %v546 = vsel %vm290, %v162, %v418
  %v547 = vsel %vm291, %v163, %v419
  %v548 = vsel %vm292, %v164, %v420
  %v549 = vsel %vm293, %v165, %v421
  %v550 = vsel %vm294, %v166, %v422
  %v551 = vsel %vm295, %v167, %v423
  %v552 = vsel %vm296, %v168, %v424
  %v553 = vsel %vm297, %v169, %v425
  %v554 = vsel %vm298, %v170, %v426
  %v555 = vsel %vm299, %v171, %v427
  %v556 = vsel %vm300, %v172, %v428
  %v557 = vsel %vm301, %v173, %v429
  %v558 = vsel %vm302, %v174, %v430
  %v559 = vsel %vm303, %v175, %v431
  %v560 = vsel %vm304, %v176, %v432
  %v561 = vsel %vm305, %v177, %v433
  %v562 = vsel %vm306, %v178, %v434
  %v563 = vsel %vm307, %v179, %v435
  %v564 = vsel %vm308, %v180, %v436
  %v565 = vsel %vm309, %v181, %v437
  %v566 = vsel %vm310, %v182, %v438
  %v567 = vsel %vm311, %v183, %v439
  %v568 = vsel %vm312, %v184, %v440
  %v569 = vsel %vm313, %v185, %v441
  %v570 = vsel %vm314, %v186, %v442
  %v571 = vsel %vm315, %v187, %v443
  %v572 = vsel %vm316, %v188, %v444
  %v573 = vsel %vm317, %v189, %v445
  %v574 = vsel %vm318, %v190, %v446
  %v575 = vsel %vm319, %v191, %v447
  %v576 = vsel %vm320, %v192, %v448
  %v577 = vsel %vm321, %v193, %v449
  %v578 = vsel %vm322, %v194, %v450
  %v579 = vsel %vm323, %v195, %v451
  %v580 = vsel %vm324, %v196, %v452
  %v581 = vsel %vm325, %v197, %v453
  %v582 = vsel %vm326, %v198, %v454
  %v583 = vsel %vm327, %v199, %v455
  %v584 = vsel %vm328, %v200, %v456
  %v585 = vsel %vm329, %v201, %v457
  %v586 = vsel %vm330, %v202, %v458
  %v587 = vsel %vm331, %v203, %v459
  %v588 = vsel %vm332, %v204, %v460
  %v589 = vsel %vm333, %v205, %v461
  %v590 = vsel %vm334, %v206, %v462
  %v591 = vsel %vm335, %v207, %v463
  %v592 = vsel %vm336, %v208, %v464
  %v593 = vsel %vm337, %v209, %v465
  %v594 = vsel %vm338, %v210, %v466
  %v595 = vsel %vm339, %v211, %v467
  %v596 = vsel %vm340, %v212, %v468
  %v597 = vsel %vm341, %v213, %v469
  %v598 = vsel %vm342, %v214, %v470
  %v599 = vsel %vm343, %v215, %v471
  %v600 = vsel %vm344, %v216, %v472
  %v601 = vsel %vm345, %v217, %v473
  %v602 = vsel %vm346, %v218, %v474
  %v603 = vsel %vm347, %v219, %v475
  %v604 = vsel %vm348, %v220, %v476
  %v605 = vsel %vm349, %v221, %v477
  %v606 = vsel %vm350, %v222, %v478
  %v607 = vsel %vm351, %v223, %v479
  %v608 = vsel %vm352, %v224, %v480
  %v609 = vsel %vm353, %v225, %v481
  %v610 = vsel %vm354, %v226, %v482
  %v611 = vsel %vm355, %v227, %v483
  %v612 = vsel %vm356, %v228, %v484
  %v613 = vsel %vm357, %v229, %v485
  %v614 = vsel %vm358, %v230, %v486
  %v615 = vsel %vm359, %v231, %v487
  %v616 = vsel %vm360, %v232, %v488
  %v617 = vsel %vm361, %v233, %v489
  %v618 = vsel %vm362, %v234, %v490
  %v619 = vsel %vm363, %v235, %v491
  %v620 = vsel %vm364, %v236, %v492
  %v621 = vsel %vm365, %v237, %v493
  %v622 = vsel %vm366, %v238, %v494
  %v623 = vsel %vm367, %v239, %v495
  %v624 = vsel %vm368, %v240, %v496
  %v625 = vsel %vm369, %v241, %v497
  %v626 = vsel %vm370, %v242, %v498
  %v627 = vsel %vm371, %v243, %v499
  %v628 = vsel %vm372, %v244, %v500
  %v629 = vsel %vm373, %v245, %v501
  %v630 = vsel %vm374, %v246, %v502
  %v631 = vsel %vm375, %v247, %v503
  %v632 = vsel %vm376, %v248, %v504
  %v633 = vsel %vm377, %v249, %v505
  %v634 = vsel %vm378, %v250, %v506
  %v635 = vsel %vm379, %v251, %v507
  %v636 = vsel %vm380, %v252, %v508
  %v637 = vsel %vm381, %v253, %v509
  %v638 = vsel %vm382, %v254, %v510
  %v639 = vsel %vm383, %v255, %v511
  %v640 = vsel %vm384, %v256, %v512
  %v641 = vsel %vm385, %v257, %v513
  %v642 = vsel %vm386, %v258, %v514
  %v643 = vsel %vm387, %v259, %v515
  %v644 = vsel %vm388, %v260, %v516
  %v645 = vsel %vm389, %v261, %v517
  %v646 = vsel %vm390, %v262, %v518
  %v647 = vsel %vm391, %v263, %v519
  %v648 = vsel %vm392, %v264, %v520
  %v649 = vsel %vm393, %v265, %v521
  %v650 = vsel %vm394, %v266, %v522
  %v651 = vsel %vm395, %v267, %v523
  %v652 = vsel %vm396, %v268, %v524
  %v653 = vsel %vm397, %v269, %v525
  %v654 = vsel %vm398, %v270, %v526
  %v655 = vpack.c.bf16 %v528, %v527
  %v656 = vpack.c.bf16 %v530, %v529
  %v657 = vpack.c.bf16 %v532, %v531
  %v658 = vpack.c.bf16 %v534, %v533
  %v659 = vpack.c.bf16 %v536, %v535
  %v660 = vpack.c.bf16 %v538, %v537
  %v661 = vpack.c.bf16 %v540, %v539
  %v662 = vpack.c.bf16 %v542, %v541
  %v663 = vpack.c.bf16 %v544, %v543
  %v664 = vpack.c.bf16 %v546, %v545
  %v665 = vpack.c.bf16 %v548, %v547
  %v666 = vpack.c.bf16 %v550, %v549
  %v667 = vpack.c.bf16 %v552, %v551
  %v668 = vpack.c.bf16 %v554, %v553
  %v669 = vpack.c.bf16 %v556, %v555
  %v670 = vpack.c.bf16 %v558, %v557
  %v671 = vpack.c.bf16 %v560, %v559
  %v672 = vpack.c.bf16 %v562, %v561
  %v673 = vpack.c.bf16 %v564, %v563
  %v674 = vpack.c.bf16 %v566, %v565
  %v675 = vpack.c.bf16 %v568, %v567
  %v676 = vpack.c.bf16 %v570, %v569
  %v677 = vpack.c.bf16 %v572, %v571
  %v678 = vpack.c.bf16 %v574, %v573
  %v679 = vpack.c.bf16 %v576, %v575
  %v680 = vpack.c.bf16 %v578, %v577
  %v681 = vpack.c.bf16 %v580, %v579
  %v682 = vpack.c.bf16 %v582, %v581
  %v683 = vpack.c.bf16 %v584, %v583
  %v684 = vpack.c.bf16 %v586, %v585
  %v685 = vpack.c.bf16 %v588, %v587
  %v686 = vpack.c.bf16 %v590, %v589
  %v687 = vpack.c.bf16 %v592, %v591
  %v688 = vpack.c.bf16 %v594, %v593
  %v689 = vpack.c.bf16 %v596, %v595
  %v690 = vpack.c.bf16 %v598, %v597
  %v691 = vpack.c.bf16 %v600, %v599
  %v692 = vpack.c.bf16 %v602, %v601
  %v693 = vpack.c.bf16 %v604, %v603
  %v694 = vpack.c.bf16 %v606, %v605
  %v695 = vpack.c.bf16 %v608, %v607
  %v696 = vpack.c.bf16 %v610, %v609
  %v697 = vpack.c.bf16 %v612, %v611
  %v698 = vpack.c.bf16 %v614, %v613
  %v699 = vpack.c.bf16 %v616, %v615
  %v700 = vpack.c.bf16 %v618, %v617
  %v701 = vpack.c.bf16 %v620, %v619
  %v702 = vpack.c.bf16 %v622, %v621
  %v703 = vpack.c.bf16 %v624, %v623
  %v704 = vpack.c.bf16 %v626, %v625
  %v705 = vpack.c.bf16 %v628, %v627
  %v706 = vpack.c.bf16 %v630, %v629
  %v707 = vpack.c.bf16 %v632, %v631
  %v708 = vpack.c.bf16 %v634, %v633
  %v709 = vpack.c.bf16 %v636, %v635
  %v710 = vpack.c.bf16 %v638, %v637
  %v711 = vpack.c.bf16 %v640, %v639
  %v712 = vpack.c.bf16 %v642, %v641
  %v713 = vpack.c.bf16 %v644, %v643
  %v714 = vpack.c.bf16 %v646, %v645
  %v715 = vpack.c.bf16 %v648, %v647
  %v716 = vpack.c.bf16 %v650, %v649
  %v717 = vpack.c.bf16 %v652, %v651
  %v718 = vpack.c.bf16 %v654, %v653
  %v719 = vld [vmem:[%s1] sm:$0xff]
  %v720 = vld [vmem:[%s1 + $0x8] sm:$0xff]
  %v721 = vld [vmem:[%s1 + $0x10] sm:$0xff]
  %v722 = vld [vmem:[%s1 + $0x18] sm:$0xff]
  %v723 = vld [vmem:[%s1 + $0x20] sm:$0xff]
  %v724 = vld [vmem:[%s1 + $0x28] sm:$0xff]
  %v725 = vld [vmem:[%s1 + $0x30] sm:$0xff]
  %v726 = vld [vmem:[%s1 + $0x38] sm:$0xff]
  %v727 = vld [vmem:[%s1 + $0x40] sm:$0xff]
  %v728 = vld [vmem:[%s1 + $0x48] sm:$0xff]
  %v729 = vld [vmem:[%s1 + $0x50] sm:$0xff]
  %v730 = vld [vmem:[%s1 + $0x58] sm:$0xff]
  %v731 = vld [vmem:[%s1 + $0x60] sm:$0xff]
  %v732 = vld [vmem:[%s1 + $0x68] sm:$0xff]
  %v733 = vld [vmem:[%s1 + $0x70] sm:$0xff]
  %v734 = vld [vmem:[%s1 + $0x78] sm:$0xff]
  %v735 = vld [vmem:[%s2] sm:$0xff]
  %v736 = vld [vmem:[%s2 + $0x8] sm:$0xff]
  %v737 = vld [vmem:[%s2 + $0x10] sm:$0xff]
  %v738 = vld [vmem:[%s2 + $0x18] sm:$0xff]
  %740 = vset.pattern.permute.xlu0 0
  %741 = vperm.xlu0 %740, %v735
  %v742 = vpop.permute.xlu0 %741
  %745 = vset.pattern.permute.xlu0 0
  %746 = vperm.xlu0 %745, %v736
  %v747 = vpop.permute.xlu0 %746
  %750 = vset.pattern.permute.xlu0 0
  %751 = vperm.xlu0 %750, %v737
  %v752 = vpop.permute.xlu0 %751
  %755 = vset.pattern.permute.xlu0 0
  %756 = vperm.xlu0 %755, %v738
  %v757 = vpop.permute.xlu0 %756
  %v775 = vunpack.c.l.b16 %v719
  %v776 = vunpack.c.h.b16 %v719
  %v777 = vunpack.c.l.b16 %v720
  %v778 = vunpack.c.h.b16 %v720
  %v779 = vunpack.c.l.b16 %v721
  %v780 = vunpack.c.h.b16 %v721
  %v781 = vunpack.c.l.b16 %v722
  %v782 = vunpack.c.h.b16 %v722
  %v783 = vunpack.c.l.b16 %v723
  %v784 = vunpack.c.h.b16 %v723
  %v785 = vunpack.c.l.b16 %v724
  %v786 = vunpack.c.h.b16 %v724
  %v787 = vunpack.c.l.b16 %v725
  %v788 = vunpack.c.h.b16 %v725
  %v789 = vunpack.c.l.b16 %v726
  %v790 = vunpack.c.h.b16 %v726
  %v791 = vunpack.c.l.b16 %v727
  %v792 = vunpack.c.h.b16 %v727
  %v793 = vunpack.c.l.b16 %v728
  %v794 = vunpack.c.h.b16 %v728
  %v795 = vunpack.c.l.b16 %v729
  %v796 = vunpack.c.h.b16 %v729
  %v797 = vunpack.c.l.b16 %v730
  %v798 = vunpack.c.h.b16 %v730
  %v799 = vunpack.c.l.b16 %v731
  %v800 = vunpack.c.h.b16 %v731
  %v801 = vunpack.c.l.b16 %v732
  %v802 = vunpack.c.h.b16 %v732
  %v803 = vunpack.c.l.b16 %v733
  %v804 = vunpack.c.h.b16 %v733
  %v805 = vunpack.c.l.b16 %v734
  %v806 = vunpack.c.h.b16 %v734
  %v807 = vpack.c.b16 %v783, %v775
  %v808 = vpack.c.b16 %v784, %v776
  %v809 = vpack.c.b16 %v785, %v777
  %v810 = vpack.c.b16 %v786, %v778
  %v811 = vpack.c.b16 %v787, %v779
  %v812 = vpack.c.b16 %v788, %v780
  %v813 = vpack.c.b16 %v789, %v781
  %v814 = vpack.c.b16 %v790, %v782
  %v815 = vpack.c.b16 %v799, %v791
  %v816 = vpack.c.b16 %v800, %v792
  %v817 = vpack.c.b16 %v801, %v793
  %v818 = vpack.c.b16 %v802, %v794
  %v819 = vpack.c.b16 %v803, %v795
  %v820 = vpack.c.b16 %v804, %v796
  %v821 = vpack.c.b16 %v805, %v797
  %v822 = vpack.c.b16 %v806, %v798
  %839 = vmatprep.subr.bf16.mxu0 0
  %840 = vmatpush1.bf16.msra.mxu0 %v655
  %841 = vmatprep.subr.bf16.mxu0 0
  %842 = vmatpush1.bf16.msra.mxu0 %v656
  %843 = vmatprep.subr.bf16.mxu0 0
  %844 = vmatpush1.bf16.msra.mxu0 %v657
  %845 = vmatprep.subr.bf16.mxu0 0
  %846 = vmatpush1.bf16.msra.mxu0 %v658
  %847 = vmatprep.subr.bf16.mxu0 0
  %848 = vmatpush1.bf16.msra.mxu0 %v659
  %849 = vmatprep.subr.bf16.mxu0 0
  %850 = vmatpush1.bf16.msra.mxu0 %v660
  %851 = vmatprep.subr.bf16.mxu0 0
  %852 = vmatpush1.bf16.msra.mxu0 %v661
  %853 = vmatprep.subr.bf16.mxu0 0
  %854 = vmatpush1.bf16.msra.mxu0 %v662
  %855 = vmatprep.subr.bf16.mxu0 0
  %856 = vmatpush1.bf16.msra.mxu0 %v663
  %857 = vmatprep.subr.bf16.mxu0 0
  %858 = vmatpush1.bf16.msra.mxu0 %v664
  %859 = vmatprep.subr.bf16.mxu0 0
  %860 = vmatpush1.bf16.msra.mxu0 %v665
  %861 = vmatprep.subr.bf16.mxu0 0
  %862 = vmatpush1.bf16.msra.mxu0 %v666
  %863 = vmatprep.subr.bf16.mxu0 0
  %864 = vmatpush1.bf16.msra.mxu0 %v667
  %865 = vmatprep.subr.bf16.mxu0 0
  %866 = vmatpush1.bf16.msra.mxu0 %v668
  %867 = vmatprep.subr.bf16.mxu0 0
  %868 = vmatpush1.bf16.msra.mxu0 %v669
  %869 = vmatprep.subr.bf16.mxu0 0
  %870 = vmatpush1.bf16.msra.mxu0 %v670
  %871 = vmatprep.mubr.bf16.mxu0 %v808
  %872 = vmatmul.mubr.bf16.gmra.mrb[0].mxu0 %v807
  %v873 = vpop.f32.mrb[0].mxu0
  %v874 = vadd.f32 %v742, %v873
  %v875 = vpop.f32.mrb[0].mxu0
  %v876 = vpop.f32.mrb[0].mxu0
  %v877 = vadd.f32 %v747, %v876
  %v878 = vpop.f32.mrb[0].mxu0
  %879 = vmatprep.mubr.bf16.mxu0 %v816
  %880 = vmatmul.mubr.bf16.gmra.mrb[0].mxu0 %v815
  %v881 = vpop.f32.mrb[0].mxu0
  %v882 = vadd.f32 %v752, %v881
  %v883 = vpop.f32.mrb[0].mxu0
  %v884 = vpop.f32.mrb[0].mxu0
  %v885 = vadd.f32 %v757, %v884
  %v886 = vpop.f32.mrb[0].mxu0
  %887 = vdwg.mxu0
  %888 = vmatprep.subr.bf16.mxu0 0
  %889 = vmatpush1.bf16.msra.mxu0 %v671
  %890 = vmatprep.subr.bf16.mxu0 0
  %891 = vmatpush1.bf16.msra.mxu0 %v672
  %892 = vmatprep.subr.bf16.mxu0 0
  %893 = vmatpush1.bf16.msra.mxu0 %v673
  %894 = vmatprep.subr.bf16.mxu0 0
  %895 = vmatpush1.bf16.msra.mxu0 %v674
  %896 = vmatprep.subr.bf16.mxu0 0
  %897 = vmatpush1.bf16.msra.mxu0 %v675
  %898 = vmatprep.subr.bf16.mxu0 0
  %899 = vmatpush1.bf16.msra.mxu0 %v676
  %900 = vmatprep.subr.bf16.mxu0 0
  %901 = vmatpush1.bf16.msra.mxu0 %v677
  %902 = vmatprep.subr.bf16.mxu0 0
  %903 = vmatpush1.bf16.msra.mxu0 %v678
  %904 = vmatprep.subr.bf16.mxu0 0
  %905 = vmatpush1.bf16.msra.mxu0 %v679
  %906 = vmatprep.subr.bf16.mxu0 0
  %907 = vmatpush1.bf16.msra.mxu0 %v680
  %908 = vmatprep.subr.bf16.mxu0 0
  %909 = vmatpush1.bf16.msra.mxu0 %v681
  %910 = vmatprep.subr.bf16.mxu0 0
  %911 = vmatpush1.bf16.msra.mxu0 %v682
  %912 = vmatprep.subr.bf16.mxu0 0
  %913 = vmatpush1.bf16.msra.mxu0 %v683
  %914 = vmatprep.subr.bf16.mxu0 0
  %915 = vmatpush1.bf16.msra.mxu0 %v684
  %916 = vmatprep.subr.bf16.mxu0 0
  %917 = vmatpush1.bf16.msra.mxu0 %v685
  %918 = vmatprep.subr.bf16.mxu0 0
  %919 = vmatpush1.bf16.msra.mxu0 %v686
  %920 = vmatprep.mubr.bf16.mxu0 %v810
  %921 = vmatmul.mubr.bf16.gmra.mrb[0].mxu0 %v809
  %v922 = vpop.f32.mrb[0].mxu0
  %v923 = vadd.f32 %v874, %v922
  %v924 = vpop.f32.mrb[0].mxu0
  %v925 = vpop.f32.mrb[0].mxu0
  %v926 = vadd.f32 %v877, %v925
  %v927 = vpop.f32.mrb[0].mxu0
  %928 = vmatprep.mubr.bf16.mxu0 %v818
  %929 = vmatmul.mubr.bf16.gmra.mrb[0].mxu0 %v817
  %v930 = vpop.f32.mrb[0].mxu0
  %v931 = vadd.f32 %v882, %v930
  %v932 = vpop.f32.mrb[0].mxu0
  %v933 = vpop.f32.mrb[0].mxu0
  %v934 = vadd.f32 %v885, %v933
  %v935 = vpop.f32.mrb[0].mxu0
  %936 = vdwg.mxu0
  %937 = vmatprep.subr.bf16.mxu0 0
  %938 = vmatpush1.bf16.msra.mxu0 %v687
  %939 = vmatprep.subr.bf16.mxu0 0
  %940 = vmatpush1.bf16.msra.mxu0 %v688
  %941 = vmatprep.subr.bf16.mxu0 0
  %942 = vmatpush1.bf16.msra.mxu0 %v689
  %943 = vmatprep.subr.bf16.mxu0 0
  %944 = vmatpush1.bf16.msra.mxu0 %v690
  %945 = vmatprep.subr.bf16.mxu0 0
  %946 = vmatpush1.bf16.msra.mxu0 %v691
  %947 = vmatprep.subr.bf16.mxu0 0
  %948 = vmatpush1.bf16.msra.mxu0 %v692
  %949 = vmatprep.subr.bf16.mxu0 0
  %950 = vmatpush1.bf16.msra.mxu0 %v693
  %951 = vmatprep.subr.bf16.mxu0 0
  %952 = vmatpush1.bf16.msra.mxu0 %v694
  %953 = vmatprep.subr.bf16.mxu0 0
  %954 = vmatpush1.bf16.msra.mxu0 %v695
  %955 = vmatprep.subr.bf16.mxu0 0
  %956 = vmatpush1.bf16.msra.mxu0 %v696
  %957 = vmatprep.subr.bf16.mxu0 0
  %958 = vmatpush1.bf16.msra.mxu0 %v697
  %959 = vmatprep.subr.bf16.mxu0 0
  %960 = vmatpush1.bf16.msra.mxu0 %v698
  %961 = vmatprep.subr.bf16.mxu0 0
  %962 = vmatpush1.bf16.msra.mxu0 %v699
  %963 = vmatprep.subr.bf16.mxu0 0
  %964 = vmatpush1.bf16.msra.mxu0 %v700
  %965 = vmatprep.subr.bf16.mxu0 0
  %966 = vmatpush1.bf16.msra.mxu0 %v701
  %967 = vmatprep.subr.bf16.mxu0 0
  %968 = vmatpush1.bf16.msra.mxu0 %v702
  %969 = vmatprep.mubr.bf16.mxu0 %v812
  %970 = vmatmul.mubr.bf16.gmra.mrb[0].mxu0 %v811
  %v971 = vpop.f32.mrb[0].mxu0
  %v972 = vadd.f32 %v923, %v971
  %v973 = vpop.f32.mrb[0].mxu0
  %v974 = vpop.f32.mrb[0].mxu0
  %v975 = vadd.f32 %v926, %v974
  %v976 = vpop.f32.mrb[0].mxu0
  %977 = vmatprep.mubr.bf16.mxu0 %v820
  %978 = vmatmul.mubr.bf16.gmra.mrb[0].mxu0 %v819
  %v979 = vpop.f32.mrb[0].mxu0
  %v980 = vadd.f32 %v931, %v979
  %v981 = vpop.f32.mrb[0].mxu0
  %v982 = vpop.f32.mrb[0].mxu0
  %v983 = vadd.f32 %v934, %v982
  %v984 = vpop.f32.mrb[0].mxu0
  %985 = vdwg.mxu0
  %986 = vmatprep.subr.bf16.mxu0 0
  %987 = vmatpush1.bf16.msra.mxu0 %v703
  %988 = vmatprep.subr.bf16.mxu0 0
  %989 = vmatpush1.bf16.msra.mxu0 %v704
  %990 = vmatprep.subr.bf16.mxu0 0
  %991 = vmatpush1.bf16.msra.mxu0 %v705
  %992 = vmatprep.subr.bf16.mxu0 0
  %993 = vmatpush1.bf16.msra.mxu0 %v706
  %994 = vmatprep.subr.bf16.mxu0 0
  %995 = vmatpush1.bf16.msra.mxu0 %v707
  %996 = vmatprep.subr.bf16.mxu0 0
  %997 = vmatpush1.bf16.msra.mxu0 %v708
  %998 = vmatprep.subr.bf16.mxu0 0
  %999 = vmatpush1.bf16.msra.mxu0 %v709
  %1000 = vmatprep.subr.bf16.mxu0 0
  %1001 = vmatpush1.bf16.msra.mxu0 %v710
  %1002 = vmatprep.subr.bf16.mxu0 0
  %1003 = vmatpush1.bf16.msra.mxu0 %v711
  %1004 = vmatprep.subr.bf16.mxu0 0
  %1005 = vmatpush1.bf16.msra.mxu0 %v712
  %1006 = vmatprep.subr.bf16.mxu0 0
  %1007 = vmatpush1.bf16.msra.mxu0 %v713
  %1008 = vmatprep.subr.bf16.mxu0 0
  %1009 = vmatpush1.bf16.msra.mxu0 %v714
  %1010 = vmatprep.subr.bf16.mxu0 0
  %1011 = vmatpush1.bf16.msra.mxu0 %v715
  %1012 = vmatprep.subr.bf16.mxu0 0
  %1013 = vmatpush1.bf16.msra.mxu0 %v716
  %1014 = vmatprep.subr.bf16.mxu0 0
  %1015 = vmatpush1.bf16.msra.mxu0 %v717
  %1016 = vmatprep.subr.bf16.mxu0 0
  %1017 = vmatpush1.bf16.msra.mxu0 %v718
  %1018 = vmatprep.mubr.bf16.mxu0 %v814
  %1019 = vmatmul.mubr.bf16.gmra.mrb[0].mxu0 %v813
  %v1020 = vpop.f32.mrb[0].mxu0
  %v1021 = vadd.f32 %v972, %v1020
  %v1022 = vpop.f32.mrb[0].mxu0
  %v1023 = vpop.f32.mrb[0].mxu0
  %v1024 = vadd.f32 %v975, %v1023
  %v1025 = vpop.f32.mrb[0].mxu0
  %1026 = vmatprep.mubr.bf16.mxu0 %v822
  %1027 = vmatmul.mubr.bf16.gmra.mrb[0].mxu0 %v821
  %v1028 = vpop.f32.mrb[0].mxu0
  %v1029 = vadd.f32 %v980, %v1028
  %v1030 = vpop.f32.mrb[0].mxu0
  %v1031 = vpop.f32.mrb[0].mxu0
  %v1032 = vadd.f32 %v983, %v1031
  %v1033 = vpop.f32.mrb[0].mxu0
  %1034 = vdwg.mxu0
  %v1035 = vpack.c.bf16 %v1024, %v1021
  %v1036 = vpack.c.bf16 %v1032, %v1029
  %v1039 = vunpack.c.l.b16 %v1035
  %v1040 = vunpack.c.h.b16 %v1035
  %v1041 = vunpack.c.l.b16 %v1036
  %v1042 = vunpack.c.h.b16 %v1036
  %v1043 = vpack.c.b16 %v1039, %v1039
  %v1044 = vpack.c.b16 %v1040, %v1040
  %v1045 = vpack.c.b16 %v1041, %v1041
  %v1046 = vpack.c.b16 %v1042, %v1042
  %vm1051 = vcmask 519168
  %1052 = vst.msk [vmem:[%s3] sm:$0xf] %vm1051, %v1043
  %1053 = vst.msk [vmem:[%s3 + $0x4] sm:$0xf] %vm1051, %v1044
  %1054 = vst.msk [vmem:[%s3 + $0x8] sm:$0xf] %vm1051, %v1045
  %1055 = vst.msk [vmem:[%s3 + $0xc] sm:$0xf] %vm1051, %v1046
  // Predicated region
  $region14: #{unet_g_hr_forward.7} parent=0 // pred_check
    _
  $region15: #{unet_g_hr_forward.7} parent=0 // pred_check_branch
    %1057 = sbr.rel (0) target = $region17
  $region16: #{unet_g_hr_forward.7} parent=0 // pred_region
    _
  $region17: #{unet_g_hr_forward.7} parent=0 // pred_fallthru
    _
  // Predicated region
  $region18: #{unet_g_hr_forward.7} parent=0 // pred_check
    _
  $region19: #{unet_g_hr_forward.7} parent=0 // pred_check_branch
    %1059 = sbr.rel (0) target = $region21
  $region20: #{unet_g_hr_forward.7} parent=0 // pred_region
    _
  $region21: #{unet_g_hr_forward.7} parent=0 // pred_fallthru
    _

// kernel: unet_g_hr_forward.8
$region0: #{unet_g_hr_forward.8}
  #allocation0 [shape = 'u32[]', space=smem, size = 0x4, offset = 0x4, fixed_abs, tag = 'smem constant byte address 0x4 - core index']
  #allocation1 [shape = 'u32[144,128]{1,0:T(1,128)}', space=vmem, size = 0x12000, scoped, tag = 'internal scratch']
  %s0 = inlined_call_operand.vmem [shape: bf16[2048,8], index: 0, kind: input, shape index: {}]
  %s1 = inlined_call_operand.vmem [shape: bf16[64,2048], index: 1, kind: input, shape index: {}]
  %s2 = inlined_call_operand.vmem [shape: f32[64,1], index: 2, kind: input, shape index: {}]
  %s3 = inlined_call_operand.vmem [shape: bf16[64,8], index: 3, kind: output, shape index: {}]
  %s4 = sld [smem:[#allocation0]]
  $region22: #{unet_g_hr_forward.8} parent=0
    _
  %s6 = ssub.s32 1, %s4
  %s7 = scalar_select 0, %s6, %s4
  // Predicated region
  $region2: #{unet_g_hr_forward.8} parent=0 // pred_check
    _
  $region3: #{unet_g_hr_forward.8} parent=0 // pred_check_branch
    %9 = sbr.rel (0) target = $region5
  $region4: #{unet_g_hr_forward.8} parent=0 // pred_region
    _
  $region5: #{unet_g_hr_forward.8} parent=0 // pred_fallthru
    _
  // Predicated region
  $region6: #{unet_g_hr_forward.8} parent=0 // pred_check
    _
  $region7: #{unet_g_hr_forward.8} parent=0 // pred_check_branch
    %11 = sbr.rel (0) target = $region9
  $region8: #{unet_g_hr_forward.8} parent=0 // pred_region
    _
  $region9: #{unet_g_hr_forward.8} parent=0 // pred_fallthru
    _
  // Predicated region
  $region10: #{unet_g_hr_forward.8} parent=0 // pred_check
    _
  $region11: #{unet_g_hr_forward.8} parent=0 // pred_check_branch
    %13 = sbr.rel (0) target = $region13
  $region12: #{unet_g_hr_forward.8} parent=0 // pred_region
    _
  $region13: #{unet_g_hr_forward.8} parent=0 // pred_fallthru
    _
  %v15 = vld [vmem:[%s0] sm:$0xf]
  %v16 = vld [vmem:[%s0 + $0x4] sm:$0xf]
  %v17 = vld [vmem:[%s0 + $0x8] sm:$0xf]
  %v18 = vld [vmem:[%s0 + $0xc] sm:$0xf]
  %v19 = vld [vmem:[%s0 + $0x10] sm:$0xf]
  %v20 = vld [vmem:[%s0 + $0x14] sm:$0xf]
  %v21 = vld [vmem:[%s0 + $0x18] sm:$0xf]
  %v22 = vld [vmem:[%s0 + $0x1c] sm:$0xf]
  %v23 = vld [vmem:[%s0 + $0x20] sm:$0xf]
  %v24 = vld [vmem:[%s0 + $0x24] sm:$0xf]
  %v25 = vld [vmem:[%s0 + $0x28] sm:$0xf]
  %v26 = vld [vmem:[%s0 + $0x2c] sm:$0xf]
  %v27 = vld [vmem:[%s0 + $0x30] sm:$0xf]
  %v28 = vld [vmem:[%s0 + $0x34] sm:$0xf]
  %v29 = vld [vmem:[%s0 + $0x38] sm:$0xf]
  %v30 = vld [vmem:[%s0 + $0x3c] sm:$0xf]
  %v31 = vld [vmem:[%s0 + $0x40] sm:$0xf]
  %v32 = vld [vmem:[%s0 + $0x44] sm:$0xf]
  %v33 = vld [vmem:[%s0 + $0x48] sm:$0xf]
  %v34 = vld [vmem:[%s0 + $0x4c] sm:$0xf]
  %v35 = vld [vmem:[%s0 + $0x50] sm:$0xf]
  %v36 = vld [vmem:[%s0 + $0x54] sm:$0xf]
  %v37 = vld [vmem:[%s0 + $0x58] sm:$0xf]
  %v38 = vld [vmem:[%s0 + $0x5c] sm:$0xf]
  %v39 = vld [vmem:[%s0 + $0x60] sm:$0xf]
  %v40 = vld [vmem:[%s0 + $0x64] sm:$0xf]
  %v41 = vld [vmem:[%s0 + $0x68] sm:$0xf]
  %v42 = vld [vmem:[%s0 + $0x6c] sm:$0xf]
  %v43 = vld [vmem:[%s0 + $0x70] sm:$0xf]
  %v44 = vld [vmem:[%s0 + $0x74] sm:$0xf]
  %v45 = vld [vmem:[%s0 + $0x78] sm:$0xf]
  %v46 = vld [vmem:[%s0 + $0x7c] sm:$0xf]
  %v47 = vld [vmem:[%s0 + $0x80] sm:$0xf]
  %v48 = vld [vmem:[%s0 + $0x84] sm:$0xf]
  %v49 = vld [vmem:[%s0 + $0x88] sm:$0xf]
  %v50 = vld [vmem:[%s0 + $0x8c] sm:$0xf]
  %v51 = vld [vmem:[%s0 + $0x90] sm:$0xf]
  %v52 = vld [vmem:[%s0 + $0x94] sm:$0xf]
  %v53 = vld [vmem:[%s0 + $0x98] sm:$0xf]
  %v54 = vld [vmem:[%s0 + $0x9c] sm:$0xf]
  %v55 = vld [vmem:[%s0 + $0xa0] sm:$0xf]
  %v56 = vld [vmem:[%s0 + $0xa4] sm:$0xf]
  %v57 = vld [vmem:[%s0 + $0xa8] sm:$0xf]
  %v58 = vld [vmem:[%s0 + $0xac] sm:$0xf]
  %v59 = vld [vmem:[%s0 + $0xb0] sm:$0xf]
  %v60 = vld [vmem:[%s0 + $0xb4] sm:$0xf]
  %v61 = vld [vmem:[%s0 + $0xb8] sm:$0xf]
  %v62 = vld [vmem:[%s0 + $0xbc] sm:$0xf]
  %v63 = vld [vmem:[%s0 + $0xc0] sm:$0xf]
  %v64 = vld [vmem:[%s0 + $0xc4] sm:$0xf]
  %v65 = vld [vmem:[%s0 + $0xc8] sm:$0xf]
  %v66 = vld [vmem:[%s0 + $0xcc] sm:$0xf]
  %v67 = vld [vmem:[%s0 + $0xd0] sm:$0xf]
  %v68 = vld [vmem:[%s0 + $0xd4] sm:$0xf]
  %v69 = vld [vmem:[%s0 + $0xd8] sm:$0xf]
  %v70 = vld [vmem:[%s0 + $0xdc] sm:$0xf]
  %v71 = vld [vmem:[%s0 + $0xe0] sm:$0xf]
  %v72 = vld [vmem:[%s0 + $0xe4] sm:$0xf]
  %v73 = vld [vmem:[%s0 + $0xe8] sm:$0xf]
  %v74 = vld [vmem:[%s0 + $0xec] sm:$0xf]
  %v75 = vld [vmem:[%s0 + $0xf0] sm:$0xf]
  %v76 = vld [vmem:[%s0 + $0xf4] sm:$0xf]
  %v77 = vld [vmem:[%s0 + $0xf8] sm:$0xf]
  %v78 = vld [vmem:[%s0 + $0xfc] sm:$0xf]
  %v79 = vld [vmem:[%s0 + $0x100] sm:$0xf]
  %v80 = vld [vmem:[%s0 + $0x104] sm:$0xf]
  %v81 = vld [vmem:[%s0 + $0x108] sm:$0xf]
  %v82 = vld [vmem:[%s0 + $0x10c] sm:$0xf]
  %v83 = vld [vmem:[%s0 + $0x110] sm:$0xf]
  %v84 = vld [vmem:[%s0 + $0x114] sm:$0xf]
  %v85 = vld [vmem:[%s0 + $0x118] sm:$0xf]
  %v86 = vld [vmem:[%s0 + $0x11c] sm:$0xf]
  %v87 = vld [vmem:[%s0 + $0x120] sm:$0xf]
  %v88 = vld [vmem:[%s0 + $0x124] sm:$0xf]
  %v89 = vld [vmem:[%s0 + $0x128] sm:$0xf]
  %v90 = vld [vmem:[%s0 + $0x12c] sm:$0xf]
  %v91 = vld [vmem:[%s0 + $0x130] sm:$0xf]
  %v92 = vld [vmem:[%s0 + $0x134] sm:$0xf]
  %v93 = vld [vmem:[%s0 + $0x138] sm:$0xf]
  %v94 = vld [vmem:[%s0 + $0x13c] sm:$0xf]
  %v95 = vld [vmem:[%s0 + $0x140] sm:$0xf]
  %v96 = vld [vmem:[%s0 + $0x144] sm:$0xf]
  %v97 = vld [vmem:[%s0 + $0x148] sm:$0xf]
  %v98 = vld [vmem:[%s0 + $0x14c] sm:$0xf]
  %v99 = vld [vmem:[%s0 + $0x150] sm:$0xf]
  %v100 = vld [vmem:[%s0 + $0x154] sm:$0xf]
  %v101 = vld [vmem:[%s0 + $0x158] sm:$0xf]
  %v102 = vld [vmem:[%s0 + $0x15c] sm:$0xf]
  %v103 = vld [vmem:[%s0 + $0x160] sm:$0xf]
  %v104 = vld [vmem:[%s0 + $0x164] sm:$0xf]
  %v105 = vld [vmem:[%s0 + $0x168] sm:$0xf]
  %v106 = vld [vmem:[%s0 + $0x16c] sm:$0xf]
  %v107 = vld [vmem:[%s0 + $0x170] sm:$0xf]
  %v108 = vld [vmem:[%s0 + $0x174] sm:$0xf]
  %v109 = vld [vmem:[%s0 + $0x178] sm:$0xf]
  %v110 = vld [vmem:[%s0 + $0x17c] sm:$0xf]
  %v111 = vld [vmem:[%s0 + $0x180] sm:$0xf]
  %v112 = vld [vmem:[%s0 + $0x184] sm:$0xf]
  %v113 = vld [vmem:[%s0 + $0x188] sm:$0xf]
  %v114 = vld [vmem:[%s0 + $0x18c] sm:$0xf]
  %v115 = vld [vmem:[%s0 + $0x190] sm:$0xf]
  %v116 = vld [vmem:[%s0 + $0x194] sm:$0xf]
  %v117 = vld [vmem:[%s0 + $0x198] sm:$0xf]
  %v118 = vld [vmem:[%s0 + $0x19c] sm:$0xf]
  %v119 = vld [vmem:[%s0 + $0x1a0] sm:$0xf]
  %v120 = vld [vmem:[%s0 + $0x1a4] sm:$0xf]
  %v121 = vld [vmem:[%s0 + $0x1a8] sm:$0xf]
  %v122 = vld [vmem:[%s0 + $0x1ac] sm:$0xf]
  %v123 = vld [vmem:[%s0 + $0x1b0] sm:$0xf]
  %v124 = vld [vmem:[%s0 + $0x1b4] sm:$0xf]
  %v125 = vld [vmem:[%s0 + $0x1b8] sm:$0xf]
  %v126 = vld [vmem:[%s0 + $0x1bc] sm:$0xf]
  %v127 = vld [vmem:[%s0 + $0x1c0] sm:$0xf]
  %v128 = vld [vmem:[%s0 + $0x1c4] sm:$0xf]
  %v129 = vld [vmem:[%s0 + $0x1c8] sm:$0xf]
  %v130 = vld [vmem:[%s0 + $0x1cc] sm:$0xf]
  %v131 = vld [vmem:[%s0 + $0x1d0] sm:$0xf]
  %v132 = vld [vmem:[%s0 + $0x1d4] sm:$0xf]
  %v133 = vld [vmem:[%s0 + $0x1d8] sm:$0xf]
  %v134 = vld [vmem:[%s0 + $0x1dc] sm:$0xf]
  %v135 = vld [vmem:[%s0 + $0x1e0] sm:$0xf]
  %v136 = vld [vmem:[%s0 + $0x1e4] sm:$0xf]
  %v137 = vld [vmem:[%s0 + $0x1e8] sm:$0xf]
  %v138 = vld [vmem:[%s0 + $0x1ec] sm:$0xf]
  %v139 = vld [vmem:[%s0 + $0x1f0] sm:$0xf]
  %v140 = vld [vmem:[%s0 + $0x1f4] sm:$0xf]
  %v141 = vld [vmem:[%s0 + $0x1f8] sm:$0xf]
  %v142 = vld [vmem:[%s0 + $0x1fc] sm:$0xf]
  %v143 = vld [vmem:[%s0 + $0x200] sm:$0xf]
  %v144 = vld [vmem:[%s0 + $0x204] sm:$0xf]
  %v145 = vld [vmem:[%s0 + $0x208] sm:$0xf]
  %v146 = vld [vmem:[%s0 + $0x20c] sm:$0xf]
  %v147 = vld [vmem:[%s0 + $0x210] sm:$0xf]
  %v148 = vld [vmem:[%s0 + $0x214] sm:$0xf]
  %v149 = vld [vmem:[%s0 + $0x218] sm:$0xf]
  %v150 = vld [vmem:[%s0 + $0x21c] sm:$0xf]
  %v151 = vld [vmem:[%s0 + $0x220] sm:$0xf]
  %v152 = vld [vmem:[%s0 + $0x224] sm:$0xf]
  %v153 = vld [vmem:[%s0 + $0x228] sm:$0xf]
  %v154 = vld [vmem:[%s0 + $0x22c] sm:$0xf]
  %v155 = vld [vmem:[%s0 + $0x230] sm:$0xf]
  %v156 = vld [vmem:[%s0 + $0x234] sm:$0xf]
  %v157 = vld [vmem:[%s0 + $0x238] sm:$0xf]
  %v158 = vld [vmem:[%s0 + $0x23c] sm:$0xf]
  %v159 = vld [vmem:[%s0 + $0x240] sm:$0xf]
  %v160 = vld [vmem:[%s0 + $0x244] sm:$0xf]
  %v161 = vld [vmem:[%s0 + $0x248] sm:$0xf]
  %v162 = vld [vmem:[%s0 + $0x24c] sm:$0xf]
  %v163 = vld [vmem:[%s0 + $0x250] sm:$0xf]
  %v164 = vld [vmem:[%s0 + $0x254] sm:$0xf]
  %v165 = vld [vmem:[%s0 + $0x258] sm:$0xf]
  %v166 = vld [vmem:[%s0 + $0x25c] sm:$0xf]
  %v167 = vld [vmem:[%s0 + $0x260] sm:$0xf]
  %v168 = vld [vmem:[%s0 + $0x264] sm:$0xf]
  %v169 = vld [vmem:[%s0 + $0x268] sm:$0xf]
  %v170 = vld [vmem:[%s0 + $0x26c] sm:$0xf]
  %v171 = vld [vmem:[%s0 + $0x270] sm:$0xf]
  %v172 = vld [vmem:[%s0 + $0x274] sm:$0xf]
  %v173 = vld [vmem:[%s0 + $0x278] sm:$0xf]
  %v174 = vld [vmem:[%s0 + $0x27c] sm:$0xf]
  %v175 = vld [vmem:[%s0 + $0x280] sm:$0xf]
  %v176 = vld [vmem:[%s0 + $0x284] sm:$0xf]
  %v177 = vld [vmem:[%s0 + $0x288] sm:$0xf]
  %v178 = vld [vmem:[%s0 + $0x28c] sm:$0xf]
  %v179 = vld [vmem:[%s0 + $0x290] sm:$0xf]
  %v180 = vld [vmem:[%s0 + $0x294] sm:$0xf]
  %v181 = vld [vmem:[%s0 + $0x298] sm:$0xf]
  %v182 = vld [vmem:[%s0 + $0x29c] sm:$0xf]
  %v183 = vld [vmem:[%s0 + $0x2a0] sm:$0xf]
  %v184 = vld [vmem:[%s0 + $0x2a4] sm:$0xf]
  %v185 = vld [vmem:[%s0 + $0x2a8] sm:$0xf]
  %v186 = vld [vmem:[%s0 + $0x2ac] sm:$0xf]
  %v187 = vld [vmem:[%s0 + $0x2b0] sm:$0xf]
  %v188 = vld [vmem:[%s0 + $0x2b4] sm:$0xf]
  %v189 = vld [vmem:[%s0 + $0x2b8] sm:$0xf]
  %v190 = vld [vmem:[%s0 + $0x2bc] sm:$0xf]
  %v191 = vld [vmem:[%s0 + $0x2c0] sm:$0xf]
  %v192 = vld [vmem:[%s0 + $0x2c4] sm:$0xf]
  %v193 = vld [vmem:[%s0 + $0x2c8] sm:$0xf]
  %v194 = vld [vmem:[%s0 + $0x2cc] sm:$0xf]
  %v195 = vld [vmem:[%s0 + $0x2d0] sm:$0xf]
  %v196 = vld [vmem:[%s0 + $0x2d4] sm:$0xf]
  %v197 = vld [vmem:[%s0 + $0x2d8] sm:$0xf]
  %v198 = vld [vmem:[%s0 + $0x2dc] sm:$0xf]
  %v199 = vld [vmem:[%s0 + $0x2e0] sm:$0xf]
  %v200 = vld [vmem:[%s0 + $0x2e4] sm:$0xf]
  %v201 = vld [vmem:[%s0 + $0x2e8] sm:$0xf]
  %v202 = vld [vmem:[%s0 + $0x2ec] sm:$0xf]
  %v203 = vld [vmem:[%s0 + $0x2f0] sm:$0xf]
  %v204 = vld [vmem:[%s0 + $0x2f4] sm:$0xf]
  %v205 = vld [vmem:[%s0 + $0x2f8] sm:$0xf]
  %v206 = vld [vmem:[%s0 + $0x2fc] sm:$0xf]
  %v207 = vld [vmem:[%s0 + $0x300] sm:$0xf]
  %v208 = vld [vmem:[%s0 + $0x304] sm:$0xf]
  %v209 = vld [vmem:[%s0 + $0x308] sm:$0xf]
  %v210 = vld [vmem:[%s0 + $0x30c] sm:$0xf]
  %v211 = vld [vmem:[%s0 + $0x310] sm:$0xf]
  %v212 = vld [vmem:[%s0 + $0x314] sm:$0xf]
  %v213 = vld [vmem:[%s0 + $0x318] sm:$0xf]
  %v214 = vld [vmem:[%s0 + $0x31c] sm:$0xf]
  %v215 = vld [vmem:[%s0 + $0x320] sm:$0xf]
  %v216 = vld [vmem:[%s0 + $0x324] sm:$0xf]
  %v217 = vld [vmem:[%s0 + $0x328] sm:$0xf]
  %v218 = vld [vmem:[%s0 + $0x32c] sm:$0xf]
  %v219 = vld [vmem:[%s0 + $0x330] sm:$0xf]
  %v220 = vld [vmem:[%s0 + $0x334] sm:$0xf]
  %v221 = vld [vmem:[%s0 + $0x338] sm:$0xf]
  %v222 = vld [vmem:[%s0 + $0x33c] sm:$0xf]
  %v223 = vld [vmem:[%s0 + $0x340] sm:$0xf]
  %v224 = vld [vmem:[%s0 + $0x344] sm:$0xf]
  %v225 = vld [vmem:[%s0 + $0x348] sm:$0xf]
  %v226 = vld [vmem:[%s0 + $0x34c] sm:$0xf]
  %v227 = vld [vmem:[%s0 + $0x350] sm:$0xf]
  %v228 = vld [vmem:[%s0 + $0x354] sm:$0xf]
  %v229 = vld [vmem:[%s0 + $0x358] sm:$0xf]
  %v230 = vld [vmem:[%s0 + $0x35c] sm:$0xf]
  %v231 = vld [vmem:[%s0 + $0x360] sm:$0xf]
  %v232 = vld [vmem:[%s0 + $0x364] sm:$0xf]
  %v233 = vld [vmem:[%s0 + $0x368] sm:$0xf]
  %v234 = vld [vmem:[%s0 + $0x36c] sm:$0xf]
  %v235 = vld [vmem:[%s0 + $0x370] sm:$0xf]
  %v236 = vld [vmem:[%s0 + $0x374] sm:$0xf]
  %v237 = vld [vmem:[%s0 + $0x378] sm:$0xf]
  %v238 = vld [vmem:[%s0 + $0x37c] sm:$0xf]
  %v239 = vld [vmem:[%s0 + $0x380] sm:$0xf]
  %v240 = vld [vmem:[%s0 + $0x384] sm:$0xf]
  %v241 = vld [vmem:[%s0 + $0x388] sm:$0xf]
  %v242 = vld [vmem:[%s0 + $0x38c] sm:$0xf]
  %v243 = vld [vmem:[%s0 + $0x390] sm:$0xf]
  %v244 = vld [vmem:[%s0 + $0x394] sm:$0xf]
  %v245 = vld [vmem:[%s0 + $0x398] sm:$0xf]
  %v246 = vld [vmem:[%s0 + $0x39c] sm:$0xf]
  %v247 = vld [vmem:[%s0 + $0x3a0] sm:$0xf]
  %v248 = vld [vmem:[%s0 + $0x3a4] sm:$0xf]
  %v249 = vld [vmem:[%s0 + $0x3a8] sm:$0xf]
  %v250 = vld [vmem:[%s0 + $0x3ac] sm:$0xf]
  %v251 = vld [vmem:[%s0 + $0x3b0] sm:$0xf]
  %v252 = vld [vmem:[%s0 + $0x3b4] sm:$0xf]
  %v253 = vld [vmem:[%s0 + $0x3b8] sm:$0xf]
  %v254 = vld [vmem:[%s0 + $0x3bc] sm:$0xf]
  %v255 = vld [vmem:[%s0 + $0x3c0] sm:$0xf]
  %v256 = vld [vmem:[%s0 + $0x3c4] sm:$0xf]
  %v257 = vld [vmem:[%s0 + $0x3c8] sm:$0xf]
  %v258 = vld [vmem:[%s0 + $0x3cc] sm:$0xf]
  %v259 = vld [vmem:[%s0 + $0x3d0] sm:$0xf]
  %v260 = vld [vmem:[%s0 + $0x3d4] sm:$0xf]
  %v261 = vld [vmem:[%s0 + $0x3d8] sm:$0xf]
  %v262 = vld [vmem:[%s0 + $0x3dc] sm:$0xf]
  %v263 = vld [vmem:[%s0 + $0x3e0] sm:$0xf]
  %v264 = vld [vmem:[%s0 + $0x3e4] sm:$0xf]
  %v265 = vld [vmem:[%s0 + $0x3e8] sm:$0xf]
  %v266 = vld [vmem:[%s0 + $0x3ec] sm:$0xf]
  %v267 = vld [vmem:[%s0 + $0x3f0] sm:$0xf]
  %v268 = vld [vmem:[%s0 + $0x3f4] sm:$0xf]
  %v269 = vld [vmem:[%s0 + $0x3f8] sm:$0xf]
  %v270 = vld [vmem:[%s0 + $0x3fc] sm:$0xf]
  %v271 = vunpack.c.l.bf16 %v15
  %v272 = vunpack.c.l.bf16 %v16
  %v273 = vunpack.c.l.bf16 %v17
  %v274 = vunpack.c.l.bf16 %v18
  %v275 = vunpack.c.l.bf16 %v19
  %v276 = vunpack.c.l.bf16 %v20
  %v277 = vunpack.c.l.bf16 %v21
  %v278 = vunpack.c.l.bf16 %v22
  %v279 = vunpack.c.l.bf16 %v23
  %v280 = vunpack.c.l.bf16 %v24
  %v281 = vunpack.c.l.bf16 %v25
  %v282 = vunpack.c.l.bf16 %v26
  %v283 = vunpack.c.l.bf16 %v27
  %v284 = vunpack.c.l.bf16 %v28
  %v285 = vunpack.c.l.bf16 %v29
  %v286 = vunpack.c.l.bf16 %v30
  %v287 = vunpack.c.l.bf16 %v31
  %v288 = vunpack.c.l.bf16 %v32
  %v289 = vunpack.c.l.bf16 %v33
  %v290 = vunpack.c.l.bf16 %v34
  %v291 = vunpack.c.l.bf16 %v35
  %v292 = vunpack.c.l.bf16 %v36
  %v293 = vunpack.c.l.bf16 %v37
  %v294 = vunpack.c.l.bf16 %v38
  %v295 = vunpack.c.l.bf16 %v39
  %v296 = vunpack.c.l.bf16 %v40
  %v297 = vunpack.c.l.bf16 %v41
  %v298 = vunpack.c.l.bf16 %v42
  %v299 = vunpack.c.l.bf16 %v43
  %v300 = vunpack.c.l.bf16 %v44
  %v301 = vunpack.c.l.bf16 %v45
  %v302 = vunpack.c.l.bf16 %v46
  %v303 = vunpack.c.l.bf16 %v47
  %v304 = vunpack.c.l.bf16 %v48
  %v305 = vunpack.c.l.bf16 %v49
  %v306 = vunpack.c.l.bf16 %v50
  %v307 = vunpack.c.l.bf16 %v51
  %v308 = vunpack.c.l.bf16 %v52
  %v309 = vunpack.c.l.bf16 %v53
  %v310 = vunpack.c.l.bf16 %v54
  %v311 = vunpack.c.l.bf16 %v55
  %v312 = vunpack.c.l.bf16 %v56
  %v313 = vunpack.c.l.bf16 %v57
  %v314 = vunpack.c.l.bf16 %v58
  %v315 = vunpack.c.l.bf16 %v59
  %v316 = vunpack.c.l.bf16 %v60
  %v317 = vunpack.c.l.bf16 %v61
  %v318 = vunpack.c.l.bf16 %v62
  %v319 = vunpack.c.l.bf16 %v63
  %v320 = vunpack.c.l.bf16 %v64
  %v321 = vunpack.c.l.bf16 %v65
  %v322 = vunpack.c.l.bf16 %v66
  %v323 = vunpack.c.l.bf16 %v67
  %v324 = vunpack.c.l.bf16 %v68
  %v325 = vunpack.c.l.bf16 %v69
  %v326 = vunpack.c.l.bf16 %v70
  %v327 = vunpack.c.l.bf16 %v71
  %v328 = vunpack.c.l.bf16 %v72
  %v329 = vunpack.c.l.bf16 %v73
  %v330 = vunpack.c.l.bf16 %v74
  %v331 = vunpack.c.l.bf16 %v75
  %v332 = vunpack.c.l.bf16 %v76
  %v333 = vunpack.c.l.bf16 %v77
  %v334 = vunpack.c.l.bf16 %v78
  %v335 = vunpack.c.l.bf16 %v79
  %v336 = vunpack.c.l.bf16 %v80
  %v337 = vunpack.c.l.bf16 %v81
  %v338 = vunpack.c.l.bf16 %v82
  %v339 = vunpack.c.l.bf16 %v83
  %v340 = vunpack.c.l.bf16 %v84
  %v341 = vunpack.c.l.bf16 %v85
  %v342 = vunpack.c.l.bf16 %v86
  %v343 = vunpack.c.l.bf16 %v87
  %v344 = vunpack.c.l.bf16 %v88
  %v345 = vunpack.c.l.bf16 %v89
  %v346 = vunpack.c.l.bf16 %v90
  %v347 = vunpack.c.l.bf16 %v91
  %v348 = vunpack.c.l.bf16 %v92
  %v349 = vunpack.c.l.bf16 %v93
  %v350 = vunpack.c.l.bf16 %v94
  %v351 = vunpack.c.l.bf16 %v95
  %v352 = vunpack.c.l.bf16 %v96
  %v353 = vunpack.c.l.bf16 %v97
  %v354 = vunpack.c.l.bf16 %v98
  %v355 = vunpack.c.l.bf16 %v99
  %v356 = vunpack.c.l.bf16 %v100
  %v357 = vunpack.c.l.bf16 %v101
  %v358 = vunpack.c.l.bf16 %v102
  %v359 = vunpack.c.l.bf16 %v103
  %v360 = vunpack.c.l.bf16 %v104
  %v361 = vunpack.c.l.bf16 %v105
  %v362 = vunpack.c.l.bf16 %v106
  %v363 = vunpack.c.l.bf16 %v107
  %v364 = vunpack.c.l.bf16 %v108
  %v365 = vunpack.c.l.bf16 %v109
  %v366 = vunpack.c.l.bf16 %v110
  %v367 = vunpack.c.l.bf16 %v111
  %v368 = vunpack.c.l.bf16 %v112
  %v369 = vunpack.c.l.bf16 %v113
  %v370 = vunpack.c.l.bf16 %v114
  %v371 = vunpack.c.l.bf16 %v115
  %v372 = vunpack.c.l.bf16 %v116
  %v373 = vunpack.c.l.bf16 %v117
  %v374 = vunpack.c.l.bf16 %v118
  %v375 = vunpack.c.l.bf16 %v119
  %v376 = vunpack.c.l.bf16 %v120
  %v377 = vunpack.c.l.bf16 %v121
  %v378 = vunpack.c.l.bf16 %v122
  %v379 = vunpack.c.l.bf16 %v123
  %v380 = vunpack.c.l.bf16 %v124
  %v381 = vunpack.c.l.bf16 %v125
  %v382 = vunpack.c.l.bf16 %v126
  %v383 = vunpack.c.l.bf16 %v127
  %v384 = vunpack.c.l.bf16 %v128
  %v385 = vunpack.c.l.bf16 %v129
  %v386 = vunpack.c.l.bf16 %v130
  %v387 = vunpack.c.l.bf16 %v131
  %v388 = vunpack.c.l.bf16 %v132
  %v389 = vunpack.c.l.bf16 %v133
  %v390 = vunpack.c.l.bf16 %v134
  %v391 = vunpack.c.l.bf16 %v135
  %v392 = vunpack.c.l.bf16 %v136
  %v393 = vunpack.c.l.bf16 %v137
  %v394 = vunpack.c.l.bf16 %v138
  %v395 = vunpack.c.l.bf16 %v139
  %v396 = vunpack.c.l.bf16 %v140
  %v397 = vunpack.c.l.bf16 %v141
  %v398 = vunpack.c.l.bf16 %v142
  %v399 = vunpack.c.l.bf16 %v143
  %v400 = vunpack.c.l.bf16 %v144
  %v401 = vunpack.c.l.bf16 %v145
  %v402 = vunpack.c.l.bf16 %v146
  %v403 = vunpack.c.l.bf16 %v147
  %v404 = vunpack.c.l.bf16 %v148
  %v405 = vunpack.c.l.bf16 %v149
  %v406 = vunpack.c.l.bf16 %v150
  %v407 = vunpack.c.l.bf16 %v151
  %v408 = vunpack.c.l.bf16 %v152
  %v409 = vunpack.c.l.bf16 %v153
  %v410 = vunpack.c.l.bf16 %v154
  %v411 = vunpack.c.l.bf16 %v155
  %v412 = vunpack.c.l.bf16 %v156
  %v413 = vunpack.c.l.bf16 %v157
  %v414 = vunpack.c.l.bf16 %v158
  %v415 = vunpack.c.l.bf16 %v159
  %v416 = vunpack.c.l.bf16 %v160
  %v417 = vunpack.c.l.bf16 %v161
  %v418 = vunpack.c.l.bf16 %v162
  %v419 = vunpack.c.l.bf16 %v163
  %v420 = vunpack.c.l.bf16 %v164
  %v421 = vunpack.c.l.bf16 %v165
  %v422 = vunpack.c.l.bf16 %v166
  %v423 = vunpack.c.l.bf16 %v167
  %v424 = vunpack.c.l.bf16 %v168
  %v425 = vunpack.c.l.bf16 %v169
  %v426 = vunpack.c.l.bf16 %v170
  %v427 = vunpack.c.l.bf16 %v171
  %v428 = vunpack.c.l.bf16 %v172
  %v429 = vunpack.c.l.bf16 %v173
  %v430 = vunpack.c.l.bf16 %v174
  %v431 = vunpack.c.l.bf16 %v175
  %v432 = vunpack.c.l.bf16 %v176
  %v433 = vunpack.c.l.bf16 %v177
  %v434 = vunpack.c.l.bf16 %v178
  %v435 = vunpack.c.l.bf16 %v179
  %v436 = vunpack.c.l.bf16 %v180
  %v437 = vunpack.c.l.bf16 %v181
  %v438 = vunpack.c.l.bf16 %v182
  %v439 = vunpack.c.l.bf16 %v183
  %v440 = vunpack.c.l.bf16 %v184
  %v441 = vunpack.c.l.bf16 %v185
  %v442 = vunpack.c.l.bf16 %v186
  %v443 = vunpack.c.l.bf16 %v187
  %v444 = vunpack.c.l.bf16 %v188
  %v445 = vunpack.c.l.bf16 %v189
  %v446 = vunpack.c.l.bf16 %v190
  %v447 = vunpack.c.l.bf16 %v191
  %v448 = vunpack.c.l.bf16 %v192
  %v449 = vunpack.c.l.bf16 %v193
  %v450 = vunpack.c.l.bf16 %v194
  %v451 = vunpack.c.l.bf16 %v195
  %v452 = vunpack.c.l.bf16 %v196
  %v453 = vunpack.c.l.bf16 %v197
  %v454 = vunpack.c.l.bf16 %v198
  %v455 = vunpack.c.l.bf16 %v199
  %v456 = vunpack.c.l.bf16 %v200
  %v457 = vunpack.c.l.bf16 %v201
  %v458 = vunpack.c.l.bf16 %v202
  %v459 = vunpack.c.l.bf16 %v203
  %v460 = vunpack.c.l.bf16 %v204
  %v461 = vunpack.c.l.bf16 %v205
  %v462 = vunpack.c.l.bf16 %v206
  %v463 = vunpack.c.l.bf16 %v207
  %v464 = vunpack.c.l.bf16 %v208
  %v465 = vunpack.c.l.bf16 %v209
  %v466 = vunpack.c.l.bf16 %v210
  %v467 = vunpack.c.l.bf16 %v211
  %v468 = vunpack.c.l.bf16 %v212
  %v469 = vunpack.c.l.bf16 %v213
  %v470 = vunpack.c.l.bf16 %v214
  %v471 = vunpack.c.l.bf16 %v215
  %v472 = vunpack.c.l.bf16 %v216
  %v473 = vunpack.c.l.bf16 %v217
  %v474 = vunpack.c.l.bf16 %v218
  %v475 = vunpack.c.l.bf16 %v219
  %v476 = vunpack.c.l.bf16 %v220
  %v477 = vunpack.c.l.bf16 %v221
  %v478 = vunpack.c.l.bf16 %v222
  %v479 = vunpack.c.l.bf16 %v223
  %v480 = vunpack.c.l.bf16 %v224
  %v481 = vunpack.c.l.bf16 %v225
  %v482 = vunpack.c.l.bf16 %v226
  %v483 = vunpack.c.l.bf16 %v227
  %v484 = vunpack.c.l.bf16 %v228
  %v485 = vunpack.c.l.bf16 %v229
  %v486 = vunpack.c.l.bf16 %v230
  %v487 = vunpack.c.l.bf16 %v231
  %v488 = vunpack.c.l.bf16 %v232
  %v489 = vunpack.c.l.bf16 %v233
  %v490 = vunpack.c.l.bf16 %v234
  %v491 = vunpack.c.l.bf16 %v235
  %v492 = vunpack.c.l.bf16 %v236
  %v493 = vunpack.c.l.bf16 %v237
  %v494 = vunpack.c.l.bf16 %v238
  %v495 = vunpack.c.l.bf16 %v239
  %v496 = vunpack.c.l.bf16 %v240
  %v497 = vunpack.c.l.bf16 %v241
  %v498 = vunpack.c.l.bf16 %v242
  %v499 = vunpack.c.l.bf16 %v243
  %v500 = vunpack.c.l.bf16 %v244
  %v501 = vunpack.c.l.bf16 %v245
  %v502 = vunpack.c.l.bf16 %v246
  %v503 = vunpack.c.l.bf16 %v247
  %v504 = vunpack.c.l.bf16 %v248
  %v505 = vunpack.c.l.bf16 %v249
  %v506 = vunpack.c.l.bf16 %v250
  %v507 = vunpack.c.l.bf16 %v251
  %v508 = vunpack.c.l.bf16 %v252
  %v509 = vunpack.c.l.bf16 %v253
  %v510 = vunpack.c.l.bf16 %v254
  %v511 = vunpack.c.l.bf16 %v255
  %v512 = vunpack.c.l.bf16 %v256
  %v513 = vunpack.c.l.bf16 %v257
  %v514 = vunpack.c.l.bf16 %v258
  %v515 = vunpack.c.l.bf16 %v259
  %v516 = vunpack.c.l.bf16 %v260
  %v517 = vunpack.c.l.bf16 %v261
  %v518 = vunpack.c.l.bf16 %v262
  %v519 = vunpack.c.l.bf16 %v263
  %v520 = vunpack.c.l.bf16 %v264
  %v521 = vunpack.c.l.bf16 %v265
  %v522 = vunpack.c.l.bf16 %v266
  %v523 = vunpack.c.l.bf16 %v267
  %v524 = vunpack.c.l.bf16 %v268
  %v525 = vunpack.c.l.bf16 %v269
  %v526 = vunpack.c.l.bf16 %v270
  %vm527 = vcmp.gt.f32.partialorder %v271, 0.0
  %vm528 = vcmp.gt.f32.partialorder %v272, 0.0
  %vm529 = vcmp.gt.f32.partialorder %v273, 0.0
  %vm530 = vcmp.gt.f32.partialorder %v274, 0.0
  %vm531 = vcmp.gt.f32.partialorder %v275, 0.0
  %vm532 = vcmp.gt.f32.partialorder %v276, 0.0
  %vm533 = vcmp.gt.f32.partialorder %v277, 0.0
  %vm534 = vcmp.gt.f32.partialorder %v278, 0.0
  %vm535 = vcmp.gt.f32.partialorder %v279, 0.0
  %vm536 = vcmp.gt.f32.partialorder %v280, 0.0
  %vm537 = vcmp.gt.f32.partialorder %v281, 0.0
  %vm538 = vcmp.gt.f32.partialorder %v282, 0.0
  %vm539 = vcmp.gt.f32.partialorder %v283, 0.0
  %vm540 = vcmp.gt.f32.partialorder %v284, 0.0
  %vm541 = vcmp.gt.f32.partialorder %v285, 0.0
  %vm542 = vcmp.gt.f32.partialorder %v286, 0.0
  %vm543 = vcmp.gt.f32.partialorder %v287, 0.0
  %vm544 = vcmp.gt.f32.partialorder %v288, 0.0
  %vm545 = vcmp.gt.f32.partialorder %v289, 0.0
  %vm546 = vcmp.gt.f32.partialorder %v290, 0.0
  %vm547 = vcmp.gt.f32.partialorder %v291, 0.0
  %vm548 = vcmp.gt.f32.partialorder %v292, 0.0
  %vm549 = vcmp.gt.f32.partialorder %v293, 0.0
  %vm550 = vcmp.gt.f32.partialorder %v294, 0.0
  %vm551 = vcmp.gt.f32.partialorder %v295, 0.0
  %vm552 = vcmp.gt.f32.partialorder %v296, 0.0
  %vm553 = vcmp.gt.f32.partialorder %v297, 0.0
  %vm554 = vcmp.gt.f32.partialorder %v298, 0.0
  %vm555 = vcmp.gt.f32.partialorder %v299, 0.0
  %vm556 = vcmp.gt.f32.partialorder %v300, 0.0
  %vm557 = vcmp.gt.f32.partialorder %v301, 0.0
  %vm558 = vcmp.gt.f32.partialorder %v302, 0.0
  %vm559 = vcmp.gt.f32.partialorder %v303, 0.0
  %vm560 = vcmp.gt.f32.partialorder %v304, 0.0
  %vm561 = vcmp.gt.f32.partialorder %v305, 0.0
  %vm562 = vcmp.gt.f32.partialorder %v306, 0.0
  %vm563 = vcmp.gt.f32.partialorder %v307, 0.0
  %vm564 = vcmp.gt.f32.partialorder %v308, 0.0
  %vm565 = vcmp.gt.f32.partialorder %v309, 0.0
  %vm566 = vcmp.gt.f32.partialorder %v310, 0.0
  %vm567 = vcmp.gt.f32.partialorder %v311, 0.0
  %vm568 = vcmp.gt.f32.partialorder %v312, 0.0
  %vm569 = vcmp.gt.f32.partialorder %v313, 0.0
  %vm570 = vcmp.gt.f32.partialorder %v314, 0.0
  %vm571 = vcmp.gt.f32.partialorder %v315, 0.0
  %vm572 = vcmp.gt.f32.partialorder %v316, 0.0
  %vm573 = vcmp.gt.f32.partialorder %v317, 0.0
  %vm574 = vcmp.gt.f32.partialorder %v318, 0.0
  %vm575 = vcmp.gt.f32.partialorder %v319, 0.0
  %vm576 = vcmp.gt.f32.partialorder %v320, 0.0
  %vm577 = vcmp.gt.f32.partialorder %v321, 0.0
  %vm578 = vcmp.gt.f32.partialorder %v322, 0.0
  %vm579 = vcmp.gt.f32.partialorder %v323, 0.0
  %vm580 = vcmp.gt.f32.partialorder %v324, 0.0
  %vm581 = vcmp.gt.f32.partialorder %v325, 0.0
  %vm582 = vcmp.gt.f32.partialorder %v326, 0.0
  %vm583 = vcmp.gt.f32.partialorder %v327, 0.0
  %vm584 = vcmp.gt.f32.partialorder %v328, 0.0
  %vm585 = vcmp.gt.f32.partialorder %v329, 0.0
  %vm586 = vcmp.gt.f32.partialorder %v330, 0.0
  %vm587 = vcmp.gt.f32.partialorder %v331, 0.0
  %vm588 = vcmp.gt.f32.partialorder %v332, 0.0
  %vm589 = vcmp.gt.f32.partialorder %v333, 0.0
  %vm590 = vcmp.gt.f32.partialorder %v334, 0.0
  %vm591 = vcmp.gt.f32.partialorder %v335, 0.0
  %vm592 = vcmp.gt.f32.partialorder %v336, 0.0
  %vm593 = vcmp.gt.f32.partialorder %v337, 0.0
  %vm594 = vcmp.gt.f32.partialorder %v338, 0.0
  %vm595 = vcmp.gt.f32.partialorder %v339, 0.0
  %vm596 = vcmp.gt.f32.partialorder %v340, 0.0
  %vm597 = vcmp.gt.f32.partialorder %v341, 0.0
  %vm598 = vcmp.gt.f32.partialorder %v342, 0.0
  %vm599 = vcmp.gt.f32.partialorder %v343, 0.0
  %vm600 = vcmp.gt.f32.partialorder %v344, 0.0
  %vm601 = vcmp.gt.f32.partialorder %v345, 0.0
  %vm602 = vcmp.gt.f32.partialorder %v346, 0.0
  %vm603 = vcmp.gt.f32.partialorder %v347, 0.0
  %vm604 = vcmp.gt.f32.partialorder %v348, 0.0
  %vm605 = vcmp.gt.f32.partialorder %v349, 0.0
  %vm606 = vcmp.gt.f32.partialorder %v350, 0.0
  %vm607 = vcmp.gt.f32.partialorder %v351, 0.0
  %vm608 = vcmp.gt.f32.partialorder %v352, 0.0
  %vm609 = vcmp.gt.f32.partialorder %v353, 0.0
  %vm610 = vcmp.gt.f32.partialorder %v354, 0.0
  %vm611 = vcmp.gt.f32.partialorder %v355, 0.0
  %vm612 = vcmp.gt.f32.partialorder %v356, 0.0
  %vm613 = vcmp.gt.f32.partialorder %v357, 0.0
  %vm614 = vcmp.gt.f32.partialorder %v358, 0.0
  %vm615 = vcmp.gt.f32.partialorder %v359, 0.0
  %vm616 = vcmp.gt.f32.partialorder %v360, 0.0
  %vm617 = vcmp.gt.f32.partialorder %v361, 0.0
  %vm618 = vcmp.gt.f32.partialorder %v362, 0.0
  %vm619 = vcmp.gt.f32.partialorder %v363, 0.0
  %vm620 = vcmp.gt.f32.partialorder %v364, 0.0
  %vm621 = vcmp.gt.f32.partialorder %v365, 0.0
  %vm622 = vcmp.gt.f32.partialorder %v366, 0.0
  %vm623 = vcmp.gt.f32.partialorder %v367, 0.0
  %vm624 = vcmp.gt.f32.partialorder %v368, 0.0
  %vm625 = vcmp.gt.f32.partialorder %v369, 0.0
  %vm626 = vcmp.gt.f32.partialorder %v370, 0.0
  %vm627 = vcmp.gt.f32.partialorder %v371, 0.0
  %vm628 = vcmp.gt.f32.partialorder %v372, 0.0
  %vm629 = vcmp.gt.f32.partialorder %v373, 0.0
  %vm630 = vcmp.gt.f32.partialorder %v374, 0.0
  %vm631 = vcmp.gt.f32.partialorder %v375, 0.0
  %vm632 = vcmp.gt.f32.partialorder %v376, 0.0
  %vm633 = vcmp.gt.f32.partialorder %v377, 0.0
  %vm634 = vcmp.gt.f32.partialorder %v378, 0.0
  %vm635 = vcmp.gt.f32.partialorder %v379, 0.0
  %vm636 = vcmp.gt.f32.partialorder %v380, 0.0
  %vm637 = vcmp.gt.f32.partialorder %v381, 0.0
  %vm638 = vcmp.gt.f32.partialorder %v382, 0.0
  %vm639 = vcmp.gt.f32.partialorder %v383, 0.0
  %vm640 = vcmp.gt.f32.partialorder %v384, 0.0
  %vm641 = vcmp.gt.f32.partialorder %v385, 0.0
  %vm642 = vcmp.gt.f32.partialorder %v386, 0.0
  %vm643 = vcmp.gt.f32.partialorder %v387, 0.0
  %vm644 = vcmp.gt.f32.partialorder %v388, 0.0
  %vm645 = vcmp.gt.f32.partialorder %v389, 0.0
  %vm646 = vcmp.gt.f32.partialorder %v390, 0.0
  %vm647 = vcmp.gt.f32.partialorder %v391, 0.0
  %vm648 = vcmp.gt.f32.partialorder %v392, 0.0
  %vm649 = vcmp.gt.f32.partialorder %v393, 0.0
  %vm650 = vcmp.gt.f32.partialorder %v394, 0.0
  %vm651 = vcmp.gt.f32.partialorder %v395, 0.0
  %vm652 = vcmp.gt.f32.partialorder %v396, 0.0
  %vm653 = vcmp.gt.f32.partialorder %v397, 0.0
  %vm654 = vcmp.gt.f32.partialorder %v398, 0.0
  %vm655 = vcmp.gt.f32.partialorder %v399, 0.0
  %vm656 = vcmp.gt.f32.partialorder %v400, 0.0
  %vm657 = vcmp.gt.f32.partialorder %v401, 0.0
  %vm658 = vcmp.gt.f32.partialorder %v402, 0.0
  %vm659 = vcmp.gt.f32.partialorder %v403, 0.0
  %vm660 = vcmp.gt.f32.partialorder %v404, 0.0
  %vm661 = vcmp.gt.f32.partialorder %v405, 0.0
  %vm662 = vcmp.gt.f32.partialorder %v406, 0.0
  %vm663 = vcmp.gt.f32.partialorder %v407, 0.0
  %vm664 = vcmp.gt.f32.partialorder %v408, 0.0
  %vm665 = vcmp.gt.f32.partialorder %v409, 0.0
  %vm666 = vcmp.gt.f32.partialorder %v410, 0.0
  %vm667 = vcmp.gt.f32.partialorder %v411, 0.0
  %vm668 = vcmp.gt.f32.partialorder %v412, 0.0
  %vm669 = vcmp.gt.f32.partialorder %v413, 0.0
  %vm670 = vcmp.gt.f32.partialorder %v414, 0.0
  %vm671 = vcmp.gt.f32.partialorder %v415, 0.0
  %vm672 = vcmp.gt.f32.partialorder %v416, 0.0
  %vm673 = vcmp.gt.f32.partialorder %v417, 0.0
  %vm674 = vcmp.gt.f32.partialorder %v418, 0.0
  %vm675 = vcmp.gt.f32.partialorder %v419, 0.0
  %vm676 = vcmp.gt.f32.partialorder %v420, 0.0
  %vm677 = vcmp.gt.f32.partialorder %v421, 0.0
  %vm678 = vcmp.gt.f32.partialorder %v422, 0.0
  %vm679 = vcmp.gt.f32.partialorder %v423, 0.0
  %vm680 = vcmp.gt.f32.partialorder %v424, 0.0
  %vm681 = vcmp.gt.f32.partialorder %v425, 0.0
  %vm682 = vcmp.gt.f32.partialorder %v426, 0.0
  %vm683 = vcmp.gt.f32.partialorder %v427, 0.0
  %vm684 = vcmp.gt.f32.partialorder %v428, 0.0
  %vm685 = vcmp.gt.f32.partialorder %v429, 0.0
  %vm686 = vcmp.gt.f32.partialorder %v430, 0.0
  %vm687 = vcmp.gt.f32.partialorder %v431, 0.0
  %vm688 = vcmp.gt.f32.partialorder %v432, 0.0
  %vm689 = vcmp.gt.f32.partialorder %v433, 0.0
  %vm690 = vcmp.gt.f32.partialorder %v434, 0.0
  %vm691 = vcmp.gt.f32.partialorder %v435, 0.0
  %vm692 = vcmp.gt.f32.partialorder %v436, 0.0
  %vm693 = vcmp.gt.f32.partialorder %v437, 0.0
  %vm694 = vcmp.gt.f32.partialorder %v438, 0.0
  %vm695 = vcmp.gt.f32.partialorder %v439, 0.0
  %vm696 = vcmp.gt.f32.partialorder %v440, 0.0
  %vm697 = vcmp.gt.f32.partialorder %v441, 0.0
  %vm698 = vcmp.gt.f32.partialorder %v442, 0.0
  %vm699 = vcmp.gt.f32.partialorder %v443, 0.0
  %vm700 = vcmp.gt.f32.partialorder %v444, 0.0
  %vm701 = vcmp.gt.f32.partialorder %v445, 0.0
  %vm702 = vcmp.gt.f32.partialorder %v446, 0.0
  %vm703 = vcmp.gt.f32.partialorder %v447, 0.0
  %vm704 = vcmp.gt.f32.partialorder %v448, 0.0
  %vm705 = vcmp.gt.f32.partialorder %v449, 0.0
  %vm706 = vcmp.gt.f32.partialorder %v450, 0.0
  %vm707 = vcmp.gt.f32.partialorder %v451, 0.0
  %vm708 = vcmp.gt.f32.partialorder %v452, 0.0
  %vm709 = vcmp.gt.f32.partialorder %v453, 0.0
  %vm710 = vcmp.gt.f32.partialorder %v454, 0.0
  %vm711 = vcmp.gt.f32.partialorder %v455, 0.0
  %vm712 = vcmp.gt.f32.partialorder %v456, 0.0
  %vm713 = vcmp.gt.f32.partialorder %v457, 0.0
  %vm714 = vcmp.gt.f32.partialorder %v458, 0.0
  %vm715 = vcmp.gt.f32.partialorder %v459, 0.0
  %vm716 = vcmp.gt.f32.partialorder %v460, 0.0
  %vm717 = vcmp.gt.f32.partialorder %v461, 0.0
  %vm718 = vcmp.gt.f32.partialorder %v462, 0.0
  %vm719 = vcmp.gt.f32.partialorder %v463, 0.0
  %vm720 = vcmp.gt.f32.partialorder %v464, 0.0
  %vm721 = vcmp.gt.f32.partialorder %v465, 0.0
  %vm722 = vcmp.gt.f32.partialorder %v466, 0.0
  %vm723 = vcmp.gt.f32.partialorder %v467, 0.0
  %vm724 = vcmp.gt.f32.partialorder %v468, 0.0
  %vm725 = vcmp.gt.f32.partialorder %v469, 0.0
  %vm726 = vcmp.gt.f32.partialorder %v470, 0.0
  %vm727 = vcmp.gt.f32.partialorder %v471, 0.0
  %vm728 = vcmp.gt.f32.partialorder %v472, 0.0
  %vm729 = vcmp.gt.f32.partialorder %v473, 0.0
  %vm730 = vcmp.gt.f32.partialorder %v474, 0.0
  %vm731 = vcmp.gt.f32.partialorder %v475, 0.0
  %vm732 = vcmp.gt.f32.partialorder %v476, 0.0
  %vm733 = vcmp.gt.f32.partialorder %v477, 0.0
  %vm734 = vcmp.gt.f32.partialorder %v478, 0.0
  %vm735 = vcmp.gt.f32.partialorder %v479, 0.0
  %vm736 = vcmp.gt.f32.partialorder %v480, 0.0
  %vm737 = vcmp.gt.f32.partialorder %v481, 0.0
  %vm738 = vcmp.gt.f32.partialorder %v482, 0.0
  %vm739 = vcmp.gt.f32.partialorder %v483, 0.0
  %vm740 = vcmp.gt.f32.partialorder %v484, 0.0
  %vm741 = vcmp.gt.f32.partialorder %v485, 0.0
  %vm742 = vcmp.gt.f32.partialorder %v486, 0.0
  %vm743 = vcmp.gt.f32.partialorder %v487, 0.0
  %vm744 = vcmp.gt.f32.partialorder %v488, 0.0
  %vm745 = vcmp.gt.f32.partialorder %v489, 0.0
  %vm746 = vcmp.gt.f32.partialorder %v490, 0.0
  %vm747 = vcmp.gt.f32.partialorder %v491, 0.0
  %vm748 = vcmp.gt.f32.partialorder %v492, 0.0
  %vm749 = vcmp.gt.f32.partialorder %v493, 0.0
  %vm750 = vcmp.gt.f32.partialorder %v494, 0.0
  %vm751 = vcmp.gt.f32.partialorder %v495, 0.0
  %vm752 = vcmp.gt.f32.partialorder %v496, 0.0
  %vm753 = vcmp.gt.f32.partialorder %v497, 0.0
  %vm754 = vcmp.gt.f32.partialorder %v498, 0.0
  %vm755 = vcmp.gt.f32.partialorder %v499, 0.0
  %vm756 = vcmp.gt.f32.partialorder %v500, 0.0
  %vm757 = vcmp.gt.f32.partialorder %v501, 0.0
  %vm758 = vcmp.gt.f32.partialorder %v502, 0.0
  %vm759 = vcmp.gt.f32.partialorder %v503, 0.0
  %vm760 = vcmp.gt.f32.partialorder %v504, 0.0
  %vm761 = vcmp.gt.f32.partialorder %v505, 0.0
  %vm762 = vcmp.gt.f32.partialorder %v506, 0.0
  %vm763 = vcmp.gt.f32.partialorder %v507, 0.0
  %vm764 = vcmp.gt.f32.partialorder %v508, 0.0
  %vm765 = vcmp.gt.f32.partialorder %v509, 0.0
  %vm766 = vcmp.gt.f32.partialorder %v510, 0.0
  %vm767 = vcmp.gt.f32.partialorder %v511, 0.0
  %vm768 = vcmp.gt.f32.partialorder %v512, 0.0
  %vm769 = vcmp.gt.f32.partialorder %v513, 0.0
  %vm770 = vcmp.gt.f32.partialorder %v514, 0.0
  %vm771 = vcmp.gt.f32.partialorder %v515, 0.0
  %vm772 = vcmp.gt.f32.partialorder %v516, 0.0
  %vm773 = vcmp.gt.f32.partialorder %v517, 0.0
  %vm774 = vcmp.gt.f32.partialorder %v518, 0.0
  %vm775 = vcmp.gt.f32.partialorder %v519, 0.0
  %vm776 = vcmp.gt.f32.partialorder %v520, 0.0
  %vm777 = vcmp.gt.f32.partialorder %v521, 0.0
  %vm778 = vcmp.gt.f32.partialorder %v522, 0.0
  %vm779 = vcmp.gt.f32.partialorder %v523, 0.0
  %vm780 = vcmp.gt.f32.partialorder %v524, 0.0
  %vm781 = vcmp.gt.f32.partialorder %v525, 0.0
  %vm782 = vcmp.gt.f32.partialorder %v526, 0.0
  %v783 = vmul.f32 %v271, 0.2
  %v784 = vmul.f32 %v272, 0.2
  %v785 = vmul.f32 %v273, 0.2
  %v786 = vmul.f32 %v274, 0.2
  %v787 = vmul.f32 %v275, 0.2
  %v788 = vmul.f32 %v276, 0.2
  %v789 = vmul.f32 %v277, 0.2
  %v790 = vmul.f32 %v278, 0.2
  %v791 = vmul.f32 %v279, 0.2
  %v792 = vmul.f32 %v280, 0.2
  %v793 = vmul.f32 %v281, 0.2
  %v794 = vmul.f32 %v282, 0.2
  %v795 = vmul.f32 %v283, 0.2
  %v796 = vmul.f32 %v284, 0.2
  %v797 = vmul.f32 %v285, 0.2
  %v798 = vmul.f32 %v286, 0.2
  %v799 = vmul.f32 %v287, 0.2
  %v800 = vmul.f32 %v288, 0.2
  %v801 = vmul.f32 %v289, 0.2
  %v802 = vmul.f32 %v290, 0.2
  %v803 = vmul.f32 %v291, 0.2
  %v804 = vmul.f32 %v292, 0.2
  %v805 = vmul.f32 %v293, 0.2
  %v806 = vmul.f32 %v294, 0.2
  %v807 = vmul.f32 %v295, 0.2
  %v808 = vmul.f32 %v296, 0.2
  %v809 = vmul.f32 %v297, 0.2
  %v810 = vmul.f32 %v298, 0.2
  %v811 = vmul.f32 %v299, 0.2
  %v812 = vmul.f32 %v300, 0.2
  %v813 = vmul.f32 %v301, 0.2
  %v814 = vmul.f32 %v302, 0.2
  %v815 = vmul.f32 %v303, 0.2
  %v816 = vmul.f32 %v304, 0.2
  %v817 = vmul.f32 %v305, 0.2
  %v818 = vmul.f32 %v306, 0.2
  %v819 = vmul.f32 %v307, 0.2
  %v820 = vmul.f32 %v308, 0.2
  %v821 = vmul.f32 %v309, 0.2
  %v822 = vmul.f32 %v310, 0.2
  %v823 = vmul.f32 %v311, 0.2
  %v824 = vmul.f32 %v312, 0.2
  %v825 = vmul.f32 %v313, 0.2
  %v826 = vmul.f32 %v314, 0.2
  %v827 = vmul.f32 %v315, 0.2
  %v828 = vmul.f32 %v316, 0.2
  %v829 = vmul.f32 %v317, 0.2
  %v830 = vmul.f32 %v318, 0.2
  %v831 = vmul.f32 %v319, 0.2
  %v832 = vmul.f32 %v320, 0.2
  %v833 = vmul.f32 %v321, 0.2
  %v834 = vmul.f32 %v322, 0.2
  %v835 = vmul.f32 %v323, 0.2
  %v836 = vmul.f32 %v324, 0.2
  %v837 = vmul.f32 %v325, 0.2
  %v838 = vmul.f32 %v326, 0.2
  %v839 = vmul.f32 %v327, 0.2
  %v840 = vmul.f32 %v328, 0.2
  %v841 = vmul.f32 %v329, 0.2
  %v842 = vmul.f32 %v330, 0.2
  %v843 = vmul.f32 %v331, 0.2
  %v844 = vmul.f32 %v332, 0.2
  %v845 = vmul.f32 %v333, 0.2
  %v846 = vmul.f32 %v334, 0.2
  %v847 = vmul.f32 %v335, 0.2
  %v848 = vmul.f32 %v336, 0.2
  %v849 = vmul.f32 %v337, 0.2
  %v850 = vmul.f32 %v338, 0.2
  %v851 = vmul.f32 %v339, 0.2
  %v852 = vmul.f32 %v340, 0.2
  %v853 = vmul.f32 %v341, 0.2
  %v854 = vmul.f32 %v342, 0.2
  %v855 = vmul.f32 %v343, 0.2
  %v856 = vmul.f32 %v344, 0.2
  %v857 = vmul.f32 %v345, 0.2
  %v858 = vmul.f32 %v346, 0.2
  %v859 = vmul.f32 %v347, 0.2
  %v860 = vmul.f32 %v348, 0.2
  %v861 = vmul.f32 %v349, 0.2
  %v862 = vmul.f32 %v350, 0.2
  %v863 = vmul.f32 %v351, 0.2
  %v864 = vmul.f32 %v352, 0.2
  %v865 = vmul.f32 %v353, 0.2
  %v866 = vmul.f32 %v354, 0.2
  %v867 = vmul.f32 %v355, 0.2
  %v868 = vmul.f32 %v356, 0.2
  %v869 = vmul.f32 %v357, 0.2
  %v870 = vmul.f32 %v358, 0.2
  %v871 = vmul.f32 %v359, 0.2
  %v872 = vmul.f32 %v360, 0.2
  %v873 = vmul.f32 %v361, 0.2
  %v874 = vmul.f32 %v362, 0.2
  %v875 = vmul.f32 %v363, 0.2
  %v876 = vmul.f32 %v364, 0.2
  %v877 = vmul.f32 %v365, 0.2
  %v878 = vmul.f32 %v366, 0.2
  %v879 = vmul.f32 %v367, 0.2
  %v880 = vmul.f32 %v368, 0.2
  %v881 = vmul.f32 %v369, 0.2
  %v882 = vmul.f32 %v370, 0.2
  %v883 = vmul.f32 %v371, 0.2
  %v884 = vmul.f32 %v372, 0.2
  %v885 = vmul.f32 %v373, 0.2
  %v886 = vmul.f32 %v374, 0.2
  %v887 = vmul.f32 %v375, 0.2
  %v888 = vmul.f32 %v376, 0.2
  %v889 = vmul.f32 %v377, 0.2
  %v890 = vmul.f32 %v378, 0.2
  %v891 = vmul.f32 %v379, 0.2
  %v892 = vmul.f32 %v380, 0.2
  %v893 = vmul.f32 %v381, 0.2
  %v894 = vmul.f32 %v382, 0.2
  %v895 = vmul.f32 %v383, 0.2
  %v896 = vmul.f32 %v384, 0.2
  %v897 = vmul.f32 %v385, 0.2
  %v898 = vmul.f32 %v386, 0.2
  %v899 = vmul.f32 %v387, 0.2
  %v900 = vmul.f32 %v388, 0.2
  %v901 = vmul.f32 %v389, 0.2
  %v902 = vmul.f32 %v390, 0.2
  %v903 = vmul.f32 %v391, 0.2
  %v904 = vmul.f32 %v392, 0.2
  %v905 = vmul.f32 %v393, 0.2
  %v906 = vmul.f32 %v394, 0.2
  %v907 = vmul.f32 %v395, 0.2
  %v908 = vmul.f32 %v396, 0.2
  %v909 = vmul.f32 %v397, 0.2
  %v910 = vmul.f32 %v398, 0.2
  %v911 = vmul.f32 %v399, 0.2
  %v912 = vmul.f32 %v400, 0.2
  %v913 = vmul.f32 %v401, 0.2
  %v914 = vmul.f32 %v402, 0.2
  %v915 = vmul.f32 %v403, 0.2
  %v916 = vmul.f32 %v404, 0.2
  %v917 = vmul.f32 %v405, 0.2
  %v918 = vmul.f32 %v406, 0.2
  %v919 = vmul.f32 %v407, 0.2
  %v920 = vmul.f32 %v408, 0.2
  %v921 = vmul.f32 %v409, 0.2
  %v922 = vmul.f32 %v410, 0.2
  %v923 = vmul.f32 %v411, 0.2
  %v924 = vmul.f32 %v412, 0.2
  %v925 = vmul.f32 %v413, 0.2
  %v926 = vmul.f32 %v414, 0.2
  %v927 = vmul.f32 %v415, 0.2
  %v928 = vmul.f32 %v416, 0.2
  %v929 = vmul.f32 %v417, 0.2
  %v930 = vmul.f32 %v418, 0.2
  %v931 = vmul.f32 %v419, 0.2
  %v932 = vmul.f32 %v420, 0.2
  %v933 = vmul.f32 %v421, 0.2
  %v934 = vmul.f32 %v422, 0.2
  %v935 = vmul.f32 %v423, 0.2
  %v936 = vmul.f32 %v424, 0.2
  %v937 = vmul.f32 %v425, 0.2
  %v938 = vmul.f32 %v426, 0.2
  %v939 = vmul.f32 %v427, 0.2
  %v940 = vmul.f32 %v428, 0.2
  %v941 = vmul.f32 %v429, 0.2
  %v942 = vmul.f32 %v430, 0.2
  %v943 = vmul.f32 %v431, 0.2
  %v944 = vmul.f32 %v432, 0.2
  %v945 = vmul.f32 %v433, 0.2
  %v946 = vmul.f32 %v434, 0.2
  %v947 = vmul.f32 %v435, 0.2
  %v948 = vmul.f32 %v436, 0.2
  %v949 = vmul.f32 %v437, 0.2
  %v950 = vmul.f32 %v438, 0.2
  %v951 = vmul.f32 %v439, 0.2
  %v952 = vmul.f32 %v440, 0.2
  %v953 = vmul.f32 %v441, 0.2
  %v954 = vmul.f32 %v442, 0.2
  %v955 = vmul.f32 %v443, 0.2
  %v956 = vmul.f32 %v444, 0.2
  %v957 = vmul.f32 %v445, 0.2
  %v958 = vmul.f32 %v446, 0.2
  %v959 = vmul.f32 %v447, 0.2
  %v960 = vmul.f32 %v448, 0.2
  %v961 = vmul.f32 %v449, 0.2
  %v962 = vmul.f32 %v450, 0.2
  %v963 = vmul.f32 %v451, 0.2
  %v964 = vmul.f32 %v452, 0.2
  %v965 = vmul.f32 %v453, 0.2
  %v966 = vmul.f32 %v454, 0.2
  %v967 = vmul.f32 %v455, 0.2
  %v968 = vmul.f32 %v456, 0.2
  %v969 = vmul.f32 %v457, 0.2
  %v970 = vmul.f32 %v458, 0.2
  %v971 = vmul.f32 %v459, 0.2
  %v972 = vmul.f32 %v460, 0.2
  %v973 = vmul.f32 %v461, 0.2
  %v974 = vmul.f32 %v462, 0.2
  %v975 = vmul.f32 %v463, 0.2
  %v976 = vmul.f32 %v464, 0.2
  %v977 = vmul.f32 %v465, 0.2
  %v978 = vmul.f32 %v466, 0.2
  %v979 = vmul.f32 %v467, 0.2
  %v980 = vmul.f32 %v468, 0.2
  %v981 = vmul.f32 %v469, 0.2
  %v982 = vmul.f32 %v470, 0.2
  %v983 = vmul.f32 %v471, 0.2
  %v984 = vmul.f32 %v472, 0.2
  %v985 = vmul.f32 %v473, 0.2
  %v986 = vmul.f32 %v474, 0.2
  %v987 = vmul.f32 %v475, 0.2
  %v988 = vmul.f32 %v476, 0.2
  %v989 = vmul.f32 %v477, 0.2
  %v990 = vmul.f32 %v478, 0.2
  %v991 = vmul.f32 %v479, 0.2
  %v992 = vmul.f32 %v480, 0.2
  %v993 = vmul.f32 %v481, 0.2
  %v994 = vmul.f32 %v482, 0.2
  %v995 = vmul.f32 %v483, 0.2
  %v996 = vmul.f32 %v484, 0.2
  %v997 = vmul.f32 %v485, 0.2
  %v998 = vmul.f32 %v486, 0.2
  %v999 = vmul.f32 %v487, 0.2
  %v1000 = vmul.f32 %v488, 0.2
  %v1001 = vmul.f32 %v489, 0.2
  %v1002 = vmul.f32 %v490, 0.2
  %v1003 = vmul.f32 %v491, 0.2
  %v1004 = vmul.f32 %v492, 0.2
  %v1005 = vmul.f32 %v493, 0.2
  %v1006 = vmul.f32 %v494, 0.2
  %v1007 = vmul.f32 %v495, 0.2
  %v1008 = vmul.f32 %v496, 0.2
  %v1009 = vmul.f32 %v497, 0.2
  %v1010 = vmul.f32 %v498, 0.2
  %v1011 = vmul.f32 %v499, 0.2
  %v1012 = vmul.f32 %v500, 0.2
  %v1013 = vmul.f32 %v501, 0.2
  %v1014 = vmul.f32 %v502, 0.2
  %v1015 = vmul.f32 %v503, 0.2
  %v1016 = vmul.f32 %v504, 0.2
  %v1017 = vmul.f32 %v505, 0.2
  %v1018 = vmul.f32 %v506, 0.2
  %v1019 = vmul.f32 %v507, 0.2
  %v1020 = vmul.f32 %v508, 0.2
  %v1021 = vmul.f32 %v509, 0.2
  %v1022 = vmul.f32 %v510, 0.2
  %v1023 = vmul.f32 %v511, 0.2
  %v1024 = vmul.f32 %v512, 0.2
  %v1025 = vmul.f32 %v513, 0.2
  %v1026 = vmul.f32 %v514, 0.2
  %v1027 = vmul.f32 %v515, 0.2
  %v1028 = vmul.f32 %v516, 0.2
  %v1029 = vmul.f32 %v517, 0.2
  %v1030 = vmul.f32 %v518, 0.2
  %v1031 = vmul.f32 %v519, 0.2
  %v1032 = vmul.f32 %v520, 0.2
  %v1033 = vmul.f32 %v521, 0.2
  %v1034 = vmul.f32 %v522, 0.2
  %v1035 = vmul.f32 %v523, 0.2
  %v1036 = vmul.f32 %v524, 0.2
  %v1037 = vmul.f32 %v525, 0.2
  %v1038 = vmul.f32 %v526, 0.2
  %v1039 = vsel %vm527, %v271, %v783
  %v1040 = vsel %vm528, %v272, %v784
  %v1041 = vsel %vm529, %v273, %v785
  %v1042 = vsel %vm530, %v274, %v786
  %v1043 = vsel %vm531, %v275, %v787
  %v1044 = vsel %vm532, %v276, %v788
  %v1045 = vsel %vm533, %v277, %v789
  %v1046 = vsel %vm534, %v278, %v790
  %v1047 = vsel %vm535, %v279, %v791
  %v1048 = vsel %vm536, %v280, %v792
  %v1049 = vsel %vm537, %v281, %v793
  %v1050 = vsel %vm538, %v282, %v794
  %v1051 = vsel %vm539, %v283, %v795
  %v1052 = vsel %vm540, %v284, %v796
  %v1053 = vsel %vm541, %v285, %v797
  %v1054 = vsel %vm542, %v286, %v798
  %v1055 = vsel %vm543, %v287, %v799
  %v1056 = vsel %vm544, %v288, %v800
  %v1057 = vsel %vm545, %v289, %v801
  %v1058 = vsel %vm546, %v290, %v802
  %v1059 = vsel %vm547, %v291, %v803
  %v1060 = vsel %vm548, %v292, %v804
  %v1061 = vsel %vm549, %v293, %v805
  %v1062 = vsel %vm550, %v294, %v806
  %v1063 = vsel %vm551, %v295, %v807
  %v1064 = vsel %vm552, %v296, %v808
  %v1065 = vsel %vm553, %v297, %v809
  %v1066 = vsel %vm554, %v298, %v810
  %v1067 = vsel %vm555, %v299, %v811
  %v1068 = vsel %vm556, %v300, %v812
  %v1069 = vsel %vm557, %v301, %v813
  %v1070 = vsel %vm558, %v302, %v814
  %v1071 = vsel %vm559, %v303, %v815
  %v1072 = vsel %vm560, %v304, %v816
  %v1073 = vsel %vm561, %v305, %v817
  %v1074 = vsel %vm562, %v306, %v818
  %v1075 = vsel %vm563, %v307, %v819
  %v1076 = vsel %vm564, %v308, %v820
  %v1077 = vsel %vm565, %v309, %v821
  %v1078 = vsel %vm566, %v310, %v822
  %v1079 = vsel %vm567, %v311, %v823
  %v1080 = vsel %vm568, %v312, %v824
  %v1081 = vsel %vm569, %v313, %v825
  %v1082 = vsel %vm570, %v314, %v826
  %v1083 = vsel %vm571, %v315, %v827
  %v1084 = vsel %vm572, %v316, %v828
  %v1085 = vsel %vm573, %v317, %v829
  %v1086 = vsel %vm574, %v318, %v830
  %v1087 = vsel %vm575, %v319, %v831
  %v1088 = vsel %vm576, %v320, %v832
  %v1089 = vsel %vm577, %v321, %v833
  %v1090 = vsel %vm578, %v322, %v834
  %v1091 = vsel %vm579, %v323, %v835
  %v1092 = vsel %vm580, %v324, %v836
  %v1093 = vsel %vm581, %v325, %v837
  %v1094 = vsel %vm582, %v326, %v838
  %v1095 = vsel %vm583, %v327, %v839
  %v1096 = vsel %vm584, %v328, %v840
  %v1097 = vsel %vm585, %v329, %v841
  %v1098 = vsel %vm586, %v330, %v842
  %v1099 = vsel %vm587, %v331, %v843
  %v1100 = vsel %vm588, %v332, %v844
  %v1101 = vsel %vm589, %v333, %v845
  %v1102 = vsel %vm590, %v334, %v846
  %v1103 = vsel %vm591, %v335, %v847
  %v1104 = vsel %vm592, %v336, %v848
  %v1105 = vsel %vm593, %v337, %v849
  %v1106 = vsel %vm594, %v338, %v850
  %v1107 = vsel %vm595, %v339, %v851
  %v1108 = vsel %vm596, %v340, %v852
  %v1109 = vsel %vm597, %v341, %v853
  %v1110 = vsel %vm598, %v342, %v854
  %v1111 = vsel %vm599, %v343, %v855
  %v1112 = vsel %vm600, %v344, %v856
  %v1113 = vsel %vm601, %v345, %v857
  %v1114 = vsel %vm602, %v346, %v858
  %v1115 = vsel %vm603, %v347, %v859
  %v1116 = vsel %vm604, %v348, %v860
  %v1117 = vsel %vm605, %v349, %v861
  %v1118 = vsel %vm606, %v350, %v862
  %v1119 = vsel %vm607, %v351, %v863
  %v1120 = vsel %vm608, %v352, %v864
  %v1121 = vsel %vm609, %v353, %v865
  %v1122 = vsel %vm610, %v354, %v866
  %v1123 = vsel %vm611, %v355, %v867
  %v1124 = vsel %vm612, %v356, %v868
  %v1125 = vsel %vm613, %v357, %v869
  %v1126 = vsel %vm614, %v358, %v870
  %v1127 = vsel %vm615, %v359, %v871
  %v1128 = vsel %vm616, %v360, %v872
  %v1129 = vsel %vm617, %v361, %v873
  %v1130 = vsel %vm618, %v362, %v874
  %v1131 = vsel %vm619, %v363, %v875
  %v1132 = vsel %vm620, %v364, %v876
  %v1133 = vsel %vm621, %v365, %v877
  %v1134 = vsel %vm622, %v366, %v878
  %v1135 = vsel %vm623, %v367, %v879
  %v1136 = vsel %vm624, %v368, %v880
  %v1137 = vsel %vm625, %v369, %v881
  %v1138 = vsel %vm626, %v370, %v882
  %v1139 = vsel %vm627, %v371, %v883
  %v1140 = vsel %vm628, %v372, %v884
  %v1141 = vsel %vm629, %v373, %v885
  %v1142 = vsel %vm630, %v374, %v886
  %v1143 = vsel %vm631, %v375, %v887
  %v1144 = vsel %vm632, %v376, %v888
  %v1145 = vsel %vm633, %v377, %v889
  %v1146 = vsel %vm634, %v378, %v890
  %v1147 = vsel %vm635, %v379, %v891
  %v1148 = vsel %vm636, %v380, %v892
  %v1149 = vsel %vm637, %v381, %v893
  %v1150 = vsel %vm638, %v382, %v894
  %v1151 = vsel %vm639, %v383, %v895
  %v1152 = vsel %vm640, %v384, %v896
  %v1153 = vsel %vm641, %v385, %v897
  %v1154 = vsel %vm642, %v386, %v898
  %v1155 = vsel %vm643, %v387, %v899
  %v1156 = vsel %vm644, %v388, %v900
  %v1157 = vsel %vm645, %v389, %v901
  %v1158 = vsel %vm646, %v390, %v902
  %v1159 = vsel %vm647, %v391, %v903
  %v1160 = vsel %vm648, %v392, %v904
  %v1161 = vsel %vm649, %v393, %v905
  %v1162 = vsel %vm650, %v394, %v906
  %v1163 = vsel %vm651, %v395, %v907
  %v1164 = vsel %vm652, %v396, %v908
  %v1165 = vsel %vm653, %v397, %v909
  %v1166 = vsel %vm654, %v398, %v910
  %v1167 = vsel %vm655, %v399, %v911
  %v1168 = vsel %vm656, %v400, %v912
  %v1169 = vsel %vm657, %v401, %v913
  %v1170 = vsel %vm658, %v402, %v914
  %v1171 = vsel %vm659, %v403, %v915
  %v1172 = vsel %vm660, %v404, %v916
  %v1173 = vsel %vm661, %v405, %v917
  %v1174 = vsel %vm662, %v406, %v918
  %v1175 = vsel %vm663, %v407, %v919
  %v1176 = vsel %vm664, %v408, %v920
  %v1177 = vsel %vm665, %v409, %v921
  %v1178 = vsel %vm666, %v410, %v922
  %v1179 = vsel %vm667, %v411, %v923
  %v1180 = vsel %vm668, %v412, %v924
  %v1181 = vsel %vm669, %v413, %v925
  %v1182 = vsel %vm670, %v414, %v926
  %v1183 = vsel %vm671, %v415, %v927
  %v1184 = vsel %vm672, %v416, %v928
  %v1185 = vsel %vm673, %v417, %v929
  %v1186 = vsel %vm674, %v418, %v930
  %v1187 = vsel %vm675, %v419, %v931
  %v1188 = vsel %vm676, %v420, %v932
  %v1189 = vsel %vm677, %v421, %v933
  %v1190 = vsel %vm678, %v422, %v934
  %v1191 = vsel %vm679, %v423, %v935
  %v1192 = vsel %vm680, %v424, %v936
  %v1193 = vsel %vm681, %v425, %v937
  %v1194 = vsel %vm682, %v426, %v938
  %v1195 = vsel %vm683, %v427, %v939
  %v1196 = vsel %vm684, %v428, %v940
  %v1197 = vsel %vm685, %v429, %v941
  %v1198 = vsel %vm686, %v430, %v942
  %v1199 = vsel %vm687, %v431, %v943
  %v1200 = vsel %vm688, %v432, %v944
  %v1201 = vsel %vm689, %v433, %v945
  %v1202 = vsel %vm690, %v434, %v946
  %v1203 = vsel %vm691, %v435, %v947
  %v1204 = vsel %vm692, %v436, %v948
  %v1205 = vsel %vm693, %v437, %v949
  %v1206 = vsel %vm694, %v438, %v950
  %v1207 = vsel %vm695, %v439, %v951
  %v1208 = vsel %vm696, %v440, %v952
  %v1209 = vsel %vm697, %v441, %v953
  %v1210 = vsel %vm698, %v442, %v954
  %v1211 = vsel %vm699, %v443, %v955
  %v1212 = vsel %vm700, %v444, %v956
  %v1213 = vsel %vm701, %v445, %v957
  %v1214 = vsel %vm702, %v446, %v958
  %v1215 = vsel %vm703, %v447, %v959
  %v1216 = vsel %vm704, %v448, %v960
  %v1217 = vsel %vm705, %v449, %v961
  %v1218 = vsel %vm706, %v450, %v962
  %v1219 = vsel %vm707, %v451, %v963
  %v1220 = vsel %vm708, %v452, %v964
  %v1221 = vsel %vm709, %v453, %v965
  %v1222 = vsel %vm710, %v454, %v966
  %v1223 = vsel %vm711, %v455, %v967
  %v1224 = vsel %vm712, %v456, %v968
  %v1225 = vsel %vm713, %v457, %v969
  %v1226 = vsel %vm714, %v458, %v970
  %v1227 = vsel %vm715, %v459, %v971
  %v1228 = vsel %vm716, %v460, %v972
  %v1229 = vsel %vm717, %v461, %v973
  %v1230 = vsel %vm718, %v462, %v974
  %v1231 = vsel %vm719, %v463, %v975
  %v1232 = vsel %vm720, %v464, %v976
  %v1233 = vsel %vm721, %v465, %v977
  %v1234 = vsel %vm722, %v466, %v978
  %v1235 = vsel %vm723, %v467, %v979
  %v1236 = vsel %vm724, %v468, %v980
  %v1237 = vsel %vm725, %v469, %v981
  %v1238 = vsel %vm726, %v470, %v982
  %v1239 = vsel %vm727, %v471, %v983
  %v1240 = vsel %vm728, %v472, %v984
  %v1241 = vsel %vm729, %v473, %v985
  %v1242 = vsel %vm730, %v474, %v986
  %v1243 = vsel %vm731, %v475, %v987
  %v1244 = vsel %vm732, %v476, %v988
  %v1245 = vsel %vm733, %v477, %v989
  %v1246 = vsel %vm734, %v478, %v990
  %v1247 = vsel %vm735, %v479, %v991
  %v1248 = vsel %vm736, %v480, %v992
  %v1249 = vsel %vm737, %v481, %v993
  %v1250 = vsel %vm738, %v482, %v994
  %v1251 = vsel %vm739, %v483, %v995
  %v1252 = vsel %vm740, %v484, %v996
  %v1253 = vsel %vm741, %v485, %v997
  %v1254 = vsel %vm742, %v486, %v998
  %v1255 = vsel %vm743, %v487, %v999
  %v1256 = vsel %vm744, %v488, %v1000
  %v1257 = vsel %vm745, %v489, %v1001
  %v1258 = vsel %vm746, %v490, %v1002
  %v1259 = vsel %vm747, %v491, %v1003
  %v1260 = vsel %vm748, %v492, %v1004
  %v1261 = vsel %vm749, %v493, %v1005
  %v1262 = vsel %vm750, %v494, %v1006
  %v1263 = vsel %vm751, %v495, %v1007
  %v1264 = vsel %vm752, %v496, %v1008
  %v1265 = vsel %vm753, %v497, %v1009
  %v1266 = vsel %vm754, %v498, %v1010
  %v1267 = vsel %vm755, %v499, %v1011
  %v1268 = vsel %vm756, %v500, %v1012
  %v1269 = vsel %vm757, %v501, %v1013
  %v1270 = vsel %vm758, %v502, %v1014
  %v1271 = vsel %vm759, %v503, %v1015
  %v1272 = vsel %vm760, %v504, %v1016
  %v1273 = vsel %vm761, %v505, %v1017
  %v1274 = vsel %vm762, %v506, %v1018
  %v1275 = vsel %vm763, %v507, %v1019
  %v1276 = vsel %vm764, %v508, %v1020
  %v1277 = vsel %vm765, %v509, %v1021
  %v1278 = vsel %vm766, %v510, %v1022
  %v1279 = vsel %vm767, %v511, %v1023
  %v1280 = vsel %vm768, %v512, %v1024
  %v1281 = vsel %vm769, %v513, %v1025
  %v1282 = vsel %vm770, %v514, %v1026
  %v1283 = vsel %vm771, %v515, %v1027
  %v1284 = vsel %vm772, %v516, %v1028
  %v1285 = vsel %vm773, %v517, %v1029
  %v1286 = vsel %vm774, %v518, %v1030
  %v1287 = vsel %vm775, %v519, %v1031
  %v1288 = vsel %vm776, %v520, %v1032
  %v1289 = vsel %vm777, %v521, %v1033
  %v1290 = vsel %vm778, %v522, %v1034
  %v1291 = vsel %vm779, %v523, %v1035
  %v1292 = vsel %vm780, %v524, %v1036
  %v1293 = vsel %vm781, %v525, %v1037
  %v1294 = vsel %vm782, %v526, %v1038
  %v1295 = vpack.c.bf16 %v1040, %v1039
  %v1296 = vpack.c.bf16 %v1042, %v1041
  %v1297 = vpack.c.bf16 %v1044, %v1043
  %v1298 = vpack.c.bf16 %v1046, %v1045
  %v1299 = vpack.c.bf16 %v1048, %v1047
  %v1300 = vpack.c.bf16 %v1050, %v1049
  %v1301 = vpack.c.bf16 %v1052, %v1051
  %v1302 = vpack.c.bf16 %v1054, %v1053
  %v1303 = vpack.c.bf16 %v1056, %v1055
  %v1304 = vpack.c.bf16 %v1058, %v1057
  %v1305 = vpack.c.bf16 %v1060, %v1059
  %v1306 = vpack.c.bf16 %v1062, %v1061
  %v1307 = vpack.c.bf16 %v1064, %v1063
  %v1308 = vpack.c.bf16 %v1066, %v1065
  %v1309 = vpack.c.bf16 %v1068, %v1067
  %v1310 = vpack.c.bf16 %v1070, %v1069
  %v1311 = vpack.c.bf16 %v1072, %v1071
  %v1312 = vpack.c.bf16 %v1074, %v1073
  %v1313 = vpack.c.bf16 %v1076, %v1075
  %v1314 = vpack.c.bf16 %v1078, %v1077
  %v1315 = vpack.c.bf16 %v1080, %v1079
  %v1316 = vpack.c.bf16 %v1082, %v1081
  %v1317 = vpack.c.bf16 %v1084, %v1083
  %v1318 = vpack.c.bf16 %v1086, %v1085
  %v1319 = vpack.c.bf16 %v1088, %v1087
  %v1320 = vpack.c.bf16 %v1090, %v1089
  %v1321 = vpack.c.bf16 %v1092, %v1091
  %v1322 = vpack.c.bf16 %v1094, %v1093
  %v1323 = vpack.c.bf16 %v1096, %v1095
  %v1324 = vpack.c.bf16 %v1098, %v1097
  %v1325 = vpack.c.bf16 %v1100, %v1099
  %v1326 = vpack.c.bf16 %v1102, %v1101
  %v1327 = vpack.c.bf16 %v1104, %v1103
  %v1328 = vpack.c.bf16 %v1106, %v1105
  %v1329 = vpack.c.bf16 %v1108, %v1107
  %v1330 = vpack.c.bf16 %v1110, %v1109
  %v1331 = vpack.c.bf16 %v1112, %v1111
  %v1332 = vpack.c.bf16 %v1114, %v1113
  %v1333 = vpack.c.bf16 %v1116, %v1115
  %v1334 = vpack.c.bf16 %v1118, %v1117
  %v1335 = vpack.c.bf16 %v1120, %v1119
  %v1336 = vpack.c.bf16 %v1122, %v1121
  %v1337 = vpack.c.bf16 %v1124, %v1123
  %v1338 = vpack.c.bf16 %v1126, %v1125
  %v1339 = vpack.c.bf16 %v1128, %v1127
  %v1340 = vpack.c.bf16 %v1130, %v1129
  %v1341 = vpack.c.bf16 %v1132, %v1131
  %v1342 = vpack.c.bf16 %v1134, %v1133
  %v1343 = vpack.c.bf16 %v1136, %v1135
  %v1344 = vpack.c.bf16 %v1138, %v1137
  %v1345 = vpack.c.bf16 %v1140, %v1139
  %v1346 = vpack.c.bf16 %v1142, %v1141
  %v1347 = vpack.c.bf16 %v1144, %v1143
  %v1348 = vpack.c.bf16 %v1146, %v1145
  %v1349 = vpack.c.bf16 %v1148, %v1147
  %v1350 = vpack.c.bf16 %v1150, %v1149
  %v1351 = vpack.c.bf16 %v1152, %v1151
  %v1352 = vpack.c.bf16 %v1154, %v1153
  %v1353 = vpack.c.bf16 %v1156, %v1155
  %v1354 = vpack.c.bf16 %v1158, %v1157
  %v1355 = vpack.c.bf16 %v1160, %v1159
  %v1356 = vpack.c.bf16 %v1162, %v1161
  %v1357 = vpack.c.bf16 %v1164, %v1163
  %v1358 = vpack.c.bf16 %v1166, %v1165
  %v1359 = vpack.c.bf16 %v1168, %v1167
  %v1360 = vpack.c.bf16 %v1170, %v1169
  %v1361 = vpack.c.bf16 %v1172, %v1171
  %v1362 = vpack.c.bf16 %v1174, %v1173
  %v1363 = vpack.c.bf16 %v1176, %v1175
  %v1364 = vpack.c.bf16 %v1178, %v1177
  %v1365 = vpack.c.bf16 %v1180, %v1179
  %v1366 = vpack.c.bf16 %v1182, %v1181
  %v1367 = vpack.c.bf16 %v1184, %v1183
  %v1368 = vpack.c.bf16 %v1186, %v1185
  %v1369 = vpack.c.bf16 %v1188, %v1187
  %v1370 = vpack.c.bf16 %v1190, %v1189
  %v1371 = vpack.c.bf16 %v1192, %v1191
  %v1372 = vpack.c.bf16 %v1194, %v1193
  %v1373 = vpack.c.bf16 %v1196, %v1195
  %v1374 = vpack.c.bf16 %v1198, %v1197
  %v1375 = vpack.c.bf16 %v1200, %v1199
  %v1376 = vpack.c.bf16 %v1202, %v1201
  %v1377 = vpack.c.bf16 %v1204, %v1203
  %v1378 = vpack.c.bf16 %v1206, %v1205
  %v1379 = vpack.c.bf16 %v1208, %v1207
  %v1380 = vpack.c.bf16 %v1210, %v1209
  %v1381 = vpack.c.bf16 %v1212, %v1211
  %v1382 = vpack.c.bf16 %v1214, %v1213
  %v1383 = vpack.c.bf16 %v1216, %v1215
  %v1384 = vpack.c.bf16 %v1218, %v1217
  %v1385 = vpack.c.bf16 %v1220, %v1219
  %v1386 = vpack.c.bf16 %v1222, %v1221
  %v1387 = vpack.c.bf16 %v1224, %v1223
  %v1388 = vpack.c.bf16 %v1226, %v1225
  %v1389 = vpack.c.bf16 %v1228, %v1227
  %v1390 = vpack.c.bf16 %v1230, %v1229
  %v1391 = vpack.c.bf16 %v1232, %v1231
  %v1392 = vpack.c.bf16 %v1234, %v1233
  %v1393 = vpack.c.bf16 %v1236, %v1235
  %v1394 = vpack.c.bf16 %v1238, %v1237
  %v1395 = vpack.c.bf16 %v1240, %v1239
  %v1396 = vpack.c.bf16 %v1242, %v1241
  %v1397 = vpack.c.bf16 %v1244, %v1243
  %v1398 = vpack.c.bf16 %v1246, %v1245
  %v1399 = vpack.c.bf16 %v1248, %v1247
  %v1400 = vpack.c.bf16 %v1250, %v1249
  %v1401 = vpack.c.bf16 %v1252, %v1251
  %v1402 = vpack.c.bf16 %v1254, %v1253
  %v1403 = vpack.c.bf16 %v1256, %v1255
  %v1404 = vpack.c.bf16 %v1258, %v1257
  %v1405 = vpack.c.bf16 %v1260, %v1259
  %v1406 = vpack.c.bf16 %v1262, %v1261
  %v1407 = vpack.c.bf16 %v1264, %v1263
  %v1408 = vpack.c.bf16 %v1266, %v1265
  %v1409 = vpack.c.bf16 %v1268, %v1267
  %v1410 = vpack.c.bf16 %v1270, %v1269
  %v1411 = vpack.c.bf16 %v1272, %v1271
  %v1412 = vpack.c.bf16 %v1274, %v1273
  %v1413 = vpack.c.bf16 %v1276, %v1275
  %v1414 = vpack.c.bf16 %v1278, %v1277
  %v1415 = vpack.c.bf16 %v1280, %v1279
  %v1416 = vpack.c.bf16 %v1282, %v1281
  %v1417 = vpack.c.bf16 %v1284, %v1283
  %v1418 = vpack.c.bf16 %v1286, %v1285
  %v1419 = vpack.c.bf16 %v1288, %v1287
  %v1420 = vpack.c.bf16 %v1290, %v1289
  %v1421 = vpack.c.bf16 %v1292, %v1291
  %v1422 = vpack.c.bf16 %v1294, %v1293
  %v1423 = vld [vmem:[%s1] sm:$0xff]
  %v1424 = vld [vmem:[%s1 + $0x8] sm:$0xff]
  %v1425 = vld [vmem:[%s1 + $0x10] sm:$0xff]
  %v1426 = vld [vmem:[%s1 + $0x18] sm:$0xff]
  %v1427 = vld [vmem:[%s1 + $0x20] sm:$0xff]
  %v1428 = vld [vmem:[%s1 + $0x28] sm:$0xff]
  %v1429 = vld [vmem:[%s1 + $0x30] sm:$0xff]
  %v1430 = vld [vmem:[%s1 + $0x38] sm:$0xff]
  %v1431 = vld [vmem:[%s1 + $0x40] sm:$0xff]
  %v1432 = vld [vmem:[%s1 + $0x48] sm:$0xff]
  %v1433 = vld [vmem:[%s1 + $0x50] sm:$0xff]
  %v1434 = vld [vmem:[%s1 + $0x58] sm:$0xff]
  %v1435 = vld [vmem:[%s1 + $0x60] sm:$0xff]
  %v1436 = vld [vmem:[%s1 + $0x68] sm:$0xff]
  %v1437 = vld [vmem:[%s1 + $0x70] sm:$0xff]
  %v1438 = vld [vmem:[%s1 + $0x78] sm:$0xff]
  %v1439 = vld [vmem:[%s1 + $0x80] sm:$0xff]
  %v1440 = vld [vmem:[%s1 + $0x88] sm:$0xff]
  %v1441 = vld [vmem:[%s1 + $0x90] sm:$0xff]
  %v1442 = vld [vmem:[%s1 + $0x98] sm:$0xff]
  %v1443 = vld [vmem:[%s1 + $0xa0] sm:$0xff]
  %v1444 = vld [vmem:[%s1 + $0xa8] sm:$0xff]
  %v1445 = vld [vmem:[%s1 + $0xb0] sm:$0xff]
  %v1446 = vld [vmem:[%s1 + $0xb8] sm:$0xff]
  %v1447 = vld [vmem:[%s1 + $0xc0] sm:$0xff]
  %v1448 = vld [vmem:[%s1 + $0xc8] sm:$0xff]
  %v1449 = vld [vmem:[%s1 + $0xd0] sm:$0xff]
  %v1450 = vld [vmem:[%s1 + $0xd8] sm:$0xff]
  %v1451 = vld [vmem:[%s1 + $0xe0] sm:$0xff]
  %v1452 = vld [vmem:[%s1 + $0xe8] sm:$0xff]
  %v1453 = vld [vmem:[%s1 + $0xf0] sm:$0xff]
  %v1454 = vld [vmem:[%s1 + $0xf8] sm:$0xff]
  %v1455 = vld [vmem:[%s1 + $0x100] sm:$0xff]
  %v1456 = vld [vmem:[%s1 + $0x108] sm:$0xff]
  %v1457 = vld [vmem:[%s1 + $0x110] sm:$0xff]
  %v1458 = vld [vmem:[%s1 + $0x118] sm:$0xff]
  %v1459 = vld [vmem:[%s1 + $0x120] sm:$0xff]
  %v1460 = vld [vmem:[%s1 + $0x128] sm:$0xff]
  %v1461 = vld [vmem:[%s1 + $0x130] sm:$0xff]
  %v1462 = vld [vmem:[%s1 + $0x138] sm:$0xff]
  %v1463 = vld [vmem:[%s1 + $0x140] sm:$0xff]
  %v1464 = vld [vmem:[%s1 + $0x148] sm:$0xff]
  %v1465 = vld [vmem:[%s1 + $0x150] sm:$0xff]
  %v1466 = vld [vmem:[%s1 + $0x158] sm:$0xff]
  %v1467 = vld [vmem:[%s1 + $0x160] sm:$0xff]
  %v1468 = vld [vmem:[%s1 + $0x168] sm:$0xff]
  %v1469 = vld [vmem:[%s1 + $0x170] sm:$0xff]
  %v1470 = vld [vmem:[%s1 + $0x178] sm:$0xff]
  %v1471 = vld [vmem:[%s1 + $0x180] sm:$0xff]
  %v1472 = vld [vmem:[%s1 + $0x188] sm:$0xff]
  %v1473 = vld [vmem:[%s1 + $0x190] sm:$0xff]
  %v1474 = vld [vmem:[%s1 + $0x198] sm:$0xff]
  %v1475 = vld [vmem:[%s1 + $0x1a0] sm:$0xff]
  %v1476 = vld [vmem:[%s1 + $0x1a8] sm:$0xff]
  %v1477 = vld [vmem:[%s1 + $0x1b0] sm:$0xff]
  %v1478 = vld [vmem:[%s1 + $0x1b8] sm:$0xff]
  %v1479 = vld [vmem:[%s1 + $0x1c0] sm:$0xff]
  %v1480 = vld [vmem:[%s1 + $0x1c8] sm:$0xff]
  %v1481 = vld [vmem:[%s1 + $0x1d0] sm:$0xff]
  %v1482 = vld [vmem:[%s1 + $0x1d8] sm:$0xff]
  %v1483 = vld [vmem:[%s1 + $0x1e0] sm:$0xff]
  %v1484 = vld [vmem:[%s1 + $0x1e8] sm:$0xff]
  %v1485 = vld [vmem:[%s1 + $0x1f0] sm:$0xff]
  %v1486 = vld [vmem:[%s1 + $0x1f8] sm:$0xff]
  %v1487 = vld [vmem:[%s2] sm:$0xff]
  %v1488 = vld [vmem:[%s2 + $0x8] sm:$0xff]
  %v1489 = vld [vmem:[%s2 + $0x10] sm:$0xff]
  %v1490 = vld [vmem:[%s2 + $0x18] sm:$0xff]
  %v1491 = vld [vmem:[%s2 + $0x20] sm:$0xff]
  %v1492 = vld [vmem:[%s2 + $0x28] sm:$0xff]
  %v1493 = vld [vmem:[%s2 + $0x30] sm:$0xff]
  %v1494 = vld [vmem:[%s2 + $0x38] sm:$0xff]
  %1496 = vset.pattern.permute.xlu0 0
  %1497 = vperm.xlu0 %1496, %v1487
  %v1498 = vpop.permute.xlu0 %1497
  %1501 = vset.pattern.permute.xlu0 0
  %1502 = vperm.xlu0 %1501, %v1488
  %v1503 = vpop.permute.xlu0 %1502
  %1506 = vset.pattern.permute.xlu0 0
  %1507 = vperm.xlu0 %1506, %v1489
  %v1508 = vpop.permute.xlu0 %1507
  %1511 = vset.pattern.permute.xlu0 0
  %1512 = vperm.xlu0 %1511, %v1490
  %v1513 = vpop.permute.xlu0 %1512
  %1516 = vset.pattern.permute.xlu0 0
  %1517 = vperm.xlu0 %1516, %v1491
  %v1518 = vpop.permute.xlu0 %1517
  %1521 = vset.pattern.permute.xlu0 0
  %1522 = vperm.xlu0 %1521, %v1492
  %v1523 = vpop.permute.xlu0 %1522
  %1526 = vset.pattern.permute.xlu0 0
  %1527 = vperm.xlu0 %1526, %v1493
  %v1528 = vpop.permute.xlu0 %1527
  %1531 = vset.pattern.permute.xlu0 0
  %1532 = vperm.xlu0 %1531, %v1494
  %v1533 = vpop.permute.xlu0 %1532
  %v1599 = vunpack.c.l.b16 %v1423
  %v1600 = vunpack.c.h.b16 %v1423
  %v1601 = vunpack.c.l.b16 %v1424
  %v1602 = vunpack.c.h.b16 %v1424
  %v1603 = vunpack.c.l.b16 %v1425
  %v1604 = vunpack.c.h.b16 %v1425
  %v1605 = vunpack.c.l.b16 %v1426
  %v1606 = vunpack.c.h.b16 %v1426
  %v1607 = vunpack.c.l.b16 %v1427
  %v1608 = vunpack.c.h.b16 %v1427
  %v1609 = vunpack.c.l.b16 %v1428
  %v1610 = vunpack.c.h.b16 %v1428
  %v1611 = vunpack.c.l.b16 %v1429
  %v1612 = vunpack.c.h.b16 %v1429
  %v1613 = vunpack.c.l.b16 %v1430
  %v1614 = vunpack.c.h.b16 %v1430
  %v1615 = vunpack.c.l.b16 %v1431
  %v1616 = vunpack.c.h.b16 %v1431
  %v1617 = vunpack.c.l.b16 %v1432
  %v1618 = vunpack.c.h.b16 %v1432
  %v1619 = vunpack.c.l.b16 %v1433
  %v1620 = vunpack.c.h.b16 %v1433
  %v1621 = vunpack.c.l.b16 %v1434
  %v1622 = vunpack.c.h.b16 %v1434
  %v1623 = vunpack.c.l.b16 %v1435
  %v1624 = vunpack.c.h.b16 %v1435
  %v1625 = vunpack.c.l.b16 %v1436
  %v1626 = vunpack.c.h.b16 %v1436
  %v1627 = vunpack.c.l.b16 %v1437
  %v1628 = vunpack.c.h.b16 %v1437
  %v1629 = vunpack.c.l.b16 %v1438
  %v1630 = vunpack.c.h.b16 %v1438
  %v1631 = vunpack.c.l.b16 %v1439
  %v1632 = vunpack.c.h.b16 %v1439
  %v1633 = vunpack.c.l.b16 %v1440
  %v1634 = vunpack.c.h.b16 %v1440
  %v1635 = vunpack.c.l.b16 %v1441
  %v1636 = vunpack.c.h.b16 %v1441
  %v1637 = vunpack.c.l.b16 %v1442
  %v1638 = vunpack.c.h.b16 %v1442
  %v1639 = vunpack.c.l.b16 %v1443
  %v1640 = vunpack.c.h.b16 %v1443
  %v1641 = vunpack.c.l.b16 %v1444
  %v1642 = vunpack.c.h.b16 %v1444
  %v1643 = vunpack.c.l.b16 %v1445
  %v1644 = vunpack.c.h.b16 %v1445
  %v1645 = vunpack.c.l.b16 %v1446
  %v1646 = vunpack.c.h.b16 %v1446
  %v1647 = vunpack.c.l.b16 %v1447
  %v1648 = vunpack.c.h.b16 %v1447
  %v1649 = vunpack.c.l.b16 %v1448
  %v1650 = vunpack.c.h.b16 %v1448
  %v1651 = vunpack.c.l.b16 %v1449
  %v1652 = vunpack.c.h.b16 %v1449
  %v1653 = vunpack.c.l.b16 %v1450
  %v1654 = vunpack.c.h.b16 %v1450
  %v1655 = vunpack.c.l.b16 %v1451
  %v1656 = vunpack.c.h.b16 %v1451
  %v1657 = vunpack.c.l.b16 %v1452
  %v1658 = vunpack.c.h.b16 %v1452
  %v1659 = vunpack.c.l.b16 %v1453
  %v1660 = vunpack.c.h.b16 %v1453
  %v1661 = vunpack.c.l.b16 %v1454
  %v1662 = vunpack.c.h.b16 %v1454
  %v1663 = vunpack.c.l.b16 %v1455
  %v1664 = vunpack.c.h.b16 %v1455
  %v1665 = vunpack.c.l.b16 %v1456
  %v1666 = vunpack.c.h.b16 %v1456
  %v1667 = vunpack.c.l.b16 %v1457
  %v1668 = vunpack.c.h.b16 %v1457
  %v1669 = vunpack.c.l.b16 %v1458
  %v1670 = vunpack.c.h.b16 %v1458
  %v1671 = vunpack.c.l.b16 %v1459
  %v1672 = vunpack.c.h.b16 %v1459
  %v1673 = vunpack.c.l.b16 %v1460
  %v1674 = vunpack.c.h.b16 %v1460
  %v1675 = vunpack.c.l.b16 %v1461
  %v1676 = vunpack.c.h.b16 %v1461
  %v1677 = vunpack.c.l.b16 %v1462
  %v1678 = vunpack.c.h.b16 %v1462
  %v1679 = vunpack.c.l.b16 %v1463
  %v1680 = vunpack.c.h.b16 %v1463
  %v1681 = vunpack.c.l.b16 %v1464
  %v1682 = vunpack.c.h.b16 %v1464
  %v1683 = vunpack.c.l.b16 %v1465
  %v1684 = vunpack.c.h.b16 %v1465
  %v1685 = vunpack.c.l.b16 %v1466
  %v1686 = vunpack.c.h.b16 %v1466
  %v1687 = vunpack.c.l.b16 %v1467
  %v1688 = vunpack.c.h.b16 %v1467
  %v1689 = vunpack.c.l.b16 %v1468
  %v1690 = vunpack.c.h.b16 %v1468
  %v1691 = vunpack.c.l.b16 %v1469
  %v1692 = vunpack.c.h.b16 %v1469
  %v1693 = vunpack.c.l.b16 %v1470
  %v1694 = vunpack.c.h.b16 %v1470
  %v1695 = vunpack.c.l.b16 %v1471
  %v1696 = vunpack.c.h.b16 %v1471
  %v1697 = vunpack.c.l.b16 %v1472
  %v1698 = vunpack.c.h.b16 %v1472
  %v1699 = vunpack.c.l.b16 %v1473
  %v1700 = vunpack.c.h.b16 %v1473
  %v1701 = vunpack.c.l.b16 %v1474
  %v1702 = vunpack.c.h.b16 %v1474
  %v1703 = vunpack.c.l.b16 %v1475
  %v1704 = vunpack.c.h.b16 %v1475
  %v1705 = vunpack.c.l.b16 %v1476
  %v1706 = vunpack.c.h.b16 %v1476
  %v1707 = vunpack.c.l.b16 %v1477
  %v1708 = vunpack.c.h.b16 %v1477
  %v1709 = vunpack.c.l.b16 %v1478
  %v1710 = vunpack.c.h.b16 %v1478
  %v1711 = vunpack.c.l.b16 %v1479
  %v1712 = vunpack.c.h.b16 %v1479
  %v1713 = vunpack.c.l.b16 %v1480
  %v1714 = vunpack.c.h.b16 %v1480
  %v1715 = vunpack.c.l.b16 %v1481
  %v1716 = vunpack.c.h.b16 %v1481
  %v1717 = vunpack.c.l.b16 %v1482
  %v1718 = vunpack.c.h.b16 %v1482
  %v1719 = vunpack.c.l.b16 %v1483
  %v1720 = vunpack.c.h.b16 %v1483
  %v1721 = vunpack.c.l.b16 %v1484
  %v1722 = vunpack.c.h.b16 %v1484
  %v1723 = vunpack.c.l.b16 %v1485
  %v1724 = vunpack.c.h.b16 %v1485
  %v1725 = vunpack.c.l.b16 %v1486
  %v1726 = vunpack.c.h.b16 %v1486
  %v1727 = vpack.c.b16 %v1615, %v1599
  %v1728 = vpack.c.b16 %v1616, %v1600
  %v1729 = vpack.c.b16 %v1617, %v1601
  %v1730 = vpack.c.b16 %v1618, %v1602
  %v1731 = vpack.c.b16 %v1619, %v1603
  %v1732 = vpack.c.b16 %v1620, %v1604
  %v1733 = vpack.c.b16 %v1621, %v1605
  %v1734 = vpack.c.b16 %v1622, %v1606
  %v1735 = vpack.c.b16 %v1623, %v1607
  %v1736 = vpack.c.b16 %v1624, %v1608
  %v1737 = vpack.c.b16 %v1625, %v1609
  %v1738 = vpack.c.b16 %v1626, %v1610
  %v1739 = vpack.c.b16 %v1627, %v1611
  %v1740 = vpack.c.b16 %v1628, %v1612
  %v1741 = vpack.c.b16 %v1629, %v1613
  %v1742 = vpack.c.b16 %v1630, %v1614
  %v1743 = vpack.c.b16 %v1647, %v1631
  %v1744 = vpack.c.b16 %v1648, %v1632
  %v1745 = vpack.c.b16 %v1649, %v1633
  %v1746 = vpack.c.b16 %v1650, %v1634
  %v1747 = vpack.c.b16 %v1651, %v1635
  %v1748 = vpack.c.b16 %v1652, %v1636
  %v1749 = vpack.c.b16 %v1653, %v1637
  %v1750 = vpack.c.b16 %v1654, %v1638
  %v1751 = vpack.c.b16 %v1655, %v1639
  %v1752 = vpack.c.b16 %v1656, %v1640
  %v1753 = vpack.c.b16 %v1657, %v1641
  %v1754 = vpack.c.b16 %v1658, %v1642
  %v1755 = vpack.c.b16 %v1659, %v1643
  %v1756 = vpack.c.b16 %v1660, %v1644
  %v1757 = vpack.c.b16 %v1661, %v1645
  %v1758 = vpack.c.b16 %v1662, %v1646
  %v1759 = vpack.c.b16 %v1679, %v1663
  %v1760 = vpack.c.b16 %v1680, %v1664
  %v1761 = vpack.c.b16 %v1681, %v1665
  %v1762 = vpack.c.b16 %v1682, %v1666
  %v1763 = vpack.c.b16 %v1683, %v1667
  %v1764 = vpack.c.b16 %v1684, %v1668
  %v1765 = vpack.c.b16 %v1685, %v1669
  %v1766 = vpack.c.b16 %v1686, %v1670
  %v1767 = vpack.c.b16 %v1687, %v1671
  %v1768 = vpack.c.b16 %v1688, %v1672
  %v1769 = vpack.c.b16 %v1689, %v1673
  %v1770 = vpack.c.b16 %v1690, %v1674
  %v1771 = vpack.c.b16 %v1691, %v1675
  %v1772 = vpack.c.b16 %v1692, %v1676
  %v1773 = vpack.c.b16 %v1693, %v1677
  %v1774 = vpack.c.b16 %v1694, %v1678
  %v1775 = vpack.c.b16 %v1711, %v1695
  %v1776 = vpack.c.b16 %v1712, %v1696
  %v1777 = vpack.c.b16 %v1713, %v1697
  %v1778 = vpack.c.b16 %v1714, %v1698
  %v1779 = vpack.c.b16 %v1715, %v1699
  %v1780 = vpack.c.b16 %v1716, %v1700
  %v1781 = vpack.c.b16 %v1717, %v1701
  %v1782 = vpack.c.b16 %v1718, %v1702
  %v1783 = vpack.c.b16 %v1719, %v1703
  %v1784 = vpack.c.b16 %v1720, %v1704
  %v1785 = vpack.c.b16 %v1721, %v1705
  %v1786 = vpack.c.b16 %v1722, %v1706
  %v1787 = vpack.c.b16 %v1723, %v1707
  %v1788 = vpack.c.b16 %v1724, %v1708
  %v1789 = vpack.c.b16 %v1725, %v1709
  %v1790 = vpack.c.b16 %v1726, %v1710
  %1855 = vmatprep.subr.bf16.mxu0 0
  %1856 = vmatpush1.bf16.msra.mxu0 %v1295
  %1857 = vmatprep.subr.bf16.mxu0 0
  %1858 = vmatpush1.bf16.msra.mxu0 %v1296
  %1859 = vmatprep.subr.bf16.mxu0 0
  %1860 = vmatpush1.bf16.msra.mxu0 %v1297
  %1861 = vmatprep.subr.bf16.mxu0 0
  %1862 = vmatpush1.bf16.msra.mxu0 %v1298
  %1863 = vmatprep.subr.bf16.mxu0 0
  %1864 = vmatpush1.bf16.msra.mxu0 %v1299
  %1865 = vmatprep.subr.bf16.mxu0 0
  %1866 = vmatpush1.bf16.msra.mxu0 %v1300
  %1867 = vmatprep.subr.bf16.mxu0 0
  %1868 = vmatpush1.bf16.msra.mxu0 %v1301
  %1869 = vmatprep.subr.bf16.mxu0 0
  %1870 = vmatpush1.bf16.msra.mxu0 %v1302
  %1871 = vmatprep.subr.bf16.mxu0 0
  %1872 = vmatpush1.bf16.msra.mxu0 %v1303
  %1873 = vmatprep.subr.bf16.mxu0 0
  %1874 = vmatpush1.bf16.msra.mxu0 %v1304
  %1875 = vmatprep.subr.bf16.mxu0 0
  %1876 = vmatpush1.bf16.msra.mxu0 %v1305
  %1877 = vmatprep.subr.bf16.mxu0 0
  %1878 = vmatpush1.bf16.msra.mxu0 %v1306
  %1879 = vmatprep.subr.bf16.mxu0 0
  %1880 = vmatpush1.bf16.msra.mxu0 %v1307
  %1881 = vmatprep.subr.bf16.mxu0 0
  %1882 = vmatpush1.bf16.msra.mxu0 %v1308
  %1883 = vmatprep.subr.bf16.mxu0 0
  %1884 = vmatpush1.bf16.msra.mxu0 %v1309
  %1885 = vmatprep.subr.bf16.mxu0 0
  %1886 = vmatpush1.bf16.msra.mxu0 %v1310
  %1887 = vmatprep.mubr.bf16.mxu0 %v1728
  %1888 = vmatmul.mubr.bf16.gmra.mrb[0].mxu0 %v1727
  %v1889 = vpop.f32.mrb[0].mxu0
  %v1890 = vadd.f32 %v1498, %v1889
  %v1891 = vpop.f32.mrb[0].mxu0
  %v1892 = vpop.f32.mrb[0].mxu0
  %v1893 = vadd.f32 %v1503, %v1892
  %v1894 = vpop.f32.mrb[0].mxu0
  %1895 = vmatprep.mubr.bf16.mxu0 %v1744
  %1896 = vmatmul.mubr.bf16.gmra.mrb[0].mxu0 %v1743
  %v1897 = vpop.f32.mrb[0].mxu0
  %v1898 = vadd.f32 %v1508, %v1897
  %v1899 = vpop.f32.mrb[0].mxu0
  %v1900 = vpop.f32.mrb[0].mxu0
  %v1901 = vadd.f32 %v1513, %v1900
  %v1902 = vpop.f32.mrb[0].mxu0
  %1903 = vmatprep.mubr.bf16.mxu0 %v1760
  %1904 = vmatmul.mubr.bf16.gmra.mrb[0].mxu0 %v1759
  %v1905 = vpop.f32.mrb[0].mxu0
  %v1906 = vadd.f32 %v1518, %v1905
  %v1907 = vpop.f32.mrb[0].mxu0
  %v1908 = vpop.f32.mrb[0].mxu0
  %v1909 = vadd.f32 %v1523, %v1908
  %v1910 = vpop.f32.mrb[0].mxu0
  %1911 = vmatprep.mubr.bf16.mxu0 %v1776
  %1912 = vmatmul.mubr.bf16.gmra.mrb[0].mxu0 %v1775
  %v1913 = vpop.f32.mrb[0].mxu0
  %v1914 = vadd.f32 %v1528, %v1913
  %v1915 = vpop.f32.mrb[0].mxu0
  %v1916 = vpop.f32.mrb[0].mxu0
  %v1917 = vadd.f32 %v1533, %v1916
  %v1918 = vpop.f32.mrb[0].mxu0
  %1919 = vdwg.mxu0
  %1920 = vmatprep.subr.bf16.mxu0 0
  %1921 = vmatpush1.bf16.msra.mxu0 %v1311
  %1922 = vmatprep.subr.bf16.mxu0 0
  %1923 = vmatpush1.bf16.msra.mxu0 %v1312
  %1924 = vmatprep.subr.bf16.mxu0 0
  %1925 = vmatpush1.bf16.msra.mxu0 %v1313
  %1926 = vmatprep.subr.bf16.mxu0 0
  %1927 = vmatpush1.bf16.msra.mxu0 %v1314
  %1928 = vmatprep.subr.bf16.mxu0 0
  %1929 = vmatpush1.bf16.msra.mxu0 %v1315
  %1930 = vmatprep.subr.bf16.mxu0 0
  %1931 = vmatpush1.bf16.msra.mxu0 %v1316
  %1932 = vmatprep.subr.bf16.mxu0 0
  %1933 = vmatpush1.bf16.msra.mxu0 %v1317
  %1934 = vmatprep.subr.bf16.mxu0 0
  %1935 = vmatpush1.bf16.msra.mxu0 %v1318
  %1936 = vmatprep.subr.bf16.mxu0 0
  %1937 = vmatpush1.bf16.msra.mxu0 %v1319
  %1938 = vmatprep.subr.bf16.mxu0 0
  %1939 = vmatpush1.bf16.msra.mxu0 %v1320
  %1940 = vmatprep.subr.bf16.mxu0 0
  %1941 = vmatpush1.bf16.msra.mxu0 %v1321
  %1942 = vmatprep.subr.bf16.mxu0 0
  %1943 = vmatpush1.bf16.msra.mxu0 %v1322
  %1944 = vmatprep.subr.bf16.mxu0 0
  %1945 = vmatpush1.bf16.msra.mxu0 %v1323
  %1946 = vmatprep.subr.bf16.mxu0 0
  %1947 = vmatpush1.bf16.msra.mxu0 %v1324
  %1948 = vmatprep.subr.bf16.mxu0 0
  %1949 = vmatpush1.bf16.msra.mxu0 %v1325
  %1950 = vmatprep.subr.bf16.mxu0 0
  %1951 = vmatpush1.bf16.msra.mxu0 %v1326
  %1952 = vmatprep.mubr.bf16.mxu0 %v1730
  %1953 = vmatmul.mubr.bf16.gmra.mrb[0].mxu0 %v1729
  %v1954 = vpop.f32.mrb[0].mxu0
  %v1955 = vadd.f32 %v1890, %v1954
  %v1956 = vpop.f32.mrb[0].mxu0
  %v1957 = vpop.f32.mrb[0].mxu0
  %v1958 = vadd.f32 %v1893, %v1957
  %v1959 = vpop.f32.mrb[0].mxu0
  %1960 = vmatprep.mubr.bf16.mxu0 %v1746
  %1961 = vmatmul.mubr.bf16.gmra.mrb[0].mxu0 %v1745
  %v1962 = vpop.f32.mrb[0].mxu0
  %v1963 = vadd.f32 %v1898, %v1962
  %v1964 = vpop.f32.mrb[0].mxu0
  %v1965 = vpop.f32.mrb[0].mxu0
  %v1966 = vadd.f32 %v1901, %v1965
  %v1967 = vpop.f32.mrb[0].mxu0
  %1968 = vmatprep.mubr.bf16.mxu0 %v1762
  %1969 = vmatmul.mubr.bf16.gmra.mrb[0].mxu0 %v1761
  %v1970 = vpop.f32.mrb[0].mxu0
  %v1971 = vadd.f32 %v1906, %v1970
  %v1972 = vpop.f32.mrb[0].mxu0
  %v1973 = vpop.f32.mrb[0].mxu0
  %v1974 = vadd.f32 %v1909, %v1973
  %v1975 = vpop.f32.mrb[0].mxu0
  %1976 = vmatprep.mubr.bf16.mxu0 %v1778
  %1977 = vmatmul.mubr.bf16.gmra.mrb[0].mxu0 %v1777
  %v1978 = vpop.f32.mrb[0].mxu0
  %v1979 = vadd.f32 %v1914, %v1978
  %v1980 = vpop.f32.mrb[0].mxu0
  %v1981 = vpop.f32.mrb[0].mxu0
  %v1982 = vadd.f32 %v1917, %v1981
  %v1983 = vpop.f32.mrb[0].mxu0
  %1984 = vdwg.mxu0
  %1985 = vmatprep.subr.bf16.mxu0 0
  %1986 = vmatpush1.bf16.msra.mxu0 %v1327
  %1987 = vmatprep.subr.bf16.mxu0 0
  %1988 = vmatpush1.bf16.msra.mxu0 %v1328
  %1989 = vmatprep.subr.bf16.mxu0 0
  %1990 = vmatpush1.bf16.msra.mxu0 %v1329
  %1991 = vmatprep.subr.bf16.mxu0 0
  %1992 = vmatpush1.bf16.msra.mxu0 %v1330
  %1993 = vmatprep.subr.bf16.mxu0 0
  %1994 = vmatpush1.bf16.msra.mxu0 %v1331
  %1995 = vmatprep.subr.bf16.mxu0 0
  %1996 = vmatpush1.bf16.msra.mxu0 %v1332
  %1997 = vmatprep.subr.bf16.mxu0 0
  %1998 = vmatpush1.bf16.msra.mxu0 %v1333
  %1999 = vmatprep.subr.bf16.mxu0 0
  %2000 = vmatpush1.bf16.msra.mxu0 %v1334
  %2001 = vmatprep.subr.bf16.mxu0 0
  %2002 = vmatpush1.bf16.msra.mxu0 %v1335
  %2003 = vmatprep.subr.bf16.mxu0 0
  %2004 = vmatpush1.bf16.msra.mxu0 %v1336
  %2005 = vmatprep.subr.bf16.mxu0 0
  %2006 = vmatpush1.bf16.msra.mxu0 %v1337
  %2007 = vmatprep.subr.bf16.mxu0 0
  %2008 = vmatpush1.bf16.msra.mxu0 %v1338
  %2009 = vmatprep.subr.bf16.mxu0 0
  %2010 = vmatpush1.bf16.msra.mxu0 %v1339
  %2011 = vmatprep.subr.bf16.mxu0 0
  %2012 = vmatpush1.bf16.msra.mxu0 %v1340
  %2013 = vmatprep.subr.bf16.mxu0 0
  %2014 = vmatpush1.bf16.msra.mxu0 %v1341
  %2015 = vmatprep.subr.bf16.mxu0 0
  %2016 = vmatpush1.bf16.msra.mxu0 %v1342
  %2017 = vmatprep.mubr.bf16.mxu0 %v1732
  %2018 = vmatmul.mubr.bf16.gmra.mrb[0].mxu0 %v1731
  %v2019 = vpop.f32.mrb[0].mxu0
  %v2020 = vadd.f32 %v1955, %v2019
  %v2021 = vpop.f32.mrb[0].mxu0
  %v2022 = vpop.f32.mrb[0].mxu0
  %v2023 = vadd.f32 %v1958, %v2022
  %v2024 = vpop.f32.mrb[0].mxu0
  %2025 = vmatprep.mubr.bf16.mxu0 %v1748
  %2026 = vmatmul.mubr.bf16.gmra.mrb[0].mxu0 %v1747
  %v2027 = vpop.f32.mrb[0].mxu0
  %v2028 = vadd.f32 %v1963, %v2027
  %v2029 = vpop.f32.mrb[0].mxu0
  %v2030 = vpop.f32.mrb[0].mxu0
  %v2031 = vadd.f32 %v1966, %v2030
  %v2032 = vpop.f32.mrb[0].mxu0
  %2033 = vmatprep.mubr.bf16.mxu0 %v1764
  %2034 = vmatmul.mubr.bf16.gmra.mrb[0].mxu0 %v1763
  %v2035 = vpop.f32.mrb[0].mxu0
  %v2036 = vadd.f32 %v1971, %v2035
  %v2037 = vpop.f32.mrb[0].mxu0
  %v2038 = vpop.f32.mrb[0].mxu0
  %v2039 = vadd.f32 %v1974, %v2038
  %v2040 = vpop.f32.mrb[0].mxu0
  %2041 = vmatprep.mubr.bf16.mxu0 %v1780
  %2042 = vmatmul.mubr.bf16.gmra.mrb[0].mxu0 %v1779
  %v2043 = vpop.f32.mrb[0].mxu0
  %v2044 = vadd.f32 %v1979, %v2043
  %v2045 = vpop.f32.mrb[0].mxu0
  %v2046 = vpop.f32.mrb[0].mxu0
  %v2047 = vadd.f32 %v1982, %v2046
  %v2048 = vpop.f32.mrb[0].mxu0
  %2049 = vdwg.mxu0
  %2050 = vmatprep.subr.bf16.mxu0 0
  %2051 = vmatpush1.bf16.msra.mxu0 %v1343
  %2052 = vmatprep.subr.bf16.mxu0 0
  %2053 = vmatpush1.bf16.msra.mxu0 %v1344
  %2054 = vmatprep.subr.bf16.mxu0 0
  %2055 = vmatpush1.bf16.msra.mxu0 %v1345
  %2056 = vmatprep.subr.bf16.mxu0 0
  %2057 = vmatpush1.bf16.msra.mxu0 %v1346
  %2058 = vmatprep.subr.bf16.mxu0 0
  %2059 = vmatpush1.bf16.msra.mxu0 %v1347
  %2060 = vmatprep.subr.bf16.mxu0 0
  %2061 = vmatpush1.bf16.msra.mxu0 %v1348
  %2062 = vmatprep.subr.bf16.mxu0 0
  %2063 = vmatpush1.bf16.msra.mxu0 %v1349
  %2064 = vmatprep.subr.bf16.mxu0 0
  %2065 = vmatpush1.bf16.msra.mxu0 %v1350
  %2066 = vmatprep.subr.bf16.mxu0 0
  %2067 = vmatpush1.bf16.msra.mxu0 %v1351
  %2068 = vmatprep.subr.bf16.mxu0 0
  %2069 = vmatpush1.bf16.msra.mxu0 %v1352
  %2070 = vmatprep.subr.bf16.mxu0 0
  %2071 = vmatpush1.bf16.msra.mxu0 %v1353
  %2072 = vmatprep.subr.bf16.mxu0 0
  %2073 = vmatpush1.bf16.msra.mxu0 %v1354
  %2074 = vmatprep.subr.bf16.mxu0 0
  %2075 = vmatpush1.bf16.msra.mxu0 %v1355
  %2076 = vmatprep.subr.bf16.mxu0 0
  %2077 = vmatpush1.bf16.msra.mxu0 %v1356
  %2078 = vmatprep.subr.bf16.mxu0 0
  %2079 = vmatpush1.bf16.msra.mxu0 %v1357
  %2080 = vmatprep.subr.bf16.mxu0 0
  %2081 = vmatpush1.bf16.msra.mxu0 %v1358
  %2082 = vmatprep.mubr.bf16.mxu0 %v1734
  %2083 = vmatmul.mubr.bf16.gmra.mrb[0].mxu0 %v1733
  %v2084 = vpop.f32.mrb[0].mxu0
  %v2085 = vadd.f32 %v2020, %v2084
  %v2086 = vpop.f32.mrb[0].mxu0
  %v2087 = vpop.f32.mrb[0].mxu0
  %v2088 = vadd.f32 %v2023, %v2087
  %v2089 = vpop.f32.mrb[0].mxu0
  %2090 = vmatprep.mubr.bf16.mxu0 %v1750
  %2091 = vmatmul.mubr.bf16.gmra.mrb[0].mxu0 %v1749
  %v2092 = vpop.f32.mrb[0].mxu0
  %v2093 = vadd.f32 %v2028, %v2092
  %v2094 = vpop.f32.mrb[0].mxu0
  %v2095 = vpop.f32.mrb[0].mxu0
  %v2096 = vadd.f32 %v2031, %v2095
  %v2097 = vpop.f32.mrb[0].mxu0
  %2098 = vmatprep.mubr.bf16.mxu0 %v1766
  %2099 = vmatmul.mubr.bf16.gmra.mrb[0].mxu0 %v1765
  %v2100 = vpop.f32.mrb[0].mxu0
  %v2101 = vadd.f32 %v2036, %v2100
  %v2102 = vpop.f32.mrb[0].mxu0
  %v2103 = vpop.f32.mrb[0].mxu0
  %v2104 = vadd.f32 %v2039, %v2103
  %v2105 = vpop.f32.mrb[0].mxu0
  %2106 = vmatprep.mubr.bf16.mxu0 %v1782
  %2107 = vmatmul.mubr.bf16.gmra.mrb[0].mxu0 %v1781
  %v2108 = vpop.f32.mrb[0].mxu0
  %v2109 = vadd.f32 %v2044, %v2108
  %v2110 = vpop.f32.mrb[0].mxu0
  %v2111 = vpop.f32.mrb[0].mxu0
  %v2112 = vadd.f32 %v2047, %v2111
  %v2113 = vpop.f32.mrb[0].mxu0
  %2114 = vdwg.mxu0
  %2115 = vmatprep.subr.bf16.mxu0 0
  %2116 = vmatpush1.bf16.msra.mxu0 %v1359
  %2117 = vmatprep.subr.bf16.mxu0 0
  %2118 = vmatpush1.bf16.msra.mxu0 %v1360
  %2119 = vmatprep.subr.bf16.mxu0 0
  %2120 = vmatpush1.bf16.msra.mxu0 %v1361
  %2121 = vmatprep.subr.bf16.mxu0 0
  %2122 = vmatpush1.bf16.msra.mxu0 %v1362
  %2123 = vmatprep.subr.bf16.mxu0 0
  %2124 = vmatpush1.bf16.msra.mxu0 %v1363
  %2125 = vmatprep.subr.bf16.mxu0 0
  %2126 = vmatpush1.bf16.msra.mxu0 %v1364
  %2127 = vmatprep.subr.bf16.mxu0 0
  %2128 = vmatpush1.bf16.msra.mxu0 %v1365
  %2129 = vmatprep.subr.bf16.mxu0 0
  %2130 = vmatpush1.bf16.msra.mxu0 %v1366
  %2131 = vmatprep.subr.bf16.mxu0 0
  %2132 = vmatpush1.bf16.msra.mxu0 %v1367
  %2133 = vmatprep.subr.bf16.mxu0 0
  %2134 = vmatpush1.bf16.msra.mxu0 %v1368
  %2135 = vmatprep.subr.bf16.mxu0 0
  %2136 = vmatpush1.bf16.msra.mxu0 %v1369
  %2137 = vmatprep.subr.bf16.mxu0 0
  %2138 = vmatpush1.bf16.msra.mxu0 %v1370
  %2139 = vmatprep.subr.bf16.mxu0 0
  %2140 = vmatpush1.bf16.msra.mxu0 %v1371
  %2141 = vmatprep.subr.bf16.mxu0 0
  %2142 = vmatpush1.bf16.msra.mxu0 %v1372
  %2143 = vmatprep.subr.bf16.mxu0 0
  %2144 = vmatpush1.bf16.msra.mxu0 %v1373
  %2145 = vmatprep.subr.bf16.mxu0 0
  %2146 = vmatpush1.bf16.msra.mxu0 %v1374
  %2147 = vmatprep.mubr.bf16.mxu0 %v1736
  %2148 = vmatmul.mubr.bf16.gmra.mrb[0].mxu0 %v1735
  %v2149 = vpop.f32.mrb[0].mxu0
  %v2150 = vadd.f32 %v2085, %v2149
  %v2151 = vpop.f32.mrb[0].mxu0
  %v2152 = vpop.f32.mrb[0].mxu0
  %v2153 = vadd.f32 %v2088, %v2152
  %v2154 = vpop.f32.mrb[0].mxu0
  %2155 = vmatprep.mubr.bf16.mxu0 %v1752
  %2156 = vmatmul.mubr.bf16.gmra.mrb[0].mxu0 %v1751
  %v2157 = vpop.f32.mrb[0].mxu0
  %v2158 = vadd.f32 %v2093, %v2157
  %v2159 = vpop.f32.mrb[0].mxu0
  %v2160 = vpop.f32.mrb[0].mxu0
  %v2161 = vadd.f32 %v2096, %v2160
  %v2162 = vpop.f32.mrb[0].mxu0
  %2163 = vmatprep.mubr.bf16.mxu0 %v1768
  %2164 = vmatmul.mubr.bf16.gmra.mrb[0].mxu0 %v1767
  %v2165 = vpop.f32.mrb[0].mxu0
  %v2166 = vadd.f32 %v2101, %v2165
  %v2167 = vpop.f32.mrb[0].mxu0
  %v2168 = vpop.f32.mrb[0].mxu0
  %v2169 = vadd.f32 %v2104, %v2168
  %v2170 = vpop.f32.mrb[0].mxu0
  %2171 = vmatprep.mubr.bf16.mxu0 %v1784
  %2172 = vmatmul.mubr.bf16.gmra.mrb[0].mxu0 %v1783
  %v2173 = vpop.f32.mrb[0].mxu0
  %v2174 = vadd.f32 %v2109, %v2173
  %v2175 = vpop.f32.mrb[0].mxu0
  %v2176 = vpop.f32.mrb[0].mxu0
  %v2177 = vadd.f32 %v2112, %v2176
  %v2178 = vpop.f32.mrb[0].mxu0
  %2179 = vdwg.mxu0
  %2180 = vmatprep.subr.bf16.mxu0 0
  %2181 = vmatpush1.bf16.msra.mxu0 %v1375
  %2182 = vmatprep.subr.bf16.mxu0 0
  %2183 = vmatpush1.bf16.msra.mxu0 %v1376
  %2184 = vmatprep.subr.bf16.mxu0 0
  %2185 = vmatpush1.bf16.msra.mxu0 %v1377
  %2186 = vmatprep.subr.bf16.mxu0 0
  %2187 = vmatpush1.bf16.msra.mxu0 %v1378
  %2188 = vmatprep.subr.bf16.mxu0 0
  %2189 = vmatpush1.bf16.msra.mxu0 %v1379
  %2190 = vmatprep.subr.bf16.mxu0 0
  %2191 = vmatpush1.bf16.msra.mxu0 %v1380
  %2192 = vmatprep.subr.bf16.mxu0 0
  %2193 = vmatpush1.bf16.msra.mxu0 %v1381
  %2194 = vmatprep.subr.bf16.mxu0 0
  %2195 = vmatpush1.bf16.msra.mxu0 %v1382
  %2196 = vmatprep.subr.bf16.mxu0 0
  %2197 = vmatpush1.bf16.msra.mxu0 %v1383
  %2198 = vmatprep.subr.bf16.mxu0 0
  %2199 = vmatpush1.bf16.msra.mxu0 %v1384
  %2200 = vmatprep.subr.bf16.mxu0 0
  %2201 = vmatpush1.bf16.msra.mxu0 %v1385
  %2202 = vmatprep.subr.bf16.mxu0 0
  %2203 = vmatpush1.bf16.msra.mxu0 %v1386
  %2204 = vmatprep.subr.bf16.mxu0 0
  %2205 = vmatpush1.bf16.msra.mxu0 %v1387
  %2206 = vmatprep.subr.bf16.mxu0 0
  %2207 = vmatpush1.bf16.msra.mxu0 %v1388
  %2208 = vmatprep.subr.bf16.mxu0 0
  %2209 = vmatpush1.bf16.msra.mxu0 %v1389
  %2210 = vmatprep.subr.bf16.mxu0 0
  %2211 = vmatpush1.bf16.msra.mxu0 %v1390
  %2212 = vmatprep.mubr.bf16.mxu0 %v1738
  %2213 = vmatmul.mubr.bf16.gmra.mrb[0].mxu0 %v1737
  %v2214 = vpop.f32.mrb[0].mxu0
  %v2215 = vadd.f32 %v2150, %v2214
  %v2216 = vpop.f32.mrb[0].mxu0
  %v2217 = vpop.f32.mrb[0].mxu0
  %v2218 = vadd.f32 %v2153, %v2217
  %v2219 = vpop.f32.mrb[0].mxu0
  %2220 = vmatprep.mubr.bf16.mxu0 %v1754
  %2221 = vmatmul.mubr.bf16.gmra.mrb[0].mxu0 %v1753
  %v2222 = vpop.f32.mrb[0].mxu0
  %v2223 = vadd.f32 %v2158, %v2222
  %v2224 = vpop.f32.mrb[0].mxu0
  %v2225 = vpop.f32.mrb[0].mxu0
  %v2226 = vadd.f32 %v2161, %v2225
  %v2227 = vpop.f32.mrb[0].mxu0
  %2228 = vmatprep.mubr.bf16.mxu0 %v1770
  %2229 = vmatmul.mubr.bf16.gmra.mrb[0].mxu0 %v1769
  %v2230 = vpop.f32.mrb[0].mxu0
  %v2231 = vadd.f32 %v2166, %v2230
  %v2232 = vpop.f32.mrb[0].mxu0
  %v2233 = vpop.f32.mrb[0].mxu0
  %v2234 = vadd.f32 %v2169, %v2233
  %v2235 = vpop.f32.mrb[0].mxu0
  %2236 = vmatprep.mubr.bf16.mxu0 %v1786
  %2237 = vmatmul.mubr.bf16.gmra.mrb[0].mxu0 %v1785
  %v2238 = vpop.f32.mrb[0].mxu0
  %v2239 = vadd.f32 %v2174, %v2238
  %v2240 = vpop.f32.mrb[0].mxu0
  %v2241 = vpop.f32.mrb[0].mxu0
  %v2242 = vadd.f32 %v2177, %v2241
  %v2243 = vpop.f32.mrb[0].mxu0
  %2244 = vdwg.mxu0
  %2245 = vmatprep.subr.bf16.mxu0 0
  %2246 = vmatpush1.bf16.msra.mxu0 %v1391
  %2247 = vmatprep.subr.bf16.mxu0 0
  %2248 = vmatpush1.bf16.msra.mxu0 %v1392
  %2249 = vmatprep.subr.bf16.mxu0 0
  %2250 = vmatpush1.bf16.msra.mxu0 %v1393
  %2251 = vmatprep.subr.bf16.mxu0 0
  %2252 = vmatpush1.bf16.msra.mxu0 %v1394
  %2253 = vmatprep.subr.bf16.mxu0 0
  %2254 = vmatpush1.bf16.msra.mxu0 %v1395
  %2255 = vmatprep.subr.bf16.mxu0 0
  %2256 = vmatpush1.bf16.msra.mxu0 %v1396
  %2257 = vmatprep.subr.bf16.mxu0 0
  %2258 = vmatpush1.bf16.msra.mxu0 %v1397
  %2259 = vmatprep.subr.bf16.mxu0 0
  %2260 = vmatpush1.bf16.msra.mxu0 %v1398
  %2261 = vmatprep.subr.bf16.mxu0 0
  %2262 = vmatpush1.bf16.msra.mxu0 %v1399
  %2263 = vmatprep.subr.bf16.mxu0 0
  %2264 = vmatpush1.bf16.msra.mxu0 %v1400
  %2265 = vmatprep.subr.bf16.mxu0 0
  %2266 = vmatpush1.bf16.msra.mxu0 %v1401
  %2267 = vmatprep.subr.bf16.mxu0 0
  %2268 = vmatpush1.bf16.msra.mxu0 %v1402
  %2269 = vmatprep.subr.bf16.mxu0 0
  %2270 = vmatpush1.bf16.msra.mxu0 %v1403
  %2271 = vmatprep.subr.bf16.mxu0 0
  %2272 = vmatpush1.bf16.msra.mxu0 %v1404
  %2273 = vmatprep.subr.bf16.mxu0 0
  %2274 = vmatpush1.bf16.msra.mxu0 %v1405
  %2275 = vmatprep.subr.bf16.mxu0 0
  %2276 = vmatpush1.bf16.msra.mxu0 %v1406
  %2277 = vmatprep.mubr.bf16.mxu0 %v1740
  %2278 = vmatmul.mubr.bf16.gmra.mrb[0].mxu0 %v1739
  %v2279 = vpop.f32.mrb[0].mxu0
  %v2280 = vadd.f32 %v2215, %v2279
  %v2281 = vpop.f32.mrb[0].mxu0
  %v2282 = vpop.f32.mrb[0].mxu0
  %v2283 = vadd.f32 %v2218, %v2282
  %v2284 = vpop.f32.mrb[0].mxu0
  %2285 = vmatprep.mubr.bf16.mxu0 %v1756
  %2286 = vmatmul.mubr.bf16.gmra.mrb[0].mxu0 %v1755
  %v2287 = vpop.f32.mrb[0].mxu0
  %v2288 = vadd.f32 %v2223, %v2287
  %v2289 = vpop.f32.mrb[0].mxu0
  %v2290 = vpop.f32.mrb[0].mxu0
  %v2291 = vadd.f32 %v2226, %v2290
  %v2292 = vpop.f32.mrb[0].mxu0
  %2293 = vmatprep.mubr.bf16.mxu0 %v1772
  %2294 = vmatmul.mubr.bf16.gmra.mrb[0].mxu0 %v1771
  %v2295 = vpop.f32.mrb[0].mxu0
  %v2296 = vadd.f32 %v2231, %v2295
  %v2297 = vpop.f32.mrb[0].mxu0
  %v2298 = vpop.f32.mrb[0].mxu0
  %v2299 = vadd.f32 %v2234, %v2298
  %v2300 = vpop.f32.mrb[0].mxu0
  %2301 = vmatprep.mubr.bf16.mxu0 %v1788
  %2302 = vmatmul.mubr.bf16.gmra.mrb[0].mxu0 %v1787
  %v2303 = vpop.f32.mrb[0].mxu0
  %v2304 = vadd.f32 %v2239, %v2303
  %v2305 = vpop.f32.mrb[0].mxu0
  %v2306 = vpop.f32.mrb[0].mxu0
  %v2307 = vadd.f32 %v2242, %v2306
  %v2308 = vpop.f32.mrb[0].mxu0
  %2309 = vdwg.mxu0
  %2310 = vmatprep.subr.bf16.mxu0 0
  %2311 = vmatpush1.bf16.msra.mxu0 %v1407
  %2312 = vmatprep.subr.bf16.mxu0 0
  %2313 = vmatpush1.bf16.msra.mxu0 %v1408
  %2314 = vmatprep.subr.bf16.mxu0 0
  %2315 = vmatpush1.bf16.msra.mxu0 %v1409
  %2316 = vmatprep.subr.bf16.mxu0 0
  %2317 = vmatpush1.bf16.msra.mxu0 %v1410
  %2318 = vmatprep.subr.bf16.mxu0 0
  %2319 = vmatpush1.bf16.msra.mxu0 %v1411
  %2320 = vmatprep.subr.bf16.mxu0 0
  %2321 = vmatpush1.bf16.msra.mxu0 %v1412
  %2322 = vmatprep.subr.bf16.mxu0 0
  %2323 = vmatpush1.bf16.msra.mxu0 %v1413
  %2324 = vmatprep.subr.bf16.mxu0 0
  %2325 = vmatpush1.bf16.msra.mxu0 %v1414
  %2326 = vmatprep.subr.bf16.mxu0 0
  %2327 = vmatpush1.bf16.msra.mxu0 %v1415
  %2328 = vmatprep.subr.bf16.mxu0 0
  %2329 = vmatpush1.bf16.msra.mxu0 %v1416
  %2330 = vmatprep.subr.bf16.mxu0 0
  %2331 = vmatpush1.bf16.msra.mxu0 %v1417
  %2332 = vmatprep.subr.bf16.mxu0 0
  %2333 = vmatpush1.bf16.msra.mxu0 %v1418
  %2334 = vmatprep.subr.bf16.mxu0 0
  %2335 = vmatpush1.bf16.msra.mxu0 %v1419
  %2336 = vmatprep.subr.bf16.mxu0 0
  %2337 = vmatpush1.bf16.msra.mxu0 %v1420
  %2338 = vmatprep.subr.bf16.mxu0 0
  %2339 = vmatpush1.bf16.msra.mxu0 %v1421
  %2340 = vmatprep.subr.bf16.mxu0 0
  %2341 = vmatpush1.bf16.msra.mxu0 %v1422
  %2342 = vmatprep.mubr.bf16.mxu0 %v1742
  %2343 = vmatmul.mubr.bf16.gmra.mrb[0].mxu0 %v1741
  %v2344 = vpop.f32.mrb[0].mxu0
  %v2345 = vadd.f32 %v2280, %v2344
  %v2346 = vpop.f32.mrb[0].mxu0
  %v2347 = vpop.f32.mrb[0].mxu0
  %v2348 = vadd.f32 %v2283, %v2347
  %v2349 = vpop.f32.mrb[0].mxu0
  %2350 = vmatprep.mubr.bf16.mxu0 %v1758
  %2351 = vmatmul.mubr.bf16.gmra.mrb[0].mxu0 %v1757
  %v2352 = vpop.f32.mrb[0].mxu0
  %v2353 = vadd.f32 %v2288, %v2352
  %v2354 = vpop.f32.mrb[0].mxu0
  %v2355 = vpop.f32.mrb[0].mxu0
  %v2356 = vadd.f32 %v2291, %v2355
  %v2357 = vpop.f32.mrb[0].mxu0
  %2358 = vmatprep.mubr.bf16.mxu0 %v1774
  %2359 = vmatmul.mubr.bf16.gmra.mrb[0].mxu0 %v1773
  %v2360 = vpop.f32.mrb[0].mxu0
  %v2361 = vadd.f32 %v2296, %v2360
  %v2362 = vpop.f32.mrb[0].mxu0
  %v2363 = vpop.f32.mrb[0].mxu0
  %v2364 = vadd.f32 %v2299, %v2363
  %v2365 = vpop.f32.mrb[0].mxu0
  %2366 = vmatprep.mubr.bf16.mxu0 %v1790
  %2367 = vmatmul.mubr.bf16.gmra.mrb[0].mxu0 %v1789
  %v2368 = vpop.f32.mrb[0].mxu0
  %v2369 = vadd.f32 %v2304, %v2368
  %v2370 = vpop.f32.mrb[0].mxu0
  %v2371 = vpop.f32.mrb[0].mxu0
  %v2372 = vadd.f32 %v2307, %v2371
  %v2373 = vpop.f32.mrb[0].mxu0
  %2374 = vdwg.mxu0
  %v2375 = vpack.c.bf16 %v2348, %v2345
  %v2376 = vpack.c.bf16 %v2356, %v2353
  %v2377 = vpack.c.bf16 %v2364, %v2361
  %v2378 = vpack.c.bf16 %v2372, %v2369
  %v2383 = vunpack.c.l.b16 %v2375
  %v2384 = vunpack.c.h.b16 %v2375
  %v2385 = vunpack.c.l.b16 %v2376
  %v2386 = vunpack.c.h.b16 %v2376
  %v2387 = vunpack.c.l.b16 %v2377
  %v2388 = vunpack.c.h.b16 %v2377
  %v2389 = vunpack.c.l.b16 %v2378
  %v2390 = vunpack.c.h.b16 %v2378
  %v2391 = vpack.c.b16 %v2383, %v2383
  %v2392 = vpack.c.b16 %v2384, %v2384
  %v2393 = vpack.c.b16 %v2385, %v2385
  %v2394 = vpack.c.b16 %v2386, %v2386
  %v2395 = vpack.c.b16 %v2387, %v2387
  %v2396 = vpack.c.b16 %v2388, %v2388
  %v2397 = vpack.c.b16 %v2389, %v2389
  %v2398 = vpack.c.b16 %v2390, %v2390
  %vm2407 = vcmask 60416
  %2408 = vst.msk [vmem:[%s3] sm:$0xf] %vm2407, %v2391
  %2409 = vst.msk [vmem:[%s3 + $0x4] sm:$0xf] %vm2407, %v2392
  %2410 = vst.msk [vmem:[%s3 + $0x8] sm:$0xf] %vm2407, %v2393
  %2411 = vst.msk [vmem:[%s3 + $0xc] sm:$0xf] %vm2407, %v2394
  %2412 = vst.msk [vmem:[%s3 + $0x10] sm:$0xf] %vm2407, %v2395
  %2413 = vst.msk [vmem:[%s3 + $0x14] sm:$0xf] %vm2407, %v2396
  %2414 = vst.msk [vmem:[%s3 + $0x18] sm:$0xf] %vm2407, %v2397
  %2415 = vst.msk [vmem:[%s3 + $0x1c] sm:$0xf] %vm2407, %v2398
  // Predicated region
  $region14: #{unet_g_hr_forward.8} parent=0 // pred_check
    _
  $region15: #{unet_g_hr_forward.8} parent=0 // pred_check_branch
    %2417 = sbr.rel (0) target = $region17
  $region16: #{unet_g_hr_forward.8} parent=0 // pred_region
    _
  $region17: #{unet_g_hr_forward.8} parent=0 // pred_fallthru
    _
  // Predicated region
  $region18: #{unet_g_hr_forward.8} parent=0 // pred_check
    _
  $region19: #{unet_g_hr_forward.8} parent=0 // pred_check_branch
    %2419 = sbr.rel (0) target = $region21
  $region20: #{unet_g_hr_forward.8} parent=0 // pred_region
    _
  $region21: #{unet_g_hr_forward.8} parent=0 // pred_fallthru
    _

// kernel: unet_g_hr_forward.9
$region0: #{unet_g_hr_forward.9}
  #allocation0 [shape = 'u32[]', space=smem, size = 0x4, offset = 0x4, fixed_abs, tag = 'smem constant byte address 0x4 - core index']
  #allocation1 [shape = 'u32[144,128]{1,0:T(1,128)}', space=vmem, size = 0x12000, scoped, tag = 'internal scratch']
  %s0 = inlined_call_operand.vmem [shape: bf16[64,8], index: 0, kind: input, shape index: {}]
  %s1 = inlined_call_operand.vmem [shape: bf16[32,64], index: 1, kind: input, shape index: {}]
  %s2 = inlined_call_operand.vmem [shape: bf16[16,512], index: 2, kind: input, shape index: {}]
  %s3 = inlined_call_operand.vmem [shape: bf16[8,64,64], index: 3, kind: input, shape index: {}]
  %s4 = inlined_call_operand.vmem [shape: f32[64,1], index: 4, kind: input, shape index: {}]
  %s5 = inlined_call_operand.vmem [shape: bf16[64,64], index: 5, kind: input, shape index: {}]
  %s6 = inlined_call_operand.vmem [shape: f32[64,1], index: 6, kind: input, shape index: {}]
  %s7 = inlined_call_operand.vmem [shape: bf16[32,64], index: 7, kind: input, shape index: {}]
  %s8 = inlined_call_operand.vmem [shape: bf16[32,64], index: 8, kind: input, shape index: {}]
  %s9 = inlined_call_operand.vmem [shape: f32[32,1], index: 9, kind: input, shape index: {}]
  %s10 = inlined_call_operand.vmem [shape: bf16[16,32], index: 10, kind: input, shape index: {}]
  %s11 = inlined_call_operand.vmem [shape: bf16[16,32], index: 11, kind: input, shape index: {}]
  %s12 = inlined_call_operand.vmem [shape: f32[16,1], index: 12, kind: input, shape index: {}]
  %s13 = inlined_call_operand.vmem [shape: bf16[8,16], index: 13, kind: input, shape index: {}]
  %s14 = inlined_call_operand.vmem [shape: bf16[8,16], index: 14, kind: input, shape index: {}]
  %s15 = inlined_call_operand.vmem [shape: f32[8,1], index: 15, kind: input, shape index: {}]
  %s16 = inlined_call_operand.vmem [shape: bf16[1,8], index: 16, kind: input, shape index: {}]
  %s17 = inlined_call_operand.vmem [shape: bf16[8,64], index: 17, kind: input, shape index: {}]
  %s18 = inlined_call_operand.vmem [shape: bf16[64,512], index: 18, kind: input, shape index: {}]
  %s19 = inlined_call_operand.vmem [shape: f32[1,512], index: 19, kind: output, shape index: {}]
  %s20 = sld [smem:[#allocation0]]
  $region86: #{unet_g_hr_forward.9} parent=0
    _
  %s22 = ssub.s32 1, %s20
  %s23 = scalar_select 0, %s22, %s20
  // Predicated region
  $region2: #{unet_g_hr_forward.9} parent=0 // pred_check
    _
  $region3: #{unet_g_hr_forward.9} parent=0 // pred_check_branch
    %25 = sbr.rel (0) target = $region5
  $region4: #{unet_g_hr_forward.9} parent=0 // pred_region
    _
  $region5: #{unet_g_hr_forward.9} parent=0 // pred_fallthru
    _
  // Predicated region
  $region6: #{unet_g_hr_forward.9} parent=0 // pred_check
    _
  $region7: #{unet_g_hr_forward.9} parent=0 // pred_check_branch
    %27 = sbr.rel (0) target = $region9
  $region8: #{unet_g_hr_forward.9} parent=0 // pred_region
    _
  $region9: #{unet_g_hr_forward.9} parent=0 // pred_fallthru
    _
  // Predicated region
  $region10: #{unet_g_hr_forward.9} parent=0 // pred_check
    _
  $region11: #{unet_g_hr_forward.9} parent=0 // pred_check_branch
    %29 = sbr.rel (0) target = $region13
  $region12: #{unet_g_hr_forward.9} parent=0 // pred_region
    _
  $region13: #{unet_g_hr_forward.9} parent=0 // pred_fallthru
    _
  // Predicated region
  $region14: #{unet_g_hr_forward.9} parent=0 // pred_check
    _
  $region15: #{unet_g_hr_forward.9} parent=0 // pred_check_branch
    %31 = sbr.rel (0) target = $region17
  $region16: #{unet_g_hr_forward.9} parent=0 // pred_region
    _
  $region17: #{unet_g_hr_forward.9} parent=0 // pred_fallthru
    _
  // Predicated region
  $region18: #{unet_g_hr_forward.9} parent=0 // pred_check
    _
  $region19: #{unet_g_hr_forward.9} parent=0 // pred_check_branch
    %33 = sbr.rel (0) target = $region21
  $region20: #{unet_g_hr_forward.9} parent=0 // pred_region
    _
  $region21: #{unet_g_hr_forward.9} parent=0 // pred_fallthru
    _
  // Predicated region
  $region22: #{unet_g_hr_forward.9} parent=0 // pred_check
    _
  $region23: #{unet_g_hr_forward.9} parent=0 // pred_check_branch
    %35 = sbr.rel (0) target = $region25
  $region24: #{unet_g_hr_forward.9} parent=0 // pred_region
    _
  $region25: #{unet_g_hr_forward.9} parent=0 // pred_fallthru
    _
  // Predicated region
  $region26: #{unet_g_hr_forward.9} parent=0 // pred_check
    _
  $region27: #{unet_g_hr_forward.9} parent=0 // pred_check_branch
    %37 = sbr.rel (0) target = $region29
  $region28: #{unet_g_hr_forward.9} parent=0 // pred_region
    _
  $region29: #{unet_g_hr_forward.9} parent=0 // pred_fallthru
    _
  // Predicated region
  $region30: #{unet_g_hr_forward.9} parent=0 // pred_check
    _
  $region31: #{unet_g_hr_forward.9} parent=0 // pred_check_branch
    %39 = sbr.rel (0) target = $region33
  $region32: #{unet_g_hr_forward.9} parent=0 // pred_region
    _
  $region33: #{unet_g_hr_forward.9} parent=0 // pred_fallthru
    _
  // Predicated region
  $region34: #{unet_g_hr_forward.9} parent=0 // pred_check
    _
  $region35: #{unet_g_hr_forward.9} parent=0 // pred_check_branch
    %41 = sbr.rel (0) target = $region37
  $region36: #{unet_g_hr_forward.9} parent=0 // pred_region
    _
  $region37: #{unet_g_hr_forward.9} parent=0 // pred_fallthru
    _
  // Predicated region
  $region38: #{unet_g_hr_forward.9} parent=0 // pred_check
    _
  $region39: #{unet_g_hr_forward.9} parent=0 // pred_check_branch
    %43 = sbr.rel (0) target = $region41
  $region40: #{unet_g_hr_forward.9} parent=0 // pred_region
    _
  $region41: #{unet_g_hr_forward.9} parent=0 // pred_fallthru
    _
  // Predicated region
  $region42: #{unet_g_hr_forward.9} parent=0 // pred_check
    _
  $region43: #{unet_g_hr_forward.9} parent=0 // pred_check_branch
    %45 = sbr.rel (0) target = $region45
  $region44: #{unet_g_hr_forward.9} parent=0 // pred_region
    _
  $region45: #{unet_g_hr_forward.9} parent=0 // pred_fallthru
    _
  // Predicated region
  $region46: #{unet_g_hr_forward.9} parent=0 // pred_check
    _
  $region47: #{unet_g_hr_forward.9} parent=0 // pred_check_branch
    %47 = sbr.rel (0) target = $region49
  $region48: #{unet_g_hr_forward.9} parent=0 // pred_region
    _
  $region49: #{unet_g_hr_forward.9} parent=0 // pred_fallthru
    _
  // Predicated region
  $region50: #{unet_g_hr_forward.9} parent=0 // pred_check
    _
  $region51: #{unet_g_hr_forward.9} parent=0 // pred_check_branch
    %49 = sbr.rel (0) target = $region53
  $region52: #{unet_g_hr_forward.9} parent=0 // pred_region
    _
  $region53: #{unet_g_hr_forward.9} parent=0 // pred_fallthru
    _
  // Predicated region
  $region54: #{unet_g_hr_forward.9} parent=0 // pred_check
    _
  $region55: #{unet_g_hr_forward.9} parent=0 // pred_check_branch
    %51 = sbr.rel (0) target = $region57
  $region56: #{unet_g_hr_forward.9} parent=0 // pred_region
    _
  $region57: #{unet_g_hr_forward.9} parent=0 // pred_fallthru
    _
  // Predicated region
  $region58: #{unet_g_hr_forward.9} parent=0 // pred_check
    _
  $region59: #{unet_g_hr_forward.9} parent=0 // pred_check_branch
    %53 = sbr.rel (0) target = $region61
  $region60: #{unet_g_hr_forward.9} parent=0 // pred_region
    _
  $region61: #{unet_g_hr_forward.9} parent=0 // pred_fallthru
    _
  // Predicated region
  $region62: #{unet_g_hr_forward.9} parent=0 // pred_check
    _
  $region63: #{unet_g_hr_forward.9} parent=0 // pred_check_branch
    %55 = sbr.rel (0) target = $region65
  $region64: #{unet_g_hr_forward.9} parent=0 // pred_region
    _
  $region65: #{unet_g_hr_forward.9} parent=0 // pred_fallthru
    _
  // Predicated region
  $region66: #{unet_g_hr_forward.9} parent=0 // pred_check
    _
  $region67: #{unet_g_hr_forward.9} parent=0 // pred_check_branch
    %57 = sbr.rel (0) target = $region69
  $region68: #{unet_g_hr_forward.9} parent=0 // pred_region
    _
  $region69: #{unet_g_hr_forward.9} parent=0 // pred_fallthru
    _
  // Predicated region
  $region70: #{unet_g_hr_forward.9} parent=0 // pred_check
    _
  $region71: #{unet_g_hr_forward.9} parent=0 // pred_check_branch
    %59 = sbr.rel (0) target = $region73
  $region72: #{unet_g_hr_forward.9} parent=0 // pred_region
    _
  $region73: #{unet_g_hr_forward.9} parent=0 // pred_fallthru
    _
  // Predicated region
  $region74: #{unet_g_hr_forward.9} parent=0 // pred_check
    _
  $region75: #{unet_g_hr_forward.9} parent=0 // pred_check_branch
    %61 = sbr.rel (0) target = $region77
  $region76: #{unet_g_hr_forward.9} parent=0 // pred_region
    _
  $region77: #{unet_g_hr_forward.9} parent=0 // pred_fallthru
    _
  %v63 = vld [vmem:[%s0] sm:$0xf]
  %v64 = vld [vmem:[%s0 + $0x4] sm:$0xf]
  %v65 = vld [vmem:[%s0 + $0x8] sm:$0xf]
  %v66 = vld [vmem:[%s0 + $0xc] sm:$0xf]
  %v67 = vld [vmem:[%s0 + $0x10] sm:$0xf]
  %v68 = vld [vmem:[%s0 + $0x14] sm:$0xf]
  %v69 = vld [vmem:[%s0 + $0x18] sm:$0xf]
  %v70 = vld [vmem:[%s0 + $0x1c] sm:$0xf]
  %v71 = vunpack.c.l.bf16 %v63
  %v72 = vunpack.c.l.bf16 %v64
  %v73 = vunpack.c.l.bf16 %v65
  %v74 = vunpack.c.l.bf16 %v66
  %v75 = vunpack.c.l.bf16 %v67
  %v76 = vunpack.c.l.bf16 %v68
  %v77 = vunpack.c.l.bf16 %v69
  %v78 = vunpack.c.l.bf16 %v70
  %vm79 = vcmp.gt.f32.partialorder %v71, 0.0
  %vm80 = vcmp.gt.f32.partialorder %v72, 0.0
  %vm81 = vcmp.gt.f32.partialorder %v73, 0.0
  %vm82 = vcmp.gt.f32.partialorder %v74, 0.0
  %vm83 = vcmp.gt.f32.partialorder %v75, 0.0
  %vm84 = vcmp.gt.f32.partialorder %v76, 0.0
  %vm85 = vcmp.gt.f32.partialorder %v77, 0.0
  %vm86 = vcmp.gt.f32.partialorder %v78, 0.0
  %v87 = vmul.f32 %v71, 0.2
  %v88 = vmul.f32 %v72, 0.2
  %v89 = vmul.f32 %v73, 0.2
  %v90 = vmul.f32 %v74, 0.2
  %v91 = vmul.f32 %v75, 0.2
  %v92 = vmul.f32 %v76, 0.2
  %v93 = vmul.f32 %v77, 0.2
  %v94 = vmul.f32 %v78, 0.2
  %v95 = vsel %vm79, %v71, %v87
  %v96 = vsel %vm80, %v72, %v88
  %v97 = vsel %vm81, %v73, %v89
  %v98 = vsel %vm82, %v74, %v90
  %v99 = vsel %vm83, %v75, %v91
  %v100 = vsel %vm84, %v76, %v92
  %v101 = vsel %vm85, %v77, %v93
  %v102 = vsel %vm86, %v78, %v94
  %v103 = vpack.c.bf16 %v96, %v95
  %v104 = vpack.c.bf16 %v98, %v97
  %v105 = vpack.c.bf16 %v100, %v99
  %v106 = vpack.c.bf16 %v102, %v101
  %v107 = vld [vmem:[%s4] sm:$0xff]
  %v108 = vld [vmem:[%s4 + $0x8] sm:$0xff]
  %v109 = vld [vmem:[%s4 + $0x10] sm:$0xff]
  %v110 = vld [vmem:[%s4 + $0x18] sm:$0xff]
  %v111 = vld [vmem:[%s4 + $0x20] sm:$0xff]
  %v112 = vld [vmem:[%s4 + $0x28] sm:$0xff]
  %v113 = vld [vmem:[%s4 + $0x30] sm:$0xff]
  %v114 = vld [vmem:[%s4 + $0x38] sm:$0xff]
  %v115 = vld [vmem:[%s3] sm:$0xf]
  %v116 = vld [vmem:[%s3 + $0x4] sm:$0xf]
  %v117 = vld [vmem:[%s3 + $0x8] sm:$0xf]
  %v118 = vld [vmem:[%s3 + $0xc] sm:$0xf]
  %v119 = vld [vmem:[%s3 + $0x10] sm:$0xf]
  %v120 = vld [vmem:[%s3 + $0x14] sm:$0xf]
  %v121 = vld [vmem:[%s3 + $0x18] sm:$0xf]
  %v122 = vld [vmem:[%s3 + $0x1c] sm:$0xf]
  %v131 = vunpack.c.l.b16 %v115
  %v132 = vunpack.c.l.b16 %v116
  %v133 = vunpack.c.l.b16 %v117
  %v134 = vunpack.c.l.b16 %v118
  %v135 = vunpack.c.l.b16 %v119
  %v136 = vunpack.c.l.b16 %v120
  %v137 = vunpack.c.l.b16 %v121
  %v138 = vunpack.c.l.b16 %v122
  %v139 = vpack.c.b16 %v132, %v131
  %v140 = vpack.c.b16 %v134, %v133
  %v141 = vpack.c.b16 %v136, %v135
  %v142 = vpack.c.b16 %v138, %v137
  %vm143 = vcmask 523264
  %v145 = vsel %vm143, %v139, 0
  %v148 = vsel %vm143, %v140, 0
  %v151 = vsel %vm143, %v141, 0
  %v154 = vsel %vm143, %v142, 0
  %156 = vmatprep.subr.bf16.mxu0 0
  %157 = vmatpush1.bf16.msra.mxu0 %v103
  %158 = vmatprep.subr.bf16.mxu0 0
  %159 = vmatpush1.bf16.msra.mxu0 %v104
  %160 = vmatprep.subr.bf16.mxu0 0
  %161 = vmatpush1.bf16.msra.mxu0 %v105
  %162 = vmatprep.subr.bf16.mxu0 0
  %163 = vmatpush1.bf16.msra.mxu0 %v106
  %164 = vmatprep.subr.bf16.mxu0 0
  %165 = vmatpush1.bf16.msra.mxu0 0
  %166 = vmatprep.subr.bf16.mxu0 0
  %167 = vmatpush1.bf16.msra.mxu0 0
  %168 = vmatprep.subr.bf16.mxu0 0
  %169 = vmatpush1.bf16.msra.mxu0 0
  %170 = vmatprep.subr.bf16.mxu0 0
  %171 = vmatpush1.bf16.msra.mxu0 0
  %172 = vmatprep.subr.bf16.mxu0 0
  %173 = vmatpush1.bf16.msra.mxu0 0
  %174 = vmatprep.subr.bf16.mxu0 0
  %175 = vmatpush1.bf16.msra.mxu0 0
  %176 = vmatprep.subr.bf16.mxu0 0
  %177 = vmatpush1.bf16.msra.mxu0 0
  %178 = vmatprep.subr.bf16.mxu0 0
  %179 = vmatpush1.bf16.msra.mxu0 0
  %180 = vmatprep.subr.bf16.mxu0 0
  %181 = vmatpush1.bf16.msra.mxu0 0
  %182 = vmatprep.subr.bf16.mxu0 0
  %183 = vmatpush1.bf16.msra.mxu0 0
  %184 = vmatprep.subr.bf16.mxu0 0
  %185 = vmatpush1.bf16.msra.mxu0 0
  %186 = vmatprep.subr.bf16.mxu0 0
  %187 = vmatpush1.bf16.msra.mxu0 0
  %188 = vmatprep.mubr.bf16.mxu0 0
  %189 = vmatmul.mubr.bf16.gmra.mrb[0].mxu0 %v145
  %v190 = vpop.f32.mrb[0].mxu0
  %v191 = vadd.f32 0.0, %v190
  %v192 = vpop.f32.mrb[0].mxu0
  %v193 = vpop.f32.mrb[0].mxu0
  %v194 = vadd.f32 0.0, %v193
  %v195 = vpop.f32.mrb[0].mxu0
  %196 = vmatprep.mubr.bf16.mxu0 0
  %197 = vmatmul.mubr.bf16.gmra.mrb[0].mxu0 %v148
  %v198 = vpop.f32.mrb[0].mxu0
  %v199 = vadd.f32 0.0, %v198
  %v200 = vpop.f32.mrb[0].mxu0
  %v201 = vpop.f32.mrb[0].mxu0
  %v202 = vadd.f32 0.0, %v201
  %v203 = vpop.f32.mrb[0].mxu0
  %204 = vmatprep.mubr.bf16.mxu0 0
  %205 = vmatmul.mubr.bf16.gmra.mrb[0].mxu0 %v151
  %v206 = vpop.f32.mrb[0].mxu0
  %v207 = vadd.f32 0.0, %v206
  %v208 = vpop.f32.mrb[0].mxu0
  %v209 = vpop.f32.mrb[0].mxu0
  %v210 = vadd.f32 0.0, %v209
  %v211 = vpop.f32.mrb[0].mxu0
  %212 = vmatprep.mubr.bf16.mxu0 0
  %213 = vmatmul.mubr.bf16.gmra.mrb[0].mxu0 %v154
  %v214 = vpop.f32.mrb[0].mxu0
  %v215 = vadd.f32 0.0, %v214
  %v216 = vpop.f32.mrb[0].mxu0
  %v217 = vpop.f32.mrb[0].mxu0
  %v218 = vadd.f32 0.0, %v217
  %v219 = vpop.f32.mrb[0].mxu0
  %220 = vdwg.mxu0
  %v221 = vadd.f32 %v107, %v191
  %v222 = vadd.f32 %v108, %v194
  %v223 = vadd.f32 %v109, %v199
  %v224 = vadd.f32 %v110, %v202
  %v225 = vadd.f32 %v111, %v207
  %v226 = vadd.f32 %v112, %v210
  %v227 = vadd.f32 %v113, %v215
  %v228 = vadd.f32 %v114, %v218
  %s229 = scalar_lea.vmem %s3, 32
  %v230 = vld [vmem:[%s229] sm:$0xf]
  %v231 = vld [vmem:[%s229 + $0x4] sm:$0xf]
  %v232 = vld [vmem:[%s229 + $0x8] sm:$0xf]
  %v233 = vld [vmem:[%s229 + $0xc] sm:$0xf]
  %v234 = vld [vmem:[%s229 + $0x10] sm:$0xf]
  %v235 = vld [vmem:[%s229 + $0x14] sm:$0xf]
  %v236 = vld [vmem:[%s229 + $0x18] sm:$0xf]
  %v237 = vld [vmem:[%s229 + $0x1c] sm:$0xf]
  %v246 = vunpack.c.l.b16 %v230
  %v247 = vunpack.c.l.b16 %v231
  %v248 = vunpack.c.l.b16 %v232
  %v249 = vunpack.c.l.b16 %v233
  %v250 = vunpack.c.l.b16 %v234
  %v251 = vunpack.c.l.b16 %v235
  %v252 = vunpack.c.l.b16 %v236
  %v253 = vunpack.c.l.b16 %v237
  %v254 = vpack.c.b16 %v247, %v246
  %v255 = vpack.c.b16 %v249, %v248
  %v256 = vpack.c.b16 %v251, %v250
  %v257 = vpack.c.b16 %v253, %v252
  %262 = vrot.lane.b32.xlu0 %v103, 127
  %v263 = vpop.permute.xlu0 %262
  %264 = vrot.lane.b32.xlu0 %v104, 127
  %v265 = vpop.permute.xlu0 %264
  %266 = vrot.lane.b32.xlu0 %v105, 127
  %v267 = vpop.permute.xlu0 %266
  %268 = vrot.lane.b32.xlu0 %v106, 127
  %v269 = vpop.permute.xlu0 %268
  %v275 = vsel %vm143, %v254, 0
  %v278 = vsel %vm143, %v255, 0
  %v281 = vsel %vm143, %v256, 0
  %v284 = vsel %vm143, %v257, 0
  %286 = vmatprep.subr.bf16.mxu0 0
  %287 = vmatpush1.bf16.msra.mxu0 %v263
  %288 = vmatprep.subr.bf16.mxu0 0
  %289 = vmatpush1.bf16.msra.mxu0 %v265
  %290 = vmatprep.subr.bf16.mxu0 0
  %291 = vmatpush1.bf16.msra.mxu0 %v267
  %292 = vmatprep.subr.bf16.mxu0 0
  %293 = vmatpush1.bf16.msra.mxu0 %v269
  %294 = vmatprep.subr.bf16.mxu0 0
  %295 = vmatpush1.bf16.msra.mxu0 0
  %296 = vmatprep.subr.bf16.mxu0 0
  %297 = vmatpush1.bf16.msra.mxu0 0
  %298 = vmatprep.subr.bf16.mxu0 0
  %299 = vmatpush1.bf16.msra.mxu0 0
  %300 = vmatprep.subr.bf16.mxu0 0
  %301 = vmatpush1.bf16.msra.mxu0 0
  %302 = vmatprep.subr.bf16.mxu0 0
  %303 = vmatpush1.bf16.msra.mxu0 0
  %304 = vmatprep.subr.bf16.mxu0 0
  %305 = vmatpush1.bf16.msra.mxu0 0
  %306 = vmatprep.subr.bf16.mxu0 0
  %307 = vmatpush1.bf16.msra.mxu0 0
  %308 = vmatprep.subr.bf16.mxu0 0
  %309 = vmatpush1.bf16.msra.mxu0 0
  %310 = vmatprep.subr.bf16.mxu0 0
  %311 = vmatpush1.bf16.msra.mxu0 0
  %312 = vmatprep.subr.bf16.mxu0 0
  %313 = vmatpush1.bf16.msra.mxu0 0
  %314 = vmatprep.subr.bf16.mxu0 0
  %315 = vmatpush1.bf16.msra.mxu0 0
  %316 = vmatprep.subr.bf16.mxu0 0
  %317 = vmatpush1.bf16.msra.mxu0 0
  %318 = vmatprep.mubr.bf16.mxu0 0
  %319 = vmatmul.mubr.bf16.gmra.mrb[0].mxu0 %v275
  %v320 = vpop.f32.mrb[0].mxu0
  %v321 = vadd.f32 0.0, %v320
  %v322 = vpop.f32.mrb[0].mxu0
  %v323 = vpop.f32.mrb[0].mxu0
  %v324 = vadd.f32 0.0, %v323
  %v325 = vpop.f32.mrb[0].mxu0
  %326 = vmatprep.mubr.bf16.mxu0 0
  %327 = vmatmul.mubr.bf16.gmra.mrb[0].mxu0 %v278
  %v328 = vpop.f32.mrb[0].mxu0
  %v329 = vadd.f32 0.0, %v328
  %v330 = vpop.f32.mrb[0].mxu0
  %v331 = vpop.f32.mrb[0].mxu0
  %v332 = vadd.f32 0.0, %v331
  %v333 = vpop.f32.mrb[0].mxu0
  %334 = vmatprep.mubr.bf16.mxu0 0
  %335 = vmatmul.mubr.bf16.gmra.mrb[0].mxu0 %v281
  %v336 = vpop.f32.mrb[0].mxu0
  %v337 = vadd.f32 0.0, %v336
  %v338 = vpop.f32.mrb[0].mxu0
  %v339 = vpop.f32.mrb[0].mxu0
  %v340 = vadd.f32 0.0, %v339
  %v341 = vpop.f32.mrb[0].mxu0
  %342 = vmatprep.mubr.bf16.mxu0 0
  %343 = vmatmul.mubr.bf16.gmra.mrb[0].mxu0 %v284
  %v344 = vpop.f32.mrb[0].mxu0
  %v345 = vadd.f32 0.0, %v344
  %v346 = vpop.f32.mrb[0].mxu0
  %v347 = vpop.f32.mrb[0].mxu0
  %v348 = vadd.f32 0.0, %v347
  %v349 = vpop.f32.mrb[0].mxu0
  %350 = vdwg.mxu0
  %v351 = vadd.f32 %v221, %v321
  %v352 = vadd.f32 %v222, %v324
  %v353 = vadd.f32 %v223, %v329
  %v354 = vadd.f32 %v224, %v332
  %v355 = vadd.f32 %v225, %v337
  %v356 = vadd.f32 %v226, %v340
  %v357 = vadd.f32 %v227, %v345
  %v358 = vadd.f32 %v228, %v348
  %s359 = scalar_lea.vmem %s3, 64
  %v360 = vld [vmem:[%s359] sm:$0xf]
  %v361 = vld [vmem:[%s359 + $0x4] sm:$0xf]
  %v362 = vld [vmem:[%s359 + $0x8] sm:$0xf]
  %v363 = vld [vmem:[%s359 + $0xc] sm:$0xf]
  %v364 = vld [vmem:[%s359 + $0x10] sm:$0xf]
  %v365 = vld [vmem:[%s359 + $0x14] sm:$0xf]
  %v366 = vld [vmem:[%s359 + $0x18] sm:$0xf]
  %v367 = vld [vmem:[%s359 + $0x1c] sm:$0xf]
  %v376 = vunpack.c.l.b16 %v360
  %v377 = vunpack.c.l.b16 %v361
  %v378 = vunpack.c.l.b16 %v362
  %v379 = vunpack.c.l.b16 %v363
  %v380 = vunpack.c.l.b16 %v364
  %v381 = vunpack.c.l.b16 %v365
  %v382 = vunpack.c.l.b16 %v366
  %v383 = vunpack.c.l.b16 %v367
  %v384 = vpack.c.b16 %v377, %v376
  %v385 = vpack.c.b16 %v379, %v378
  %v386 = vpack.c.b16 %v381, %v380
  %v387 = vpack.c.b16 %v383, %v382
  %388 = vrot.lane.b32.xlu0 %v103, 126
  %v389 = vpop.permute.xlu0 %388
  %390 = vrot.lane.b32.xlu0 %v104, 126
  %v391 = vpop.permute.xlu0 %390
  %392 = vrot.lane.b32.xlu0 %v105, 126
  %v393 = vpop.permute.xlu0 %392
  %394 = vrot.lane.b32.xlu0 %v106, 126
  %v395 = vpop.permute.xlu0 %394
  %v401 = vsel %vm143, %v384, 0
  %v404 = vsel %vm143, %v385, 0
  %v407 = vsel %vm143, %v386, 0
  %v410 = vsel %vm143, %v387, 0
  %412 = vmatprep.subr.bf16.mxu0 0
  %413 = vmatpush1.bf16.msra.mxu0 %v389
  %414 = vmatprep.subr.bf16.mxu0 0
  %415 = vmatpush1.bf16.msra.mxu0 %v391
  %416 = vmatprep.subr.bf16.mxu0 0
  %417 = vmatpush1.bf16.msra.mxu0 %v393
  %418 = vmatprep.subr.bf16.mxu0 0
  %419 = vmatpush1.bf16.msra.mxu0 %v395
  %420 = vmatprep.subr.bf16.mxu0 0
  %421 = vmatpush1.bf16.msra.mxu0 0
  %422 = vmatprep.subr.bf16.mxu0 0
  %423 = vmatpush1.bf16.msra.mxu0 0
  %424 = vmatprep.subr.bf16.mxu0 0
  %425 = vmatpush1.bf16.msra.mxu0 0
  %426 = vmatprep.subr.bf16.mxu0 0
  %427 = vmatpush1.bf16.msra.mxu0 0
  %428 = vmatprep.subr.bf16.mxu0 0
  %429 = vmatpush1.bf16.msra.mxu0 0
  %430 = vmatprep.subr.bf16.mxu0 0
  %431 = vmatpush1.bf16.msra.mxu0 0
  %432 = vmatprep.subr.bf16.mxu0 0
  %433 = vmatpush1.bf16.msra.mxu0 0
  %434 = vmatprep.subr.bf16.mxu0 0
  %435 = vmatpush1.bf16.msra.mxu0 0
  %436 = vmatprep.subr.bf16.mxu0 0
  %437 = vmatpush1.bf16.msra.mxu0 0
  %438 = vmatprep.subr.bf16.mxu0 0
  %439 = vmatpush1.bf16.msra.mxu0 0
  %440 = vmatprep.subr.bf16.mxu0 0
  %441 = vmatpush1.bf16.msra.mxu0 0
  %442 = vmatprep.subr.bf16.mxu0 0
  %443 = vmatpush1.bf16.msra.mxu0 0
  %444 = vmatprep.mubr.bf16.mxu0 0
  %445 = vmatmul.mubr.bf16.gmra.mrb[0].mxu0 %v401
  %v446 = vpop.f32.mrb[0].mxu0
  %v447 = vadd.f32 0.0, %v446
  %v448 = vpop.f32.mrb[0].mxu0
  %v449 = vpop.f32.mrb[0].mxu0
  %v450 = vadd.f32 0.0, %v449
  %v451 = vpop.f32.mrb[0].mxu0
  %452 = vmatprep.mubr.bf16.mxu0 0
  %453 = vmatmul.mubr.bf16.gmra.mrb[0].mxu0 %v404
  %v454 = vpop.f32.mrb[0].mxu0
  %v455 = vadd.f32 0.0, %v454
  %v456 = vpop.f32.mrb[0].mxu0
  %v457 = vpop.f32.mrb[0].mxu0
  %v458 = vadd.f32 0.0, %v457
  %v459 = vpop.f32.mrb[0].mxu0
  %460 = vmatprep.mubr.bf16.mxu0 0
  %461 = vmatmul.mubr.bf16.gmra.mrb[0].mxu0 %v407
  %v462 = vpop.f32.mrb[0].mxu0
  %v463 = vadd.f32 0.0, %v462
  %v464 = vpop.f32.mrb[0].mxu0
  %v465 = vpop.f32.mrb[0].mxu0
  %v466 = vadd.f32 0.0, %v465
  %v467 = vpop.f32.mrb[0].mxu0
  %468 = vmatprep.mubr.bf16.mxu0 0
  %469 = vmatmul.mubr.bf16.gmra.mrb[0].mxu0 %v410
  %v470 = vpop.f32.mrb[0].mxu0
  %v471 = vadd.f32 0.0, %v470
  %v472 = vpop.f32.mrb[0].mxu0
  %v473 = vpop.f32.mrb[0].mxu0
  %v474 = vadd.f32 0.0, %v473
  %v475 = vpop.f32.mrb[0].mxu0
  %476 = vdwg.mxu0
  %v477 = vadd.f32 %v351, %v447
  %v478 = vadd.f32 %v352, %v450
  %v479 = vadd.f32 %v353, %v455
  %v480 = vadd.f32 %v354, %v458
  %v481 = vadd.f32 %v355, %v463
  %v482 = vadd.f32 %v356, %v466
  %v483 = vadd.f32 %v357, %v471
  %v484 = vadd.f32 %v358, %v474
  %s485 = scalar_lea.vmem %s3, 96
  %v486 = vld [vmem:[%s485] sm:$0xf]
  %v487 = vld [vmem:[%s485 + $0x4] sm:$0xf]
  %v488 = vld [vmem:[%s485 + $0x8] sm:$0xf]
  %v489 = vld [vmem:[%s485 + $0xc] sm:$0xf]
  %v490 = vld [vmem:[%s485 + $0x10] sm:$0xf]
  %v491 = vld [vmem:[%s485 + $0x14] sm:$0xf]
  %v492 = vld [vmem:[%s485 + $0x18] sm:$0xf]
  %v493 = vld [vmem:[%s485 + $0x1c] sm:$0xf]
  %v502 = vunpack.c.l.b16 %v486
  %v503 = vunpack.c.l.b16 %v487
  %v504 = vunpack.c.l.b16 %v488
  %v505 = vunpack.c.l.b16 %v489
  %v506 = vunpack.c.l.b16 %v490
  %v507 = vunpack.c.l.b16 %v491
  %v508 = vunpack.c.l.b16 %v492
  %v509 = vunpack.c.l.b16 %v493
  %v510 = vpack.c.b16 %v503, %v502
  %v511 = vpack.c.b16 %v505, %v504
  %v512 = vpack.c.b16 %v507, %v506
  %v513 = vpack.c.b16 %v509, %v508
  %514 = vrot.lane.b32.xlu0 %v103, 125
  %v515 = vpop.permute.xlu0 %514
  %516 = vrot.lane.b32.xlu0 %v104, 125
  %v517 = vpop.permute.xlu0 %516
  %518 = vrot.lane.b32.xlu0 %v105, 125
  %v519 = vpop.permute.xlu0 %518
  %520 = vrot.lane.b32.xlu0 %v106, 125
  %v521 = vpop.permute.xlu0 %520
  %v527 = vsel %vm143, %v510, 0
  %v530 = vsel %vm143, %v511, 0
  %v533 = vsel %vm143, %v512, 0
  %v536 = vsel %vm143, %v513, 0
  %538 = vmatprep.subr.bf16.mxu0 0
  %539 = vmatpush1.bf16.msra.mxu0 %v515
  %540 = vmatprep.subr.bf16.mxu0 0
  %541 = vmatpush1.bf16.msra.mxu0 %v517
  %542 = vmatprep.subr.bf16.mxu0 0
  %543 = vmatpush1.bf16.msra.mxu0 %v519
  %544 = vmatprep.subr.bf16.mxu0 0
  %545 = vmatpush1.bf16.msra.mxu0 %v521
  %546 = vmatprep.subr.bf16.mxu0 0
  %547 = vmatpush1.bf16.msra.mxu0 0
  %548 = vmatprep.subr.bf16.mxu0 0
  %549 = vmatpush1.bf16.msra.mxu0 0
  %550 = vmatprep.subr.bf16.mxu0 0
  %551 = vmatpush1.bf16.msra.mxu0 0
  %552 = vmatprep.subr.bf16.mxu0 0
  %553 = vmatpush1.bf16.msra.mxu0 0
  %554 = vmatprep.subr.bf16.mxu0 0
  %555 = vmatpush1.bf16.msra.mxu0 0
  %556 = vmatprep.subr.bf16.mxu0 0
  %557 = vmatpush1.bf16.msra.mxu0 0
  %558 = vmatprep.subr.bf16.mxu0 0
  %559 = vmatpush1.bf16.msra.mxu0 0
  %560 = vmatprep.subr.bf16.mxu0 0
  %561 = vmatpush1.bf16.msra.mxu0 0
  %562 = vmatprep.subr.bf16.mxu0 0
  %563 = vmatpush1.bf16.msra.mxu0 0
  %564 = vmatprep.subr.bf16.mxu0 0
  %565 = vmatpush1.bf16.msra.mxu0 0
  %566 = vmatprep.subr.bf16.mxu0 0
  %567 = vmatpush1.bf16.msra.mxu0 0
  %568 = vmatprep.subr.bf16.mxu0 0
  %569 = vmatpush1.bf16.msra.mxu0 0
  %570 = vmatprep.mubr.bf16.mxu0 0
  %571 = vmatmul.mubr.bf16.gmra.mrb[0].mxu0 %v527
  %v572 = vpop.f32.mrb[0].mxu0
  %v573 = vadd.f32 0.0, %v572
  %v574 = vpop.f32.mrb[0].mxu0
  %v575 = vpop.f32.mrb[0].mxu0
  %v576 = vadd.f32 0.0, %v575
  %v577 = vpop.f32.mrb[0].mxu0
  %578 = vmatprep.mubr.bf16.mxu0 0
  %579 = vmatmul.mubr.bf16.gmra.mrb[0].mxu0 %v530
  %v580 = vpop.f32.mrb[0].mxu0
  %v581 = vadd.f32 0.0, %v580
  %v582 = vpop.f32.mrb[0].mxu0
  %v583 = vpop.f32.mrb[0].mxu0
  %v584 = vadd.f32 0.0, %v583
  %v585 = vpop.f32.mrb[0].mxu0
  %586 = vmatprep.mubr.bf16.mxu0 0
  %587 = vmatmul.mubr.bf16.gmra.mrb[0].mxu0 %v533
  %v588 = vpop.f32.mrb[0].mxu0
  %v589 = vadd.f32 0.0, %v588
  %v590 = vpop.f32.mrb[0].mxu0
  %v591 = vpop.f32.mrb[0].mxu0
  %v592 = vadd.f32 0.0, %v591
  %v593 = vpop.f32.mrb[0].mxu0
  %594 = vmatprep.mubr.bf16.mxu0 0
  %595 = vmatmul.mubr.bf16.gmra.mrb[0].mxu0 %v536
  %v596 = vpop.f32.mrb[0].mxu0
  %v597 = vadd.f32 0.0, %v596
  %v598 = vpop.f32.mrb[0].mxu0
  %v599 = vpop.f32.mrb[0].mxu0
  %v600 = vadd.f32 0.0, %v599
  %v601 = vpop.f32.mrb[0].mxu0
  %602 = vdwg.mxu0
  %v603 = vadd.f32 %v477, %v573
  %v604 = vadd.f32 %v478, %v576
  %v605 = vadd.f32 %v479, %v581
  %v606 = vadd.f32 %v480, %v584
  %v607 = vadd.f32 %v481, %v589
  %v608 = vadd.f32 %v482, %v592
  %v609 = vadd.f32 %v483, %v597
  %v610 = vadd.f32 %v484, %v600
  %s611 = scalar_lea.vmem %s3, 128
  %v612 = vld [vmem:[%s611] sm:$0xf]
  %v613 = vld [vmem:[%s611 + $0x4] sm:$0xf]
  %v614 = vld [vmem:[%s611 + $0x8] sm:$0xf]
  %v615 = vld [vmem:[%s611 + $0xc] sm:$0xf]
  %v616 = vld [vmem:[%s611 + $0x10] sm:$0xf]
  %v617 = vld [vmem:[%s611 + $0x14] sm:$0xf]
  %v618 = vld [vmem:[%s611 + $0x18] sm:$0xf]
  %v619 = vld [vmem:[%s611 + $0x1c] sm:$0xf]
  %v628 = vunpack.c.l.b16 %v612
  %v629 = vunpack.c.l.b16 %v613
  %v630 = vunpack.c.l.b16 %v614
  %v631 = vunpack.c.l.b16 %v615
  %v632 = vunpack.c.l.b16 %v616
  %v633 = vunpack.c.l.b16 %v617
  %v634 = vunpack.c.l.b16 %v618
  %v635 = vunpack.c.l.b16 %v619
  %v636 = vpack.c.b16 %v629, %v628
  %v637 = vpack.c.b16 %v631, %v630
  %v638 = vpack.c.b16 %v633, %v632
  %v639 = vpack.c.b16 %v635, %v634
  %640 = vrot.lane.b32.xlu0 %v103, 124
  %v641 = vpop.permute.xlu0 %640
  %642 = vrot.lane.b32.xlu0 %v104, 124
  %v643 = vpop.permute.xlu0 %642
  %644 = vrot.lane.b32.xlu0 %v105, 124
  %v645 = vpop.permute.xlu0 %644
  %646 = vrot.lane.b32.xlu0 %v106, 124
  %v647 = vpop.permute.xlu0 %646
  %v653 = vsel %vm143, %v636, 0
  %v656 = vsel %vm143, %v637, 0
  %v659 = vsel %vm143, %v638, 0
  %v662 = vsel %vm143, %v639, 0
  %664 = vmatprep.subr.bf16.mxu0 0
  %665 = vmatpush1.bf16.msra.mxu0 %v641
  %666 = vmatprep.subr.bf16.mxu0 0
  %667 = vmatpush1.bf16.msra.mxu0 %v643
  %668 = vmatprep.subr.bf16.mxu0 0
  %669 = vmatpush1.bf16.msra.mxu0 %v645
  %670 = vmatprep.subr.bf16.mxu0 0
  %671 = vmatpush1.bf16.msra.mxu0 %v647
  %672 = vmatprep.subr.bf16.mxu0 0
  %673 = vmatpush1.bf16.msra.mxu0 0
  %674 = vmatprep.subr.bf16.mxu0 0
  %675 = vmatpush1.bf16.msra.mxu0 0
  %676 = vmatprep.subr.bf16.mxu0 0
  %677 = vmatpush1.bf16.msra.mxu0 0
  %678 = vmatprep.subr.bf16.mxu0 0
  %679 = vmatpush1.bf16.msra.mxu0 0
  %680 = vmatprep.subr.bf16.mxu0 0
  %681 = vmatpush1.bf16.msra.mxu0 0
  %682 = vmatprep.subr.bf16.mxu0 0
  %683 = vmatpush1.bf16.msra.mxu0 0
  %684 = vmatprep.subr.bf16.mxu0 0
  %685 = vmatpush1.bf16.msra.mxu0 0
  %686 = vmatprep.subr.bf16.mxu0 0
  %687 = vmatpush1.bf16.msra.mxu0 0
  %688 = vmatprep.subr.bf16.mxu0 0
  %689 = vmatpush1.bf16.msra.mxu0 0
  %690 = vmatprep.subr.bf16.mxu0 0
  %691 = vmatpush1.bf16.msra.mxu0 0
  %692 = vmatprep.subr.bf16.mxu0 0
  %693 = vmatpush1.bf16.msra.mxu0 0
  %694 = vmatprep.subr.bf16.mxu0 0
  %695 = vmatpush1.bf16.msra.mxu0 0
  %696 = vmatprep.mubr.bf16.mxu0 0
  %697 = vmatmul.mubr.bf16.gmra.mrb[0].mxu0 %v653
  %v698 = vpop.f32.mrb[0].mxu0
  %v699 = vadd.f32 0.0, %v698
  %v700 = vpop.f32.mrb[0].mxu0
  %v701 = vpop.f32.mrb[0].mxu0
  %v702 = vadd.f32 0.0, %v701
  %v703 = vpop.f32.mrb[0].mxu0
  %704 = vmatprep.mubr.bf16.mxu0 0
  %705 = vmatmul.mubr.bf16.gmra.mrb[0].mxu0 %v656
  %v706 = vpop.f32.mrb[0].mxu0
  %v707 = vadd.f32 0.0, %v706
  %v708 = vpop.f32.mrb[0].mxu0
  %v709 = vpop.f32.mrb[0].mxu0
  %v710 = vadd.f32 0.0, %v709
  %v711 = vpop.f32.mrb[0].mxu0
  %712 = vmatprep.mubr.bf16.mxu0 0
  %713 = vmatmul.mubr.bf16.gmra.mrb[0].mxu0 %v659
  %v714 = vpop.f32.mrb[0].mxu0
  %v715 = vadd.f32 0.0, %v714
  %v716 = vpop.f32.mrb[0].mxu0
  %v717 = vpop.f32.mrb[0].mxu0
  %v718 = vadd.f32 0.0, %v717
  %v719 = vpop.f32.mrb[0].mxu0
  %720 = vmatprep.mubr.bf16.mxu0 0
  %721 = vmatmul.mubr.bf16.gmra.mrb[0].mxu0 %v662
  %v722 = vpop.f32.mrb[0].mxu0
  %v723 = vadd.f32 0.0, %v722
  %v724 = vpop.f32.mrb[0].mxu0
  %v725 = vpop.f32.mrb[0].mxu0
  %v726 = vadd.f32 0.0, %v725
  %v727 = vpop.f32.mrb[0].mxu0
  %728 = vdwg.mxu0
  %v729 = vadd.f32 %v603, %v699
  %v730 = vadd.f32 %v604, %v702
  %v731 = vadd.f32 %v605, %v707
  %v732 = vadd.f32 %v606, %v710
  %v733 = vadd.f32 %v607, %v715
  %v734 = vadd.f32 %v608, %v718
  %v735 = vadd.f32 %v609, %v723
  %v736 = vadd.f32 %v610, %v726
  %s737 = scalar_lea.vmem %s3, 160
  %v738 = vld [vmem:[%s737] sm:$0xf]
  %v739 = vld [vmem:[%s737 + $0x4] sm:$0xf]
  %v740 = vld [vmem:[%s737 + $0x8] sm:$0xf]
  %v741 = vld [vmem:[%s737 + $0xc] sm:$0xf]
  %v742 = vld [vmem:[%s737 + $0x10] sm:$0xf]
  %v743 = vld [vmem:[%s737 + $0x14] sm:$0xf]
  %v744 = vld [vmem:[%s737 + $0x18] sm:$0xf]
  %v745 = vld [vmem:[%s737 + $0x1c] sm:$0xf]
  %v754 = vunpack.c.l.b16 %v738
  %v755 = vunpack.c.l.b16 %v739
  %v756 = vunpack.c.l.b16 %v740
  %v757 = vunpack.c.l.b16 %v741
  %v758 = vunpack.c.l.b16 %v742
  %v759 = vunpack.c.l.b16 %v743
  %v760 = vunpack.c.l.b16 %v744
  %v761 = vunpack.c.l.b16 %v745
  %v762 = vpack.c.b16 %v755, %v754
  %v763 = vpack.c.b16 %v757, %v756
  %v764 = vpack.c.b16 %v759, %v758
  %v765 = vpack.c.b16 %v761, %v760
  %766 = vrot.lane.b32.xlu0 %v103, 123
  %v767 = vpop.permute.xlu0 %766
  %768 = vrot.lane.b32.xlu0 %v104, 123
  %v769 = vpop.permute.xlu0 %768
  %770 = vrot.lane.b32.xlu0 %v105, 123
  %v771 = vpop.permute.xlu0 %770
  %772 = vrot.lane.b32.xlu0 %v106, 123
  %v773 = vpop.permute.xlu0 %772
  %v779 = vsel %vm143, %v762, 0
  %v782 = vsel %vm143, %v763, 0
  %v785 = vsel %vm143, %v764, 0
  %v788 = vsel %vm143, %v765, 0
  %790 = vmatprep.subr.bf16.mxu0 0
  %791 = vmatpush1.bf16.msra.mxu0 %v767
  %792 = vmatprep.subr.bf16.mxu0 0
  %793 = vmatpush1.bf16.msra.mxu0 %v769
  %794 = vmatprep.subr.bf16.mxu0 0
  %795 = vmatpush1.bf16.msra.mxu0 %v771
  %796 = vmatprep.subr.bf16.mxu0 0
  %797 = vmatpush1.bf16.msra.mxu0 %v773
  %798 = vmatprep.subr.bf16.mxu0 0
  %799 = vmatpush1.bf16.msra.mxu0 0
  %800 = vmatprep.subr.bf16.mxu0 0
  %801 = vmatpush1.bf16.msra.mxu0 0
  %802 = vmatprep.subr.bf16.mxu0 0
  %803 = vmatpush1.bf16.msra.mxu0 0
  %804 = vmatprep.subr.bf16.mxu0 0
  %805 = vmatpush1.bf16.msra.mxu0 0
  %806 = vmatprep.subr.bf16.mxu0 0
  %807 = vmatpush1.bf16.msra.mxu0 0
  %808 = vmatprep.subr.bf16.mxu0 0
  %809 = vmatpush1.bf16.msra.mxu0 0
  %810 = vmatprep.subr.bf16.mxu0 0
  %811 = vmatpush1.bf16.msra.mxu0 0
  %812 = vmatprep.subr.bf16.mxu0 0
  %813 = vmatpush1.bf16.msra.mxu0 0
  %814 = vmatprep.subr.bf16.mxu0 0
  %815 = vmatpush1.bf16.msra.mxu0 0
  %816 = vmatprep.subr.bf16.mxu0 0
  %817 = vmatpush1.bf16.msra.mxu0 0
  %818 = vmatprep.subr.bf16.mxu0 0
  %819 = vmatpush1.bf16.msra.mxu0 0
  %820 = vmatprep.subr.bf16.mxu0 0
  %821 = vmatpush1.bf16.msra.mxu0 0
  %822 = vmatprep.mubr.bf16.mxu0 0
  %823 = vmatmul.mubr.bf16.gmra.mrb[0].mxu0 %v779
  %v824 = vpop.f32.mrb[0].mxu0
  %v825 = vadd.f32 0.0, %v824
  %v826 = vpop.f32.mrb[0].mxu0
  %v827 = vpop.f32.mrb[0].mxu0
  %v828 = vadd.f32 0.0, %v827
  %v829 = vpop.f32.mrb[0].mxu0
  %830 = vmatprep.mubr.bf16.mxu0 0
  %831 = vmatmul.mubr.bf16.gmra.mrb[0].mxu0 %v782
  %v832 = vpop.f32.mrb[0].mxu0
  %v833 = vadd.f32 0.0, %v832
  %v834 = vpop.f32.mrb[0].mxu0
  %v835 = vpop.f32.mrb[0].mxu0
  %v836 = vadd.f32 0.0, %v835
  %v837 = vpop.f32.mrb[0].mxu0
  %838 = vmatprep.mubr.bf16.mxu0 0
  %839 = vmatmul.mubr.bf16.gmra.mrb[0].mxu0 %v785
  %v840 = vpop.f32.mrb[0].mxu0
  %v841 = vadd.f32 0.0, %v840
  %v842 = vpop.f32.mrb[0].mxu0
  %v843 = vpop.f32.mrb[0].mxu0
  %v844 = vadd.f32 0.0, %v843
  %v845 = vpop.f32.mrb[0].mxu0
  %846 = vmatprep.mubr.bf16.mxu0 0
  %847 = vmatmul.mubr.bf16.gmra.mrb[0].mxu0 %v788
  %v848 = vpop.f32.mrb[0].mxu0
  %v849 = vadd.f32 0.0, %v848
  %v850 = vpop.f32.mrb[0].mxu0
  %v851 = vpop.f32.mrb[0].mxu0
  %v852 = vadd.f32 0.0, %v851
  %v853 = vpop.f32.mrb[0].mxu0
  %854 = vdwg.mxu0
  %v855 = vadd.f32 %v729, %v825
  %v856 = vadd.f32 %v730, %v828
  %v857 = vadd.f32 %v731, %v833
  %v858 = vadd.f32 %v732, %v836
  %v859 = vadd.f32 %v733, %v841
  %v860 = vadd.f32 %v734, %v844
  %v861 = vadd.f32 %v735, %v849
  %v862 = vadd.f32 %v736, %v852
  %s863 = scalar_lea.vmem %s3, 192
  %v864 = vld [vmem:[%s863] sm:$0xf]
  %v865 = vld [vmem:[%s863 + $0x4] sm:$0xf]
  %v866 = vld [vmem:[%s863 + $0x8] sm:$0xf]
  %v867 = vld [vmem:[%s863 + $0xc] sm:$0xf]
  %v868 = vld [vmem:[%s863 + $0x10] sm:$0xf]
  %v869 = vld [vmem:[%s863 + $0x14] sm:$0xf]
  %v870 = vld [vmem:[%s863 + $0x18] sm:$0xf]
  %v871 = vld [vmem:[%s863 + $0x1c] sm:$0xf]
  %v880 = vunpack.c.l.b16 %v864
  %v881 = vunpack.c.l.b16 %v865
  %v882 = vunpack.c.l.b16 %v866
  %v883 = vunpack.c.l.b16 %v867
  %v884 = vunpack.c.l.b16 %v868
  %v885 = vunpack.c.l.b16 %v869
  %v886 = vunpack.c.l.b16 %v870
  %v887 = vunpack.c.l.b16 %v871
  %v888 = vpack.c.b16 %v881, %v880
  %v889 = vpack.c.b16 %v883, %v882
  %v890 = vpack.c.b16 %v885, %v884
  %v891 = vpack.c.b16 %v887, %v886
  %892 = vrot.lane.b32.xlu0 %v103, 122
  %v893 = vpop.permute.xlu0 %892
  %894 = vrot.lane.b32.xlu0 %v104, 122
  %v895 = vpop.permute.xlu0 %894
  %896 = vrot.lane.b32.xlu0 %v105, 122
  %v897 = vpop.permute.xlu0 %896
  %898 = vrot.lane.b32.xlu0 %v106, 122
  %v899 = vpop.permute.xlu0 %898
  %v905 = vsel %vm143, %v888, 0
  %v908 = vsel %vm143, %v889, 0
  %v911 = vsel %vm143, %v890, 0
  %v914 = vsel %vm143, %v891, 0
  %916 = vmatprep.subr.bf16.mxu0 0
  %917 = vmatpush1.bf16.msra.mxu0 %v893
  %918 = vmatprep.subr.bf16.mxu0 0
  %919 = vmatpush1.bf16.msra.mxu0 %v895
  %920 = vmatprep.subr.bf16.mxu0 0
  %921 = vmatpush1.bf16.msra.mxu0 %v897
  %922 = vmatprep.subr.bf16.mxu0 0
  %923 = vmatpush1.bf16.msra.mxu0 %v899
  %924 = vmatprep.subr.bf16.mxu0 0
  %925 = vmatpush1.bf16.msra.mxu0 0
  %926 = vmatprep.subr.bf16.mxu0 0
  %927 = vmatpush1.bf16.msra.mxu0 0
  %928 = vmatprep.subr.bf16.mxu0 0
  %929 = vmatpush1.bf16.msra.mxu0 0
  %930 = vmatprep.subr.bf16.mxu0 0
  %931 = vmatpush1.bf16.msra.mxu0 0
  %932 = vmatprep.subr.bf16.mxu0 0
  %933 = vmatpush1.bf16.msra.mxu0 0
  %934 = vmatprep.subr.bf16.mxu0 0
  %935 = vmatpush1.bf16.msra.mxu0 0
  %936 = vmatprep.subr.bf16.mxu0 0
  %937 = vmatpush1.bf16.msra.mxu0 0
  %938 = vmatprep.subr.bf16.mxu0 0
  %939 = vmatpush1.bf16.msra.mxu0 0
  %940 = vmatprep.subr.bf16.mxu0 0
  %941 = vmatpush1.bf16.msra.mxu0 0
  %942 = vmatprep.subr.bf16.mxu0 0
  %943 = vmatpush1.bf16.msra.mxu0 0
  %944 = vmatprep.subr.bf16.mxu0 0
  %945 = vmatpush1.bf16.msra.mxu0 0
  %946 = vmatprep.subr.bf16.mxu0 0
  %947 = vmatpush1.bf16.msra.mxu0 0
  %948 = vmatprep.mubr.bf16.mxu0 0
  %949 = vmatmul.mubr.bf16.gmra.mrb[0].mxu0 %v905
  %v950 = vpop.f32.mrb[0].mxu0
  %v951 = vadd.f32 0.0, %v950
  %v952 = vpop.f32.mrb[0].mxu0
  %v953 = vpop.f32.mrb[0].mxu0
  %v954 = vadd.f32 0.0, %v953
  %v955 = vpop.f32.mrb[0].mxu0
  %956 = vmatprep.mubr.bf16.mxu0 0
  %957 = vmatmul.mubr.bf16.gmra.mrb[0].mxu0 %v908
  %v958 = vpop.f32.mrb[0].mxu0
  %v959 = vadd.f32 0.0, %v958
  %v960 = vpop.f32.mrb[0].mxu0
  %v961 = vpop.f32.mrb[0].mxu0
  %v962 = vadd.f32 0.0, %v961
  %v963 = vpop.f32.mrb[0].mxu0
  %964 = vmatprep.mubr.bf16.mxu0 0
  %965 = vmatmul.mubr.bf16.gmra.mrb[0].mxu0 %v911
  %v966 = vpop.f32.mrb[0].mxu0
  %v967 = vadd.f32 0.0, %v966
  %v968 = vpop.f32.mrb[0].mxu0
  %v969 = vpop.f32.mrb[0].mxu0
  %v970 = vadd.f32 0.0, %v969
  %v971 = vpop.f32.mrb[0].mxu0
  %972 = vmatprep.mubr.bf16.mxu0 0
  %973 = vmatmul.mubr.bf16.gmra.mrb[0].mxu0 %v914
  %v974 = vpop.f32.mrb[0].mxu0
  %v975 = vadd.f32 0.0, %v974
  %v976 = vpop.f32.mrb[0].mxu0
  %v977 = vpop.f32.mrb[0].mxu0
  %v978 = vadd.f32 0.0, %v977
  %v979 = vpop.f32.mrb[0].mxu0
  %980 = vdwg.mxu0
  %v981 = vadd.f32 %v855, %v951
  %v982 = vadd.f32 %v856, %v954
  %v983 = vadd.f32 %v857, %v959
  %v984 = vadd.f32 %v858, %v962
  %v985 = vadd.f32 %v859, %v967
  %v986 = vadd.f32 %v860, %v970
  %v987 = vadd.f32 %v861, %v975
  %v988 = vadd.f32 %v862, %v978
  %s989 = scalar_lea.vmem %s3, 224
  %v990 = vld [vmem:[%s989] sm:$0xf]
  %v991 = vld [vmem:[%s989 + $0x4] sm:$0xf]
  %v992 = vld [vmem:[%s989 + $0x8] sm:$0xf]
  %v993 = vld [vmem:[%s989 + $0xc] sm:$0xf]
  %v994 = vld [vmem:[%s989 + $0x10] sm:$0xf]
  %v995 = vld [vmem:[%s989 + $0x14] sm:$0xf]
  %v996 = vld [vmem:[%s989 + $0x18] sm:$0xf]
  %v997 = vld [vmem:[%s989 + $0x1c] sm:$0xf]
  %v1006 = vunpack.c.l.b16 %v990
  %v1007 = vunpack.c.l.b16 %v991
  %v1008 = vunpack.c.l.b16 %v992
  %v1009 = vunpack.c.l.b16 %v993
  %v1010 = vunpack.c.l.b16 %v994
  %v1011 = vunpack.c.l.b16 %v995
  %v1012 = vunpack.c.l.b16 %v996
  %v1013 = vunpack.c.l.b16 %v997
  %v1014 = vpack.c.b16 %v1007, %v1006
  %v1015 = vpack.c.b16 %v1009, %v1008
  %v1016 = vpack.c.b16 %v1011, %v1010
  %v1017 = vpack.c.b16 %v1013, %v1012
  %1018 = vrot.lane.b32.xlu0 %v103, 121
  %v1019 = vpop.permute.xlu0 %1018
  %1020 = vrot.lane.b32.xlu0 %v104, 121
  %v1021 = vpop.permute.xlu0 %1020
  %1022 = vrot.lane.b32.xlu0 %v105, 121
  %v1023 = vpop.permute.xlu0 %1022
  %1024 = vrot.lane.b32.xlu0 %v106, 121
  %v1025 = vpop.permute.xlu0 %1024
  %v1031 = vsel %vm143, %v1014, 0
  %v1034 = vsel %vm143, %v1015, 0
  %v1037 = vsel %vm143, %v1016, 0
  %v1040 = vsel %vm143, %v1017, 0
  %1042 = vmatprep.subr.bf16.mxu0 0
  %1043 = vmatpush1.bf16.msra.mxu0 %v1019
  %1044 = vmatprep.subr.bf16.mxu0 0
  %1045 = vmatpush1.bf16.msra.mxu0 %v1021
  %1046 = vmatprep.subr.bf16.mxu0 0
  %1047 = vmatpush1.bf16.msra.mxu0 %v1023
  %1048 = vmatprep.subr.bf16.mxu0 0
  %1049 = vmatpush1.bf16.msra.mxu0 %v1025
  %1050 = vmatprep.subr.bf16.mxu0 0
  %1051 = vmatpush1.bf16.msra.mxu0 0
  %1052 = vmatprep.subr.bf16.mxu0 0
  %1053 = vmatpush1.bf16.msra.mxu0 0
  %1054 = vmatprep.subr.bf16.mxu0 0
  %1055 = vmatpush1.bf16.msra.mxu0 0
  %1056 = vmatprep.subr.bf16.mxu0 0
  %1057 = vmatpush1.bf16.msra.mxu0 0
  %1058 = vmatprep.subr.bf16.mxu0 0
  %1059 = vmatpush1.bf16.msra.mxu0 0
  %1060 = vmatprep.subr.bf16.mxu0 0
  %1061 = vmatpush1.bf16.msra.mxu0 0
  %1062 = vmatprep.subr.bf16.mxu0 0
  %1063 = vmatpush1.bf16.msra.mxu0 0
  %1064 = vmatprep.subr.bf16.mxu0 0
  %1065 = vmatpush1.bf16.msra.mxu0 0
  %1066 = vmatprep.subr.bf16.mxu0 0
  %1067 = vmatpush1.bf16.msra.mxu0 0
  %1068 = vmatprep.subr.bf16.mxu0 0
  %1069 = vmatpush1.bf16.msra.mxu0 0
  %1070 = vmatprep.subr.bf16.mxu0 0
  %1071 = vmatpush1.bf16.msra.mxu0 0
  %1072 = vmatprep.subr.bf16.mxu0 0
  %1073 = vmatpush1.bf16.msra.mxu0 0
  %1074 = vmatprep.mubr.bf16.mxu0 0
  %1075 = vmatmul.mubr.bf16.gmra.mrb[0].mxu0 %v1031
  %v1076 = vpop.f32.mrb[0].mxu0
  %v1077 = vadd.f32 0.0, %v1076
  %v1078 = vpop.f32.mrb[0].mxu0
  %v1079 = vpop.f32.mrb[0].mxu0
  %v1080 = vadd.f32 0.0, %v1079
  %v1081 = vpop.f32.mrb[0].mxu0
  %1082 = vmatprep.mubr.bf16.mxu0 0
  %1083 = vmatmul.mubr.bf16.gmra.mrb[0].mxu0 %v1034
  %v1084 = vpop.f32.mrb[0].mxu0
  %v1085 = vadd.f32 0.0, %v1084
  %v1086 = vpop.f32.mrb[0].mxu0
  %v1087 = vpop.f32.mrb[0].mxu0
  %v1088 = vadd.f32 0.0, %v1087
  %v1089 = vpop.f32.mrb[0].mxu0
  %1090 = vmatprep.mubr.bf16.mxu0 0
  %1091 = vmatmul.mubr.bf16.gmra.mrb[0].mxu0 %v1037
  %v1092 = vpop.f32.mrb[0].mxu0
  %v1093 = vadd.f32 0.0, %v1092
  %v1094 = vpop.f32.mrb[0].mxu0
  %v1095 = vpop.f32.mrb[0].mxu0
  %v1096 = vadd.f32 0.0, %v1095
  %v1097 = vpop.f32.mrb[0].mxu0
  %1098 = vmatprep.mubr.bf16.mxu0 0
  %1099 = vmatmul.mubr.bf16.gmra.mrb[0].mxu0 %v1040
  %v1100 = vpop.f32.mrb[0].mxu0
  %v1101 = vadd.f32 0.0, %v1100
  %v1102 = vpop.f32.mrb[0].mxu0
  %v1103 = vpop.f32.mrb[0].mxu0
  %v1104 = vadd.f32 0.0, %v1103
  %v1105 = vpop.f32.mrb[0].mxu0
  %1106 = vdwg.mxu0
  %v1107 = vadd.f32 %v981, %v1077
  %v1108 = vadd.f32 %v982, %v1080
  %v1109 = vadd.f32 %v983, %v1085
  %v1110 = vadd.f32 %v984, %v1088
  %v1111 = vadd.f32 %v985, %v1093
  %v1112 = vadd.f32 %v986, %v1096
  %v1113 = vadd.f32 %v987, %v1101
  %v1114 = vadd.f32 %v988, %v1104
  %v1115 = vld [vmem:[%s5] sm:$0xf]
  %v1116 = vld [vmem:[%s5 + $0x4] sm:$0xf]
  %v1117 = vld [vmem:[%s5 + $0x8] sm:$0xf]
  %v1118 = vld [vmem:[%s5 + $0xc] sm:$0xf]
  %v1119 = vld [vmem:[%s5 + $0x10] sm:$0xf]
  %v1120 = vld [vmem:[%s5 + $0x14] sm:$0xf]
  %v1121 = vld [vmem:[%s5 + $0x18] sm:$0xf]
  %v1122 = vld [vmem:[%s5 + $0x1c] sm:$0xf]
  %v1123 = vmax.f32 %v1107, 0.0
  %v1124 = vmax.f32 %v1108, 0.0
  %v1125 = vmax.f32 %v1109, 0.0
  %v1126 = vmax.f32 %v1110, 0.0
  %v1127 = vmax.f32 %v1111, 0.0
  %v1128 = vmax.f32 %v1112, 0.0
  %v1129 = vmax.f32 %v1113, 0.0
  %v1130 = vmax.f32 %v1114, 0.0
  %v1131 = vpack.c.bf16 %v1124, %v1123
  %v1132 = vpack.c.bf16 %v1126, %v1125
  %v1133 = vpack.c.bf16 %v1128, %v1127
  %v1134 = vpack.c.bf16 %v1130, %v1129
  %v1135 = vld [vmem:[%s6] sm:$0xff]
  %v1136 = vld [vmem:[%s6 + $0x8] sm:$0xff]
  %v1137 = vld [vmem:[%s6 + $0x10] sm:$0xff]
  %v1138 = vld [vmem:[%s6 + $0x18] sm:$0xff]
  %v1139 = vld [vmem:[%s6 + $0x20] sm:$0xff]
  %v1140 = vld [vmem:[%s6 + $0x28] sm:$0xff]
  %v1141 = vld [vmem:[%s6 + $0x30] sm:$0xff]
  %v1142 = vld [vmem:[%s6 + $0x38] sm:$0xff]
  %v1151 = vunpack.c.l.b16 %v1115
  %v1152 = vunpack.c.l.b16 %v1116
  %v1153 = vunpack.c.l.b16 %v1117
  %v1154 = vunpack.c.l.b16 %v1118
  %v1155 = vunpack.c.l.b16 %v1119
  %v1156 = vunpack.c.l.b16 %v1120
  %v1157 = vunpack.c.l.b16 %v1121
  %v1158 = vunpack.c.l.b16 %v1122
  %v1159 = vpack.c.b16 %v1152, %v1151
  %v1160 = vpack.c.b16 %v1154, %v1153
  %v1161 = vpack.c.b16 %v1156, %v1155
  %v1162 = vpack.c.b16 %v1158, %v1157
  %v1164 = vsel %vm143, %v1159, 0
  %v1167 = vsel %vm143, %v1160, 0
  %v1170 = vsel %vm143, %v1161, 0
  %v1173 = vsel %vm143, %v1162, 0
  %1175 = vmatprep.subr.bf16.mxu0 0
  %1176 = vmatpush1.bf16.msra.mxu0 %v1131
  %1177 = vmatprep.subr.bf16.mxu0 0
  %1178 = vmatpush1.bf16.msra.mxu0 %v1132
  %1179 = vmatprep.subr.bf16.mxu0 0
  %1180 = vmatpush1.bf16.msra.mxu0 %v1133
  %1181 = vmatprep.subr.bf16.mxu0 0
  %1182 = vmatpush1.bf16.msra.mxu0 %v1134
  %1183 = vmatprep.subr.bf16.mxu0 0
  %1184 = vmatpush1.bf16.msra.mxu0 0
  %1185 = vmatprep.subr.bf16.mxu0 0
  %1186 = vmatpush1.bf16.msra.mxu0 0
  %1187 = vmatprep.subr.bf16.mxu0 0
  %1188 = vmatpush1.bf16.msra.mxu0 0
  %1189 = vmatprep.subr.bf16.mxu0 0
  %1190 = vmatpush1.bf16.msra.mxu0 0
  %1191 = vmatprep.subr.bf16.mxu0 0
  %1192 = vmatpush1.bf16.msra.mxu0 0
  %1193 = vmatprep.subr.bf16.mxu0 0
  %1194 = vmatpush1.bf16.msra.mxu0 0
  %1195 = vmatprep.subr.bf16.mxu0 0
  %1196 = vmatpush1.bf16.msra.mxu0 0
  %1197 = vmatprep.subr.bf16.mxu0 0
  %1198 = vmatpush1.bf16.msra.mxu0 0
  %1199 = vmatprep.subr.bf16.mxu0 0
  %1200 = vmatpush1.bf16.msra.mxu0 0
  %1201 = vmatprep.subr.bf16.mxu0 0
  %1202 = vmatpush1.bf16.msra.mxu0 0
  %1203 = vmatprep.subr.bf16.mxu0 0
  %1204 = vmatpush1.bf16.msra.mxu0 0
  %1205 = vmatprep.subr.bf16.mxu0 0
  %1206 = vmatpush1.bf16.msra.mxu0 0
  %1207 = vmatprep.mubr.bf16.mxu0 0
  %1208 = vmatmul.mubr.bf16.gmra.mrb[0].mxu0 %v1164
  %v1209 = vpop.f32.mrb[0].mxu0
  %v1210 = vadd.f32 %v1135, %v1209
  %v1211 = vpop.f32.mrb[0].mxu0
  %v1212 = vpop.f32.mrb[0].mxu0
  %v1213 = vadd.f32 %v1136, %v1212
  %v1214 = vpop.f32.mrb[0].mxu0
  %1215 = vmatprep.mubr.bf16.mxu0 0
  %1216 = vmatmul.mubr.bf16.gmra.mrb[0].mxu0 %v1167
  %v1217 = vpop.f32.mrb[0].mxu0
  %v1218 = vadd.f32 %v1137, %v1217
  %v1219 = vpop.f32.mrb[0].mxu0
  %v1220 = vpop.f32.mrb[0].mxu0
  %v1221 = vadd.f32 %v1138, %v1220
  %v1222 = vpop.f32.mrb[0].mxu0
  %1223 = vmatprep.mubr.bf16.mxu0 0
  %1224 = vmatmul.mubr.bf16.gmra.mrb[0].mxu0 %v1170
  %v1225 = vpop.f32.mrb[0].mxu0
  %v1226 = vadd.f32 %v1139, %v1225
  %v1227 = vpop.f32.mrb[0].mxu0
  %v1228 = vpop.f32.mrb[0].mxu0
  %v1229 = vadd.f32 %v1140, %v1228
  %v1230 = vpop.f32.mrb[0].mxu0
  %1231 = vmatprep.mubr.bf16.mxu0 0
  %1232 = vmatmul.mubr.bf16.gmra.mrb[0].mxu0 %v1173
  %v1233 = vpop.f32.mrb[0].mxu0
  %v1234 = vadd.f32 %v1141, %v1233
  %v1235 = vpop.f32.mrb[0].mxu0
  %v1236 = vpop.f32.mrb[0].mxu0
  %v1237 = vadd.f32 %v1142, %v1236
  %v1238 = vpop.f32.mrb[0].mxu0
  %1239 = vdwg.mxu0
  %v1240 = vmax.f32 %v1210, 0.0
  %v1241 = vmax.f32 %v1213, 0.0
  %v1242 = vmax.f32 %v1218, 0.0
  %v1243 = vmax.f32 %v1221, 0.0
  %v1244 = vmax.f32 %v1226, 0.0
  %v1245 = vmax.f32 %v1229, 0.0
  %v1246 = vmax.f32 %v1234, 0.0
  %v1247 = vmax.f32 %v1237, 0.0
  %1249 = vset.pattern.permute.xlu0 0
  %1250 = vperm.xlu0 %1249, %v1240
  %v1251 = vpop.permute.xlu0 %1250
  %1254 = vset.pattern.permute.xlu0 0
  %1255 = vperm.xlu0 %1254, %v1241
  %v1256 = vpop.permute.xlu0 %1255
  %1259 = vset.pattern.permute.xlu0 0
  %1260 = vperm.xlu0 %1259, %v1242
  %v1261 = vpop.permute.xlu0 %1260
  %1264 = vset.pattern.permute.xlu0 0
  %1265 = vperm.xlu0 %1264, %v1243
  %v1266 = vpop.permute.xlu0 %1265
  %1269 = vset.pattern.permute.xlu0 0
  %1270 = vperm.xlu0 %1269, %v1244
  %v1271 = vpop.permute.xlu0 %1270
  %1274 = vset.pattern.permute.xlu0 0
  %1275 = vperm.xlu0 %1274, %v1245
  %v1276 = vpop.permute.xlu0 %1275
  %1279 = vset.pattern.permute.xlu0 0
  %1280 = vperm.xlu0 %1279, %v1246
  %v1281 = vpop.permute.xlu0 %1280
  %1284 = vset.pattern.permute.xlu0 0
  %1285 = vperm.xlu0 %1284, %v1247
  %v1286 = vpop.permute.xlu0 %1285
  %v1288 = vpack.c.bf16 %v1256, %v1251
  %v1289 = vpack.c.bf16 %v1266, %v1261
  %v1290 = vpack.c.bf16 %v1276, %v1271
  %v1291 = vpack.c.bf16 %v1286, %v1281
  %v1292 = vmax.f32 %v71, 0.0
  %v1293 = vmax.f32 %v72, 0.0
  %v1294 = vmax.f32 %v73, 0.0
  %v1295 = vmax.f32 %v74, 0.0
  %v1296 = vmax.f32 %v75, 0.0
  %v1297 = vmax.f32 %v76, 0.0
  %v1298 = vmax.f32 %v77, 0.0
  %v1299 = vmax.f32 %v78, 0.0
  %v1300 = vpack.c.bf16 %v1293, %v1292
  %v1301 = vpack.c.bf16 %v1295, %v1294
  %v1302 = vpack.c.bf16 %v1297, %v1296
  %v1303 = vpack.c.bf16 %v1299, %v1298
  %v1304 = vld [vmem:[%s7] sm:$0xf]
  %v1305 = vld [vmem:[%s7 + $0x4] sm:$0xf]
  %v1306 = vld [vmem:[%s7 + $0x8] sm:$0xf]
  %v1307 = vld [vmem:[%s7 + $0xc] sm:$0xf]
  %v1308 = vld [vmem:[%s8] sm:$0xf]
  %v1309 = vld [vmem:[%s8 + $0x4] sm:$0xf]
  %v1310 = vld [vmem:[%s8 + $0x8] sm:$0xf]
  %v1311 = vld [vmem:[%s8 + $0xc] sm:$0xf]
  %v1316 = vunpack.c.l.b16 %v1308
  %v1317 = vunpack.c.l.b16 %v1309
  %v1318 = vunpack.c.l.b16 %v1310
  %v1319 = vunpack.c.l.b16 %v1311
  %v1320 = vpack.c.b16 %v1317, %v1316
  %v1321 = vpack.c.b16 %v1319, %v1318
  %v1323 = vsel %vm143, %v1320, 0
  %v1326 = vsel %vm143, %v1321, 0
  %1328 = vmatprep.subr.bf16.mxu0 0
  %1329 = vmatpush1.bf16.msra.mxu0 %v1300
  %1330 = vmatprep.subr.bf16.mxu0 0
  %1331 = vmatpush1.bf16.msra.mxu0 %v1301
  %1332 = vmatprep.subr.bf16.mxu0 0
  %1333 = vmatpush1.bf16.msra.mxu0 %v1302
  %1334 = vmatprep.subr.bf16.mxu0 0
  %1335 = vmatpush1.bf16.msra.mxu0 %v1303
  %1336 = vmatprep.subr.bf16.mxu0 0
  %1337 = vmatpush1.bf16.msra.mxu0 0
  %1338 = vmatprep.subr.bf16.mxu0 0
  %1339 = vmatpush1.bf16.msra.mxu0 0
  %1340 = vmatprep.subr.bf16.mxu0 0
  %1341 = vmatpush1.bf16.msra.mxu0 0
  %1342 = vmatprep.subr.bf16.mxu0 0
  %1343 = vmatpush1.bf16.msra.mxu0 0
  %1344 = vmatprep.subr.bf16.mxu0 0
  %1345 = vmatpush1.bf16.msra.mxu0 0
  %1346 = vmatprep.subr.bf16.mxu0 0
  %1347 = vmatpush1.bf16.msra.mxu0 0
  %1348 = vmatprep.subr.bf16.mxu0 0
  %1349 = vmatpush1.bf16.msra.mxu0 0
  %1350 = vmatprep.subr.bf16.mxu0 0
  %1351 = vmatpush1.bf16.msra.mxu0 0
  %1352 = vmatprep.subr.bf16.mxu0 0
  %1353 = vmatpush1.bf16.msra.mxu0 0
  %1354 = vmatprep.subr.bf16.mxu0 0
  %1355 = vmatpush1.bf16.msra.mxu0 0
  %1356 = vmatprep.subr.bf16.mxu0 0
  %1357 = vmatpush1.bf16.msra.mxu0 0
  %1358 = vmatprep.subr.bf16.mxu0 0
  %1359 = vmatpush1.bf16.msra.mxu0 0
  %1360 = vmatprep.mubr.bf16.mxu0 0
  %1361 = vmatmul.mubr.bf16.gmra.mrb[0].mxu0 %v1323
  %v1362 = vpop.f32.mrb[0].mxu0
  %v1363 = vadd.f32 0.0, %v1362
  %v1364 = vpop.f32.mrb[0].mxu0
  %v1365 = vpop.f32.mrb[0].mxu0
  %v1366 = vadd.f32 0.0, %v1365
  %v1367 = vpop.f32.mrb[0].mxu0
  %1368 = vmatprep.mubr.bf16.mxu0 0
  %1369 = vmatmul.mubr.bf16.gmra.mrb[0].mxu0 %v1326
  %v1370 = vpop.f32.mrb[0].mxu0
  %v1371 = vadd.f32 0.0, %v1370
  %v1372 = vpop.f32.mrb[0].mxu0
  %v1373 = vpop.f32.mrb[0].mxu0
  %v1374 = vadd.f32 0.0, %v1373
  %v1375 = vpop.f32.mrb[0].mxu0
  %1376 = vdwg.mxu0
  %v1381 = vunpack.c.l.b16 %v1304
  %v1382 = vunpack.c.l.b16 %v1305
  %v1383 = vunpack.c.l.b16 %v1306
  %v1384 = vunpack.c.l.b16 %v1307
  %v1385 = vpack.c.b16 %v1382, %v1381
  %v1386 = vpack.c.b16 %v1384, %v1383
  %v1388 = vsel %vm143, %v1385, 0
  %v1391 = vsel %vm143, %v1386, 0
  %1393 = vmatprep.subr.bf16.mxu0 0
  %1394 = vmatpush1.bf16.msra.mxu0 %v1288
  %1395 = vmatprep.subr.bf16.mxu0 0
  %1396 = vmatpush1.bf16.msra.mxu0 %v1289
  %1397 = vmatprep.subr.bf16.mxu0 0
  %1398 = vmatpush1.bf16.msra.mxu0 %v1290
  %1399 = vmatprep.subr.bf16.mxu0 0
  %1400 = vmatpush1.bf16.msra.mxu0 %v1291
  %1401 = vmatprep.subr.bf16.mxu0 0
  %1402 = vmatpush1.bf16.msra.mxu0 0
  %1403 = vmatprep.subr.bf16.mxu0 0
  %1404 = vmatpush1.bf16.msra.mxu0 0
  %1405 = vmatprep.subr.bf16.mxu0 0
  %1406 = vmatpush1.bf16.msra.mxu0 0
  %1407 = vmatprep.subr.bf16.mxu0 0
  %1408 = vmatpush1.bf16.msra.mxu0 0
  %1409 = vmatprep.subr.bf16.mxu0 0
  %1410 = vmatpush1.bf16.msra.mxu0 0
  %1411 = vmatprep.subr.bf16.mxu0 0
  %1412 = vmatpush1.bf16.msra.mxu0 0
  %1413 = vmatprep.subr.bf16.mxu0 0
  %1414 = vmatpush1.bf16.msra.mxu0 0
  %1415 = vmatprep.subr.bf16.mxu0 0
  %1416 = vmatpush1.bf16.msra.mxu0 0
  %1417 = vmatprep.subr.bf16.mxu0 0
  %1418 = vmatpush1.bf16.msra.mxu0 0
  %1419 = vmatprep.subr.bf16.mxu0 0
  %1420 = vmatpush1.bf16.msra.mxu0 0
  %1421 = vmatprep.subr.bf16.mxu0 0
  %1422 = vmatpush1.bf16.msra.mxu0 0
  %1423 = vmatprep.subr.bf16.mxu0 0
  %1424 = vmatpush1.bf16.msra.mxu0 0
  %1425 = vmatprep.mubr.bf16.mxu0 0
  %1426 = vmatmul.mubr.bf16.gmra.mrb[0].mxu0 %v1388
  %v1427 = vpop.f32.mrb[0].mxu0
  %v1428 = vadd.f32 %v1363, %v1427
  %v1429 = vpop.f32.mrb[0].mxu0
  %v1430 = vpop.f32.mrb[0].mxu0
  %v1431 = vadd.f32 %v1366, %v1430
  %v1432 = vpop.f32.mrb[0].mxu0
  %1433 = vmatprep.mubr.bf16.mxu0 0
  %1434 = vmatmul.mubr.bf16.gmra.mrb[0].mxu0 %v1391
  %v1435 = vpop.f32.mrb[0].mxu0
  %v1436 = vadd.f32 %v1371, %v1435
  %v1437 = vpop.f32.mrb[0].mxu0
  %v1438 = vpop.f32.mrb[0].mxu0
  %v1439 = vadd.f32 %v1374, %v1438
  %v1440 = vpop.f32.mrb[0].mxu0
  %1441 = vdwg.mxu0
  %v1442 = vld [vmem:[%s9] sm:$0xff]
  %v1443 = vld [vmem:[%s9 + $0x8] sm:$0xff]
  %v1444 = vld [vmem:[%s9 + $0x10] sm:$0xff]
  %v1445 = vld [vmem:[%s9 + $0x18] sm:$0xff]
  %1447 = vset.pattern.permute.xlu0 0
  %1448 = vperm.xlu0 %1447, %v1442
  %v1449 = vpop.permute.xlu0 %1448
  %1452 = vset.pattern.permute.xlu0 0
  %1453 = vperm.xlu0 %1452, %v1443
  %v1454 = vpop.permute.xlu0 %1453
  %1457 = vset.pattern.permute.xlu0 0
  %1458 = vperm.xlu0 %1457, %v1444
  %v1459 = vpop.permute.xlu0 %1458
  %1462 = vset.pattern.permute.xlu0 0
  %1463 = vperm.xlu0 %1462, %v1445
  %v1464 = vpop.permute.xlu0 %1463
  %v1466 = vadd.f32 %v1428, %v1449
  %v1467 = vadd.f32 %v1431, %v1454
  %v1468 = vadd.f32 %v1436, %v1459
  %v1469 = vadd.f32 %v1439, %v1464
  %v1470 = vmax.f32 %v1466, 0.0
  %v1471 = vmax.f32 %v1467, 0.0
  %v1472 = vmax.f32 %v1468, 0.0
  %v1473 = vmax.f32 %v1469, 0.0
  %v1474 = vpack.c.bf16 %v1471, %v1470
  %v1475 = vpack.c.bf16 %v1473, %v1472
  %v1476 = vld [vmem:[%s17] sm:$0xf]
  %vm1477 = vcmask 64512
  %v1479 = vsel %vm1477, %v1474, 0
  %v1482 = vsel %vm1477, %v1475, 0
  %vm1484 = vcmask 1043456
  %v1486 = vsel %vm1484, %v1476, 0
  %1488 = vmatprep.subr.bf16.mxu0 0
  %1489 = vmatpush1.bf16.msra.mxu0 %v1486
  %1490 = vmatprep.subr.bf16.mxu0 0
  %1491 = vmatpush1.bf16.msra.mxu0 0
  %1492 = vmatprep.subr.bf16.mxu0 0
  %1493 = vmatpush1.bf16.msra.mxu0 0
  %1494 = vmatprep.subr.bf16.mxu0 0
  %1495 = vmatpush1.bf16.msra.mxu0 0
  %1496 = vmatprep.subr.bf16.mxu0 0
  %1497 = vmatpush1.bf16.msra.mxu0 0
  %1498 = vmatprep.subr.bf16.mxu0 0
  %1499 = vmatpush1.bf16.msra.mxu0 0
  %1500 = vmatprep.subr.bf16.mxu0 0
  %1501 = vmatpush1.bf16.msra.mxu0 0
  %1502 = vmatprep.subr.bf16.mxu0 0
  %1503 = vmatpush1.bf16.msra.mxu0 0
  %1504 = vmatprep.subr.bf16.mxu0 0
  %1505 = vmatpush1.bf16.msra.mxu0 0
  %1506 = vmatprep.subr.bf16.mxu0 0
  %1507 = vmatpush1.bf16.msra.mxu0 0
  %1508 = vmatprep.subr.bf16.mxu0 0
  %1509 = vmatpush1.bf16.msra.mxu0 0
  %1510 = vmatprep.subr.bf16.mxu0 0
  %1511 = vmatpush1.bf16.msra.mxu0 0
  %1512 = vmatprep.subr.bf16.mxu0 0
  %1513 = vmatpush1.bf16.msra.mxu0 0
  %1514 = vmatprep.subr.bf16.mxu0 0
  %1515 = vmatpush1.bf16.msra.mxu0 0
  %1516 = vmatprep.subr.bf16.mxu0 0
  %1517 = vmatpush1.bf16.msra.mxu0 0
  %1518 = vmatprep.subr.bf16.mxu0 0
  %1519 = vmatpush1.bf16.msra.mxu0 0
  %1520 = vmatprep.mubr.bf16.mxu0 0
  %1521 = vmatmul.mubr.bf16.gmra.mrb[0].mxu0 %v1479
  %v1522 = vpop.f32.mrb[0].mxu0
  %v1523 = vadd.f32 0.0, %v1522
  %v1524 = vpop.f32.mrb[0].mxu0
  %v1525 = vpop.f32.mrb[0].mxu0
  %v1526 = vadd.f32 0.0, %v1525
  %v1527 = vpop.f32.mrb[0].mxu0
  %1528 = vmatprep.mubr.bf16.mxu0 0
  %1529 = vmatmul.mubr.bf16.gmra.mrb[0].mxu0 %v1482
  %v1530 = vpop.f32.mrb[0].mxu0
  %v1531 = vadd.f32 0.0, %v1530
  %v1532 = vpop.f32.mrb[0].mxu0
  %v1533 = vpop.f32.mrb[0].mxu0
  %v1534 = vadd.f32 0.0, %v1533
  %v1535 = vpop.f32.mrb[0].mxu0
  %1536 = vdwg.mxu0
  %v1537 = vpack.c.bf16 %v1526, %v1523
  %v1538 = vpack.c.bf16 %v1534, %v1531
  %v1539 = vld [vmem:[%s1] sm:$0xf]
  %v1540 = vld [vmem:[%s1 + $0x4] sm:$0xf]
  %v1541 = vld [vmem:[%s1 + $0x8] sm:$0xf]
  %v1542 = vld [vmem:[%s1 + $0xc] sm:$0xf]
  %v1543 = vunpack.c.l.bf16 %v1539
  %v1544 = vunpack.c.l.bf16 %v1540
  %v1545 = vunpack.c.l.bf16 %v1541
  %v1546 = vunpack.c.l.bf16 %v1542
  %v1547 = vmax.f32 %v1543, 0.0
  %v1548 = vmax.f32 %v1544, 0.0
  %v1549 = vmax.f32 %v1545, 0.0
  %v1550 = vmax.f32 %v1546, 0.0
  %v1551 = vpack.c.bf16 %v1548, %v1547
  %v1552 = vpack.c.bf16 %v1550, %v1549
  %v1553 = vld [vmem:[%s10] sm:$0xf]
  %v1554 = vld [vmem:[%s10 + $0x4] sm:$0xf]
  %v1555 = vld [vmem:[%s11] sm:$0xf]
  %v1556 = vld [vmem:[%s11 + $0x4] sm:$0xf]
  %v1559 = vunpack.c.l.b16 %v1555
  %v1560 = vunpack.c.l.b16 %v1556
  %v1561 = vpack.c.b16 %v1560, %v1559
  %vm1562 = vcmask 261120
  %v1564 = vsel %vm1562, %v1561, 0
  %1566 = vmatprep.subr.bf16.mxu0 0
  %1567 = vmatpush1.bf16.msra.mxu0 %v1551
  %1568 = vmatprep.subr.bf16.mxu0 0
  %1569 = vmatpush1.bf16.msra.mxu0 %v1552
  %1570 = vmatprep.subr.bf16.mxu0 0
  %1571 = vmatpush1.bf16.msra.mxu0 0
  %1572 = vmatprep.subr.bf16.mxu0 0
  %1573 = vmatpush1.bf16.msra.mxu0 0
  %1574 = vmatprep.subr.bf16.mxu0 0
  %1575 = vmatpush1.bf16.msra.mxu0 0
  %1576 = vmatprep.subr.bf16.mxu0 0
  %1577 = vmatpush1.bf16.msra.mxu0 0
  %1578 = vmatprep.subr.bf16.mxu0 0
  %1579 = vmatpush1.bf16.msra.mxu0 0
  %1580 = vmatprep.subr.bf16.mxu0 0
  %1581 = vmatpush1.bf16.msra.mxu0 0
  %1582 = vmatprep.subr.bf16.mxu0 0
  %1583 = vmatpush1.bf16.msra.mxu0 0
  %1584 = vmatprep.subr.bf16.mxu0 0
  %1585 = vmatpush1.bf16.msra.mxu0 0
  %1586 = vmatprep.subr.bf16.mxu0 0
  %1587 = vmatpush1.bf16.msra.mxu0 0
  %1588 = vmatprep.subr.bf16.mxu0 0
  %1589 = vmatpush1.bf16.msra.mxu0 0
  %1590 = vmatprep.subr.bf16.mxu0 0
  %1591 = vmatpush1.bf16.msra.mxu0 0
  %1592 = vmatprep.subr.bf16.mxu0 0
  %1593 = vmatpush1.bf16.msra.mxu0 0
  %1594 = vmatprep.subr.bf16.mxu0 0
  %1595 = vmatpush1.bf16.msra.mxu0 0
  %1596 = vmatprep.subr.bf16.mxu0 0
  %1597 = vmatpush1.bf16.msra.mxu0 0
  %1598 = vmatprep.mubr.bf16.mxu0 0
  %1599 = vmatmul.mubr.bf16.gmra.mrb[0].mxu0 %v1564
  %v1600 = vpop.f32.mrb[0].mxu0
  %v1601 = vadd.f32 0.0, %v1600
  %v1602 = vpop.f32.mrb[0].mxu0
  %v1603 = vpop.f32.mrb[0].mxu0
  %v1604 = vadd.f32 0.0, %v1603
  %v1605 = vpop.f32.mrb[0].mxu0
  %1606 = vdwg.mxu0
  %v1609 = vunpack.c.l.b16 %v1553
  %v1610 = vunpack.c.l.b16 %v1554
  %v1611 = vpack.c.b16 %v1610, %v1609
  %v1613 = vsel %vm1562, %v1611, 0
  %1615 = vmatprep.subr.bf16.mxu0 0
  %1616 = vmatpush1.bf16.msra.mxu0 %v1537
  %1617 = vmatprep.subr.bf16.mxu0 0
  %1618 = vmatpush1.bf16.msra.mxu0 %v1538
  %1619 = vmatprep.subr.bf16.mxu0 0
  %1620 = vmatpush1.bf16.msra.mxu0 0
  %1621 = vmatprep.subr.bf16.mxu0 0
  %1622 = vmatpush1.bf16.msra.mxu0 0
  %1623 = vmatprep.subr.bf16.mxu0 0
  %1624 = vmatpush1.bf16.msra.mxu0 0
  %1625 = vmatprep.subr.bf16.mxu0 0
  %1626 = vmatpush1.bf16.msra.mxu0 0
  %1627 = vmatprep.subr.bf16.mxu0 0
  %1628 = vmatpush1.bf16.msra.mxu0 0
  %1629 = vmatprep.subr.bf16.mxu0 0
  %1630 = vmatpush1.bf16.msra.mxu0 0
  %1631 = vmatprep.subr.bf16.mxu0 0
  %1632 = vmatpush1.bf16.msra.mxu0 0
  %1633 = vmatprep.subr.bf16.mxu0 0
  %1634 = vmatpush1.bf16.msra.mxu0 0
  %1635 = vmatprep.subr.bf16.mxu0 0
  %1636 = vmatpush1.bf16.msra.mxu0 0
  %1637 = vmatprep.subr.bf16.mxu0 0
  %1638 = vmatpush1.bf16.msra.mxu0 0
  %1639 = vmatprep.subr.bf16.mxu0 0
  %1640 = vmatpush1.bf16.msra.mxu0 0
  %1641 = vmatprep.subr.bf16.mxu0 0
  %1642 = vmatpush1.bf16.msra.mxu0 0
  %1643 = vmatprep.subr.bf16.mxu0 0
  %1644 = vmatpush1.bf16.msra.mxu0 0
  %1645 = vmatprep.subr.bf16.mxu0 0
  %1646 = vmatpush1.bf16.msra.mxu0 0
  %1647 = vmatprep.mubr.bf16.mxu0 0
  %1648 = vmatmul.mubr.bf16.gmra.mrb[0].mxu0 %v1613
  %v1649 = vpop.f32.mrb[0].mxu0
  %v1650 = vadd.f32 %v1601, %v1649
  %v1651 = vpop.f32.mrb[0].mxu0
  %v1652 = vpop.f32.mrb[0].mxu0
  %v1653 = vadd.f32 %v1604, %v1652
  %v1654 = vpop.f32.mrb[0].mxu0
  %1655 = vdwg.mxu0
  %v1656 = vld [vmem:[%s12] sm:$0xff]
  %v1657 = vld [vmem:[%s12 + $0x8] sm:$0xff]
  %1659 = vset.pattern.permute.xlu0 0
  %1660 = vperm.xlu0 %1659, %v1656
  %v1661 = vpop.permute.xlu0 %1660
  %1664 = vset.pattern.permute.xlu0 0
  %1665 = vperm.xlu0 %1664, %v1657
  %v1666 = vpop.permute.xlu0 %1665
  %v1668 = vadd.f32 %v1650, %v1661
  %v1669 = vadd.f32 %v1653, %v1666
  %v1670 = vmax.f32 %v1668, 0.0
  %v1671 = vmax.f32 %v1669, 0.0
  %v1672 = vpack.c.bf16 %v1671, %v1670
  %v1673 = vld [vmem:[%s18] sm:$0xff]
  %v1674 = vld [vmem:[%s18 + $0x8] sm:$0xff]
  %v1675 = vld [vmem:[%s18 + $0x10] sm:$0xff]
  %v1676 = vld [vmem:[%s18 + $0x18] sm:$0xff]
  %v1677 = vld [vmem:[%s18 + $0x20] sm:$0xff]
  %v1678 = vld [vmem:[%s18 + $0x28] sm:$0xff]
  %v1679 = vld [vmem:[%s18 + $0x30] sm:$0xff]
  %v1680 = vld [vmem:[%s18 + $0x38] sm:$0xff]
  %v1681 = vld [vmem:[%s18 + $0x40] sm:$0xff]
  %v1682 = vld [vmem:[%s18 + $0x48] sm:$0xff]
  %v1683 = vld [vmem:[%s18 + $0x50] sm:$0xff]
  %v1684 = vld [vmem:[%s18 + $0x58] sm:$0xff]
  %v1685 = vld [vmem:[%s18 + $0x60] sm:$0xff]
  %v1686 = vld [vmem:[%s18 + $0x68] sm:$0xff]
  %v1687 = vld [vmem:[%s18 + $0x70] sm:$0xff]
  %v1688 = vld [vmem:[%s18 + $0x78] sm:$0xff]
  %v1705 = vunpack.c.l.b16 %v1673
  %v1706 = vunpack.c.h.b16 %v1673
  %v1707 = vunpack.c.l.b16 %v1674
  %v1708 = vunpack.c.h.b16 %v1674
  %v1709 = vunpack.c.l.b16 %v1675
  %v1710 = vunpack.c.h.b16 %v1675
  %v1711 = vunpack.c.l.b16 %v1676
  %v1712 = vunpack.c.h.b16 %v1676
  %v1713 = vunpack.c.l.b16 %v1677
  %v1714 = vunpack.c.h.b16 %v1677
  %v1715 = vunpack.c.l.b16 %v1678
  %v1716 = vunpack.c.h.b16 %v1678
  %v1717 = vunpack.c.l.b16 %v1679
  %v1718 = vunpack.c.h.b16 %v1679
  %v1719 = vunpack.c.l.b16 %v1680
  %v1720 = vunpack.c.h.b16 %v1680
  %v1721 = vunpack.c.l.b16 %v1681
  %v1722 = vunpack.c.h.b16 %v1681
  %v1723 = vunpack.c.l.b16 %v1682
  %v1724 = vunpack.c.h.b16 %v1682
  %v1725 = vunpack.c.l.b16 %v1683
  %v1726 = vunpack.c.h.b16 %v1683
  %v1727 = vunpack.c.l.b16 %v1684
  %v1728 = vunpack.c.h.b16 %v1684
  %v1729 = vunpack.c.l.b16 %v1685
  %v1730 = vunpack.c.h.b16 %v1685
  %v1731 = vunpack.c.l.b16 %v1686
  %v1732 = vunpack.c.h.b16 %v1686
  %v1733 = vunpack.c.l.b16 %v1687
  %v1734 = vunpack.c.h.b16 %v1687
  %v1735 = vunpack.c.l.b16 %v1688
  %v1736 = vunpack.c.h.b16 %v1688
  %v1737 = vpack.c.b16 %v1709, %v1705
  %v1738 = vpack.c.b16 %v1710, %v1706
  %v1739 = vpack.c.b16 %v1711, %v1707
  %v1740 = vpack.c.b16 %v1712, %v1708
  %v1741 = vpack.c.b16 %v1717, %v1713
  %v1742 = vpack.c.b16 %v1718, %v1714
  %v1743 = vpack.c.b16 %v1719, %v1715
  %v1744 = vpack.c.b16 %v1720, %v1716
  %v1745 = vpack.c.b16 %v1725, %v1721
  %v1746 = vpack.c.b16 %v1726, %v1722
  %v1747 = vpack.c.b16 %v1727, %v1723
  %v1748 = vpack.c.b16 %v1728, %v1724
  %v1749 = vpack.c.b16 %v1733, %v1729
  %v1750 = vpack.c.b16 %v1734, %v1730
  %v1751 = vpack.c.b16 %v1735, %v1731
  %v1752 = vpack.c.b16 %v1736, %v1732
  %v1770 = vsel %vm143, %v1672, 0
  %1772 = vmatprep.subr.bf16.mxu0 %v1738
  %1773 = vmatpush1.bf16.msra.mxu0 %v1737
  %1774 = vmatprep.subr.bf16.mxu0 %v1742
  %1775 = vmatpush1.bf16.msra.mxu0 %v1741
  %1776 = vmatprep.subr.bf16.mxu0 %v1746
  %1777 = vmatpush1.bf16.msra.mxu0 %v1745
  %1778 = vmatprep.subr.bf16.mxu0 %v1750
  %1779 = vmatpush1.bf16.msra.mxu0 %v1749
  %1780 = vmatprep.subr.bf16.mxu0 0
  %1781 = vmatpush1.bf16.msra.mxu0 0
  %1782 = vmatprep.subr.bf16.mxu0 0
  %1783 = vmatpush1.bf16.msra.mxu0 0
  %1784 = vmatprep.subr.bf16.mxu0 0
  %1785 = vmatpush1.bf16.msra.mxu0 0
  %1786 = vmatprep.subr.bf16.mxu0 0
  %1787 = vmatpush1.bf16.msra.mxu0 0
  %1788 = vmatprep.subr.bf16.mxu0 0
  %1789 = vmatpush1.bf16.msra.mxu0 0
  %1790 = vmatprep.subr.bf16.mxu0 0
  %1791 = vmatpush1.bf16.msra.mxu0 0
  %1792 = vmatprep.subr.bf16.mxu0 0
  %1793 = vmatpush1.bf16.msra.mxu0 0
  %1794 = vmatprep.subr.bf16.mxu0 0
  %1795 = vmatpush1.bf16.msra.mxu0 0
  %1796 = vmatprep.subr.bf16.mxu0 0
  %1797 = vmatpush1.bf16.msra.mxu0 0
  %1798 = vmatprep.subr.bf16.mxu0 0
  %1799 = vmatpush1.bf16.msra.mxu0 0
  %1800 = vmatprep.subr.bf16.mxu0 0
  %1801 = vmatpush1.bf16.msra.mxu0 0
  %1802 = vmatprep.subr.bf16.mxu0 0
  %1803 = vmatpush1.bf16.msra.mxu0 0
  %1804 = vmatprep.mubr.bf16.mxu0 0
  %1805 = vmatmul.mubr.bf16.gmra.mrb[0].mxu0 %v1770
  %v1806 = vpop.f32.mrb[0].mxu0
  %v1807 = vadd.f32 0.0, %v1806
  %v1808 = vpop.f32.mrb[0].mxu0
  %v1809 = vadd.f32 0.0, %v1808
  %v1810 = vpop.f32.mrb[0].mxu0
  %v1811 = vadd.f32 0.0, %v1810
  %v1812 = vpop.f32.mrb[0].mxu0
  %v1813 = vadd.f32 0.0, %v1812
  %1814 = vdwg.mxu0
  %1815 = vmatprep.subr.bf16.mxu0 %v1740
  %1816 = vmatpush1.bf16.msra.mxu0 %v1739
  %1817 = vmatprep.subr.bf16.mxu0 %v1744
  %1818 = vmatpush1.bf16.msra.mxu0 %v1743
  %1819 = vmatprep.subr.bf16.mxu0 %v1748
  %1820 = vmatpush1.bf16.msra.mxu0 %v1747
  %1821 = vmatprep.subr.bf16.mxu0 %v1752
  %1822 = vmatpush1.bf16.msra.mxu0 %v1751
  %1823 = vmatprep.subr.bf16.mxu0 0
  %1824 = vmatpush1.bf16.msra.mxu0 0
  %1825 = vmatprep.subr.bf16.mxu0 0
  %1826 = vmatpush1.bf16.msra.mxu0 0
  %1827 = vmatprep.subr.bf16.mxu0 0
  %1828 = vmatpush1.bf16.msra.mxu0 0
  %1829 = vmatprep.subr.bf16.mxu0 0
  %1830 = vmatpush1.bf16.msra.mxu0 0
  %1831 = vmatprep.subr.bf16.mxu0 0
  %1832 = vmatpush1.bf16.msra.mxu0 0
  %1833 = vmatprep.subr.bf16.mxu0 0
  %1834 = vmatpush1.bf16.msra.mxu0 0
  %1835 = vmatprep.subr.bf16.mxu0 0
  %1836 = vmatpush1.bf16.msra.mxu0 0
  %1837 = vmatprep.subr.bf16.mxu0 0
  %1838 = vmatpush1.bf16.msra.mxu0 0
  %1839 = vmatprep.subr.bf16.mxu0 0
  %1840 = vmatpush1.bf16.msra.mxu0 0
  %1841 = vmatprep.subr.bf16.mxu0 0
  %1842 = vmatpush1.bf16.msra.mxu0 0
  %1843 = vmatprep.subr.bf16.mxu0 0
  %1844 = vmatpush1.bf16.msra.mxu0 0
  %1845 = vmatprep.subr.bf16.mxu0 0
  %1846 = vmatpush1.bf16.msra.mxu0 0
  %1847 = vmatprep.mubr.bf16.mxu0 0
  %1848 = vmatmul.mubr.bf16.gmra.mrb[0].mxu0 %v1770
  %v1849 = vpop.f32.mrb[0].mxu0
  %v1850 = vadd.f32 0.0, %v1849
  %v1851 = vpop.f32.mrb[0].mxu0
  %v1852 = vadd.f32 0.0, %v1851
  %v1853 = vpop.f32.mrb[0].mxu0
  %v1854 = vadd.f32 0.0, %v1853
  %v1855 = vpop.f32.mrb[0].mxu0
  %v1856 = vadd.f32 0.0, %v1855
  %1857 = vdwg.mxu0
  %v1858 = vpack.c.bf16 %v1811, %v1807
  %v1859 = vpack.c.bf16 %v1813, %v1809
  %v1860 = vpack.c.bf16 %v1854, %v1850
  %v1861 = vpack.c.bf16 %v1856, %v1852
  %v1862 = vld [vmem:[%s2] sm:$0xff]
  %v1863 = vld [vmem:[%s2 + $0x8] sm:$0xff]
  %v1864 = vld [vmem:[%s2 + $0x10] sm:$0xff]
  %v1865 = vld [vmem:[%s2 + $0x18] sm:$0xff]
  %v1866 = vunpack.c.l.bf16 %v1862
  %v1867 = vunpack.c.h.bf16 %v1862
  %v1868 = vunpack.c.l.bf16 %v1863
  %v1869 = vunpack.c.h.bf16 %v1863
  %v1870 = vunpack.c.l.bf16 %v1864
  %v1871 = vunpack.c.h.bf16 %v1864
  %v1872 = vunpack.c.l.bf16 %v1865
  %v1873 = vunpack.c.h.bf16 %v1865
  %v1874 = vmax.f32 %v1866, 0.0
  %v1875 = vmax.f32 %v1867, 0.0
  %v1876 = vmax.f32 %v1868, 0.0
  %v1877 = vmax.f32 %v1869, 0.0
  %v1878 = vmax.f32 %v1870, 0.0
  %v1879 = vmax.f32 %v1871, 0.0
  %v1880 = vmax.f32 %v1872, 0.0
  %v1881 = vmax.f32 %v1873, 0.0
  %v1882 = vpack.c.bf16 %v1878, %v1874
  %v1883 = vpack.c.bf16 %v1879, %v1875
  %v1884 = vpack.c.bf16 %v1880, %v1876
  %v1885 = vpack.c.bf16 %v1881, %v1877
  %v1886 = vld [vmem:[%s13] sm:$0xf]
  %v1887 = vld [vmem:[%s14] sm:$0xf]
  %vm1888 = vcmask 130048
  %v1890 = vsel %vm1888, %v1887, 0
  %1892 = vmatprep.subr.bf16.mxu0 %v1883
  %1893 = vmatpush1.bf16.msra.mxu0 %v1882
  %1894 = vmatprep.subr.bf16.mxu0 0
  %1895 = vmatpush1.bf16.msra.mxu0 0
  %1896 = vmatprep.subr.bf16.mxu0 0
  %1897 = vmatpush1.bf16.msra.mxu0 0
  %1898 = vmatprep.subr.bf16.mxu0 0
  %1899 = vmatpush1.bf16.msra.mxu0 0
  %1900 = vmatprep.subr.bf16.mxu0 0
  %1901 = vmatpush1.bf16.msra.mxu0 0
  %1902 = vmatprep.subr.bf16.mxu0 0
  %1903 = vmatpush1.bf16.msra.mxu0 0
  %1904 = vmatprep.subr.bf16.mxu0 0
  %1905 = vmatpush1.bf16.msra.mxu0 0
  %1906 = vmatprep.subr.bf16.mxu0 0
  %1907 = vmatpush1.bf16.msra.mxu0 0
  %1908 = vmatprep.subr.bf16.mxu0 0
  %1909 = vmatpush1.bf16.msra.mxu0 0
  %1910 = vmatprep.subr.bf16.mxu0 0
  %1911 = vmatpush1.bf16.msra.mxu0 0
  %1912 = vmatprep.subr.bf16.mxu0 0
  %1913 = vmatpush1.bf16.msra.mxu0 0
  %1914 = vmatprep.subr.bf16.mxu0 0
  %1915 = vmatpush1.bf16.msra.mxu0 0
  %1916 = vmatprep.subr.bf16.mxu0 0
  %1917 = vmatpush1.bf16.msra.mxu0 0
  %1918 = vmatprep.subr.bf16.mxu0 0
  %1919 = vmatpush1.bf16.msra.mxu0 0
  %1920 = vmatprep.subr.bf16.mxu0 0
  %1921 = vmatpush1.bf16.msra.mxu0 0
  %1922 = vmatprep.subr.bf16.mxu0 0
  %1923 = vmatpush1.bf16.msra.mxu0 0
  %1924 = vmatprep.mubr.bf16.mxu0 0
  %1925 = vmatmul.mubr.bf16.gmra.mrb[0].mxu0 %v1890
  %v1926 = vpop.f32.mrb[0].mxu0
  %v1927 = vadd.f32 0.0, %v1926
  %v1928 = vpop.f32.mrb[0].mxu0
  %v1929 = vadd.f32 0.0, %v1928
  %v1930 = vpop.f32.mrb[0].mxu0
  %v1931 = vpop.f32.mrb[0].mxu0
  %1932 = vdwg.mxu0
  %1933 = vmatprep.subr.bf16.mxu0 %v1885
  %1934 = vmatpush1.bf16.msra.mxu0 %v1884
  %1935 = vmatprep.subr.bf16.mxu0 0
  %1936 = vmatpush1.bf16.msra.mxu0 0
  %1937 = vmatprep.subr.bf16.mxu0 0
  %1938 = vmatpush1.bf16.msra.mxu0 0
  %1939 = vmatprep.subr.bf16.mxu0 0
  %1940 = vmatpush1.bf16.msra.mxu0 0
  %1941 = vmatprep.subr.bf16.mxu0 0
  %1942 = vmatpush1.bf16.msra.mxu0 0
  %1943 = vmatprep.subr.bf16.mxu0 0
  %1944 = vmatpush1.bf16.msra.mxu0 0
  %1945 = vmatprep.subr.bf16.mxu0 0
  %1946 = vmatpush1.bf16.msra.mxu0 0
  %1947 = vmatprep.subr.bf16.mxu0 0
  %1948 = vmatpush1.bf16.msra.mxu0 0
  %1949 = vmatprep.subr.bf16.mxu0 0
  %1950 = vmatpush1.bf16.msra.mxu0 0
  %1951 = vmatprep.subr.bf16.mxu0 0
  %1952 = vmatpush1.bf16.msra.mxu0 0
  %1953 = vmatprep.subr.bf16.mxu0 0
  %1954 = vmatpush1.bf16.msra.mxu0 0
  %1955 = vmatprep.subr.bf16.mxu0 0
  %1956 = vmatpush1.bf16.msra.mxu0 0
  %1957 = vmatprep.subr.bf16.mxu0 0
  %1958 = vmatpush1.bf16.msra.mxu0 0
  %1959 = vmatprep.subr.bf16.mxu0 0
  %1960 = vmatpush1.bf16.msra.mxu0 0
  %1961 = vmatprep.subr.bf16.mxu0 0
  %1962 = vmatpush1.bf16.msra.mxu0 0
  %1963 = vmatprep.subr.bf16.mxu0 0
  %1964 = vmatpush1.bf16.msra.mxu0 0
  %1965 = vmatprep.mubr.bf16.mxu0 0
  %1966 = vmatmul.mubr.bf16.gmra.mrb[0].mxu0 %v1890
  %v1967 = vpop.f32.mrb[0].mxu0
  %v1968 = vadd.f32 0.0, %v1967
  %v1969 = vpop.f32.mrb[0].mxu0
  %v1970 = vadd.f32 0.0, %v1969
  %v1971 = vpop.f32.mrb[0].mxu0
  %v1972 = vpop.f32.mrb[0].mxu0
  %1973 = vdwg.mxu0
  %v1975 = vsel %vm1888, %v1886, 0
  %1977 = vmatprep.subr.bf16.mxu0 %v1859
  %1978 = vmatpush1.bf16.msra.mxu0 %v1858
  %1979 = vmatprep.subr.bf16.mxu0 0
  %1980 = vmatpush1.bf16.msra.mxu0 0
  %1981 = vmatprep.subr.bf16.mxu0 0
  %1982 = vmatpush1.bf16.msra.mxu0 0
  %1983 = vmatprep.subr.bf16.mxu0 0
  %1984 = vmatpush1.bf16.msra.mxu0 0
  %1985 = vmatprep.subr.bf16.mxu0 0
  %1986 = vmatpush1.bf16.msra.mxu0 0
  %1987 = vmatprep.subr.bf16.mxu0 0
  %1988 = vmatpush1.bf16.msra.mxu0 0
  %1989 = vmatprep.subr.bf16.mxu0 0
  %1990 = vmatpush1.bf16.msra.mxu0 0
  %1991 = vmatprep.subr.bf16.mxu0 0
  %1992 = vmatpush1.bf16.msra.mxu0 0
  %1993 = vmatprep.subr.bf16.mxu0 0
  %1994 = vmatpush1.bf16.msra.mxu0 0
  %1995 = vmatprep.subr.bf16.mxu0 0
  %1996 = vmatpush1.bf16.msra.mxu0 0
  %1997 = vmatprep.subr.bf16.mxu0 0
  %1998 = vmatpush1.bf16.msra.mxu0 0
  %1999 = vmatprep.subr.bf16.mxu0 0
  %2000 = vmatpush1.bf16.msra.mxu0 0
  %2001 = vmatprep.subr.bf16.mxu0 0
  %2002 = vmatpush1.bf16.msra.mxu0 0
  %2003 = vmatprep.subr.bf16.mxu0 0
  %2004 = vmatpush1.bf16.msra.mxu0 0
  %2005 = vmatprep.subr.bf16.mxu0 0
  %2006 = vmatpush1.bf16.msra.mxu0 0
  %2007 = vmatprep.subr.bf16.mxu0 0
  %2008 = vmatpush1.bf16.msra.mxu0 0
  %2009 = vmatprep.mubr.bf16.mxu0 0
  %2010 = vmatmul.mubr.bf16.gmra.mrb[0].mxu0 %v1975
  %v2011 = vpop.f32.mrb[0].mxu0
  %v2012 = vadd.f32 %v1927, %v2011
  %v2013 = vpop.f32.mrb[0].mxu0
  %v2014 = vadd.f32 %v1929, %v2013
  %v2015 = vpop.f32.mrb[0].mxu0
  %v2016 = vpop.f32.mrb[0].mxu0
  %2017 = vdwg.mxu0
  %2018 = vmatprep.subr.bf16.mxu0 %v1861
  %2019 = vmatpush1.bf16.msra.mxu0 %v1860
  %2020 = vmatprep.subr.bf16.mxu0 0
  %2021 = vmatpush1.bf16.msra.mxu0 0
  %2022 = vmatprep.subr.bf16.mxu0 0
  %2023 = vmatpush1.bf16.msra.mxu0 0
  %2024 = vmatprep.subr.bf16.mxu0 0
  %2025 = vmatpush1.bf16.msra.mxu0 0
  %2026 = vmatprep.subr.bf16.mxu0 0
  %2027 = vmatpush1.bf16.msra.mxu0 0
  %2028 = vmatprep.subr.bf16.mxu0 0
  %2029 = vmatpush1.bf16.msra.mxu0 0
  %2030 = vmatprep.subr.bf16.mxu0 0
  %2031 = vmatpush1.bf16.msra.mxu0 0
  %2032 = vmatprep.subr.bf16.mxu0 0
  %2033 = vmatpush1.bf16.msra.mxu0 0
  %2034 = vmatprep.subr.bf16.mxu0 0
  %2035 = vmatpush1.bf16.msra.mxu0 0
  %2036 = vmatprep.subr.bf16.mxu0 0
  %2037 = vmatpush1.bf16.msra.mxu0 0
  %2038 = vmatprep.subr.bf16.mxu0 0
  %2039 = vmatpush1.bf16.msra.mxu0 0
  %2040 = vmatprep.subr.bf16.mxu0 0
  %2041 = vmatpush1.bf16.msra.mxu0 0
  %2042 = vmatprep.subr.bf16.mxu0 0
  %2043 = vmatpush1.bf16.msra.mxu0 0
  %2044 = vmatprep.subr.bf16.mxu0 0
  %2045 = vmatpush1.bf16.msra.mxu0 0
  %2046 = vmatprep.subr.bf16.mxu0 0
  %2047 = vmatpush1.bf16.msra.mxu0 0
  %2048 = vmatprep.subr.bf16.mxu0 0
  %2049 = vmatpush1.bf16.msra.mxu0 0
  %2050 = vmatprep.mubr.bf16.mxu0 0
  %2051 = vmatmul.mubr.bf16.gmra.mrb[0].mxu0 %v1975
  %v2052 = vpop.f32.mrb[0].mxu0
  %v2053 = vadd.f32 %v1968, %v2052
  %v2054 = vpop.f32.mrb[0].mxu0
  %v2055 = vadd.f32 %v1970, %v2054
  %v2056 = vpop.f32.mrb[0].mxu0
  %v2057 = vpop.f32.mrb[0].mxu0
  %2058 = vdwg.mxu0
  %v2059 = vld [vmem:[%s15] sm:$0xff]
  %2061 = vset.pattern.permute.xlu0 0
  %2062 = vperm.xlu0 %2061, %v2059
  %v2063 = vpop.permute.xlu0 %2062
  %v2065 = vadd.f32 %v2012, %v2063
  %v2066 = vadd.f32 %v2014, %v2063
  %v2067 = vadd.f32 %v2053, %v2063
  %v2068 = vadd.f32 %v2055, %v2063
  %v2069 = vld [vmem:[%s16] sm:$0x1]
  %v2070 = vmax.f32 %v2065, 0.0
  %v2071 = vmax.f32 %v2066, 0.0
  %v2072 = vmax.f32 %v2067, 0.0
  %v2073 = vmax.f32 %v2068, 0.0
  %v2074 = vpack.c.bf16 %v2070, %v2070
  %v2075 = vpack.c.bf16 %v2071, %v2071
  %v2076 = vpack.c.bf16 %v2072, %v2072
  %v2077 = vpack.c.bf16 %v2073, %v2073
  %v2079 = vsel %vm1477, %v2069, 0
  %v2082 = vsel %vm1484, %v2074, 0
  %v2085 = vsel %vm1484, %v2075, 0
  %v2088 = vsel %vm1484, %v2076, 0
  %v2091 = vsel %vm1484, %v2077, 0
  %2093 = vmatprep.subr.bf16.mxu0 %v2085
  %2094 = vmatpush1.bf16.msra.mxu0 %v2082
  %2095 = vmatprep.subr.bf16.mxu0 0
  %2096 = vmatpush1.bf16.msra.mxu0 0
  %2097 = vmatprep.subr.bf16.mxu0 0
  %2098 = vmatpush1.bf16.msra.mxu0 0
  %2099 = vmatprep.subr.bf16.mxu0 0
  %2100 = vmatpush1.bf16.msra.mxu0 0
  %2101 = vmatprep.subr.bf16.mxu0 0
  %2102 = vmatpush1.bf16.msra.mxu0 0
  %2103 = vmatprep.subr.bf16.mxu0 0
  %2104 = vmatpush1.bf16.msra.mxu0 0
  %2105 = vmatprep.subr.bf16.mxu0 0
  %2106 = vmatpush1.bf16.msra.mxu0 0
  %2107 = vmatprep.subr.bf16.mxu0 0
  %2108 = vmatpush1.bf16.msra.mxu0 0
  %2109 = vmatprep.subr.bf16.mxu0 0
  %2110 = vmatpush1.bf16.msra.mxu0 0
  %2111 = vmatprep.subr.bf16.mxu0 0
  %2112 = vmatpush1.bf16.msra.mxu0 0
  %2113 = vmatprep.subr.bf16.mxu0 0
  %2114 = vmatpush1.bf16.msra.mxu0 0
  %2115 = vmatprep.subr.bf16.mxu0 0
  %2116 = vmatpush1.bf16.msra.mxu0 0
  %2117 = vmatprep.subr.bf16.mxu0 0
  %2118 = vmatpush1.bf16.msra.mxu0 0
  %2119 = vmatprep.subr.bf16.mxu0 0
  %2120 = vmatpush1.bf16.msra.mxu0 0
  %2121 = vmatprep.subr.bf16.mxu0 0
  %2122 = vmatpush1.bf16.msra.mxu0 0
  %2123 = vmatprep.subr.bf16.mxu0 0
  %2124 = vmatpush1.bf16.msra.mxu0 0
  %2125 = vmatprep.mubr.bf16.mxu0 0
  %2126 = vmatmul.mubr.bf16.gmra.mrb[0].mxu0 %v2079
  %v2127 = vpop.f32.mrb[0].mxu0
  %v2128 = vadd.f32 0.0, %v2127
  %v2129 = vpop.f32.mrb[0].mxu0
  %v2130 = vadd.f32 0.0, %v2129
  %v2131 = vpop.f32.mrb[0].mxu0
  %v2132 = vpop.f32.mrb[0].mxu0
  %2133 = vdwg.mxu0
  %2134 = vmatprep.subr.bf16.mxu0 %v2091
  %2135 = vmatpush1.bf16.msra.mxu0 %v2088
  %2136 = vmatprep.subr.bf16.mxu0 0
  %2137 = vmatpush1.bf16.msra.mxu0 0
  %2138 = vmatprep.subr.bf16.mxu0 0
  %2139 = vmatpush1.bf16.msra.mxu0 0
  %2140 = vmatprep.subr.bf16.mxu0 0
  %2141 = vmatpush1.bf16.msra.mxu0 0
  %2142 = vmatprep.subr.bf16.mxu0 0
  %2143 = vmatpush1.bf16.msra.mxu0 0
  %2144 = vmatprep.subr.bf16.mxu0 0
  %2145 = vmatpush1.bf16.msra.mxu0 0
  %2146 = vmatprep.subr.bf16.mxu0 0
  %2147 = vmatpush1.bf16.msra.mxu0 0
  %2148 = vmatprep.subr.bf16.mxu0 0
  %2149 = vmatpush1.bf16.msra.mxu0 0
  %2150 = vmatprep.subr.bf16.mxu0 0
  %2151 = vmatpush1.bf16.msra.mxu0 0
  %2152 = vmatprep.subr.bf16.mxu0 0
  %2153 = vmatpush1.bf16.msra.mxu0 0
  %2154 = vmatprep.subr.bf16.mxu0 0
  %2155 = vmatpush1.bf16.msra.mxu0 0
  %2156 = vmatprep.subr.bf16.mxu0 0
  %2157 = vmatpush1.bf16.msra.mxu0 0
  %2158 = vmatprep.subr.bf16.mxu0 0
  %2159 = vmatpush1.bf16.msra.mxu0 0
  %2160 = vmatprep.subr.bf16.mxu0 0
  %2161 = vmatpush1.bf16.msra.mxu0 0
  %2162 = vmatprep.subr.bf16.mxu0 0
  %2163 = vmatpush1.bf16.msra.mxu0 0
  %2164 = vmatprep.subr.bf16.mxu0 0
  %2165 = vmatpush1.bf16.msra.mxu0 0
  %2166 = vmatprep.mubr.bf16.mxu0 0
  %2167 = vmatmul.mubr.bf16.gmra.mrb[0].mxu0 %v2079
  %v2168 = vpop.f32.mrb[0].mxu0
  %v2169 = vadd.f32 0.0, %v2168
  %v2170 = vpop.f32.mrb[0].mxu0
  %v2171 = vadd.f32 0.0, %v2170
  %v2172 = vpop.f32.mrb[0].mxu0
  %v2173 = vpop.f32.mrb[0].mxu0
  %2174 = vdwg.mxu0
  %v2179 = vcombine.low %v2128, %v2130
  %v2180 = vcombine.low %v2169, %v2171
  %v2182 = vunpack.c.l.s4 1966171168
  %v2183 = vunpack.c.0.s8 %v2182
  %v2184 = vlaneseq
  %v2185 = vshrl.u32 %v2184, 7
  %v2186 = vsub.s32 %v2183, %v2185
  %v2187 = vrot.slane %v2179, %v2186
  %v2189 = vunpack.c.l.s4 1966171168
  %v2190 = vunpack.c.0.s8 %v2189
  %v2191 = vlaneseq
  %v2192 = vshrl.u32 %v2191, 7
  %v2193 = vsub.s32 %v2190, %v2192
  %v2194 = vrot.slane %v2180, %v2193
  %v2195 = vcombine.low %v2187, %v2194
  %v2197 = vunpack.c.l.s4 1966171168
  %v2198 = vunpack.c.0.s8 %v2197
  %v2199 = vlaneseq
  %v2200 = vshrl.u32 %v2199, 7
  %v2201 = vsub.s32 %v2198, %v2200
  %v2202 = vrot.slane %v2195, %v2201
  %v2204 = vlaneseq
  %vm2205 = vcmp.ge.s32.totalorder %v2204, 0
  %vm2206 = vcmp.lt.s32.totalorder %v2204, 512
  %vm2207 = vmand %vm2205, %vm2206
  %2208 = vst.msk [vmem:[%s19] sm:$0xf] %vm2207, %v2202
  // Predicated region
  $region78: #{unet_g_hr_forward.9} parent=0 // pred_check
    _
  $region79: #{unet_g_hr_forward.9} parent=0 // pred_check_branch
    %2210 = sbr.rel (0) target = $region81
  $region80: #{unet_g_hr_forward.9} parent=0 // pred_region
    _
  $region81: #{unet_g_hr_forward.9} parent=0 // pred_fallthru
    _
  // Predicated region
  $region82: #{unet_g_hr_forward.9} parent=0 // pred_check
    _
  $region83: #{unet_g_hr_forward.9} parent=0 // pred_check_branch
    %2212 = sbr.rel (0) target = $region85
  $region84: #{unet_g_hr_forward.9} parent=0 // pred_region
    _
  $region85: #{unet_g_hr_forward.9} parent=0 // pred_fallthru
    _

</llo_original>
